<compile_context>
chip_gen: v7x
topology: tpu7x:2x2x1
jax: 0.10.0
libtpu: 0.0.40
codegen_flags: <defaults>
</compile_context>

<pallas_src>
import functools

import numpy as np
import jax
import jax.numpy as jnp
from jax import lax
from jax.experimental import pallas as pl
from jax.experimental.pallas import tpu as pltpu


# ----------------------------------------------------------------------------
# Kernel A: full conv backbone (conv1 + conv2 + conv3) in one pallas_call.
# ----------------------------------------------------------------------------
def _conv_backbone_kernel(x_ref, w1_ref, b1_ref, w2_ref, b2_ref, w3_ref, b3_ref,
                          o_ref, y1_scr, y2_scr):
    bt = x_ref.shape[0]
    f32 = jnp.float32
    bf16 = jnp.bfloat16

    # conv1 (8x8 stride 4) == 4 shifted unit-stride GEMMs over the
    # space-to-depth(8) input.  Rows = (b, super_row, super_col); output
    # columns are parity-packed: channel = p*64 + q*32 + cout.
    acc = jnp.zeros((bt * 64, 128), f32)
    for di in range(2):
        for dj in range(2):
            xs = x_ref[:, di:di + 8, dj:dj + 8, :].reshape(bt * 64, 256)
            acc += jnp.dot(xs, w1_ref[di * 2 + dj], preferred_element_type=f32)
    y1 = jnp.maximum(acc + b1_ref[...], 0.0).astype(bf16)
    y1_scr[:, :, 0:8, :] = y1.reshape(bt, 8, 8, 128)

    # conv2 (4x4 stride 2) == 2x2 stride-1 conv on the parity-packed grid.
    # Column offsets are realized as static offset reads from the padded
    # scratch; out-of-range / padded positions only feed spatial positions
    # that are themselves padding and never read again.
    acc = jnp.zeros((bt * 6 * 8, 64), f32)
    for i in range(2):
        for j in range(2):
            ys = y1_scr[:, i:i + 6, j:j + 8, :].reshape(bt * 6 * 8, 128)
            acc += jnp.dot(ys, w2_ref[i * 2 + j], preferred_element_type=f32)
    y2 = jnp.maximum(acc + b2_ref[...], 0.0).astype(bf16)
    y2_scr[:, :, 0:8, :] = y2.reshape(bt, 6, 8, 64)

    # conv3 (3x3 stride 1).
    acc = jnp.zeros((bt * 4 * 8, 64), f32)
    for i in range(3):
        for j in range(3):
            ys = y2_scr[:, i:i + 4, j:j + 8, :].reshape(bt * 4 * 8, 64)
            acc += jnp.dot(ys, w3_ref[i * 3 + j], preferred_element_type=f32)
    y3 = jnp.maximum(acc + b3_ref[...], 0.0).reshape(bt, 4, 8, 64)
    o_ref[...] = y3[:, :, 0:4, :].astype(o_ref.dtype)     # drop padded columns


def conv_backbone(x_s2d, params, block_b=16):
    """x_s2d: (B, 9, 9, 256) bf16 space-to-depth(8) input -> (B, 4, 4, 64) bf16."""
    B = x_s2d.shape[0]
    bb = min(B, block_b)
    grid = (pl.cdiv(B, bb),)
    w1, b1 = params["w1"], params["b1"]
    w2, b2 = params["w2"], params["b2"]
    w3, b3 = params["w3"], params["b3"]
    flops = 2 * B * (4 * 64 * 256 * 128 + 4 * 48 * 128 * 64 + 9 * 32 * 64 * 64)
    bytes_accessed = (x_s2d.size * 2 + (w1.size + w2.size + w3.size) * 2
                      + (b1.size + b2.size + b3.size) * 4 + B * 4 * 4 * 64 * 2)
    return pl.pallas_call(
        _conv_backbone_kernel,
        out_shape=jax.ShapeDtypeStruct((B, 4, 4, 64), jnp.bfloat16),
        grid=grid,
        in_specs=[
            pl.BlockSpec((bb, 9, 9, 256), lambda i: (i, 0, 0, 0)),
            pl.BlockSpec((4, 256, 128), lambda i: (0, 0, 0)),
            pl.BlockSpec((1, 128), lambda i: (0, 0)),
            pl.BlockSpec((4, 128, 64), lambda i: (0, 0, 0)),
            pl.BlockSpec((1, 64), lambda i: (0, 0)),
            pl.BlockSpec((9, 64, 64), lambda i: (0, 0, 0)),
            pl.BlockSpec((1, 64), lambda i: (0, 0)),
        ],
        out_specs=pl.BlockSpec((bb, 4, 4, 64), lambda i: (i, 0, 0, 0)),
        scratch_shapes=[pltpu.VMEM((bb, 8, 16, 128), jnp.bfloat16),
                        pltpu.VMEM((bb, 6, 16, 64), jnp.bfloat16)],
        compiler_params=pltpu.CompilerParams(dimension_semantics=("parallel",)),
        cost_estimate=pl.CostEstimate(flops=flops, transcendentals=0,
                                      bytes_accessed=bytes_accessed),
    )(x_s2d, w1, b1, w2, b2, w3, b3)


# ----------------------------------------------------------------------------
# Kernel B: fused Linear(1024->512)+ReLU plus policy + value heads.
# ----------------------------------------------------------------------------
def _fc_heads_kernel(x_ref, w1_ref, b1_ref, w2_ref, b2_ref, o_ref):
    feat = jnp.dot(x_ref[...], w1_ref[...], preferred_element_type=jnp.float32)
    feat = jnp.maximum(feat + b1_ref[...], 0.0)
    out = jnp.dot(feat.astype(w2_ref.dtype), w2_ref[...],
                  preferred_element_type=jnp.float32)
    o_ref[...] = (out + b2_ref[...]).astype(o_ref.dtype)


def fc_heads(x, params, block_m=512):
    B, K = x.shape
    w1, b1 = params["fc_w"], params["fc_b"]
    w2, b2 = params["head_w"], params["head_b"]
    N1, N2 = w1.shape[1], w2.shape[1]
    bm = min(B, block_m)
    grid = (pl.cdiv(B, bm),)
    flops = 2 * B * (K * N1 + N1 * N2)
    bytes_accessed = (x.size * 2 + (w1.size + w2.size) * 2
                      + (b1.size + b2.size) * 4 + B * N2 * 4)
    return pl.pallas_call(
        _fc_heads_kernel,
        out_shape=jax.ShapeDtypeStruct((B, N2), jnp.float32),
        grid=grid,
        in_specs=[
            pl.BlockSpec((bm, K), lambda i: (i, 0)),
            pl.BlockSpec((K, N1), lambda i: (0, 0)),
            pl.BlockSpec((1, N1), lambda i: (0, 0)),
            pl.BlockSpec((N1, N2), lambda i: (0, 0)),
            pl.BlockSpec((1, N2), lambda i: (0, 0)),
        ],
        out_specs=pl.BlockSpec((bm, N2), lambda i: (i, 0)),
        compiler_params=pltpu.CompilerParams(dimension_semantics=("parallel",)),
        cost_estimate=pl.CostEstimate(flops=flops, transcendentals=0,
                                      bytes_accessed=bytes_accessed),
    )(x, w1, b1, w2, b2)


# ----------------------------------------------------------------------------
# One-time parameter conversion: PyTorch layouts -> packed kernel layouts.
# ----------------------------------------------------------------------------
def convert_params(tp, channels, num_classes):
    assert num_classes + 1 <= 128
    cw1 = np.asarray(tp["conv1_w"]); cb1 = np.asarray(tp["conv1_b"])
    cw2 = np.asarray(tp["conv2_w"]); cb2 = np.asarray(tp["conv2_b"])
    cw3 = np.asarray(tp["conv3_w"]); cb3 = np.asarray(tp["conv3_b"])
    fcw = np.asarray(tp["fc_w"]);    fcb = np.asarray(tp["fc_b"])
    lw = np.asarray(tp["lin_w"]);    lb = np.asarray(tp["lin_b"])
    vw = np.asarray(tp["val_w"]);    vb = np.asarray(tp["val_b"])

    # conv1: merged space-to-depth(8) weights, (4, 256, 128).
    # row = r*32 + s*4 + cin ; col = p*64 + q*32 + cout ; term k = di*2 + dj.
    w1 = np.zeros((2, 2, 8, 8, 4, 2, 2, 32), np.float32)
    for di in range(2):
        for dj in range(2):
            for p in range(2):
                for q in range(2):
                    for r in range(8):
                        kh = r - 4 * p + 8 * di
                        if not 0 <= kh < 8:
                            continue
                        for s in range(8):
                            kw = s - 4 * q + 8 * dj
                            if not 0 <= kw < 8:
                                continue
                            w1[di, dj, r, s, :channels, p, q, :] = cw1[:, :, kh, kw].T
    w1 = w1.reshape(4, 8 * 8 * 4, 2 * 2 * 32)
    b1 = np.tile(cb1, 4).reshape(1, 128)

    # conv2 as a 2x2 stride-1 conv over the parity-packed conv1 output: (4,128,64).
    w2 = np.zeros((2, 2, 2, 2, 32, 64), np.float32)
    for i in range(2):
        for j in range(2):
            for p in range(2):
                for q in range(2):
                    w2[i, j, p, q] = cw2[:, :, 2 * i + p, 2 * j + q].T
    w2 = w2.reshape(4, 128, 64)
    b2 = cb2.reshape(1, 64)

    # conv3: (kh, kw, cin, cout) -> (9, 64, 64).
    w3 = np.transpose(cw3, (2, 3, 1, 0)).reshape(9, 64, 64)
    b3 = cb3.reshape(1, 64)

    # fc: permute rows from PyTorch's NCHW flatten (c, h, w) to our (h, w, c).
    fc_rows = fcw.T.reshape(64, 4, 4, 512)
    fc_mat = np.transpose(fc_rows, (1, 2, 0, 3)).reshape(1024, 512)
    fc_b = fcb.reshape(1, 512)

    # policy + value heads concatenated, lane-padded to 128.
    head_w = np.concatenate([lw.T, vw.T], axis=1)
    head_w = np.pad(head_w, ((0, 0), (0, 128 - head_w.shape[1])))
    head_b = np.pad(np.concatenate([lb, vb]), (0, 128 - num_classes - 1)).reshape(1, 128)

    bf, f32 = jnp.bfloat16, jnp.float32
    return {
        "w1": jnp.asarray(w1, bf), "b1": jnp.asarray(b1, f32),
        "w2": jnp.asarray(w2, bf), "b2": jnp.asarray(b2, f32),
        "w3": jnp.asarray(w3, bf), "b3": jnp.asarray(b3, f32),
        "fc_w": jnp.asarray(fc_mat, bf), "fc_b": jnp.asarray(fc_b, f32),
        "head_w": jnp.asarray(head_w, bf), "head_b": jnp.asarray(head_b, f32),
    }


def init_params(key, channels=3, num_classes=15):
    assert channels <= 4
    ks = jax.random.split(key, 12)

    def nrm(k, shape, scale=0.05):
        return scale * jax.random.normal(k, shape, dtype=jnp.float32)

    c1, c2, c3, out_dim, flat = 32, 64, 64, 512, 64 * 4 * 4
    torch_params = {
        "conv1_w": nrm(ks[0], (c1, channels, 8, 8)), "conv1_b": nrm(ks[1], (c1,)),
        "conv2_w": nrm(ks[2], (c2, c1, 4, 4)),       "conv2_b": nrm(ks[3], (c2,)),
        "conv3_w": nrm(ks[4], (c3, c2, 3, 3)),       "conv3_b": nrm(ks[5], (c3,)),
        "fc_w": nrm(ks[6], (out_dim, flat)),         "fc_b": nrm(ks[7], (out_dim,)),
        "lin_w": nrm(ks[8], (num_classes, out_dim)), "lin_b": nrm(ks[9], (num_classes,)),
        "val_w": nrm(ks[10], (1, out_dim)),          "val_b": nrm(ks[11], (1,)),
    }
    return convert_params(torch_params, channels, num_classes), torch_params


# ----------------------------------------------------------------------------
# Forward pass (NatureValue.forward).
# ----------------------------------------------------------------------------
def nature_value_forward(params, x_nchw, num_classes=15):
    B, C, H, W = x_nchw.shape
    assert H == 64 and W == 64 and C <= 4

    # Input prep (pure data movement, one pass): cast to bf16 FIRST, pad the
    # channel dim to 4, space-to-depth(8), pad the 8x8 super-grid to 9x9 so
    # every in-kernel window slice has a static in-bounds extent of 8.
    x = x_nchw.astype(jnp.bfloat16)
    if C < 4:
        x = jnp.pad(x, ((0, 0), (0, 4 - C), (0, 0), (0, 0)))
    x = x.reshape(B, 4, 8, 8, 8, 8)              # (B, c, A, r, Cs, s)
    x = jnp.transpose(x, (0, 2, 4, 3, 5, 1))     # (B, A, Cs, r, s, c)
    x = x.reshape(B, 8, 8, 256)                  # channel = r*32 + s*4 + c
    x = jnp.pad(x, ((0, 0), (0, 1), (0, 1), (0, 0)))

    y3 = conv_backbone(x, params)                # (B, 4, 4, 64) bf16, (h, w, c)
    feats = y3.reshape(B, 1024)                  # matches pre-permuted fc rows
    out = fc_heads(feats, params)                # (B, 128) f32
    l = out[:, :num_classes]
    v = out[:, num_classes:num_classes + 1]
    return l, v


# ----------------------------------------------------------------------------
# Pure-JAX f32 reference of the PyTorch module (for the in-script check).
# ----------------------------------------------------------------------------
def reference_forward(tp, x):
    prec = lax.Precision.HIGHEST

    def conv(x, w, b, stride):
        dn = lax.conv_dimension_numbers(x.shape, w.shape, ("NCHW", "OIHW", "NCHW"))
        y = lax.conv_general_dilated(x, w, (stride, stride), "VALID",
                                     dimension_numbers=dn, precision=prec)
        return jnp.maximum(y + b[None, :, None, None], 0.0)

    y = conv(x, tp["conv1_w"], tp["conv1_b"], 4)
    y = conv(y, tp["conv2_w"], tp["conv2_b"], 2)
    y = conv(y, tp["conv3_w"], tp["conv3_b"], 1)
    y = y.reshape(x.shape[0], -1)                      # PyTorch NCHW flatten
    feat = jnp.maximum(jnp.dot(y, tp["fc_w"].T, precision=prec) + tp["fc_b"], 0.0)
    l = jnp.dot(feat, tp["lin_w"].T, precision=prec) + tp["lin_b"]
    v = jnp.dot(feat, tp["val_w"].T, precision=prec) + tp["val_b"]
    return l, v


if __name__ == "__main__":
    key = jax.random.PRNGKey(0)
    k_param, k_input = jax.random.split(key)

    batch, channels, spatial, num_classes = 2, 3, 64, 15
    params, torch_params = init_params(k_param, channels=channels,
                                       num_classes=num_classes)
    x = jax.random.normal(k_input, (batch, channels, spatial, spatial),
                          dtype=jnp.float32)

    fwd = jax.jit(functools.partial(nature_value_forward, num_classes=num_classes))
    l, v = fwd(params, x)
    jax.block_until_ready((l, v))

    assert l.shape == (batch, num_classes), l.shape
    assert v.shape == (batch, 1), v.shape
    assert l.dtype == jnp.float32 and v.dtype == jnp.float32

    # bf16-tolerance correctness check against the f32 PyTorch-semantics reference.
    l_ref, v_ref = jax.jit(reference_forward)(torch_params, x)
    got = jnp.concatenate([l, v], axis=1)
    ref = jnp.concatenate([l_ref, v_ref], axis=1)
    err = float(jnp.max(jnp.abs(got - ref)))
    scale = max(float(jnp.max(jnp.abs(ref))), 1.0)
    assert err <= 5e-2 * scale + 5e-3, ("mismatch vs reference", err, scale)

    print("KERNEL_OK")
</pallas_src>

<mosaic_0001>
module attributes {stable_mosaic.version = 11 : i64} {
  func.func @_conv_backbone_kernel(%arg0: i32, %arg1: memref<2x9x9x256xbf16, #tpu.memory_space<vmem>>, %arg2: memref<4x256x128xbf16, #tpu.memory_space<vmem>>, %arg3: memref<1x128xf32, #tpu.memory_space<vmem>>, %arg4: memref<4x128x64xbf16, #tpu.memory_space<vmem>>, %arg5: memref<1x64xf32, #tpu.memory_space<vmem>>, %arg6: memref<9x64x64xbf16, #tpu.memory_space<vmem>>, %arg7: memref<1x64xf32, #tpu.memory_space<vmem>>, %arg8: memref<2x4x4x64xbf16, #tpu.memory_space<vmem>>, %arg9: memref<2x8x16x128xbf16, #tpu.memory_space<vmem>>, %arg10: memref<2x6x16x64xbf16, #tpu.memory_space<vmem>>) attributes {dimension_semantics = [#tpu.dimension_semantics<parallel>], iteration_bounds = array<i64: 1>, scalar_prefetch = 0 : i64, scratch_operands = 2 : i64, tpu.core_type = #tpu.core_type<tc>, window_params = [{transform_indices = @transform_0, window_bounds = array<i64: 2, 9, 9, 256>}, {pipeline_mode = #tpu.pipeline_mode<synchronous>, transform_indices = @transform_1, window_bounds = array<i64: 4, 256, 128>}, {pipeline_mode = #tpu.pipeline_mode<synchronous>, transform_indices = @transform_2, window_bounds = array<i64: 1, 128>}, {pipeline_mode = #tpu.pipeline_mode<synchronous>, transform_indices = @transform_3, window_bounds = array<i64: 4, 128, 64>}, {pipeline_mode = #tpu.pipeline_mode<synchronous>, transform_indices = @transform_4, window_bounds = array<i64: 1, 64>}, {pipeline_mode = #tpu.pipeline_mode<synchronous>, transform_indices = @transform_5, window_bounds = array<i64: 9, 64, 64>}, {pipeline_mode = #tpu.pipeline_mode<synchronous>, transform_indices = @transform_6, window_bounds = array<i64: 1, 64>}, {transform_indices = @transform_7, window_bounds = array<i64: 2, 4, 4, 64>}]} {
    %cst = arith.constant 0.000000e+00 : f32
    %0 = vector.broadcast %cst : f32 to vector<128x128xf32>
    %c0 = arith.constant 0 : index
    %c0_0 = arith.constant 0 : index
    %c0_1 = arith.constant 0 : index
    %c0_2 = arith.constant 0 : index
    %1 = vector.load %arg1[%c0, %c0_0, %c0_1, %c0_2] : memref<2x9x9x256xbf16, #tpu.memory_space<vmem>>, vector<2x8x8x256xbf16>
    %2 = vector.shape_cast %1 : vector<2x8x8x256xbf16> to vector<128x256xbf16>
    %c0_3 = arith.constant 0 : index
    %c0_4 = arith.constant 0 : index
    %c0_5 = arith.constant 0 : index
    %3 = vector.load %arg2[%c0_3, %c0_4, %c0_5] : memref<4x256x128xbf16, #tpu.memory_space<vmem>>, vector<1x256x128xbf16>
    %4 = vector.shape_cast %3 : vector<1x256x128xbf16> to vector<256x128xbf16>
    %cst_6 = arith.constant dense<0.000000e+00> : vector<128x128xf32>
    %5 = tpu.matmul %2, %4, %cst_6 {dimension_numbers = #tpu.dot_dimension_numbers<[1], [0], [0], [1], [0, 0, 1, 1], [], []>} : vector<128x256xbf16>, vector<256x128xbf16>, vector<128x128xf32> -> vector<128x128xf32>
    %6 = arith.addf %0, %5 : vector<128x128xf32>
    %c0_7 = arith.constant 0 : index
    %c0_8 = arith.constant 0 : index
    %c1 = arith.constant 1 : index
    %c0_9 = arith.constant 0 : index
    %7 = vector.load %arg1[%c0_7, %c0_8, %c1, %c0_9] : memref<2x9x9x256xbf16, #tpu.memory_space<vmem>>, vector<2x8x8x256xbf16>
    %8 = vector.shape_cast %7 : vector<2x8x8x256xbf16> to vector<128x256xbf16>
    %c1_10 = arith.constant 1 : index
    %c0_11 = arith.constant 0 : index
    %c0_12 = arith.constant 0 : index
    %9 = vector.load %arg2[%c1_10, %c0_11, %c0_12] : memref<4x256x128xbf16, #tpu.memory_space<vmem>>, vector<1x256x128xbf16>
    %10 = vector.shape_cast %9 : vector<1x256x128xbf16> to vector<256x128xbf16>
    %cst_13 = arith.constant dense<0.000000e+00> : vector<128x128xf32>
    %11 = tpu.matmul %8, %10, %cst_13 {dimension_numbers = #tpu.dot_dimension_numbers<[1], [0], [0], [1], [0, 0, 1, 1], [], []>} : vector<128x256xbf16>, vector<256x128xbf16>, vector<128x128xf32> -> vector<128x128xf32>
    %12 = arith.addf %6, %11 : vector<128x128xf32>
    %c0_14 = arith.constant 0 : index
    %c1_15 = arith.constant 1 : index
    %c0_16 = arith.constant 0 : index
    %c0_17 = arith.constant 0 : index
    %13 = vector.load %arg1[%c0_14, %c1_15, %c0_16, %c0_17] : memref<2x9x9x256xbf16, #tpu.memory_space<vmem>>, vector<2x8x8x256xbf16>
    %14 = vector.shape_cast %13 : vector<2x8x8x256xbf16> to vector<128x256xbf16>
    %c2 = arith.constant 2 : index
    %c0_18 = arith.constant 0 : index
    %c0_19 = arith.constant 0 : index
    %15 = vector.load %arg2[%c2, %c0_18, %c0_19] : memref<4x256x128xbf16, #tpu.memory_space<vmem>>, vector<1x256x128xbf16>
    %16 = vector.shape_cast %15 : vector<1x256x128xbf16> to vector<256x128xbf16>
    %cst_20 = arith.constant dense<0.000000e+00> : vector<128x128xf32>
    %17 = tpu.matmul %14, %16, %cst_20 {dimension_numbers = #tpu.dot_dimension_numbers<[1], [0], [0], [1], [0, 0, 1, 1], [], []>} : vector<128x256xbf16>, vector<256x128xbf16>, vector<128x128xf32> -> vector<128x128xf32>
    %18 = arith.addf %12, %17 : vector<128x128xf32>
    %c0_21 = arith.constant 0 : index
    %c1_22 = arith.constant 1 : index
    %c1_23 = arith.constant 1 : index
    %c0_24 = arith.constant 0 : index
    %19 = vector.load %arg1[%c0_21, %c1_22, %c1_23, %c0_24] : memref<2x9x9x256xbf16, #tpu.memory_space<vmem>>, vector<2x8x8x256xbf16>
    %20 = vector.shape_cast %19 : vector<2x8x8x256xbf16> to vector<128x256xbf16>
    %c3 = arith.constant 3 : index
    %c0_25 = arith.constant 0 : index
    %c0_26 = arith.constant 0 : index
    %21 = vector.load %arg2[%c3, %c0_25, %c0_26] : memref<4x256x128xbf16, #tpu.memory_space<vmem>>, vector<1x256x128xbf16>
    %22 = vector.shape_cast %21 : vector<1x256x128xbf16> to vector<256x128xbf16>
    %cst_27 = arith.constant dense<0.000000e+00> : vector<128x128xf32>
    %23 = tpu.matmul %20, %22, %cst_27 {dimension_numbers = #tpu.dot_dimension_numbers<[1], [0], [0], [1], [0, 0, 1, 1], [], []>} : vector<128x256xbf16>, vector<256x128xbf16>, vector<128x128xf32> -> vector<128x128xf32>
    %24 = arith.addf %18, %23 : vector<128x128xf32>
    %c0_28 = arith.constant 0 : index
    %c0_29 = arith.constant 0 : index
    %25 = vector.load %arg3[%c0_28, %c0_29] : memref<1x128xf32, #tpu.memory_space<vmem>>, vector<1x128xf32>
    %26 = vector.broadcast %25 : vector<1x128xf32> to vector<128x128xf32>
    %27 = arith.addf %24, %26 : vector<128x128xf32>
    %cst_30 = arith.constant 0.000000e+00 : f32
    %28 = vector.broadcast %cst_30 : f32 to vector<128x128xf32>
    %29 = arith.maximumf %27, %28 : vector<128x128xf32>
    %30 = arith.truncf %29 : vector<128x128xf32> to vector<128x128xbf16>
    %31 = vector.shape_cast %30 : vector<128x128xbf16> to vector<2x8x8x128xbf16>
    %c0_31 = arith.constant 0 : index
    %c0_32 = arith.constant 0 : index
    %c0_33 = arith.constant 0 : index
    %c0_34 = arith.constant 0 : index
    %32 = vector.load %arg9[%c0_31, %c0_32, %c0_33, %c0_34] : memref<2x8x16x128xbf16, #tpu.memory_space<vmem>>, vector<2x8x8x128xbf16>
    tpu.vector_store %arg9[%c0_31, %c0_32, %c0_33, %c0_34], %31 {strides = array<i32>} : memref<2x8x16x128xbf16, #tpu.memory_space<vmem>>, vector<2x8x8x128xbf16>,
    %cst_35 = arith.constant 0.000000e+00 : f32
    %33 = vector.broadcast %cst_35 : f32 to vector<96x64xf32>
    %c0_36 = arith.constant 0 : index
    %c0_37 = arith.constant 0 : index
    %c0_38 = arith.constant 0 : index
    %c0_39 = arith.constant 0 : index
    %34 = vector.load %arg9[%c0_36, %c0_37, %c0_38, %c0_39] : memref<2x8x16x128xbf16, #tpu.memory_space<vmem>>, vector<2x6x8x128xbf16>
    %35 = vector.shape_cast %34 : vector<2x6x8x128xbf16> to vector<96x128xbf16>
    %c0_40 = arith.constant 0 : index
    %c0_41 = arith.constant 0 : index
    %c0_42 = arith.constant 0 : index
    %36 = vector.load %arg4[%c0_40, %c0_41, %c0_42] : memref<4x128x64xbf16, #tpu.memory_space<vmem>>, vector<1x128x64xbf16>
    %37 = vector.shape_cast %36 : vector<1x128x64xbf16> to vector<128x64xbf16>
    %cst_43 = arith.constant dense<0.000000e+00> : vector<96x64xf32>
    %38 = tpu.matmul %35, %37, %cst_43 {dimension_numbers = #tpu.dot_dimension_numbers<[1], [0], [0], [1], [0, 0, 1, 1], [], []>} : vector<96x128xbf16>, vector<128x64xbf16>, vector<96x64xf32> -> vector<96x64xf32>
    %39 = arith.addf %33, %38 : vector<96x64xf32>
    %c0_44 = arith.constant 0 : index
    %c0_45 = arith.constant 0 : index
    %c1_46 = arith.constant 1 : index
    %c0_47 = arith.constant 0 : index
    %40 = vector.load %arg9[%c0_44, %c0_45, %c1_46, %c0_47] : memref<2x8x16x128xbf16, #tpu.memory_space<vmem>>, vector<2x6x8x128xbf16>
    %41 = vector.shape_cast %40 : vector<2x6x8x128xbf16> to vector<96x128xbf16>
    %c1_48 = arith.constant 1 : index
    %c0_49 = arith.constant 0 : index
    %c0_50 = arith.constant 0 : index
    %42 = vector.load %arg4[%c1_48, %c0_49, %c0_50] : memref<4x128x64xbf16, #tpu.memory_space<vmem>>, vector<1x128x64xbf16>
    %43 = vector.shape_cast %42 : vector<1x128x64xbf16> to vector<128x64xbf16>
    %cst_51 = arith.constant dense<0.000000e+00> : vector<96x64xf32>
    %44 = tpu.matmul %41, %43, %cst_51 {dimension_numbers = #tpu.dot_dimension_numbers<[1], [0], [0], [1], [0, 0, 1, 1], [], []>} : vector<96x128xbf16>, vector<128x64xbf16>, vector<96x64xf32> -> vector<96x64xf32>
    %45 = arith.addf %39, %44 : vector<96x64xf32>
    %c0_52 = arith.constant 0 : index
    %c1_53 = arith.constant 1 : index
    %c0_54 = arith.constant 0 : index
    %c0_55 = arith.constant 0 : index
    %46 = vector.load %arg9[%c0_52, %c1_53, %c0_54, %c0_55] : memref<2x8x16x128xbf16, #tpu.memory_space<vmem>>, vector<2x6x8x128xbf16>
    %47 = vector.shape_cast %46 : vector<2x6x8x128xbf16> to vector<96x128xbf16>
    %c2_56 = arith.constant 2 : index
    %c0_57 = arith.constant 0 : index
    %c0_58 = arith.constant 0 : index
    %48 = vector.load %arg4[%c2_56, %c0_57, %c0_58] : memref<4x128x64xbf16, #tpu.memory_space<vmem>>, vector<1x128x64xbf16>
    %49 = vector.shape_cast %48 : vector<1x128x64xbf16> to vector<128x64xbf16>
    %cst_59 = arith.constant dense<0.000000e+00> : vector<96x64xf32>
    %50 = tpu.matmul %47, %49, %cst_59 {dimension_numbers = #tpu.dot_dimension_numbers<[1], [0], [0], [1], [0, 0, 1, 1], [], []>} : vector<96x128xbf16>, vector<128x64xbf16>, vector<96x64xf32> -> vector<96x64xf32>
    %51 = arith.addf %45, %50 : vector<96x64xf32>
    %c0_60 = arith.constant 0 : index
    %c1_61 = arith.constant 1 : index
    %c1_62 = arith.constant 1 : index
    %c0_63 = arith.constant 0 : index
    %52 = vector.load %arg9[%c0_60, %c1_61, %c1_62, %c0_63] : memref<2x8x16x128xbf16, #tpu.memory_space<vmem>>, vector<2x6x8x128xbf16>
    %53 = vector.shape_cast %52 : vector<2x6x8x128xbf16> to vector<96x128xbf16>
    %c3_64 = arith.constant 3 : index
    %c0_65 = arith.constant 0 : index
    %c0_66 = arith.constant 0 : index
    %54 = vector.load %arg4[%c3_64, %c0_65, %c0_66] : memref<4x128x64xbf16, #tpu.memory_space<vmem>>, vector<1x128x64xbf16>
    %55 = vector.shape_cast %54 : vector<1x128x64xbf16> to vector<128x64xbf16>
    %cst_67 = arith.constant dense<0.000000e+00> : vector<96x64xf32>
    %56 = tpu.matmul %53, %55, %cst_67 {dimension_numbers = #tpu.dot_dimension_numbers<[1], [0], [0], [1], [0, 0, 1, 1], [], []>} : vector<96x128xbf16>, vector<128x64xbf16>, vector<96x64xf32> -> vector<96x64xf32>
    %57 = arith.addf %51, %56 : vector<96x64xf32>
    %c0_68 = arith.constant 0 : index
    %c0_69 = arith.constant 0 : index
    %58 = vector.load %arg5[%c0_68, %c0_69] : memref<1x64xf32, #tpu.memory_space<vmem>>, vector<1x64xf32>
    %59 = vector.broadcast %58 : vector<1x64xf32> to vector<96x64xf32>
    %60 = arith.addf %57, %59 : vector<96x64xf32>
    %cst_70 = arith.constant 0.000000e+00 : f32
    %61 = vector.broadcast %cst_70 : f32 to vector<96x64xf32>
    %62 = arith.maximumf %60, %61 : vector<96x64xf32>
    %63 = arith.truncf %62 : vector<96x64xf32> to vector<96x64xbf16>
    %64 = vector.shape_cast %63 : vector<96x64xbf16> to vector<2x6x8x64xbf16>
    %c0_71 = arith.constant 0 : index
    %c0_72 = arith.constant 0 : index
    %c0_73 = arith.constant 0 : index
    %c0_74 = arith.constant 0 : index
    %65 = vector.load %arg10[%c0_71, %c0_72, %c0_73, %c0_74] : memref<2x6x16x64xbf16, #tpu.memory_space<vmem>>, vector<2x6x8x64xbf16>
    tpu.vector_store %arg10[%c0_71, %c0_72, %c0_73, %c0_74], %64 {strides = array<i32>} : memref<2x6x16x64xbf16, #tpu.memory_space<vmem>>, vector<2x6x8x64xbf16>,
    %cst_75 = arith.constant 0.000000e+00 : f32
    %66 = vector.broadcast %cst_75 : f32 to vector<64x64xf32>
    %c0_76 = arith.constant 0 : index
    %c0_77 = arith.constant 0 : index
    %c0_78 = arith.constant 0 : index
    %c0_79 = arith.constant 0 : index
    %67 = vector.load %arg10[%c0_76, %c0_77, %c0_78, %c0_79] : memref<2x6x16x64xbf16, #tpu.memory_space<vmem>>, vector<2x4x8x64xbf16>
    %68 = vector.shape_cast %67 : vector<2x4x8x64xbf16> to vector<64x64xbf16>
    %c0_80 = arith.constant 0 : index
    %c0_81 = arith.constant 0 : index
    %c0_82 = arith.constant 0 : index
    %69 = vector.load %arg6[%c0_80, %c0_81, %c0_82] : memref<9x64x64xbf16, #tpu.memory_space<vmem>>, vector<1x64x64xbf16>
    %70 = vector.shape_cast %69 : vector<1x64x64xbf16> to vector<64x64xbf16>
    %cst_83 = arith.constant dense<0.000000e+00> : vector<64x64xf32>
    %71 = tpu.matmul %68, %70, %cst_83 {dimension_numbers = #tpu.dot_dimension_numbers<[1], [0], [0], [1], [0, 0, 1, 1], [], []>} : vector<64x64xbf16>, vector<64x64xbf16>, vector<64x64xf32> -> vector<64x64xf32>
    %72 = arith.addf %66, %71 : vector<64x64xf32>
    %c0_84 = arith.constant 0 : index
    %c0_85 = arith.constant 0 : index
    %c1_86 = arith.constant 1 : index
    %c0_87 = arith.constant 0 : index
    %73 = vector.load %arg10[%c0_84, %c0_85, %c1_86, %c0_87] : memref<2x6x16x64xbf16, #tpu.memory_space<vmem>>, vector<2x4x8x64xbf16>
    %74 = vector.shape_cast %73 : vector<2x4x8x64xbf16> to vector<64x64xbf16>
    %c1_88 = arith.constant 1 : index
    %c0_89 = arith.constant 0 : index
    %c0_90 = arith.constant 0 : index
    %75 = vector.load %arg6[%c1_88, %c0_89, %c0_90] : memref<9x64x64xbf16, #tpu.memory_space<vmem>>, vector<1x64x64xbf16>
    %76 = vector.shape_cast %75 : vector<1x64x64xbf16> to vector<64x64xbf16>
    %cst_91 = arith.constant dense<0.000000e+00> : vector<64x64xf32>
    %77 = tpu.matmul %74, %76, %cst_91 {dimension_numbers = #tpu.dot_dimension_numbers<[1], [0], [0], [1], [0, 0, 1, 1], [], []>} : vector<64x64xbf16>, vector<64x64xbf16>, vector<64x64xf32> -> vector<64x64xf32>
    %78 = arith.addf %72, %77 : vector<64x64xf32>
    %c0_92 = arith.constant 0 : index
    %c0_93 = arith.constant 0 : index
    %c2_94 = arith.constant 2 : index
    %c0_95 = arith.constant 0 : index
    %79 = vector.load %arg10[%c0_92, %c0_93, %c2_94, %c0_95] : memref<2x6x16x64xbf16, #tpu.memory_space<vmem>>, vector<2x4x8x64xbf16>
    %80 = vector.shape_cast %79 : vector<2x4x8x64xbf16> to vector<64x64xbf16>
    %c2_96 = arith.constant 2 : index
    %c0_97 = arith.constant 0 : index
    %c0_98 = arith.constant 0 : index
    %81 = vector.load %arg6[%c2_96, %c0_97, %c0_98] : memref<9x64x64xbf16, #tpu.memory_space<vmem>>, vector<1x64x64xbf16>
    %82 = vector.shape_cast %81 : vector<1x64x64xbf16> to vector<64x64xbf16>
    %cst_99 = arith.constant dense<0.000000e+00> : vector<64x64xf32>
    %83 = tpu.matmul %80, %82, %cst_99 {dimension_numbers = #tpu.dot_dimension_numbers<[1], [0], [0], [1], [0, 0, 1, 1], [], []>} : vector<64x64xbf16>, vector<64x64xbf16>, vector<64x64xf32> -> vector<64x64xf32>
    %84 = arith.addf %78, %83 : vector<64x64xf32>
    %c0_100 = arith.constant 0 : index
    %c1_101 = arith.constant 1 : index
    %c0_102 = arith.constant 0 : index
    %c0_103 = arith.constant 0 : index
    %85 = vector.load %arg10[%c0_100, %c1_101, %c0_102, %c0_103] : memref<2x6x16x64xbf16, #tpu.memory_space<vmem>>, vector<2x4x8x64xbf16>
    %86 = vector.shape_cast %85 : vector<2x4x8x64xbf16> to vector<64x64xbf16>
    %c3_104 = arith.constant 3 : index
    %c0_105 = arith.constant 0 : index
    %c0_106 = arith.constant 0 : index
    %87 = vector.load %arg6[%c3_104, %c0_105, %c0_106] : memref<9x64x64xbf16, #tpu.memory_space<vmem>>, vector<1x64x64xbf16>
    %88 = vector.shape_cast %87 : vector<1x64x64xbf16> to vector<64x64xbf16>
    %cst_107 = arith.constant dense<0.000000e+00> : vector<64x64xf32>
    %89 = tpu.matmul %86, %88, %cst_107 {dimension_numbers = #tpu.dot_dimension_numbers<[1], [0], [0], [1], [0, 0, 1, 1], [], []>} : vector<64x64xbf16>, vector<64x64xbf16>, vector<64x64xf32> -> vector<64x64xf32>
    %90 = arith.addf %84, %89 : vector<64x64xf32>
    %c0_108 = arith.constant 0 : index
    %c1_109 = arith.constant 1 : index
    %c1_110 = arith.constant 1 : index
    %c0_111 = arith.constant 0 : index
    %91 = vector.load %arg10[%c0_108, %c1_109, %c1_110, %c0_111] : memref<2x6x16x64xbf16, #tpu.memory_space<vmem>>, vector<2x4x8x64xbf16>
    %92 = vector.shape_cast %91 : vector<2x4x8x64xbf16> to vector<64x64xbf16>
    %c4 = arith.constant 4 : index
    %c0_112 = arith.constant 0 : index
    %c0_113 = arith.constant 0 : index
    %93 = vector.load %arg6[%c4, %c0_112, %c0_113] : memref<9x64x64xbf16, #tpu.memory_space<vmem>>, vector<1x64x64xbf16>
    %94 = vector.shape_cast %93 : vector<1x64x64xbf16> to vector<64x64xbf16>
    %cst_114 = arith.constant dense<0.000000e+00> : vector<64x64xf32>
    %95 = tpu.matmul %92, %94, %cst_114 {dimension_numbers = #tpu.dot_dimension_numbers<[1], [0], [0], [1], [0, 0, 1, 1], [], []>} : vector<64x64xbf16>, vector<64x64xbf16>, vector<64x64xf32> -> vector<64x64xf32>
    %96 = arith.addf %90, %95 : vector<64x64xf32>
    %c0_115 = arith.constant 0 : index
    %c1_116 = arith.constant 1 : index
    %c2_117 = arith.constant 2 : index
    %c0_118 = arith.constant 0 : index
    %97 = vector.load %arg10[%c0_115, %c1_116, %c2_117, %c0_118] : memref<2x6x16x64xbf16, #tpu.memory_space<vmem>>, vector<2x4x8x64xbf16>
    %98 = vector.shape_cast %97 : vector<2x4x8x64xbf16> to vector<64x64xbf16>
    %c5 = arith.constant 5 : index
    %c0_119 = arith.constant 0 : index
    %c0_120 = arith.constant 0 : index
    %99 = vector.load %arg6[%c5, %c0_119, %c0_120] : memref<9x64x64xbf16, #tpu.memory_space<vmem>>, vector<1x64x64xbf16>
    %100 = vector.shape_cast %99 : vector<1x64x64xbf16> to vector<64x64xbf16>
    %cst_121 = arith.constant dense<0.000000e+00> : vector<64x64xf32>
    %101 = tpu.matmul %98, %100, %cst_121 {dimension_numbers = #tpu.dot_dimension_numbers<[1], [0], [0], [1], [0, 0, 1, 1], [], []>} : vector<64x64xbf16>, vector<64x64xbf16>, vector<64x64xf32> -> vector<64x64xf32>
    %102 = arith.addf %96, %101 : vector<64x64xf32>
    %c0_122 = arith.constant 0 : index
    %c2_123 = arith.constant 2 : index
    %c0_124 = arith.constant 0 : index
    %c0_125 = arith.constant 0 : index
    %103 = vector.load %arg10[%c0_122, %c2_123, %c0_124, %c0_125] : memref<2x6x16x64xbf16, #tpu.memory_space<vmem>>, vector<2x4x8x64xbf16>
    %104 = vector.shape_cast %103 : vector<2x4x8x64xbf16> to vector<64x64xbf16>
    %c6 = arith.constant 6 : index
    %c0_126 = arith.constant 0 : index
    %c0_127 = arith.constant 0 : index
    %105 = vector.load %arg6[%c6, %c0_126, %c0_127] : memref<9x64x64xbf16, #tpu.memory_space<vmem>>, vector<1x64x64xbf16>
    %106 = vector.shape_cast %105 : vector<1x64x64xbf16> to vector<64x64xbf16>
    %cst_128 = arith.constant dense<0.000000e+00> : vector<64x64xf32>
    %107 = tpu.matmul %104, %106, %cst_128 {dimension_numbers = #tpu.dot_dimension_numbers<[1], [0], [0], [1], [0, 0, 1, 1], [], []>} : vector<64x64xbf16>, vector<64x64xbf16>, vector<64x64xf32> -> vector<64x64xf32>
    %108 = arith.addf %102, %107 : vector<64x64xf32>
    %c0_129 = arith.constant 0 : index
    %c2_130 = arith.constant 2 : index
    %c1_131 = arith.constant 1 : index
    %c0_132 = arith.constant 0 : index
    %109 = vector.load %arg10[%c0_129, %c2_130, %c1_131, %c0_132] : memref<2x6x16x64xbf16, #tpu.memory_space<vmem>>, vector<2x4x8x64xbf16>
    %110 = vector.shape_cast %109 : vector<2x4x8x64xbf16> to vector<64x64xbf16>
    %c7 = arith.constant 7 : index
    %c0_133 = arith.constant 0 : index
    %c0_134 = arith.constant 0 : index
    %111 = vector.load %arg6[%c7, %c0_133, %c0_134] : memref<9x64x64xbf16, #tpu.memory_space<vmem>>, vector<1x64x64xbf16>
    %112 = vector.shape_cast %111 : vector<1x64x64xbf16> to vector<64x64xbf16>
    %cst_135 = arith.constant dense<0.000000e+00> : vector<64x64xf32>
    %113 = tpu.matmul %110, %112, %cst_135 {dimension_numbers = #tpu.dot_dimension_numbers<[1], [0], [0], [1], [0, 0, 1, 1], [], []>} : vector<64x64xbf16>, vector<64x64xbf16>, vector<64x64xf32> -> vector<64x64xf32>
    %114 = arith.addf %108, %113 : vector<64x64xf32>
    %c0_136 = arith.constant 0 : index
    %c2_137 = arith.constant 2 : index
    %c2_138 = arith.constant 2 : index
    %c0_139 = arith.constant 0 : index
    %115 = vector.load %arg10[%c0_136, %c2_137, %c2_138, %c0_139] : memref<2x6x16x64xbf16, #tpu.memory_space<vmem>>, vector<2x4x8x64xbf16>
    %116 = vector.shape_cast %115 : vector<2x4x8x64xbf16> to vector<64x64xbf16>
    %c8 = arith.constant 8 : index
    %c0_140 = arith.constant 0 : index
    %c0_141 = arith.constant 0 : index
    %117 = vector.load %arg6[%c8, %c0_140, %c0_141] : memref<9x64x64xbf16, #tpu.memory_space<vmem>>, vector<1x64x64xbf16>
    %118 = vector.shape_cast %117 : vector<1x64x64xbf16> to vector<64x64xbf16>
    %cst_142 = arith.constant dense<0.000000e+00> : vector<64x64xf32>
    %119 = tpu.matmul %116, %118, %cst_142 {dimension_numbers = #tpu.dot_dimension_numbers<[1], [0], [0], [1], [0, 0, 1, 1], [], []>} : vector<64x64xbf16>, vector<64x64xbf16>, vector<64x64xf32> -> vector<64x64xf32>
    %120 = arith.addf %114, %119 : vector<64x64xf32>
    %c0_143 = arith.constant 0 : index
    %c0_144 = arith.constant 0 : index
    %121 = vector.load %arg7[%c0_143, %c0_144] : memref<1x64xf32, #tpu.memory_space<vmem>>, vector<1x64xf32>
    %122 = vector.broadcast %121 : vector<1x64xf32> to vector<64x64xf32>
    %123 = arith.addf %120, %122 : vector<64x64xf32>
    %cst_145 = arith.constant 0.000000e+00 : f32
    %124 = vector.broadcast %cst_145 : f32 to vector<64x64xf32>
    %125 = arith.maximumf %123, %124 : vector<64x64xf32>
    %126 = vector.shape_cast %125 : vector<64x64xf32> to vector<2x4x8x64xf32>
    %127 = vector.extract_strided_slice %126 {offsets = [0, 0, 0, 0], sizes = [2, 4, 4, 64], strides = [1, 1, 1, 1]} : vector<2x4x8x64xf32> to vector<2x4x4x64xf32>
    %128 = arith.truncf %127 : vector<2x4x4x64xf32> to vector<2x4x4x64xbf16>
    %c0_146 = arith.constant 0 : index
    %c0_147 = arith.constant 0 : index
    %c0_148 = arith.constant 0 : index
    %c0_149 = arith.constant 0 : index
    %129 = vector.load %arg8[%c0_146, %c0_147, %c0_148, %c0_149] : memref<2x4x4x64xbf16, #tpu.memory_space<vmem>>, vector<2x4x4x64xbf16>
    tpu.vector_store %arg8[%c0_146, %c0_147, %c0_148, %c0_149], %128 {strides = array<i32>} : memref<2x4x4x64xbf16, #tpu.memory_space<vmem>>, vector<2x4x4x64xbf16>,
    return
  }
  func.func @transform_0(%arg0: i32) -> (i32, i32, i32, i32) {
    %c0_i32 = arith.constant 0 : i32
    %c0_i32_0 = arith.constant 0 : i32
    %c0_i32_1 = arith.constant 0 : i32
    %c0_i32_2 = arith.constant 0 : i32
    return %arg0, %c0_i32, %c0_i32_0, %c0_i32_1 : i32, i32, i32, i32
  }
  func.func @transform_1(%arg0: i32) -> (i32, i32, i32) {
    %c0_i32 = arith.constant 0 : i32
    %c0_i32_0 = arith.constant 0 : i32
    %c0_i32_1 = arith.constant 0 : i32
    %c0_i32_2 = arith.constant 0 : i32
    return %c0_i32, %c0_i32_0, %c0_i32_1 : i32, i32, i32
  }
  func.func @transform_2(%arg0: i32) -> (i32, i32) {
    %c0_i32 = arith.constant 0 : i32
    %c0_i32_0 = arith.constant 0 : i32
    %c0_i32_1 = arith.constant 0 : i32
    return %c0_i32, %c0_i32_0 : i32, i32
  }
  func.func @transform_3(%arg0: i32) -> (i32, i32, i32) {
    %c0_i32 = arith.constant 0 : i32
    %c0_i32_0 = arith.constant 0 : i32
    %c0_i32_1 = arith.constant 0 : i32
    %c0_i32_2 = arith.constant 0 : i32
    return %c0_i32, %c0_i32_0, %c0_i32_1 : i32, i32, i32
  }
  func.func @transform_4(%arg0: i32) -> (i32, i32) {
    %c0_i32 = arith.constant 0 : i32
    %c0_i32_0 = arith.constant 0 : i32
    %c0_i32_1 = arith.constant 0 : i32
    return %c0_i32, %c0_i32_0 : i32, i32
  }
  func.func @transform_5(%arg0: i32) -> (i32, i32, i32) {
    %c0_i32 = arith.constant 0 : i32
    %c0_i32_0 = arith.constant 0 : i32
    %c0_i32_1 = arith.constant 0 : i32
    %c0_i32_2 = arith.constant 0 : i32
    return %c0_i32, %c0_i32_0, %c0_i32_1 : i32, i32, i32
  }
  func.func @transform_6(%arg0: i32) -> (i32, i32) {
    %c0_i32 = arith.constant 0 : i32
    %c0_i32_0 = arith.constant 0 : i32
    %c0_i32_1 = arith.constant 0 : i32
    return %c0_i32, %c0_i32_0 : i32, i32
  }
  func.func @transform_7(%arg0: i32) -> (i32, i32, i32, i32) {
    %c0_i32 = arith.constant 0 : i32
    %c0_i32_0 = arith.constant 0 : i32
    %c0_i32_1 = arith.constant 0 : i32
    %c0_i32_2 = arith.constant 0 : i32
    return %arg0, %c0_i32, %c0_i32_0, %c0_i32_1 : i32, i32, i32, i32
  }
}

module attributes {stable_mosaic.version = 11 : i64} {
  func.func @_fc_heads_kernel(%arg0: i32, %arg1: memref<2x1024xbf16, #tpu.memory_space<vmem>>, %arg2: memref<1024x512xbf16, #tpu.memory_space<vmem>>, %arg3: memref<1x512xf32, #tpu.memory_space<vmem>>, %arg4: memref<512x128xbf16, #tpu.memory_space<vmem>>, %arg5: memref<1x128xf32, #tpu.memory_space<vmem>>, %arg6: memref<2x128xf32, #tpu.memory_space<vmem>>) attributes {dimension_semantics = [#tpu.dimension_semantics<parallel>], iteration_bounds = array<i64: 1>, scalar_prefetch = 0 : i64, scratch_operands = 0 : i64, tpu.core_type = #tpu.core_type<tc>, window_params = [{transform_indices = @transform_0, window_bounds = array<i64: 2, 1024>}, {pipeline_mode = #tpu.pipeline_mode<synchronous>, transform_indices = @transform_1, window_bounds = array<i64: 1024, 512>}, {pipeline_mode = #tpu.pipeline_mode<synchronous>, transform_indices = @transform_2, window_bounds = array<i64: 1, 512>}, {pipeline_mode = #tpu.pipeline_mode<synchronous>, transform_indices = @transform_3, window_bounds = array<i64: 512, 128>}, {pipeline_mode = #tpu.pipeline_mode<synchronous>, transform_indices = @transform_4, window_bounds = array<i64: 1, 128>}, {transform_indices = @transform_5, window_bounds = array<i64: 2, 128>}]} {
    %c0 = arith.constant 0 : index
    %c0_0 = arith.constant 0 : index
    %0 = vector.load %arg1[%c0, %c0_0] : memref<2x1024xbf16, #tpu.memory_space<vmem>>, vector<2x1024xbf16>
    %c0_1 = arith.constant 0 : index
    %c0_2 = arith.constant 0 : index
    %1 = vector.load %arg2[%c0_1, %c0_2] : memref<1024x512xbf16, #tpu.memory_space<vmem>>, vector<1024x512xbf16>
    %cst = arith.constant dense<0.000000e+00> : vector<2x512xf32>
    %2 = tpu.matmul %0, %1, %cst {dimension_numbers = #tpu.dot_dimension_numbers<[1], [0], [0], [1], [0, 0, 1, 1], [], []>} : vector<2x1024xbf16>, vector<1024x512xbf16>, vector<2x512xf32> -> vector<2x512xf32>
    %c0_3 = arith.constant 0 : index
    %c0_4 = arith.constant 0 : index
    %3 = vector.load %arg3[%c0_3, %c0_4] : memref<1x512xf32, #tpu.memory_space<vmem>>, vector<1x512xf32>
    %4 = vector.broadcast %3 : vector<1x512xf32> to vector<2x512xf32>
    %5 = arith.addf %2, %4 : vector<2x512xf32>
    %cst_5 = arith.constant 0.000000e+00 : f32
    %6 = vector.broadcast %cst_5 : f32 to vector<2x512xf32>
    %7 = arith.maximumf %5, %6 : vector<2x512xf32>
    %8 = arith.truncf %7 : vector<2x512xf32> to vector<2x512xbf16>
    %c0_6 = arith.constant 0 : index
    %c0_7 = arith.constant 0 : index
    %9 = vector.load %arg4[%c0_6, %c0_7] : memref<512x128xbf16, #tpu.memory_space<vmem>>, vector<512x128xbf16>
    %cst_8 = arith.constant dense<0.000000e+00> : vector<2x128xf32>
    %10 = tpu.matmul %8, %9, %cst_8 {dimension_numbers = #tpu.dot_dimension_numbers<[1], [0], [0], [1], [0, 0, 1, 1], [], []>} : vector<2x512xbf16>, vector<512x128xbf16>, vector<2x128xf32> -> vector<2x128xf32>
    %c0_9 = arith.constant 0 : index
    %c0_10 = arith.constant 0 : index
    %11 = vector.load %arg5[%c0_9, %c0_10] : memref<1x128xf32, #tpu.memory_space<vmem>>, vector<1x128xf32>
    %12 = vector.broadcast %11 : vector<1x128xf32> to vector<2x128xf32>
    %13 = arith.addf %10, %12 : vector<2x128xf32>
    %c0_11 = arith.constant 0 : index
    %c0_12 = arith.constant 0 : index
    %14 = vector.load %arg6[%c0_11, %c0_12] : memref<2x128xf32, #tpu.memory_space<vmem>>, vector<2x128xf32>
    tpu.vector_store %arg6[%c0_11, %c0_12], %13 {strides = array<i32>} : memref<2x128xf32, #tpu.memory_space<vmem>>, vector<2x128xf32>,
    return
  }
  func.func @transform_0(%arg0: i32) -> (i32, i32) {
    %c0_i32 = arith.constant 0 : i32
    %c0_i32_0 = arith.constant 0 : i32
    return %arg0, %c0_i32 : i32, i32
  }
  func.func @transform_1(%arg0: i32) -> (i32, i32) {
    %c0_i32 = arith.constant 0 : i32
    %c0_i32_0 = arith.constant 0 : i32
    %c0_i32_1 = arith.constant 0 : i32
    return %c0_i32, %c0_i32_0 : i32, i32
  }
  func.func @transform_2(%arg0: i32) -> (i32, i32) {
    %c0_i32 = arith.constant 0 : i32
    %c0_i32_0 = arith.constant 0 : i32
    %c0_i32_1 = arith.constant 0 : i32
    return %c0_i32, %c0_i32_0 : i32, i32
  }
  func.func @transform_3(%arg0: i32) -> (i32, i32) {
    %c0_i32 = arith.constant 0 : i32
    %c0_i32_0 = arith.constant 0 : i32
    %c0_i32_1 = arith.constant 0 : i32
    return %c0_i32, %c0_i32_0 : i32, i32
  }
  func.func @transform_4(%arg0: i32) -> (i32, i32) {
    %c0_i32 = arith.constant 0 : i32
    %c0_i32_0 = arith.constant 0 : i32
    %c0_i32_1 = arith.constant 0 : i32
    return %c0_i32, %c0_i32_0 : i32, i32
  }
  func.func @transform_5(%arg0: i32) -> (i32, i32) {
    %c0_i32 = arith.constant 0 : i32
    %c0_i32_0 = arith.constant 0 : i32
    return %arg0, %c0_i32 : i32, i32
  }
}

</mosaic_0001>

<llo_original>
// kernel: nature_value_forward.3
$region0: #{nature_value_forward.3}
  #allocation0 [shape = 'u32[]', space=smem, size = 0x4, offset = 0x4, fixed_abs, tag = 'smem constant byte address 0x4 - core index']
  #allocation1 [shape = 'u32[144,128]{1,0:T(1,128)}', space=vmem, size = 0x12000, scoped, tag = 'internal scratch']
  %s0 = inlined_call_operand.vmem [shape: bf16[2,1024], index: 0, kind: input, shape index: {}]
  %s1 = inlined_call_operand.vmem [shape: bf16[1024,512], index: 1, kind: input, shape index: {}]
  %s2 = inlined_call_operand.vmem [shape: f32[1,512], index: 2, kind: input, shape index: {}]
  %s3 = inlined_call_operand.vmem [shape: bf16[512,128], index: 3, kind: input, shape index: {}]
  %s4 = inlined_call_operand.vmem [shape: f32[1,128], index: 4, kind: input, shape index: {}]
  %s5 = inlined_call_operand.vmem [shape: f32[2,128], index: 5, kind: output, shape index: {}]
  %s6 = sld [smem:[#allocation0]]
  $region30: #{nature_value_forward.3} parent=0
    _
  %s8 = ssub.s32 1, %s6
  %s9 = scalar_select 0, %s8, %s6
  // Predicated region
  $region2: #{nature_value_forward.3} parent=0 // pred_check
    _
  $region3: #{nature_value_forward.3} parent=0 // pred_check_branch
    %11 = sbr.rel (0) target = $region5
  $region4: #{nature_value_forward.3} parent=0 // pred_region
    _
  $region5: #{nature_value_forward.3} parent=0 // pred_fallthru
    _
  // Predicated region
  $region6: #{nature_value_forward.3} parent=0 // pred_check
    _
  $region7: #{nature_value_forward.3} parent=0 // pred_check_branch
    %13 = sbr.rel (0) target = $region9
  $region8: #{nature_value_forward.3} parent=0 // pred_region
    _
  $region9: #{nature_value_forward.3} parent=0 // pred_fallthru
    _
  // Predicated region
  $region10: #{nature_value_forward.3} parent=0 // pred_check
    _
  $region11: #{nature_value_forward.3} parent=0 // pred_check_branch
    %15 = sbr.rel (0) target = $region13
  $region12: #{nature_value_forward.3} parent=0 // pred_region
    _
  $region13: #{nature_value_forward.3} parent=0 // pred_fallthru
    _
  // Predicated region
  $region14: #{nature_value_forward.3} parent=0 // pred_check
    _
  $region15: #{nature_value_forward.3} parent=0 // pred_check_branch
    %17 = sbr.rel (0) target = $region17
  $region16: #{nature_value_forward.3} parent=0 // pred_region
    _
  $region17: #{nature_value_forward.3} parent=0 // pred_fallthru
    _
  // Predicated region
  $region18: #{nature_value_forward.3} parent=0 // pred_check
    _
  $region19: #{nature_value_forward.3} parent=0 // pred_check_branch
    %19 = sbr.rel (0) target = $region21
  $region20: #{nature_value_forward.3} parent=0 // pred_region
    _
  $region21: #{nature_value_forward.3} parent=0 // pred_fallthru
    _
  %v21 = vld [vmem:[%s0] sm:$0xff]
  %v22 = vld [vmem:[%s1] sm:$0xff]
  %v23 = vld [vmem:[%s1 + $0x8] sm:$0xff]
  %v24 = vld [vmem:[%s1 + $0x10] sm:$0xff]
  %v25 = vld [vmem:[%s1 + $0x18] sm:$0xff]
  %v26 = vld [vmem:[%s1 + $0x20] sm:$0xff]
  %v27 = vld [vmem:[%s1 + $0x28] sm:$0xff]
  %v28 = vld [vmem:[%s1 + $0x30] sm:$0xff]
  %v29 = vld [vmem:[%s1 + $0x38] sm:$0xff]
  %v30 = vld [vmem:[%s1 + $0x40] sm:$0xff]
  %v31 = vld [vmem:[%s1 + $0x48] sm:$0xff]
  %v32 = vld [vmem:[%s1 + $0x50] sm:$0xff]
  %v33 = vld [vmem:[%s1 + $0x58] sm:$0xff]
  %v34 = vld [vmem:[%s1 + $0x60] sm:$0xff]
  %v35 = vld [vmem:[%s1 + $0x68] sm:$0xff]
  %v36 = vld [vmem:[%s1 + $0x70] sm:$0xff]
  %v37 = vld [vmem:[%s1 + $0x78] sm:$0xff]
  %v38 = vld [vmem:[%s1 + $0x80] sm:$0xff]
  %v39 = vld [vmem:[%s1 + $0x88] sm:$0xff]
  %v40 = vld [vmem:[%s1 + $0x90] sm:$0xff]
  %v41 = vld [vmem:[%s1 + $0x98] sm:$0xff]
  %v42 = vld [vmem:[%s1 + $0xa0] sm:$0xff]
  %v43 = vld [vmem:[%s1 + $0xa8] sm:$0xff]
  %v44 = vld [vmem:[%s1 + $0xb0] sm:$0xff]
  %v45 = vld [vmem:[%s1 + $0xb8] sm:$0xff]
  %v46 = vld [vmem:[%s1 + $0xc0] sm:$0xff]
  %v47 = vld [vmem:[%s1 + $0xc8] sm:$0xff]
  %v48 = vld [vmem:[%s1 + $0xd0] sm:$0xff]
  %v49 = vld [vmem:[%s1 + $0xd8] sm:$0xff]
  %v50 = vld [vmem:[%s1 + $0xe0] sm:$0xff]
  %v51 = vld [vmem:[%s1 + $0xe8] sm:$0xff]
  %v52 = vld [vmem:[%s1 + $0xf0] sm:$0xff]
  %v53 = vld [vmem:[%s1 + $0xf8] sm:$0xff]
  %v54 = vld [vmem:[%s1 + $0x100] sm:$0xff]
  %v55 = vld [vmem:[%s1 + $0x108] sm:$0xff]
  %v56 = vld [vmem:[%s1 + $0x110] sm:$0xff]
  %v57 = vld [vmem:[%s1 + $0x118] sm:$0xff]
  %v58 = vld [vmem:[%s1 + $0x120] sm:$0xff]
  %v59 = vld [vmem:[%s1 + $0x128] sm:$0xff]
  %v60 = vld [vmem:[%s1 + $0x130] sm:$0xff]
  %v61 = vld [vmem:[%s1 + $0x138] sm:$0xff]
  %v62 = vld [vmem:[%s1 + $0x140] sm:$0xff]
  %v63 = vld [vmem:[%s1 + $0x148] sm:$0xff]
  %v64 = vld [vmem:[%s1 + $0x150] sm:$0xff]
  %v65 = vld [vmem:[%s1 + $0x158] sm:$0xff]
  %v66 = vld [vmem:[%s1 + $0x160] sm:$0xff]
  %v67 = vld [vmem:[%s1 + $0x168] sm:$0xff]
  %v68 = vld [vmem:[%s1 + $0x170] sm:$0xff]
  %v69 = vld [vmem:[%s1 + $0x178] sm:$0xff]
  %v70 = vld [vmem:[%s1 + $0x180] sm:$0xff]
  %v71 = vld [vmem:[%s1 + $0x188] sm:$0xff]
  %v72 = vld [vmem:[%s1 + $0x190] sm:$0xff]
  %v73 = vld [vmem:[%s1 + $0x198] sm:$0xff]
  %v74 = vld [vmem:[%s1 + $0x1a0] sm:$0xff]
  %v75 = vld [vmem:[%s1 + $0x1a8] sm:$0xff]
  %v76 = vld [vmem:[%s1 + $0x1b0] sm:$0xff]
  %v77 = vld [vmem:[%s1 + $0x1b8] sm:$0xff]
  %v78 = vld [vmem:[%s1 + $0x1c0] sm:$0xff]
  %v79 = vld [vmem:[%s1 + $0x1c8] sm:$0xff]
  %v80 = vld [vmem:[%s1 + $0x1d0] sm:$0xff]
  %v81 = vld [vmem:[%s1 + $0x1d8] sm:$0xff]
  %v82 = vld [vmem:[%s1 + $0x1e0] sm:$0xff]
  %v83 = vld [vmem:[%s1 + $0x1e8] sm:$0xff]
  %v84 = vld [vmem:[%s1 + $0x1f0] sm:$0xff]
  %v85 = vld [vmem:[%s1 + $0x1f8] sm:$0xff]
  %v86 = vld [vmem:[%s1 + $0x200] sm:$0xff]
  %v87 = vld [vmem:[%s1 + $0x208] sm:$0xff]
  %v88 = vld [vmem:[%s1 + $0x210] sm:$0xff]
  %v89 = vld [vmem:[%s1 + $0x218] sm:$0xff]
  %v90 = vld [vmem:[%s1 + $0x220] sm:$0xff]
  %v91 = vld [vmem:[%s1 + $0x228] sm:$0xff]
  %v92 = vld [vmem:[%s1 + $0x230] sm:$0xff]
  %v93 = vld [vmem:[%s1 + $0x238] sm:$0xff]
  %v94 = vld [vmem:[%s1 + $0x240] sm:$0xff]
  %v95 = vld [vmem:[%s1 + $0x248] sm:$0xff]
  %v96 = vld [vmem:[%s1 + $0x250] sm:$0xff]
  %v97 = vld [vmem:[%s1 + $0x258] sm:$0xff]
  %v98 = vld [vmem:[%s1 + $0x260] sm:$0xff]
  %v99 = vld [vmem:[%s1 + $0x268] sm:$0xff]
  %v100 = vld [vmem:[%s1 + $0x270] sm:$0xff]
  %v101 = vld [vmem:[%s1 + $0x278] sm:$0xff]
  %v102 = vld [vmem:[%s1 + $0x280] sm:$0xff]
  %v103 = vld [vmem:[%s1 + $0x288] sm:$0xff]
  %v104 = vld [vmem:[%s1 + $0x290] sm:$0xff]
  %v105 = vld [vmem:[%s1 + $0x298] sm:$0xff]
  %v106 = vld [vmem:[%s1 + $0x2a0] sm:$0xff]
  %v107 = vld [vmem:[%s1 + $0x2a8] sm:$0xff]
  %v108 = vld [vmem:[%s1 + $0x2b0] sm:$0xff]
  %v109 = vld [vmem:[%s1 + $0x2b8] sm:$0xff]
  %v110 = vld [vmem:[%s1 + $0x2c0] sm:$0xff]
  %v111 = vld [vmem:[%s1 + $0x2c8] sm:$0xff]
  %v112 = vld [vmem:[%s1 + $0x2d0] sm:$0xff]
  %v113 = vld [vmem:[%s1 + $0x2d8] sm:$0xff]
  %v114 = vld [vmem:[%s1 + $0x2e0] sm:$0xff]
  %v115 = vld [vmem:[%s1 + $0x2e8] sm:$0xff]
  %v116 = vld [vmem:[%s1 + $0x2f0] sm:$0xff]
  %v117 = vld [vmem:[%s1 + $0x2f8] sm:$0xff]
  %v118 = vld [vmem:[%s1 + $0x300] sm:$0xff]
  %v119 = vld [vmem:[%s1 + $0x308] sm:$0xff]
  %v120 = vld [vmem:[%s1 + $0x310] sm:$0xff]
  %v121 = vld [vmem:[%s1 + $0x318] sm:$0xff]
  %v122 = vld [vmem:[%s1 + $0x320] sm:$0xff]
  %v123 = vld [vmem:[%s1 + $0x328] sm:$0xff]
  %v124 = vld [vmem:[%s1 + $0x330] sm:$0xff]
  %v125 = vld [vmem:[%s1 + $0x338] sm:$0xff]
  %v126 = vld [vmem:[%s1 + $0x340] sm:$0xff]
  %v127 = vld [vmem:[%s1 + $0x348] sm:$0xff]
  %v128 = vld [vmem:[%s1 + $0x350] sm:$0xff]
  %v129 = vld [vmem:[%s1 + $0x358] sm:$0xff]
  %v130 = vld [vmem:[%s1 + $0x360] sm:$0xff]
  %v131 = vld [vmem:[%s1 + $0x368] sm:$0xff]
  %v132 = vld [vmem:[%s1 + $0x370] sm:$0xff]
  %v133 = vld [vmem:[%s1 + $0x378] sm:$0xff]
  %v134 = vld [vmem:[%s1 + $0x380] sm:$0xff]
  %v135 = vld [vmem:[%s1 + $0x388] sm:$0xff]
  %v136 = vld [vmem:[%s1 + $0x390] sm:$0xff]
  %v137 = vld [vmem:[%s1 + $0x398] sm:$0xff]
  %v138 = vld [vmem:[%s1 + $0x3a0] sm:$0xff]
  %v139 = vld [vmem:[%s1 + $0x3a8] sm:$0xff]
  %v140 = vld [vmem:[%s1 + $0x3b0] sm:$0xff]
  %v141 = vld [vmem:[%s1 + $0x3b8] sm:$0xff]
  %v142 = vld [vmem:[%s1 + $0x3c0] sm:$0xff]
  %v143 = vld [vmem:[%s1 + $0x3c8] sm:$0xff]
  %v144 = vld [vmem:[%s1 + $0x3d0] sm:$0xff]
  %v145 = vld [vmem:[%s1 + $0x3d8] sm:$0xff]
  %v146 = vld [vmem:[%s1 + $0x3e0] sm:$0xff]
  %v147 = vld [vmem:[%s1 + $0x3e8] sm:$0xff]
  %v148 = vld [vmem:[%s1 + $0x3f0] sm:$0xff]
  %v149 = vld [vmem:[%s1 + $0x3f8] sm:$0xff]
  %v150 = vld [vmem:[%s1 + $0x400] sm:$0xff]
  %v151 = vld [vmem:[%s1 + $0x408] sm:$0xff]
  %v152 = vld [vmem:[%s1 + $0x410] sm:$0xff]
  %v153 = vld [vmem:[%s1 + $0x418] sm:$0xff]
  %v154 = vld [vmem:[%s1 + $0x420] sm:$0xff]
  %v155 = vld [vmem:[%s1 + $0x428] sm:$0xff]
  %v156 = vld [vmem:[%s1 + $0x430] sm:$0xff]
  %v157 = vld [vmem:[%s1 + $0x438] sm:$0xff]
  %v158 = vld [vmem:[%s1 + $0x440] sm:$0xff]
  %v159 = vld [vmem:[%s1 + $0x448] sm:$0xff]
  %v160 = vld [vmem:[%s1 + $0x450] sm:$0xff]
  %v161 = vld [vmem:[%s1 + $0x458] sm:$0xff]
  %v162 = vld [vmem:[%s1 + $0x460] sm:$0xff]
  %v163 = vld [vmem:[%s1 + $0x468] sm:$0xff]
  %v164 = vld [vmem:[%s1 + $0x470] sm:$0xff]
  %v165 = vld [vmem:[%s1 + $0x478] sm:$0xff]
  %v166 = vld [vmem:[%s1 + $0x480] sm:$0xff]
  %v167 = vld [vmem:[%s1 + $0x488] sm:$0xff]
  %v168 = vld [vmem:[%s1 + $0x490] sm:$0xff]
  %v169 = vld [vmem:[%s1 + $0x498] sm:$0xff]
  %v170 = vld [vmem:[%s1 + $0x4a0] sm:$0xff]
  %v171 = vld [vmem:[%s1 + $0x4a8] sm:$0xff]
  %v172 = vld [vmem:[%s1 + $0x4b0] sm:$0xff]
  %v173 = vld [vmem:[%s1 + $0x4b8] sm:$0xff]
  %v174 = vld [vmem:[%s1 + $0x4c0] sm:$0xff]
  %v175 = vld [vmem:[%s1 + $0x4c8] sm:$0xff]
  %v176 = vld [vmem:[%s1 + $0x4d0] sm:$0xff]
  %v177 = vld [vmem:[%s1 + $0x4d8] sm:$0xff]
  %v178 = vld [vmem:[%s1 + $0x4e0] sm:$0xff]
  %v179 = vld [vmem:[%s1 + $0x4e8] sm:$0xff]
  %v180 = vld [vmem:[%s1 + $0x4f0] sm:$0xff]
  %v181 = vld [vmem:[%s1 + $0x4f8] sm:$0xff]
  %v182 = vld [vmem:[%s1 + $0x500] sm:$0xff]
  %v183 = vld [vmem:[%s1 + $0x508] sm:$0xff]
  %v184 = vld [vmem:[%s1 + $0x510] sm:$0xff]
  %v185 = vld [vmem:[%s1 + $0x518] sm:$0xff]
  %v186 = vld [vmem:[%s1 + $0x520] sm:$0xff]
  %v187 = vld [vmem:[%s1 + $0x528] sm:$0xff]
  %v188 = vld [vmem:[%s1 + $0x530] sm:$0xff]
  %v189 = vld [vmem:[%s1 + $0x538] sm:$0xff]
  %v190 = vld [vmem:[%s1 + $0x540] sm:$0xff]
  %v191 = vld [vmem:[%s1 + $0x548] sm:$0xff]
  %v192 = vld [vmem:[%s1 + $0x550] sm:$0xff]
  %v193 = vld [vmem:[%s1 + $0x558] sm:$0xff]
  %v194 = vld [vmem:[%s1 + $0x560] sm:$0xff]
  %v195 = vld [vmem:[%s1 + $0x568] sm:$0xff]
  %v196 = vld [vmem:[%s1 + $0x570] sm:$0xff]
  %v197 = vld [vmem:[%s1 + $0x578] sm:$0xff]
  %v198 = vld [vmem:[%s1 + $0x580] sm:$0xff]
  %v199 = vld [vmem:[%s1 + $0x588] sm:$0xff]
  %v200 = vld [vmem:[%s1 + $0x590] sm:$0xff]
  %v201 = vld [vmem:[%s1 + $0x598] sm:$0xff]
  %v202 = vld [vmem:[%s1 + $0x5a0] sm:$0xff]
  %v203 = vld [vmem:[%s1 + $0x5a8] sm:$0xff]
  %v204 = vld [vmem:[%s1 + $0x5b0] sm:$0xff]
  %v205 = vld [vmem:[%s1 + $0x5b8] sm:$0xff]
  %v206 = vld [vmem:[%s1 + $0x5c0] sm:$0xff]
  %v207 = vld [vmem:[%s1 + $0x5c8] sm:$0xff]
  %v208 = vld [vmem:[%s1 + $0x5d0] sm:$0xff]
  %v209 = vld [vmem:[%s1 + $0x5d8] sm:$0xff]
  %v210 = vld [vmem:[%s1 + $0x5e0] sm:$0xff]
  %v211 = vld [vmem:[%s1 + $0x5e8] sm:$0xff]
  %v212 = vld [vmem:[%s1 + $0x5f0] sm:$0xff]
  %v213 = vld [vmem:[%s1 + $0x5f8] sm:$0xff]
  %v214 = vld [vmem:[%s1 + $0x600] sm:$0xff]
  %v215 = vld [vmem:[%s1 + $0x608] sm:$0xff]
  %v216 = vld [vmem:[%s1 + $0x610] sm:$0xff]
  %v217 = vld [vmem:[%s1 + $0x618] sm:$0xff]
  %v218 = vld [vmem:[%s1 + $0x620] sm:$0xff]
  %v219 = vld [vmem:[%s1 + $0x628] sm:$0xff]
  %v220 = vld [vmem:[%s1 + $0x630] sm:$0xff]
  %v221 = vld [vmem:[%s1 + $0x638] sm:$0xff]
  %v222 = vld [vmem:[%s1 + $0x640] sm:$0xff]
  %v223 = vld [vmem:[%s1 + $0x648] sm:$0xff]
  %v224 = vld [vmem:[%s1 + $0x650] sm:$0xff]
  %v225 = vld [vmem:[%s1 + $0x658] sm:$0xff]
  %v226 = vld [vmem:[%s1 + $0x660] sm:$0xff]
  %v227 = vld [vmem:[%s1 + $0x668] sm:$0xff]
  %v228 = vld [vmem:[%s1 + $0x670] sm:$0xff]
  %v229 = vld [vmem:[%s1 + $0x678] sm:$0xff]
  %v230 = vld [vmem:[%s1 + $0x680] sm:$0xff]
  %v231 = vld [vmem:[%s1 + $0x688] sm:$0xff]
  %v232 = vld [vmem:[%s1 + $0x690] sm:$0xff]
  %v233 = vld [vmem:[%s1 + $0x698] sm:$0xff]
  %v234 = vld [vmem:[%s1 + $0x6a0] sm:$0xff]
  %v235 = vld [vmem:[%s1 + $0x6a8] sm:$0xff]
  %v236 = vld [vmem:[%s1 + $0x6b0] sm:$0xff]
  %v237 = vld [vmem:[%s1 + $0x6b8] sm:$0xff]
  %v238 = vld [vmem:[%s1 + $0x6c0] sm:$0xff]
  %v239 = vld [vmem:[%s1 + $0x6c8] sm:$0xff]
  %v240 = vld [vmem:[%s1 + $0x6d0] sm:$0xff]
  %v241 = vld [vmem:[%s1 + $0x6d8] sm:$0xff]
  %v242 = vld [vmem:[%s1 + $0x6e0] sm:$0xff]
  %v243 = vld [vmem:[%s1 + $0x6e8] sm:$0xff]
  %v244 = vld [vmem:[%s1 + $0x6f0] sm:$0xff]
  %v245 = vld [vmem:[%s1 + $0x6f8] sm:$0xff]
  %v246 = vld [vmem:[%s1 + $0x700] sm:$0xff]
  %v247 = vld [vmem:[%s1 + $0x708] sm:$0xff]
  %v248 = vld [vmem:[%s1 + $0x710] sm:$0xff]
  %v249 = vld [vmem:[%s1 + $0x718] sm:$0xff]
  %v250 = vld [vmem:[%s1 + $0x720] sm:$0xff]
  %v251 = vld [vmem:[%s1 + $0x728] sm:$0xff]
  %v252 = vld [vmem:[%s1 + $0x730] sm:$0xff]
  %v253 = vld [vmem:[%s1 + $0x738] sm:$0xff]
  %v254 = vld [vmem:[%s1 + $0x740] sm:$0xff]
  %v255 = vld [vmem:[%s1 + $0x748] sm:$0xff]
  %v256 = vld [vmem:[%s1 + $0x750] sm:$0xff]
  %v257 = vld [vmem:[%s1 + $0x758] sm:$0xff]
  %v258 = vld [vmem:[%s1 + $0x760] sm:$0xff]
  %v259 = vld [vmem:[%s1 + $0x768] sm:$0xff]
  %v260 = vld [vmem:[%s1 + $0x770] sm:$0xff]
  %v261 = vld [vmem:[%s1 + $0x778] sm:$0xff]
  %v262 = vld [vmem:[%s1 + $0x780] sm:$0xff]
  %v263 = vld [vmem:[%s1 + $0x788] sm:$0xff]
  %v264 = vld [vmem:[%s1 + $0x790] sm:$0xff]
  %v265 = vld [vmem:[%s1 + $0x798] sm:$0xff]
  %v266 = vld [vmem:[%s1 + $0x7a0] sm:$0xff]
  %v267 = vld [vmem:[%s1 + $0x7a8] sm:$0xff]
  %v268 = vld [vmem:[%s1 + $0x7b0] sm:$0xff]
  %v269 = vld [vmem:[%s1 + $0x7b8] sm:$0xff]
  %v270 = vld [vmem:[%s1 + $0x7c0] sm:$0xff]
  %v271 = vld [vmem:[%s1 + $0x7c8] sm:$0xff]
  %v272 = vld [vmem:[%s1 + $0x7d0] sm:$0xff]
  %v273 = vld [vmem:[%s1 + $0x7d8] sm:$0xff]
  %v274 = vld [vmem:[%s1 + $0x7e0] sm:$0xff]
  %v275 = vld [vmem:[%s1 + $0x7e8] sm:$0xff]
  %v276 = vld [vmem:[%s1 + $0x7f0] sm:$0xff]
  %v277 = vld [vmem:[%s1 + $0x7f8] sm:$0xff]
  %v278 = vld [vmem:[%s2] sm:$0xf]
  %v280 = vlaneseq
  %v281 = vshrl.u32 %v280, 7
  %v282 = vsub.s32 0, %v281
  %v283 = vrot.slane %v278, %v282
  %v284 = vlaneseq
  %v285 = vshrl.u32 %v284, 7
  %v286 = vsub.s32 1, %v285
  %v287 = vrot.slane %v278, %v286
  %v288 = vlaneseq
  %v289 = vshrl.u32 %v288, 7
  %v290 = vsub.s32 2, %v289
  %v291 = vrot.slane %v278, %v290
  %v292 = vlaneseq
  %v293 = vshrl.u32 %v292, 7
  %v294 = vsub.s32 3, %v293
  %v295 = vrot.slane %v278, %v294
  %v301 = vcombine.high %v21, %v21
  %v303 = vunpack.c.l.s4 1966171168
  %v304 = vunpack.c.0.s8 %v303
  %v305 = vlaneseq
  %v306 = vshrl.u32 %v305, 7
  %v307 = vsub.s32 %v304, %v306
  %v308 = vrot.slane %v21, %v307
  %v310 = vunpack.c.l.s4 1966171168
  %v311 = vunpack.c.0.s8 %v310
  %v312 = vlaneseq
  %v313 = vshrl.u32 %v312, 7
  %v314 = vsub.s32 %v311, %v313
  %v315 = vrot.slane %v301, %v314
  %v316 = vcombine.high %v308, %v308
  %v317 = vcombine.high %v315, %v315
  %v319 = vunpack.c.l.s4 1966171168
  %v320 = vunpack.c.0.s8 %v319
  %v321 = vlaneseq
  %v322 = vshrl.u32 %v321, 7
  %v323 = vsub.s32 %v320, %v322
  %v324 = vrot.slane %v308, %v323
  %v326 = vunpack.c.l.s4 1966171168
  %v327 = vunpack.c.0.s8 %v326
  %v328 = vlaneseq
  %v329 = vshrl.u32 %v328, 7
  %v330 = vsub.s32 %v327, %v329
  %v331 = vrot.slane %v315, %v330
  %v333 = vunpack.c.l.s4 1966171168
  %v334 = vunpack.c.0.s8 %v333
  %v335 = vlaneseq
  %v336 = vshrl.u32 %v335, 7
  %v337 = vsub.s32 %v334, %v336
  %v338 = vrot.slane %v316, %v337
  %v340 = vunpack.c.l.s4 1966171168
  %v341 = vunpack.c.0.s8 %v340
  %v342 = vlaneseq
  %v343 = vshrl.u32 %v342, 7
  %v344 = vsub.s32 %v341, %v343
  %v345 = vrot.slane %v317, %v344
  %v346 = vcombine.high %v324, %v324
  %v347 = vcombine.high %v331, %v331
  %v348 = vcombine.high %v338, %v338
  %v349 = vcombine.high %v345, %v345
  %v614 = vunpack.c.l.b16 %v22
  %v615 = vunpack.c.h.b16 %v22
  %v616 = vunpack.c.l.b16 %v23
  %v617 = vunpack.c.h.b16 %v23
  %v618 = vunpack.c.l.b16 %v24
  %v619 = vunpack.c.h.b16 %v24
  %v620 = vunpack.c.l.b16 %v25
  %v621 = vunpack.c.h.b16 %v25
  %v622 = vunpack.c.l.b16 %v26
  %v623 = vunpack.c.h.b16 %v26
  %v624 = vunpack.c.l.b16 %v27
  %v625 = vunpack.c.h.b16 %v27
  %v626 = vunpack.c.l.b16 %v28
  %v627 = vunpack.c.h.b16 %v28
  %v628 = vunpack.c.l.b16 %v29
  %v629 = vunpack.c.h.b16 %v29
  %v630 = vunpack.c.l.b16 %v30
  %v631 = vunpack.c.h.b16 %v30
  %v632 = vunpack.c.l.b16 %v31
  %v633 = vunpack.c.h.b16 %v31
  %v634 = vunpack.c.l.b16 %v32
  %v635 = vunpack.c.h.b16 %v32
  %v636 = vunpack.c.l.b16 %v33
  %v637 = vunpack.c.h.b16 %v33
  %v638 = vunpack.c.l.b16 %v34
  %v639 = vunpack.c.h.b16 %v34
  %v640 = vunpack.c.l.b16 %v35
  %v641 = vunpack.c.h.b16 %v35
  %v642 = vunpack.c.l.b16 %v36
  %v643 = vunpack.c.h.b16 %v36
  %v644 = vunpack.c.l.b16 %v37
  %v645 = vunpack.c.h.b16 %v37
  %v646 = vunpack.c.l.b16 %v38
  %v647 = vunpack.c.h.b16 %v38
  %v648 = vunpack.c.l.b16 %v39
  %v649 = vunpack.c.h.b16 %v39
  %v650 = vunpack.c.l.b16 %v40
  %v651 = vunpack.c.h.b16 %v40
  %v652 = vunpack.c.l.b16 %v41
  %v653 = vunpack.c.h.b16 %v41
  %v654 = vunpack.c.l.b16 %v42
  %v655 = vunpack.c.h.b16 %v42
  %v656 = vunpack.c.l.b16 %v43
  %v657 = vunpack.c.h.b16 %v43
  %v658 = vunpack.c.l.b16 %v44
  %v659 = vunpack.c.h.b16 %v44
  %v660 = vunpack.c.l.b16 %v45
  %v661 = vunpack.c.h.b16 %v45
  %v662 = vunpack.c.l.b16 %v46
  %v663 = vunpack.c.h.b16 %v46
  %v664 = vunpack.c.l.b16 %v47
  %v665 = vunpack.c.h.b16 %v47
  %v666 = vunpack.c.l.b16 %v48
  %v667 = vunpack.c.h.b16 %v48
  %v668 = vunpack.c.l.b16 %v49
  %v669 = vunpack.c.h.b16 %v49
  %v670 = vunpack.c.l.b16 %v50
  %v671 = vunpack.c.h.b16 %v50
  %v672 = vunpack.c.l.b16 %v51
  %v673 = vunpack.c.h.b16 %v51
  %v674 = vunpack.c.l.b16 %v52
  %v675 = vunpack.c.h.b16 %v52
  %v676 = vunpack.c.l.b16 %v53
  %v677 = vunpack.c.h.b16 %v53
  %v678 = vunpack.c.l.b16 %v54
  %v679 = vunpack.c.h.b16 %v54
  %v680 = vunpack.c.l.b16 %v55
  %v681 = vunpack.c.h.b16 %v55
  %v682 = vunpack.c.l.b16 %v56
  %v683 = vunpack.c.h.b16 %v56
  %v684 = vunpack.c.l.b16 %v57
  %v685 = vunpack.c.h.b16 %v57
  %v686 = vunpack.c.l.b16 %v58
  %v687 = vunpack.c.h.b16 %v58
  %v688 = vunpack.c.l.b16 %v59
  %v689 = vunpack.c.h.b16 %v59
  %v690 = vunpack.c.l.b16 %v60
  %v691 = vunpack.c.h.b16 %v60
  %v692 = vunpack.c.l.b16 %v61
  %v693 = vunpack.c.h.b16 %v61
  %v694 = vunpack.c.l.b16 %v62
  %v695 = vunpack.c.h.b16 %v62
  %v696 = vunpack.c.l.b16 %v63
  %v697 = vunpack.c.h.b16 %v63
  %v698 = vunpack.c.l.b16 %v64
  %v699 = vunpack.c.h.b16 %v64
  %v700 = vunpack.c.l.b16 %v65
  %v701 = vunpack.c.h.b16 %v65
  %v702 = vunpack.c.l.b16 %v66
  %v703 = vunpack.c.h.b16 %v66
  %v704 = vunpack.c.l.b16 %v67
  %v705 = vunpack.c.h.b16 %v67
  %v706 = vunpack.c.l.b16 %v68
  %v707 = vunpack.c.h.b16 %v68
  %v708 = vunpack.c.l.b16 %v69
  %v709 = vunpack.c.h.b16 %v69
  %v710 = vunpack.c.l.b16 %v70
  %v711 = vunpack.c.h.b16 %v70
  %v712 = vunpack.c.l.b16 %v71
  %v713 = vunpack.c.h.b16 %v71
  %v714 = vunpack.c.l.b16 %v72
  %v715 = vunpack.c.h.b16 %v72
  %v716 = vunpack.c.l.b16 %v73
  %v717 = vunpack.c.h.b16 %v73
  %v718 = vunpack.c.l.b16 %v74
  %v719 = vunpack.c.h.b16 %v74
  %v720 = vunpack.c.l.b16 %v75
  %v721 = vunpack.c.h.b16 %v75
  %v722 = vunpack.c.l.b16 %v76
  %v723 = vunpack.c.h.b16 %v76
  %v724 = vunpack.c.l.b16 %v77
  %v725 = vunpack.c.h.b16 %v77
  %v726 = vunpack.c.l.b16 %v78
  %v727 = vunpack.c.h.b16 %v78
  %v728 = vunpack.c.l.b16 %v79
  %v729 = vunpack.c.h.b16 %v79
  %v730 = vunpack.c.l.b16 %v80
  %v731 = vunpack.c.h.b16 %v80
  %v732 = vunpack.c.l.b16 %v81
  %v733 = vunpack.c.h.b16 %v81
  %v734 = vunpack.c.l.b16 %v82
  %v735 = vunpack.c.h.b16 %v82
  %v736 = vunpack.c.l.b16 %v83
  %v737 = vunpack.c.h.b16 %v83
  %v738 = vunpack.c.l.b16 %v84
  %v739 = vunpack.c.h.b16 %v84
  %v740 = vunpack.c.l.b16 %v85
  %v741 = vunpack.c.h.b16 %v85
  %v742 = vunpack.c.l.b16 %v86
  %v743 = vunpack.c.h.b16 %v86
  %v744 = vunpack.c.l.b16 %v87
  %v745 = vunpack.c.h.b16 %v87
  %v746 = vunpack.c.l.b16 %v88
  %v747 = vunpack.c.h.b16 %v88
  %v748 = vunpack.c.l.b16 %v89
  %v749 = vunpack.c.h.b16 %v89
  %v750 = vunpack.c.l.b16 %v90
  %v751 = vunpack.c.h.b16 %v90
  %v752 = vunpack.c.l.b16 %v91
  %v753 = vunpack.c.h.b16 %v91
  %v754 = vunpack.c.l.b16 %v92
  %v755 = vunpack.c.h.b16 %v92
  %v756 = vunpack.c.l.b16 %v93
  %v757 = vunpack.c.h.b16 %v93
  %v758 = vunpack.c.l.b16 %v94
  %v759 = vunpack.c.h.b16 %v94
  %v760 = vunpack.c.l.b16 %v95
  %v761 = vunpack.c.h.b16 %v95
  %v762 = vunpack.c.l.b16 %v96
  %v763 = vunpack.c.h.b16 %v96
  %v764 = vunpack.c.l.b16 %v97
  %v765 = vunpack.c.h.b16 %v97
  %v766 = vunpack.c.l.b16 %v98
  %v767 = vunpack.c.h.b16 %v98
  %v768 = vunpack.c.l.b16 %v99
  %v769 = vunpack.c.h.b16 %v99
  %v770 = vunpack.c.l.b16 %v100
  %v771 = vunpack.c.h.b16 %v100
  %v772 = vunpack.c.l.b16 %v101
  %v773 = vunpack.c.h.b16 %v101
  %v774 = vunpack.c.l.b16 %v102
  %v775 = vunpack.c.h.b16 %v102
  %v776 = vunpack.c.l.b16 %v103
  %v777 = vunpack.c.h.b16 %v103
  %v778 = vunpack.c.l.b16 %v104
  %v779 = vunpack.c.h.b16 %v104
  %v780 = vunpack.c.l.b16 %v105
  %v781 = vunpack.c.h.b16 %v105
  %v782 = vunpack.c.l.b16 %v106
  %v783 = vunpack.c.h.b16 %v106
  %v784 = vunpack.c.l.b16 %v107
  %v785 = vunpack.c.h.b16 %v107
  %v786 = vunpack.c.l.b16 %v108
  %v787 = vunpack.c.h.b16 %v108
  %v788 = vunpack.c.l.b16 %v109
  %v789 = vunpack.c.h.b16 %v109
  %v790 = vunpack.c.l.b16 %v110
  %v791 = vunpack.c.h.b16 %v110
  %v792 = vunpack.c.l.b16 %v111
  %v793 = vunpack.c.h.b16 %v111
  %v794 = vunpack.c.l.b16 %v112
  %v795 = vunpack.c.h.b16 %v112
  %v796 = vunpack.c.l.b16 %v113
  %v797 = vunpack.c.h.b16 %v113
  %v798 = vunpack.c.l.b16 %v114
  %v799 = vunpack.c.h.b16 %v114
  %v800 = vunpack.c.l.b16 %v115
  %v801 = vunpack.c.h.b16 %v115
  %v802 = vunpack.c.l.b16 %v116
  %v803 = vunpack.c.h.b16 %v116
  %v804 = vunpack.c.l.b16 %v117
  %v805 = vunpack.c.h.b16 %v117
  %v806 = vunpack.c.l.b16 %v118
  %v807 = vunpack.c.h.b16 %v118
  %v808 = vunpack.c.l.b16 %v119
  %v809 = vunpack.c.h.b16 %v119
  %v810 = vunpack.c.l.b16 %v120
  %v811 = vunpack.c.h.b16 %v120
  %v812 = vunpack.c.l.b16 %v121
  %v813 = vunpack.c.h.b16 %v121
  %v814 = vunpack.c.l.b16 %v122
  %v815 = vunpack.c.h.b16 %v122
  %v816 = vunpack.c.l.b16 %v123
  %v817 = vunpack.c.h.b16 %v123
  %v818 = vunpack.c.l.b16 %v124
  %v819 = vunpack.c.h.b16 %v124
  %v820 = vunpack.c.l.b16 %v125
  %v821 = vunpack.c.h.b16 %v125
  %v822 = vunpack.c.l.b16 %v126
  %v823 = vunpack.c.h.b16 %v126
  %v824 = vunpack.c.l.b16 %v127
  %v825 = vunpack.c.h.b16 %v127
  %v826 = vunpack.c.l.b16 %v128
  %v827 = vunpack.c.h.b16 %v128
  %v828 = vunpack.c.l.b16 %v129
  %v829 = vunpack.c.h.b16 %v129
  %v830 = vunpack.c.l.b16 %v130
  %v831 = vunpack.c.h.b16 %v130
  %v832 = vunpack.c.l.b16 %v131
  %v833 = vunpack.c.h.b16 %v131
  %v834 = vunpack.c.l.b16 %v132
  %v835 = vunpack.c.h.b16 %v132
  %v836 = vunpack.c.l.b16 %v133
  %v837 = vunpack.c.h.b16 %v133
  %v838 = vunpack.c.l.b16 %v134
  %v839 = vunpack.c.h.b16 %v134
  %v840 = vunpack.c.l.b16 %v135
  %v841 = vunpack.c.h.b16 %v135
  %v842 = vunpack.c.l.b16 %v136
  %v843 = vunpack.c.h.b16 %v136
  %v844 = vunpack.c.l.b16 %v137
  %v845 = vunpack.c.h.b16 %v137
  %v846 = vunpack.c.l.b16 %v138
  %v847 = vunpack.c.h.b16 %v138
  %v848 = vunpack.c.l.b16 %v139
  %v849 = vunpack.c.h.b16 %v139
  %v850 = vunpack.c.l.b16 %v140
  %v851 = vunpack.c.h.b16 %v140
  %v852 = vunpack.c.l.b16 %v141
  %v853 = vunpack.c.h.b16 %v141
  %v854 = vunpack.c.l.b16 %v142
  %v855 = vunpack.c.h.b16 %v142
  %v856 = vunpack.c.l.b16 %v143
  %v857 = vunpack.c.h.b16 %v143
  %v858 = vunpack.c.l.b16 %v144
  %v859 = vunpack.c.h.b16 %v144
  %v860 = vunpack.c.l.b16 %v145
  %v861 = vunpack.c.h.b16 %v145
  %v862 = vunpack.c.l.b16 %v146
  %v863 = vunpack.c.h.b16 %v146
  %v864 = vunpack.c.l.b16 %v147
  %v865 = vunpack.c.h.b16 %v147
  %v866 = vunpack.c.l.b16 %v148
  %v867 = vunpack.c.h.b16 %v148
  %v868 = vunpack.c.l.b16 %v149
  %v869 = vunpack.c.h.b16 %v149
  %v870 = vunpack.c.l.b16 %v150
  %v871 = vunpack.c.h.b16 %v150
  %v872 = vunpack.c.l.b16 %v151
  %v873 = vunpack.c.h.b16 %v151
  %v874 = vunpack.c.l.b16 %v152
  %v875 = vunpack.c.h.b16 %v152
  %v876 = vunpack.c.l.b16 %v153
  %v877 = vunpack.c.h.b16 %v153
  %v878 = vunpack.c.l.b16 %v154
  %v879 = vunpack.c.h.b16 %v154
  %v880 = vunpack.c.l.b16 %v155
  %v881 = vunpack.c.h.b16 %v155
  %v882 = vunpack.c.l.b16 %v156
  %v883 = vunpack.c.h.b16 %v156
  %v884 = vunpack.c.l.b16 %v157
  %v885 = vunpack.c.h.b16 %v157
  %v886 = vunpack.c.l.b16 %v158
  %v887 = vunpack.c.h.b16 %v158
  %v888 = vunpack.c.l.b16 %v159
  %v889 = vunpack.c.h.b16 %v159
  %v890 = vunpack.c.l.b16 %v160
  %v891 = vunpack.c.h.b16 %v160
  %v892 = vunpack.c.l.b16 %v161
  %v893 = vunpack.c.h.b16 %v161
  %v894 = vunpack.c.l.b16 %v162
  %v895 = vunpack.c.h.b16 %v162
  %v896 = vunpack.c.l.b16 %v163
  %v897 = vunpack.c.h.b16 %v163
  %v898 = vunpack.c.l.b16 %v164
  %v899 = vunpack.c.h.b16 %v164
  %v900 = vunpack.c.l.b16 %v165
  %v901 = vunpack.c.h.b16 %v165
  %v902 = vunpack.c.l.b16 %v166
  %v903 = vunpack.c.h.b16 %v166
  %v904 = vunpack.c.l.b16 %v167
  %v905 = vunpack.c.h.b16 %v167
  %v906 = vunpack.c.l.b16 %v168
  %v907 = vunpack.c.h.b16 %v168
  %v908 = vunpack.c.l.b16 %v169
  %v909 = vunpack.c.h.b16 %v169
  %v910 = vunpack.c.l.b16 %v170
  %v911 = vunpack.c.h.b16 %v170
  %v912 = vunpack.c.l.b16 %v171
  %v913 = vunpack.c.h.b16 %v171
  %v914 = vunpack.c.l.b16 %v172
  %v915 = vunpack.c.h.b16 %v172
  %v916 = vunpack.c.l.b16 %v173
  %v917 = vunpack.c.h.b16 %v173
  %v918 = vunpack.c.l.b16 %v174
  %v919 = vunpack.c.h.b16 %v174
  %v920 = vunpack.c.l.b16 %v175
  %v921 = vunpack.c.h.b16 %v175
  %v922 = vunpack.c.l.b16 %v176
  %v923 = vunpack.c.h.b16 %v176
  %v924 = vunpack.c.l.b16 %v177
  %v925 = vunpack.c.h.b16 %v177
  %v926 = vunpack.c.l.b16 %v178
  %v927 = vunpack.c.h.b16 %v178
  %v928 = vunpack.c.l.b16 %v179
  %v929 = vunpack.c.h.b16 %v179
  %v930 = vunpack.c.l.b16 %v180
  %v931 = vunpack.c.h.b16 %v180
  %v932 = vunpack.c.l.b16 %v181
  %v933 = vunpack.c.h.b16 %v181
  %v934 = vunpack.c.l.b16 %v182
  %v935 = vunpack.c.h.b16 %v182
  %v936 = vunpack.c.l.b16 %v183
  %v937 = vunpack.c.h.b16 %v183
  %v938 = vunpack.c.l.b16 %v184
  %v939 = vunpack.c.h.b16 %v184
  %v940 = vunpack.c.l.b16 %v185
  %v941 = vunpack.c.h.b16 %v185
  %v942 = vunpack.c.l.b16 %v186
  %v943 = vunpack.c.h.b16 %v186
  %v944 = vunpack.c.l.b16 %v187
  %v945 = vunpack.c.h.b16 %v187
  %v946 = vunpack.c.l.b16 %v188
  %v947 = vunpack.c.h.b16 %v188
  %v948 = vunpack.c.l.b16 %v189
  %v949 = vunpack.c.h.b16 %v189
  %v950 = vunpack.c.l.b16 %v190
  %v951 = vunpack.c.h.b16 %v190
  %v952 = vunpack.c.l.b16 %v191
  %v953 = vunpack.c.h.b16 %v191
  %v954 = vunpack.c.l.b16 %v192
  %v955 = vunpack.c.h.b16 %v192
  %v956 = vunpack.c.l.b16 %v193
  %v957 = vunpack.c.h.b16 %v193
  %v958 = vunpack.c.l.b16 %v194
  %v959 = vunpack.c.h.b16 %v194
  %v960 = vunpack.c.l.b16 %v195
  %v961 = vunpack.c.h.b16 %v195
  %v962 = vunpack.c.l.b16 %v196
  %v963 = vunpack.c.h.b16 %v196
  %v964 = vunpack.c.l.b16 %v197
  %v965 = vunpack.c.h.b16 %v197
  %v966 = vunpack.c.l.b16 %v198
  %v967 = vunpack.c.h.b16 %v198
  %v968 = vunpack.c.l.b16 %v199
  %v969 = vunpack.c.h.b16 %v199
  %v970 = vunpack.c.l.b16 %v200
  %v971 = vunpack.c.h.b16 %v200
  %v972 = vunpack.c.l.b16 %v201
  %v973 = vunpack.c.h.b16 %v201
  %v974 = vunpack.c.l.b16 %v202
  %v975 = vunpack.c.h.b16 %v202
  %v976 = vunpack.c.l.b16 %v203
  %v977 = vunpack.c.h.b16 %v203
  %v978 = vunpack.c.l.b16 %v204
  %v979 = vunpack.c.h.b16 %v204
  %v980 = vunpack.c.l.b16 %v205
  %v981 = vunpack.c.h.b16 %v205
  %v982 = vunpack.c.l.b16 %v206
  %v983 = vunpack.c.h.b16 %v206
  %v984 = vunpack.c.l.b16 %v207
  %v985 = vunpack.c.h.b16 %v207
  %v986 = vunpack.c.l.b16 %v208
  %v987 = vunpack.c.h.b16 %v208
  %v988 = vunpack.c.l.b16 %v209
  %v989 = vunpack.c.h.b16 %v209
  %v990 = vunpack.c.l.b16 %v210
  %v991 = vunpack.c.h.b16 %v210
  %v992 = vunpack.c.l.b16 %v211
  %v993 = vunpack.c.h.b16 %v211
  %v994 = vunpack.c.l.b16 %v212
  %v995 = vunpack.c.h.b16 %v212
  %v996 = vunpack.c.l.b16 %v213
  %v997 = vunpack.c.h.b16 %v213
  %v998 = vunpack.c.l.b16 %v214
  %v999 = vunpack.c.h.b16 %v214
  %v1000 = vunpack.c.l.b16 %v215
  %v1001 = vunpack.c.h.b16 %v215
  %v1002 = vunpack.c.l.b16 %v216
  %v1003 = vunpack.c.h.b16 %v216
  %v1004 = vunpack.c.l.b16 %v217
  %v1005 = vunpack.c.h.b16 %v217
  %v1006 = vunpack.c.l.b16 %v218
  %v1007 = vunpack.c.h.b16 %v218
  %v1008 = vunpack.c.l.b16 %v219
  %v1009 = vunpack.c.h.b16 %v219
  %v1010 = vunpack.c.l.b16 %v220
  %v1011 = vunpack.c.h.b16 %v220
  %v1012 = vunpack.c.l.b16 %v221
  %v1013 = vunpack.c.h.b16 %v221
  %v1014 = vunpack.c.l.b16 %v222
  %v1015 = vunpack.c.h.b16 %v222
  %v1016 = vunpack.c.l.b16 %v223
  %v1017 = vunpack.c.h.b16 %v223
  %v1018 = vunpack.c.l.b16 %v224
  %v1019 = vunpack.c.h.b16 %v224
  %v1020 = vunpack.c.l.b16 %v225
  %v1021 = vunpack.c.h.b16 %v225
  %v1022 = vunpack.c.l.b16 %v226
  %v1023 = vunpack.c.h.b16 %v226
  %v1024 = vunpack.c.l.b16 %v227
  %v1025 = vunpack.c.h.b16 %v227
  %v1026 = vunpack.c.l.b16 %v228
  %v1027 = vunpack.c.h.b16 %v228
  %v1028 = vunpack.c.l.b16 %v229
  %v1029 = vunpack.c.h.b16 %v229
  %v1030 = vunpack.c.l.b16 %v230
  %v1031 = vunpack.c.h.b16 %v230
  %v1032 = vunpack.c.l.b16 %v231
  %v1033 = vunpack.c.h.b16 %v231
  %v1034 = vunpack.c.l.b16 %v232
  %v1035 = vunpack.c.h.b16 %v232
  %v1036 = vunpack.c.l.b16 %v233
  %v1037 = vunpack.c.h.b16 %v233
  %v1038 = vunpack.c.l.b16 %v234
  %v1039 = vunpack.c.h.b16 %v234
  %v1040 = vunpack.c.l.b16 %v235
  %v1041 = vunpack.c.h.b16 %v235
  %v1042 = vunpack.c.l.b16 %v236
  %v1043 = vunpack.c.h.b16 %v236
  %v1044 = vunpack.c.l.b16 %v237
  %v1045 = vunpack.c.h.b16 %v237
  %v1046 = vunpack.c.l.b16 %v238
  %v1047 = vunpack.c.h.b16 %v238
  %v1048 = vunpack.c.l.b16 %v239
  %v1049 = vunpack.c.h.b16 %v239
  %v1050 = vunpack.c.l.b16 %v240
  %v1051 = vunpack.c.h.b16 %v240
  %v1052 = vunpack.c.l.b16 %v241
  %v1053 = vunpack.c.h.b16 %v241
  %v1054 = vunpack.c.l.b16 %v242
  %v1055 = vunpack.c.h.b16 %v242
  %v1056 = vunpack.c.l.b16 %v243
  %v1057 = vunpack.c.h.b16 %v243
  %v1058 = vunpack.c.l.b16 %v244
  %v1059 = vunpack.c.h.b16 %v244
  %v1060 = vunpack.c.l.b16 %v245
  %v1061 = vunpack.c.h.b16 %v245
  %v1062 = vunpack.c.l.b16 %v246
  %v1063 = vunpack.c.h.b16 %v246
  %v1064 = vunpack.c.l.b16 %v247
  %v1065 = vunpack.c.h.b16 %v247
  %v1066 = vunpack.c.l.b16 %v248
  %v1067 = vunpack.c.h.b16 %v248
  %v1068 = vunpack.c.l.b16 %v249
  %v1069 = vunpack.c.h.b16 %v249
  %v1070 = vunpack.c.l.b16 %v250
  %v1071 = vunpack.c.h.b16 %v250
  %v1072 = vunpack.c.l.b16 %v251
  %v1073 = vunpack.c.h.b16 %v251
  %v1074 = vunpack.c.l.b16 %v252
  %v1075 = vunpack.c.h.b16 %v252
  %v1076 = vunpack.c.l.b16 %v253
  %v1077 = vunpack.c.h.b16 %v253
  %v1078 = vunpack.c.l.b16 %v254
  %v1079 = vunpack.c.h.b16 %v254
  %v1080 = vunpack.c.l.b16 %v255
  %v1081 = vunpack.c.h.b16 %v255
  %v1082 = vunpack.c.l.b16 %v256
  %v1083 = vunpack.c.h.b16 %v256
  %v1084 = vunpack.c.l.b16 %v257
  %v1085 = vunpack.c.h.b16 %v257
  %v1086 = vunpack.c.l.b16 %v258
  %v1087 = vunpack.c.h.b16 %v258
  %v1088 = vunpack.c.l.b16 %v259
  %v1089 = vunpack.c.h.b16 %v259
  %v1090 = vunpack.c.l.b16 %v260
  %v1091 = vunpack.c.h.b16 %v260
  %v1092 = vunpack.c.l.b16 %v261
  %v1093 = vunpack.c.h.b16 %v261
  %v1094 = vunpack.c.l.b16 %v262
  %v1095 = vunpack.c.h.b16 %v262
  %v1096 = vunpack.c.l.b16 %v263
  %v1097 = vunpack.c.h.b16 %v263
  %v1098 = vunpack.c.l.b16 %v264
  %v1099 = vunpack.c.h.b16 %v264
  %v1100 = vunpack.c.l.b16 %v265
  %v1101 = vunpack.c.h.b16 %v265
  %v1102 = vunpack.c.l.b16 %v266
  %v1103 = vunpack.c.h.b16 %v266
  %v1104 = vunpack.c.l.b16 %v267
  %v1105 = vunpack.c.h.b16 %v267
  %v1106 = vunpack.c.l.b16 %v268
  %v1107 = vunpack.c.h.b16 %v268
  %v1108 = vunpack.c.l.b16 %v269
  %v1109 = vunpack.c.h.b16 %v269
  %v1110 = vunpack.c.l.b16 %v270
  %v1111 = vunpack.c.h.b16 %v270
  %v1112 = vunpack.c.l.b16 %v271
  %v1113 = vunpack.c.h.b16 %v271
  %v1114 = vunpack.c.l.b16 %v272
  %v1115 = vunpack.c.h.b16 %v272
  %v1116 = vunpack.c.l.b16 %v273
  %v1117 = vunpack.c.h.b16 %v273
  %v1118 = vunpack.c.l.b16 %v274
  %v1119 = vunpack.c.h.b16 %v274
  %v1120 = vunpack.c.l.b16 %v275
  %v1121 = vunpack.c.h.b16 %v275
  %v1122 = vunpack.c.l.b16 %v276
  %v1123 = vunpack.c.h.b16 %v276
  %v1124 = vunpack.c.l.b16 %v277
  %v1125 = vunpack.c.h.b16 %v277
  %v1126 = vpack.c.b16 %v618, %v614
  %v1127 = vpack.c.b16 %v619, %v615
  %v1128 = vpack.c.b16 %v620, %v616
  %v1129 = vpack.c.b16 %v621, %v617
  %v1130 = vpack.c.b16 %v626, %v622
  %v1131 = vpack.c.b16 %v627, %v623
  %v1132 = vpack.c.b16 %v628, %v624
  %v1133 = vpack.c.b16 %v629, %v625
  %v1134 = vpack.c.b16 %v634, %v630
  %v1135 = vpack.c.b16 %v635, %v631
  %v1136 = vpack.c.b16 %v636, %v632
  %v1137 = vpack.c.b16 %v637, %v633
  %v1138 = vpack.c.b16 %v642, %v638
  %v1139 = vpack.c.b16 %v643, %v639
  %v1140 = vpack.c.b16 %v644, %v640
  %v1141 = vpack.c.b16 %v645, %v641
  %v1142 = vpack.c.b16 %v650, %v646
  %v1143 = vpack.c.b16 %v651, %v647
  %v1144 = vpack.c.b16 %v652, %v648
  %v1145 = vpack.c.b16 %v653, %v649
  %v1146 = vpack.c.b16 %v658, %v654
  %v1147 = vpack.c.b16 %v659, %v655
  %v1148 = vpack.c.b16 %v660, %v656
  %v1149 = vpack.c.b16 %v661, %v657
  %v1150 = vpack.c.b16 %v666, %v662
  %v1151 = vpack.c.b16 %v667, %v663
  %v1152 = vpack.c.b16 %v668, %v664
  %v1153 = vpack.c.b16 %v669, %v665
  %v1154 = vpack.c.b16 %v674, %v670
  %v1155 = vpack.c.b16 %v675, %v671
  %v1156 = vpack.c.b16 %v676, %v672
  %v1157 = vpack.c.b16 %v677, %v673
  %v1158 = vpack.c.b16 %v682, %v678
  %v1159 = vpack.c.b16 %v683, %v679
  %v1160 = vpack.c.b16 %v684, %v680
  %v1161 = vpack.c.b16 %v685, %v681
  %v1162 = vpack.c.b16 %v690, %v686
  %v1163 = vpack.c.b16 %v691, %v687
  %v1164 = vpack.c.b16 %v692, %v688
  %v1165 = vpack.c.b16 %v693, %v689
  %v1166 = vpack.c.b16 %v698, %v694
  %v1167 = vpack.c.b16 %v699, %v695
  %v1168 = vpack.c.b16 %v700, %v696
  %v1169 = vpack.c.b16 %v701, %v697
  %v1170 = vpack.c.b16 %v706, %v702
  %v1171 = vpack.c.b16 %v707, %v703
  %v1172 = vpack.c.b16 %v708, %v704
  %v1173 = vpack.c.b16 %v709, %v705
  %v1174 = vpack.c.b16 %v714, %v710
  %v1175 = vpack.c.b16 %v715, %v711
  %v1176 = vpack.c.b16 %v716, %v712
  %v1177 = vpack.c.b16 %v717, %v713
  %v1178 = vpack.c.b16 %v722, %v718
  %v1179 = vpack.c.b16 %v723, %v719
  %v1180 = vpack.c.b16 %v724, %v720
  %v1181 = vpack.c.b16 %v725, %v721
  %v1182 = vpack.c.b16 %v730, %v726
  %v1183 = vpack.c.b16 %v731, %v727
  %v1184 = vpack.c.b16 %v732, %v728
  %v1185 = vpack.c.b16 %v733, %v729
  %v1186 = vpack.c.b16 %v738, %v734
  %v1187 = vpack.c.b16 %v739, %v735
  %v1188 = vpack.c.b16 %v740, %v736
  %v1189 = vpack.c.b16 %v741, %v737
  %v1190 = vpack.c.b16 %v746, %v742
  %v1191 = vpack.c.b16 %v747, %v743
  %v1192 = vpack.c.b16 %v748, %v744
  %v1193 = vpack.c.b16 %v749, %v745
  %v1194 = vpack.c.b16 %v754, %v750
  %v1195 = vpack.c.b16 %v755, %v751
  %v1196 = vpack.c.b16 %v756, %v752
  %v1197 = vpack.c.b16 %v757, %v753
  %v1198 = vpack.c.b16 %v762, %v758
  %v1199 = vpack.c.b16 %v763, %v759
  %v1200 = vpack.c.b16 %v764, %v760
  %v1201 = vpack.c.b16 %v765, %v761
  %v1202 = vpack.c.b16 %v770, %v766
  %v1203 = vpack.c.b16 %v771, %v767
  %v1204 = vpack.c.b16 %v772, %v768
  %v1205 = vpack.c.b16 %v773, %v769
  %v1206 = vpack.c.b16 %v778, %v774
  %v1207 = vpack.c.b16 %v779, %v775
  %v1208 = vpack.c.b16 %v780, %v776
  %v1209 = vpack.c.b16 %v781, %v777
  %v1210 = vpack.c.b16 %v786, %v782
  %v1211 = vpack.c.b16 %v787, %v783
  %v1212 = vpack.c.b16 %v788, %v784
  %v1213 = vpack.c.b16 %v789, %v785
  %v1214 = vpack.c.b16 %v794, %v790
  %v1215 = vpack.c.b16 %v795, %v791
  %v1216 = vpack.c.b16 %v796, %v792
  %v1217 = vpack.c.b16 %v797, %v793
  %v1218 = vpack.c.b16 %v802, %v798
  %v1219 = vpack.c.b16 %v803, %v799
  %v1220 = vpack.c.b16 %v804, %v800
  %v1221 = vpack.c.b16 %v805, %v801
  %v1222 = vpack.c.b16 %v810, %v806
  %v1223 = vpack.c.b16 %v811, %v807
  %v1224 = vpack.c.b16 %v812, %v808
  %v1225 = vpack.c.b16 %v813, %v809
  %v1226 = vpack.c.b16 %v818, %v814
  %v1227 = vpack.c.b16 %v819, %v815
  %v1228 = vpack.c.b16 %v820, %v816
  %v1229 = vpack.c.b16 %v821, %v817
  %v1230 = vpack.c.b16 %v826, %v822
  %v1231 = vpack.c.b16 %v827, %v823
  %v1232 = vpack.c.b16 %v828, %v824
  %v1233 = vpack.c.b16 %v829, %v825
  %v1234 = vpack.c.b16 %v834, %v830
  %v1235 = vpack.c.b16 %v835, %v831
  %v1236 = vpack.c.b16 %v836, %v832
  %v1237 = vpack.c.b16 %v837, %v833
  %v1238 = vpack.c.b16 %v842, %v838
  %v1239 = vpack.c.b16 %v843, %v839
  %v1240 = vpack.c.b16 %v844, %v840
  %v1241 = vpack.c.b16 %v845, %v841
  %v1242 = vpack.c.b16 %v850, %v846
  %v1243 = vpack.c.b16 %v851, %v847
  %v1244 = vpack.c.b16 %v852, %v848
  %v1245 = vpack.c.b16 %v853, %v849
  %v1246 = vpack.c.b16 %v858, %v854
  %v1247 = vpack.c.b16 %v859, %v855
  %v1248 = vpack.c.b16 %v860, %v856
  %v1249 = vpack.c.b16 %v861, %v857
  %v1250 = vpack.c.b16 %v866, %v862
  %v1251 = vpack.c.b16 %v867, %v863
  %v1252 = vpack.c.b16 %v868, %v864
  %v1253 = vpack.c.b16 %v869, %v865
  %v1254 = vpack.c.b16 %v874, %v870
  %v1255 = vpack.c.b16 %v875, %v871
  %v1256 = vpack.c.b16 %v876, %v872
  %v1257 = vpack.c.b16 %v877, %v873
  %v1258 = vpack.c.b16 %v882, %v878
  %v1259 = vpack.c.b16 %v883, %v879
  %v1260 = vpack.c.b16 %v884, %v880
  %v1261 = vpack.c.b16 %v885, %v881
  %v1262 = vpack.c.b16 %v890, %v886
  %v1263 = vpack.c.b16 %v891, %v887
  %v1264 = vpack.c.b16 %v892, %v888
  %v1265 = vpack.c.b16 %v893, %v889
  %v1266 = vpack.c.b16 %v898, %v894
  %v1267 = vpack.c.b16 %v899, %v895
  %v1268 = vpack.c.b16 %v900, %v896
  %v1269 = vpack.c.b16 %v901, %v897
  %v1270 = vpack.c.b16 %v906, %v902
  %v1271 = vpack.c.b16 %v907, %v903
  %v1272 = vpack.c.b16 %v908, %v904
  %v1273 = vpack.c.b16 %v909, %v905
  %v1274 = vpack.c.b16 %v914, %v910
  %v1275 = vpack.c.b16 %v915, %v911
  %v1276 = vpack.c.b16 %v916, %v912
  %v1277 = vpack.c.b16 %v917, %v913
  %v1278 = vpack.c.b16 %v922, %v918
  %v1279 = vpack.c.b16 %v923, %v919
  %v1280 = vpack.c.b16 %v924, %v920
  %v1281 = vpack.c.b16 %v925, %v921
  %v1282 = vpack.c.b16 %v930, %v926
  %v1283 = vpack.c.b16 %v931, %v927
  %v1284 = vpack.c.b16 %v932, %v928
  %v1285 = vpack.c.b16 %v933, %v929
  %v1286 = vpack.c.b16 %v938, %v934
  %v1287 = vpack.c.b16 %v939, %v935
  %v1288 = vpack.c.b16 %v940, %v936
  %v1289 = vpack.c.b16 %v941, %v937
  %v1290 = vpack.c.b16 %v946, %v942
  %v1291 = vpack.c.b16 %v947, %v943
  %v1292 = vpack.c.b16 %v948, %v944
  %v1293 = vpack.c.b16 %v949, %v945
  %v1294 = vpack.c.b16 %v954, %v950
  %v1295 = vpack.c.b16 %v955, %v951
  %v1296 = vpack.c.b16 %v956, %v952
  %v1297 = vpack.c.b16 %v957, %v953
  %v1298 = vpack.c.b16 %v962, %v958
  %v1299 = vpack.c.b16 %v963, %v959
  %v1300 = vpack.c.b16 %v964, %v960
  %v1301 = vpack.c.b16 %v965, %v961
  %v1302 = vpack.c.b16 %v970, %v966
  %v1303 = vpack.c.b16 %v971, %v967
  %v1304 = vpack.c.b16 %v972, %v968
  %v1305 = vpack.c.b16 %v973, %v969
  %v1306 = vpack.c.b16 %v978, %v974
  %v1307 = vpack.c.b16 %v979, %v975
  %v1308 = vpack.c.b16 %v980, %v976
  %v1309 = vpack.c.b16 %v981, %v977
  %v1310 = vpack.c.b16 %v986, %v982
  %v1311 = vpack.c.b16 %v987, %v983
  %v1312 = vpack.c.b16 %v988, %v984
  %v1313 = vpack.c.b16 %v989, %v985
  %v1314 = vpack.c.b16 %v994, %v990
  %v1315 = vpack.c.b16 %v995, %v991
  %v1316 = vpack.c.b16 %v996, %v992
  %v1317 = vpack.c.b16 %v997, %v993
  %v1318 = vpack.c.b16 %v1002, %v998
  %v1319 = vpack.c.b16 %v1003, %v999
  %v1320 = vpack.c.b16 %v1004, %v1000
  %v1321 = vpack.c.b16 %v1005, %v1001
  %v1322 = vpack.c.b16 %v1010, %v1006
  %v1323 = vpack.c.b16 %v1011, %v1007
  %v1324 = vpack.c.b16 %v1012, %v1008
  %v1325 = vpack.c.b16 %v1013, %v1009
  %v1326 = vpack.c.b16 %v1018, %v1014
  %v1327 = vpack.c.b16 %v1019, %v1015
  %v1328 = vpack.c.b16 %v1020, %v1016
  %v1329 = vpack.c.b16 %v1021, %v1017
  %v1330 = vpack.c.b16 %v1026, %v1022
  %v1331 = vpack.c.b16 %v1027, %v1023
  %v1332 = vpack.c.b16 %v1028, %v1024
  %v1333 = vpack.c.b16 %v1029, %v1025
  %v1334 = vpack.c.b16 %v1034, %v1030
  %v1335 = vpack.c.b16 %v1035, %v1031
  %v1336 = vpack.c.b16 %v1036, %v1032
  %v1337 = vpack.c.b16 %v1037, %v1033
  %v1338 = vpack.c.b16 %v1042, %v1038
  %v1339 = vpack.c.b16 %v1043, %v1039
  %v1340 = vpack.c.b16 %v1044, %v1040
  %v1341 = vpack.c.b16 %v1045, %v1041
  %v1342 = vpack.c.b16 %v1050, %v1046
  %v1343 = vpack.c.b16 %v1051, %v1047
  %v1344 = vpack.c.b16 %v1052, %v1048
  %v1345 = vpack.c.b16 %v1053, %v1049
  %v1346 = vpack.c.b16 %v1058, %v1054
  %v1347 = vpack.c.b16 %v1059, %v1055
  %v1348 = vpack.c.b16 %v1060, %v1056
  %v1349 = vpack.c.b16 %v1061, %v1057
  %v1350 = vpack.c.b16 %v1066, %v1062
  %v1351 = vpack.c.b16 %v1067, %v1063
  %v1352 = vpack.c.b16 %v1068, %v1064
  %v1353 = vpack.c.b16 %v1069, %v1065
  %v1354 = vpack.c.b16 %v1074, %v1070
  %v1355 = vpack.c.b16 %v1075, %v1071
  %v1356 = vpack.c.b16 %v1076, %v1072
  %v1357 = vpack.c.b16 %v1077, %v1073
  %v1358 = vpack.c.b16 %v1082, %v1078
  %v1359 = vpack.c.b16 %v1083, %v1079
  %v1360 = vpack.c.b16 %v1084, %v1080
  %v1361 = vpack.c.b16 %v1085, %v1081
  %v1362 = vpack.c.b16 %v1090, %v1086
  %v1363 = vpack.c.b16 %v1091, %v1087
  %v1364 = vpack.c.b16 %v1092, %v1088
  %v1365 = vpack.c.b16 %v1093, %v1089
  %v1366 = vpack.c.b16 %v1098, %v1094
  %v1367 = vpack.c.b16 %v1099, %v1095
  %v1368 = vpack.c.b16 %v1100, %v1096
  %v1369 = vpack.c.b16 %v1101, %v1097
  %v1370 = vpack.c.b16 %v1106, %v1102
  %v1371 = vpack.c.b16 %v1107, %v1103
  %v1372 = vpack.c.b16 %v1108, %v1104
  %v1373 = vpack.c.b16 %v1109, %v1105
  %v1374 = vpack.c.b16 %v1114, %v1110
  %v1375 = vpack.c.b16 %v1115, %v1111
  %v1376 = vpack.c.b16 %v1116, %v1112
  %v1377 = vpack.c.b16 %v1117, %v1113
  %v1378 = vpack.c.b16 %v1122, %v1118
  %v1379 = vpack.c.b16 %v1123, %v1119
  %v1380 = vpack.c.b16 %v1124, %v1120
  %v1381 = vpack.c.b16 %v1125, %v1121
  %1638 = vmatprep.subr.bf16.mxu0 %v1127
  %1639 = vmatpush1.bf16.msra.mxu0 %v1126
  %1640 = vmatprep.subr.bf16.mxu0 %v1131
  %1641 = vmatpush1.bf16.msra.mxu0 %v1130
  %1642 = vmatprep.subr.bf16.mxu0 %v1135
  %1643 = vmatpush1.bf16.msra.mxu0 %v1134
  %1644 = vmatprep.subr.bf16.mxu0 %v1139
  %1645 = vmatpush1.bf16.msra.mxu0 %v1138
  %1646 = vmatprep.subr.bf16.mxu0 %v1143
  %1647 = vmatpush1.bf16.msra.mxu0 %v1142
  %1648 = vmatprep.subr.bf16.mxu0 %v1147
  %1649 = vmatpush1.bf16.msra.mxu0 %v1146
  %1650 = vmatprep.subr.bf16.mxu0 %v1151
  %1651 = vmatpush1.bf16.msra.mxu0 %v1150
  %1652 = vmatprep.subr.bf16.mxu0 %v1155
  %1653 = vmatpush1.bf16.msra.mxu0 %v1154
  %1654 = vmatprep.subr.bf16.mxu0 %v1159
  %1655 = vmatpush1.bf16.msra.mxu0 %v1158
  %1656 = vmatprep.subr.bf16.mxu0 %v1163
  %1657 = vmatpush1.bf16.msra.mxu0 %v1162
  %1658 = vmatprep.subr.bf16.mxu0 %v1167
  %1659 = vmatpush1.bf16.msra.mxu0 %v1166
  %1660 = vmatprep.subr.bf16.mxu0 %v1171
  %1661 = vmatpush1.bf16.msra.mxu0 %v1170
  %1662 = vmatprep.subr.bf16.mxu0 %v1175
  %1663 = vmatpush1.bf16.msra.mxu0 %v1174
  %1664 = vmatprep.subr.bf16.mxu0 %v1179
  %1665 = vmatpush1.bf16.msra.mxu0 %v1178
  %1666 = vmatprep.subr.bf16.mxu0 %v1183
  %1667 = vmatpush1.bf16.msra.mxu0 %v1182
  %1668 = vmatprep.subr.bf16.mxu0 %v1187
  %1669 = vmatpush1.bf16.msra.mxu0 %v1186
  %1670 = vmatprep.mubr.bf16.mxu0 %v338
  %1671 = vmatmul.mubr.bf16.gmra.mrb[0].mxu0 %v324
  %v1672 = vpop.f32.mrb[0].mxu0
  %v1673 = vadd.f32 %v283, %v1672
  %v1674 = vpop.f32.mrb[0].mxu0
  %v1675 = vadd.f32 %v287, %v1674
  %v1676 = vpop.f32.mrb[0].mxu0
  %v1677 = vpop.f32.mrb[0].mxu0
  %1678 = vdwg.mxu0
  %1679 = vmatprep.subr.bf16.mxu0 %v1191
  %1680 = vmatpush1.bf16.msra.mxu0 %v1190
  %1681 = vmatprep.subr.bf16.mxu0 %v1195
  %1682 = vmatpush1.bf16.msra.mxu0 %v1194
  %1683 = vmatprep.subr.bf16.mxu0 %v1199
  %1684 = vmatpush1.bf16.msra.mxu0 %v1198
  %1685 = vmatprep.subr.bf16.mxu0 %v1203
  %1686 = vmatpush1.bf16.msra.mxu0 %v1202
  %1687 = vmatprep.subr.bf16.mxu0 %v1207
  %1688 = vmatpush1.bf16.msra.mxu0 %v1206
  %1689 = vmatprep.subr.bf16.mxu0 %v1211
  %1690 = vmatpush1.bf16.msra.mxu0 %v1210
  %1691 = vmatprep.subr.bf16.mxu0 %v1215
  %1692 = vmatpush1.bf16.msra.mxu0 %v1214
  %1693 = vmatprep.subr.bf16.mxu0 %v1219
  %1694 = vmatpush1.bf16.msra.mxu0 %v1218
  %1695 = vmatprep.subr.bf16.mxu0 %v1223
  %1696 = vmatpush1.bf16.msra.mxu0 %v1222
  %1697 = vmatprep.subr.bf16.mxu0 %v1227
  %1698 = vmatpush1.bf16.msra.mxu0 %v1226
  %1699 = vmatprep.subr.bf16.mxu0 %v1231
  %1700 = vmatpush1.bf16.msra.mxu0 %v1230
  %1701 = vmatprep.subr.bf16.mxu0 %v1235
  %1702 = vmatpush1.bf16.msra.mxu0 %v1234
  %1703 = vmatprep.subr.bf16.mxu0 %v1239
  %1704 = vmatpush1.bf16.msra.mxu0 %v1238
  %1705 = vmatprep.subr.bf16.mxu0 %v1243
  %1706 = vmatpush1.bf16.msra.mxu0 %v1242
  %1707 = vmatprep.subr.bf16.mxu0 %v1247
  %1708 = vmatpush1.bf16.msra.mxu0 %v1246
  %1709 = vmatprep.subr.bf16.mxu0 %v1251
  %1710 = vmatpush1.bf16.msra.mxu0 %v1250
  %1711 = vmatprep.mubr.bf16.mxu0 %v348
  %1712 = vmatmul.mubr.bf16.gmra.mrb[0].mxu0 %v346
  %v1713 = vpop.f32.mrb[0].mxu0
  %v1714 = vadd.f32 %v1673, %v1713
  %v1715 = vpop.f32.mrb[0].mxu0
  %v1716 = vadd.f32 %v1675, %v1715
  %v1717 = vpop.f32.mrb[0].mxu0
  %v1718 = vpop.f32.mrb[0].mxu0
  %1719 = vdwg.mxu0
  %1720 = vmatprep.subr.bf16.mxu0 %v1255
  %1721 = vmatpush1.bf16.msra.mxu0 %v1254
  %1722 = vmatprep.subr.bf16.mxu0 %v1259
  %1723 = vmatpush1.bf16.msra.mxu0 %v1258
  %1724 = vmatprep.subr.bf16.mxu0 %v1263
  %1725 = vmatpush1.bf16.msra.mxu0 %v1262
  %1726 = vmatprep.subr.bf16.mxu0 %v1267
  %1727 = vmatpush1.bf16.msra.mxu0 %v1266
  %1728 = vmatprep.subr.bf16.mxu0 %v1271
  %1729 = vmatpush1.bf16.msra.mxu0 %v1270
  %1730 = vmatprep.subr.bf16.mxu0 %v1275
  %1731 = vmatpush1.bf16.msra.mxu0 %v1274
  %1732 = vmatprep.subr.bf16.mxu0 %v1279
  %1733 = vmatpush1.bf16.msra.mxu0 %v1278
  %1734 = vmatprep.subr.bf16.mxu0 %v1283
  %1735 = vmatpush1.bf16.msra.mxu0 %v1282
  %1736 = vmatprep.subr.bf16.mxu0 %v1287
  %1737 = vmatpush1.bf16.msra.mxu0 %v1286
  %1738 = vmatprep.subr.bf16.mxu0 %v1291
  %1739 = vmatpush1.bf16.msra.mxu0 %v1290
  %1740 = vmatprep.subr.bf16.mxu0 %v1295
  %1741 = vmatpush1.bf16.msra.mxu0 %v1294
  %1742 = vmatprep.subr.bf16.mxu0 %v1299
  %1743 = vmatpush1.bf16.msra.mxu0 %v1298
  %1744 = vmatprep.subr.bf16.mxu0 %v1303
  %1745 = vmatpush1.bf16.msra.mxu0 %v1302
  %1746 = vmatprep.subr.bf16.mxu0 %v1307
  %1747 = vmatpush1.bf16.msra.mxu0 %v1306
  %1748 = vmatprep.subr.bf16.mxu0 %v1311
  %1749 = vmatpush1.bf16.msra.mxu0 %v1310
  %1750 = vmatprep.subr.bf16.mxu0 %v1315
  %1751 = vmatpush1.bf16.msra.mxu0 %v1314
  %1752 = vmatprep.mubr.bf16.mxu0 %v345
  %1753 = vmatmul.mubr.bf16.gmra.mrb[0].mxu0 %v331
  %v1754 = vpop.f32.mrb[0].mxu0
  %v1755 = vadd.f32 %v1714, %v1754
  %v1756 = vpop.f32.mrb[0].mxu0
  %v1757 = vadd.f32 %v1716, %v1756
  %v1758 = vpop.f32.mrb[0].mxu0
  %v1759 = vpop.f32.mrb[0].mxu0
  %1760 = vdwg.mxu0
  %1761 = vmatprep.subr.bf16.mxu0 %v1319
  %1762 = vmatpush1.bf16.msra.mxu0 %v1318
  %1763 = vmatprep.subr.bf16.mxu0 %v1323
  %1764 = vmatpush1.bf16.msra.mxu0 %v1322
  %1765 = vmatprep.subr.bf16.mxu0 %v1327
  %1766 = vmatpush1.bf16.msra.mxu0 %v1326
  %1767 = vmatprep.subr.bf16.mxu0 %v1331
  %1768 = vmatpush1.bf16.msra.mxu0 %v1330
  %1769 = vmatprep.subr.bf16.mxu0 %v1335
  %1770 = vmatpush1.bf16.msra.mxu0 %v1334
  %1771 = vmatprep.subr.bf16.mxu0 %v1339
  %1772 = vmatpush1.bf16.msra.mxu0 %v1338
  %1773 = vmatprep.subr.bf16.mxu0 %v1343
  %1774 = vmatpush1.bf16.msra.mxu0 %v1342
  %1775 = vmatprep.subr.bf16.mxu0 %v1347
  %1776 = vmatpush1.bf16.msra.mxu0 %v1346
  %1777 = vmatprep.subr.bf16.mxu0 %v1351
  %1778 = vmatpush1.bf16.msra.mxu0 %v1350
  %1779 = vmatprep.subr.bf16.mxu0 %v1355
  %1780 = vmatpush1.bf16.msra.mxu0 %v1354
  %1781 = vmatprep.subr.bf16.mxu0 %v1359
  %1782 = vmatpush1.bf16.msra.mxu0 %v1358
  %1783 = vmatprep.subr.bf16.mxu0 %v1363
  %1784 = vmatpush1.bf16.msra.mxu0 %v1362
  %1785 = vmatprep.subr.bf16.mxu0 %v1367
  %1786 = vmatpush1.bf16.msra.mxu0 %v1366
  %1787 = vmatprep.subr.bf16.mxu0 %v1371
  %1788 = vmatpush1.bf16.msra.mxu0 %v1370
  %1789 = vmatprep.subr.bf16.mxu0 %v1375
  %1790 = vmatpush1.bf16.msra.mxu0 %v1374
  %1791 = vmatprep.subr.bf16.mxu0 %v1379
  %1792 = vmatpush1.bf16.msra.mxu0 %v1378
  %1793 = vmatprep.mubr.bf16.mxu0 %v349
  %1794 = vmatmul.mubr.bf16.gmra.mrb[0].mxu0 %v347
  %v1795 = vpop.f32.mrb[0].mxu0
  %v1796 = vadd.f32 %v1755, %v1795
  %v1797 = vpop.f32.mrb[0].mxu0
  %v1798 = vadd.f32 %v1757, %v1797
  %v1799 = vpop.f32.mrb[0].mxu0
  %v1800 = vpop.f32.mrb[0].mxu0
  %1801 = vdwg.mxu0
  %1802 = vmatprep.subr.bf16.mxu0 %v1129
  %1803 = vmatpush1.bf16.msra.mxu0 %v1128
  %1804 = vmatprep.subr.bf16.mxu0 %v1133
  %1805 = vmatpush1.bf16.msra.mxu0 %v1132
  %1806 = vmatprep.subr.bf16.mxu0 %v1137
  %1807 = vmatpush1.bf16.msra.mxu0 %v1136
  %1808 = vmatprep.subr.bf16.mxu0 %v1141
  %1809 = vmatpush1.bf16.msra.mxu0 %v1140
  %1810 = vmatprep.subr.bf16.mxu0 %v1145
  %1811 = vmatpush1.bf16.msra.mxu0 %v1144
  %1812 = vmatprep.subr.bf16.mxu0 %v1149
  %1813 = vmatpush1.bf16.msra.mxu0 %v1148
  %1814 = vmatprep.subr.bf16.mxu0 %v1153
  %1815 = vmatpush1.bf16.msra.mxu0 %v1152
  %1816 = vmatprep.subr.bf16.mxu0 %v1157
  %1817 = vmatpush1.bf16.msra.mxu0 %v1156
  %1818 = vmatprep.subr.bf16.mxu0 %v1161
  %1819 = vmatpush1.bf16.msra.mxu0 %v1160
  %1820 = vmatprep.subr.bf16.mxu0 %v1165
  %1821 = vmatpush1.bf16.msra.mxu0 %v1164
  %1822 = vmatprep.subr.bf16.mxu0 %v1169
  %1823 = vmatpush1.bf16.msra.mxu0 %v1168
  %1824 = vmatprep.subr.bf16.mxu0 %v1173
  %1825 = vmatpush1.bf16.msra.mxu0 %v1172
  %1826 = vmatprep.subr.bf16.mxu0 %v1177
  %1827 = vmatpush1.bf16.msra.mxu0 %v1176
  %1828 = vmatprep.subr.bf16.mxu0 %v1181
  %1829 = vmatpush1.bf16.msra.mxu0 %v1180
  %1830 = vmatprep.subr.bf16.mxu0 %v1185
  %1831 = vmatpush1.bf16.msra.mxu0 %v1184
  %1832 = vmatprep.subr.bf16.mxu0 %v1189
  %1833 = vmatpush1.bf16.msra.mxu0 %v1188
  %1834 = vmatprep.mubr.bf16.mxu0 %v338
  %1835 = vmatmul.mubr.bf16.gmra.mrb[0].mxu0 %v324
  %v1836 = vpop.f32.mrb[0].mxu0
  %v1837 = vadd.f32 %v291, %v1836
  %v1838 = vpop.f32.mrb[0].mxu0
  %v1839 = vadd.f32 %v295, %v1838
  %v1840 = vpop.f32.mrb[0].mxu0
  %v1841 = vpop.f32.mrb[0].mxu0
  %1842 = vdwg.mxu0
  %1843 = vmatprep.subr.bf16.mxu0 %v1193
  %1844 = vmatpush1.bf16.msra.mxu0 %v1192
  %1845 = vmatprep.subr.bf16.mxu0 %v1197
  %1846 = vmatpush1.bf16.msra.mxu0 %v1196
  %1847 = vmatprep.subr.bf16.mxu0 %v1201
  %1848 = vmatpush1.bf16.msra.mxu0 %v1200
  %1849 = vmatprep.subr.bf16.mxu0 %v1205
  %1850 = vmatpush1.bf16.msra.mxu0 %v1204
  %1851 = vmatprep.subr.bf16.mxu0 %v1209
  %1852 = vmatpush1.bf16.msra.mxu0 %v1208
  %1853 = vmatprep.subr.bf16.mxu0 %v1213
  %1854 = vmatpush1.bf16.msra.mxu0 %v1212
  %1855 = vmatprep.subr.bf16.mxu0 %v1217
  %1856 = vmatpush1.bf16.msra.mxu0 %v1216
  %1857 = vmatprep.subr.bf16.mxu0 %v1221
  %1858 = vmatpush1.bf16.msra.mxu0 %v1220
  %1859 = vmatprep.subr.bf16.mxu0 %v1225
  %1860 = vmatpush1.bf16.msra.mxu0 %v1224
  %1861 = vmatprep.subr.bf16.mxu0 %v1229
  %1862 = vmatpush1.bf16.msra.mxu0 %v1228
  %1863 = vmatprep.subr.bf16.mxu0 %v1233
  %1864 = vmatpush1.bf16.msra.mxu0 %v1232
  %1865 = vmatprep.subr.bf16.mxu0 %v1237
  %1866 = vmatpush1.bf16.msra.mxu0 %v1236
  %1867 = vmatprep.subr.bf16.mxu0 %v1241
  %1868 = vmatpush1.bf16.msra.mxu0 %v1240
  %1869 = vmatprep.subr.bf16.mxu0 %v1245
  %1870 = vmatpush1.bf16.msra.mxu0 %v1244
  %1871 = vmatprep.subr.bf16.mxu0 %v1249
  %1872 = vmatpush1.bf16.msra.mxu0 %v1248
  %1873 = vmatprep.subr.bf16.mxu0 %v1253
  %1874 = vmatpush1.bf16.msra.mxu0 %v1252
  %1875 = vmatprep.mubr.bf16.mxu0 %v348
  %1876 = vmatmul.mubr.bf16.gmra.mrb[0].mxu0 %v346
  %v1877 = vpop.f32.mrb[0].mxu0
  %v1878 = vadd.f32 %v1837, %v1877
  %v1879 = vpop.f32.mrb[0].mxu0
  %v1880 = vadd.f32 %v1839, %v1879
  %v1881 = vpop.f32.mrb[0].mxu0
  %v1882 = vpop.f32.mrb[0].mxu0
  %1883 = vdwg.mxu0
  %1884 = vmatprep.subr.bf16.mxu0 %v1257
  %1885 = vmatpush1.bf16.msra.mxu0 %v1256
  %1886 = vmatprep.subr.bf16.mxu0 %v1261
  %1887 = vmatpush1.bf16.msra.mxu0 %v1260
  %1888 = vmatprep.subr.bf16.mxu0 %v1265
  %1889 = vmatpush1.bf16.msra.mxu0 %v1264
  %1890 = vmatprep.subr.bf16.mxu0 %v1269
  %1891 = vmatpush1.bf16.msra.mxu0 %v1268
  %1892 = vmatprep.subr.bf16.mxu0 %v1273
  %1893 = vmatpush1.bf16.msra.mxu0 %v1272
  %1894 = vmatprep.subr.bf16.mxu0 %v1277
  %1895 = vmatpush1.bf16.msra.mxu0 %v1276
  %1896 = vmatprep.subr.bf16.mxu0 %v1281
  %1897 = vmatpush1.bf16.msra.mxu0 %v1280
  %1898 = vmatprep.subr.bf16.mxu0 %v1285
  %1899 = vmatpush1.bf16.msra.mxu0 %v1284
  %1900 = vmatprep.subr.bf16.mxu0 %v1289
  %1901 = vmatpush1.bf16.msra.mxu0 %v1288
  %1902 = vmatprep.subr.bf16.mxu0 %v1293
  %1903 = vmatpush1.bf16.msra.mxu0 %v1292
  %1904 = vmatprep.subr.bf16.mxu0 %v1297
  %1905 = vmatpush1.bf16.msra.mxu0 %v1296
  %1906 = vmatprep.subr.bf16.mxu0 %v1301
  %1907 = vmatpush1.bf16.msra.mxu0 %v1300
  %1908 = vmatprep.subr.bf16.mxu0 %v1305
  %1909 = vmatpush1.bf16.msra.mxu0 %v1304
  %1910 = vmatprep.subr.bf16.mxu0 %v1309
  %1911 = vmatpush1.bf16.msra.mxu0 %v1308
  %1912 = vmatprep.subr.bf16.mxu0 %v1313
  %1913 = vmatpush1.bf16.msra.mxu0 %v1312
  %1914 = vmatprep.subr.bf16.mxu0 %v1317
  %1915 = vmatpush1.bf16.msra.mxu0 %v1316
  %1916 = vmatprep.mubr.bf16.mxu0 %v345
  %1917 = vmatmul.mubr.bf16.gmra.mrb[0].mxu0 %v331
  %v1918 = vpop.f32.mrb[0].mxu0
  %v1919 = vadd.f32 %v1878, %v1918
  %v1920 = vpop.f32.mrb[0].mxu0
  %v1921 = vadd.f32 %v1880, %v1920
  %v1922 = vpop.f32.mrb[0].mxu0
  %v1923 = vpop.f32.mrb[0].mxu0
  %1924 = vdwg.mxu0
  %1925 = vmatprep.subr.bf16.mxu0 %v1321
  %1926 = vmatpush1.bf16.msra.mxu0 %v1320
  %1927 = vmatprep.subr.bf16.mxu0 %v1325
  %1928 = vmatpush1.bf16.msra.mxu0 %v1324
  %1929 = vmatprep.subr.bf16.mxu0 %v1329
  %1930 = vmatpush1.bf16.msra.mxu0 %v1328
  %1931 = vmatprep.subr.bf16.mxu0 %v1333
  %1932 = vmatpush1.bf16.msra.mxu0 %v1332
  %1933 = vmatprep.subr.bf16.mxu0 %v1337
  %1934 = vmatpush1.bf16.msra.mxu0 %v1336
  %1935 = vmatprep.subr.bf16.mxu0 %v1341
  %1936 = vmatpush1.bf16.msra.mxu0 %v1340
  %1937 = vmatprep.subr.bf16.mxu0 %v1345
  %1938 = vmatpush1.bf16.msra.mxu0 %v1344
  %1939 = vmatprep.subr.bf16.mxu0 %v1349
  %1940 = vmatpush1.bf16.msra.mxu0 %v1348
  %1941 = vmatprep.subr.bf16.mxu0 %v1353
  %1942 = vmatpush1.bf16.msra.mxu0 %v1352
  %1943 = vmatprep.subr.bf16.mxu0 %v1357
  %1944 = vmatpush1.bf16.msra.mxu0 %v1356
  %1945 = vmatprep.subr.bf16.mxu0 %v1361
  %1946 = vmatpush1.bf16.msra.mxu0 %v1360
  %1947 = vmatprep.subr.bf16.mxu0 %v1365
  %1948 = vmatpush1.bf16.msra.mxu0 %v1364
  %1949 = vmatprep.subr.bf16.mxu0 %v1369
  %1950 = vmatpush1.bf16.msra.mxu0 %v1368
  %1951 = vmatprep.subr.bf16.mxu0 %v1373
  %1952 = vmatpush1.bf16.msra.mxu0 %v1372
  %1953 = vmatprep.subr.bf16.mxu0 %v1377
  %1954 = vmatpush1.bf16.msra.mxu0 %v1376
  %1955 = vmatprep.subr.bf16.mxu0 %v1381
  %1956 = vmatpush1.bf16.msra.mxu0 %v1380
  %1957 = vmatprep.mubr.bf16.mxu0 %v349
  %1958 = vmatmul.mubr.bf16.gmra.mrb[0].mxu0 %v347
  %v1959 = vpop.f32.mrb[0].mxu0
  %v1960 = vadd.f32 %v1919, %v1959
  %v1961 = vpop.f32.mrb[0].mxu0
  %v1962 = vadd.f32 %v1921, %v1961
  %v1963 = vpop.f32.mrb[0].mxu0
  %v1964 = vpop.f32.mrb[0].mxu0
  %1965 = vdwg.mxu0
  %v1966 = vmax.f32 %v1796, 0.0
  %v1967 = vmax.f32 %v1798, 0.0
  %v1968 = vmax.f32 %v1960, 0.0
  %v1969 = vmax.f32 %v1962, 0.0
  %v1970 = vpack.c.bf16 %v1966, %v1966
  %v1971 = vpack.c.bf16 %v1967, %v1967
  %v1972 = vpack.c.bf16 %v1968, %v1968
  %v1973 = vpack.c.bf16 %v1969, %v1969
  %v1974 = vld [vmem:[%s3] sm:$0xf]
  %v1975 = vld [vmem:[%s3 + $0x4] sm:$0xf]
  %v1976 = vld [vmem:[%s3 + $0x8] sm:$0xf]
  %v1977 = vld [vmem:[%s3 + $0xc] sm:$0xf]
  %v1978 = vld [vmem:[%s3 + $0x10] sm:$0xf]
  %v1979 = vld [vmem:[%s3 + $0x14] sm:$0xf]
  %v1980 = vld [vmem:[%s3 + $0x18] sm:$0xf]
  %v1981 = vld [vmem:[%s3 + $0x1c] sm:$0xf]
  %v1982 = vld [vmem:[%s3 + $0x20] sm:$0xf]
  %v1983 = vld [vmem:[%s3 + $0x24] sm:$0xf]
  %v1984 = vld [vmem:[%s3 + $0x28] sm:$0xf]
  %v1985 = vld [vmem:[%s3 + $0x2c] sm:$0xf]
  %v1986 = vld [vmem:[%s3 + $0x30] sm:$0xf]
  %v1987 = vld [vmem:[%s3 + $0x34] sm:$0xf]
  %v1988 = vld [vmem:[%s3 + $0x38] sm:$0xf]
  %v1989 = vld [vmem:[%s3 + $0x3c] sm:$0xf]
  %v1990 = vld [vmem:[%s3 + $0x40] sm:$0xf]
  %v1991 = vld [vmem:[%s3 + $0x44] sm:$0xf]
  %v1992 = vld [vmem:[%s3 + $0x48] sm:$0xf]
  %v1993 = vld [vmem:[%s3 + $0x4c] sm:$0xf]
  %v1994 = vld [vmem:[%s3 + $0x50] sm:$0xf]
  %v1995 = vld [vmem:[%s3 + $0x54] sm:$0xf]
  %v1996 = vld [vmem:[%s3 + $0x58] sm:$0xf]
  %v1997 = vld [vmem:[%s3 + $0x5c] sm:$0xf]
  %v1998 = vld [vmem:[%s3 + $0x60] sm:$0xf]
  %v1999 = vld [vmem:[%s3 + $0x64] sm:$0xf]
  %v2000 = vld [vmem:[%s3 + $0x68] sm:$0xf]
  %v2001 = vld [vmem:[%s3 + $0x6c] sm:$0xf]
  %v2002 = vld [vmem:[%s3 + $0x70] sm:$0xf]
  %v2003 = vld [vmem:[%s3 + $0x74] sm:$0xf]
  %v2004 = vld [vmem:[%s3 + $0x78] sm:$0xf]
  %v2005 = vld [vmem:[%s3 + $0x7c] sm:$0xf]
  %v2006 = vld [vmem:[%s3 + $0x80] sm:$0xf]
  %v2007 = vld [vmem:[%s3 + $0x84] sm:$0xf]
  %v2008 = vld [vmem:[%s3 + $0x88] sm:$0xf]
  %v2009 = vld [vmem:[%s3 + $0x8c] sm:$0xf]
  %v2010 = vld [vmem:[%s3 + $0x90] sm:$0xf]
  %v2011 = vld [vmem:[%s3 + $0x94] sm:$0xf]
  %v2012 = vld [vmem:[%s3 + $0x98] sm:$0xf]
  %v2013 = vld [vmem:[%s3 + $0x9c] sm:$0xf]
  %v2014 = vld [vmem:[%s3 + $0xa0] sm:$0xf]
  %v2015 = vld [vmem:[%s3 + $0xa4] sm:$0xf]
  %v2016 = vld [vmem:[%s3 + $0xa8] sm:$0xf]
  %v2017 = vld [vmem:[%s3 + $0xac] sm:$0xf]
  %v2018 = vld [vmem:[%s3 + $0xb0] sm:$0xf]
  %v2019 = vld [vmem:[%s3 + $0xb4] sm:$0xf]
  %v2020 = vld [vmem:[%s3 + $0xb8] sm:$0xf]
  %v2021 = vld [vmem:[%s3 + $0xbc] sm:$0xf]
  %v2022 = vld [vmem:[%s3 + $0xc0] sm:$0xf]
  %v2023 = vld [vmem:[%s3 + $0xc4] sm:$0xf]
  %v2024 = vld [vmem:[%s3 + $0xc8] sm:$0xf]
  %v2025 = vld [vmem:[%s3 + $0xcc] sm:$0xf]
  %v2026 = vld [vmem:[%s3 + $0xd0] sm:$0xf]
  %v2027 = vld [vmem:[%s3 + $0xd4] sm:$0xf]
  %v2028 = vld [vmem:[%s3 + $0xd8] sm:$0xf]
  %v2029 = vld [vmem:[%s3 + $0xdc] sm:$0xf]
  %v2030 = vld [vmem:[%s3 + $0xe0] sm:$0xf]
  %v2031 = vld [vmem:[%s3 + $0xe4] sm:$0xf]
  %v2032 = vld [vmem:[%s3 + $0xe8] sm:$0xf]
  %v2033 = vld [vmem:[%s3 + $0xec] sm:$0xf]
  %v2034 = vld [vmem:[%s3 + $0xf0] sm:$0xf]
  %v2035 = vld [vmem:[%s3 + $0xf4] sm:$0xf]
  %v2036 = vld [vmem:[%s3 + $0xf8] sm:$0xf]
  %v2037 = vld [vmem:[%s3 + $0xfc] sm:$0xf]
  %v2038 = vld [vmem:[%s4] sm:$0x1]
  %v2040 = vlaneseq
  %v2041 = vshrl.u32 %v2040, 7
  %v2042 = vsub.s32 0, %v2041
  %v2043 = vrot.slane %v2038, %v2042
  %v2109 = vunpack.c.l.b16 %v1974
  %v2110 = vunpack.c.l.b16 %v1975
  %v2111 = vunpack.c.l.b16 %v1976
  %v2112 = vunpack.c.l.b16 %v1977
  %v2113 = vunpack.c.l.b16 %v1978
  %v2114 = vunpack.c.l.b16 %v1979
  %v2115 = vunpack.c.l.b16 %v1980
  %v2116 = vunpack.c.l.b16 %v1981
  %v2117 = vunpack.c.l.b16 %v1982
  %v2118 = vunpack.c.l.b16 %v1983
  %v2119 = vunpack.c.l.b16 %v1984
  %v2120 = vunpack.c.l.b16 %v1985
  %v2121 = vunpack.c.l.b16 %v1986
  %v2122 = vunpack.c.l.b16 %v1987
  %v2123 = vunpack.c.l.b16 %v1988
  %v2124 = vunpack.c.l.b16 %v1989
  %v2125 = vunpack.c.l.b16 %v1990
  %v2126 = vunpack.c.l.b16 %v1991
  %v2127 = vunpack.c.l.b16 %v1992
  %v2128 = vunpack.c.l.b16 %v1993
  %v2129 = vunpack.c.l.b16 %v1994
  %v2130 = vunpack.c.l.b16 %v1995
  %v2131 = vunpack.c.l.b16 %v1996
  %v2132 = vunpack.c.l.b16 %v1997
  %v2133 = vunpack.c.l.b16 %v1998
  %v2134 = vunpack.c.l.b16 %v1999
  %v2135 = vunpack.c.l.b16 %v2000
  %v2136 = vunpack.c.l.b16 %v2001
  %v2137 = vunpack.c.l.b16 %v2002
  %v2138 = vunpack.c.l.b16 %v2003
  %v2139 = vunpack.c.l.b16 %v2004
  %v2140 = vunpack.c.l.b16 %v2005
  %v2141 = vunpack.c.l.b16 %v2006
  %v2142 = vunpack.c.l.b16 %v2007
  %v2143 = vunpack.c.l.b16 %v2008
  %v2144 = vunpack.c.l.b16 %v2009
  %v2145 = vunpack.c.l.b16 %v2010
  %v2146 = vunpack.c.l.b16 %v2011
  %v2147 = vunpack.c.l.b16 %v2012
  %v2148 = vunpack.c.l.b16 %v2013
  %v2149 = vunpack.c.l.b16 %v2014
  %v2150 = vunpack.c.l.b16 %v2015
  %v2151 = vunpack.c.l.b16 %v2016
  %v2152 = vunpack.c.l.b16 %v2017
  %v2153 = vunpack.c.l.b16 %v2018
  %v2154 = vunpack.c.l.b16 %v2019
  %v2155 = vunpack.c.l.b16 %v2020
  %v2156 = vunpack.c.l.b16 %v2021
  %v2157 = vunpack.c.l.b16 %v2022
  %v2158 = vunpack.c.l.b16 %v2023
  %v2159 = vunpack.c.l.b16 %v2024
  %v2160 = vunpack.c.l.b16 %v2025
  %v2161 = vunpack.c.l.b16 %v2026
  %v2162 = vunpack.c.l.b16 %v2027
  %v2163 = vunpack.c.l.b16 %v2028
  %v2164 = vunpack.c.l.b16 %v2029
  %v2165 = vunpack.c.l.b16 %v2030
  %v2166 = vunpack.c.l.b16 %v2031
  %v2167 = vunpack.c.l.b16 %v2032
  %v2168 = vunpack.c.l.b16 %v2033
  %v2169 = vunpack.c.l.b16 %v2034
  %v2170 = vunpack.c.l.b16 %v2035
  %v2171 = vunpack.c.l.b16 %v2036
  %v2172 = vunpack.c.l.b16 %v2037
  %v2173 = vpack.c.b16 %v2110, %v2109
  %v2174 = vpack.c.b16 %v2112, %v2111
  %v2175 = vpack.c.b16 %v2114, %v2113
  %v2176 = vpack.c.b16 %v2116, %v2115
  %v2177 = vpack.c.b16 %v2118, %v2117
  %v2178 = vpack.c.b16 %v2120, %v2119
  %v2179 = vpack.c.b16 %v2122, %v2121
  %v2180 = vpack.c.b16 %v2124, %v2123
  %v2181 = vpack.c.b16 %v2126, %v2125
  %v2182 = vpack.c.b16 %v2128, %v2127
  %v2183 = vpack.c.b16 %v2130, %v2129
  %v2184 = vpack.c.b16 %v2132, %v2131
  %v2185 = vpack.c.b16 %v2134, %v2133
  %v2186 = vpack.c.b16 %v2136, %v2135
  %v2187 = vpack.c.b16 %v2138, %v2137
  %v2188 = vpack.c.b16 %v2140, %v2139
  %v2189 = vpack.c.b16 %v2142, %v2141
  %v2190 = vpack.c.b16 %v2144, %v2143
  %v2191 = vpack.c.b16 %v2146, %v2145
  %v2192 = vpack.c.b16 %v2148, %v2147
  %v2193 = vpack.c.b16 %v2150, %v2149
  %v2194 = vpack.c.b16 %v2152, %v2151
  %v2195 = vpack.c.b16 %v2154, %v2153
  %v2196 = vpack.c.b16 %v2156, %v2155
  %v2197 = vpack.c.b16 %v2158, %v2157
  %v2198 = vpack.c.b16 %v2160, %v2159
  %v2199 = vpack.c.b16 %v2162, %v2161
  %v2200 = vpack.c.b16 %v2164, %v2163
  %v2201 = vpack.c.b16 %v2166, %v2165
  %v2202 = vpack.c.b16 %v2168, %v2167
  %v2203 = vpack.c.b16 %v2170, %v2169
  %v2204 = vpack.c.b16 %v2172, %v2171
  %2237 = vmatprep.subr.bf16.mxu0 0
  %2238 = vmatpush1.bf16.msra.mxu0 %v2173
  %2239 = vmatprep.subr.bf16.mxu0 0
  %2240 = vmatpush1.bf16.msra.mxu0 %v2174
  %2241 = vmatprep.subr.bf16.mxu0 0
  %2242 = vmatpush1.bf16.msra.mxu0 %v2175
  %2243 = vmatprep.subr.bf16.mxu0 0
  %2244 = vmatpush1.bf16.msra.mxu0 %v2176
  %2245 = vmatprep.subr.bf16.mxu0 0
  %2246 = vmatpush1.bf16.msra.mxu0 %v2177
  %2247 = vmatprep.subr.bf16.mxu0 0
  %2248 = vmatpush1.bf16.msra.mxu0 %v2178
  %2249 = vmatprep.subr.bf16.mxu0 0
  %2250 = vmatpush1.bf16.msra.mxu0 %v2179
  %2251 = vmatprep.subr.bf16.mxu0 0
  %2252 = vmatpush1.bf16.msra.mxu0 %v2180
  %2253 = vmatprep.subr.bf16.mxu0 0
  %2254 = vmatpush1.bf16.msra.mxu0 %v2181
  %2255 = vmatprep.subr.bf16.mxu0 0
  %2256 = vmatpush1.bf16.msra.mxu0 %v2182
  %2257 = vmatprep.subr.bf16.mxu0 0
  %2258 = vmatpush1.bf16.msra.mxu0 %v2183
  %2259 = vmatprep.subr.bf16.mxu0 0
  %2260 = vmatpush1.bf16.msra.mxu0 %v2184
  %2261 = vmatprep.subr.bf16.mxu0 0
  %2262 = vmatpush1.bf16.msra.mxu0 %v2185
  %2263 = vmatprep.subr.bf16.mxu0 0
  %2264 = vmatpush1.bf16.msra.mxu0 %v2186
  %2265 = vmatprep.subr.bf16.mxu0 0
  %2266 = vmatpush1.bf16.msra.mxu0 %v2187
  %2267 = vmatprep.subr.bf16.mxu0 0
  %2268 = vmatpush1.bf16.msra.mxu0 %v2188
  %2269 = vmatprep.mubr.bf16.mxu0 %v1971
  %2270 = vmatmul.mubr.bf16.gmra.mrb[0].mxu0 %v1970
  %v2271 = vpop.f32.mrb[0].mxu0
  %v2272 = vadd.f32 %v2043, %v2271
  %v2273 = vpop.f32.mrb[0].mxu0
  %v2274 = vpop.f32.mrb[0].mxu0
  %v2275 = vpop.f32.mrb[0].mxu0
  %2276 = vdwg.mxu0
  %2277 = vmatprep.subr.bf16.mxu0 0
  %2278 = vmatpush1.bf16.msra.mxu0 %v2189
  %2279 = vmatprep.subr.bf16.mxu0 0
  %2280 = vmatpush1.bf16.msra.mxu0 %v2190
  %2281 = vmatprep.subr.bf16.mxu0 0
  %2282 = vmatpush1.bf16.msra.mxu0 %v2191
  %2283 = vmatprep.subr.bf16.mxu0 0
  %2284 = vmatpush1.bf16.msra.mxu0 %v2192
  %2285 = vmatprep.subr.bf16.mxu0 0
  %2286 = vmatpush1.bf16.msra.mxu0 %v2193
  %2287 = vmatprep.subr.bf16.mxu0 0
  %2288 = vmatpush1.bf16.msra.mxu0 %v2194
  %2289 = vmatprep.subr.bf16.mxu0 0
  %2290 = vmatpush1.bf16.msra.mxu0 %v2195
  %2291 = vmatprep.subr.bf16.mxu0 0
  %2292 = vmatpush1.bf16.msra.mxu0 %v2196
  %2293 = vmatprep.subr.bf16.mxu0 0
  %2294 = vmatpush1.bf16.msra.mxu0 %v2197
  %2295 = vmatprep.subr.bf16.mxu0 0
  %2296 = vmatpush1.bf16.msra.mxu0 %v2198
  %2297 = vmatprep.subr.bf16.mxu0 0
  %2298 = vmatpush1.bf16.msra.mxu0 %v2199
  %2299 = vmatprep.subr.bf16.mxu0 0
  %2300 = vmatpush1.bf16.msra.mxu0 %v2200
  %2301 = vmatprep.subr.bf16.mxu0 0
  %2302 = vmatpush1.bf16.msra.mxu0 %v2201
  %2303 = vmatprep.subr.bf16.mxu0 0
  %2304 = vmatpush1.bf16.msra.mxu0 %v2202
  %2305 = vmatprep.subr.bf16.mxu0 0
  %2306 = vmatpush1.bf16.msra.mxu0 %v2203
  %2307 = vmatprep.subr.bf16.mxu0 0
  %2308 = vmatpush1.bf16.msra.mxu0 %v2204
  %2309 = vmatprep.mubr.bf16.mxu0 %v1973
  %2310 = vmatmul.mubr.bf16.gmra.mrb[0].mxu0 %v1972
  %v2311 = vpop.f32.mrb[0].mxu0
  %v2312 = vadd.f32 %v2272, %v2311
  %v2313 = vpop.f32.mrb[0].mxu0
  %v2314 = vpop.f32.mrb[0].mxu0
  %v2315 = vpop.f32.mrb[0].mxu0
  %2316 = vdwg.mxu0
  %2317 = vst [vmem:[%s5] sm:$0x3] %v2312
  // Predicated region
  $region22: #{nature_value_forward.3} parent=0 // pred_check
    _
  $region23: #{nature_value_forward.3} parent=0 // pred_check_branch
    %2319 = sbr.rel (0) target = $region25
  $region24: #{nature_value_forward.3} parent=0 // pred_region
    _
  $region25: #{nature_value_forward.3} parent=0 // pred_fallthru
    _
  // Predicated region
  $region26: #{nature_value_forward.3} parent=0 // pred_check
    _
  $region27: #{nature_value_forward.3} parent=0 // pred_check_branch
    %2321 = sbr.rel (0) target = $region29
  $region28: #{nature_value_forward.3} parent=0 // pred_region
    _
  $region29: #{nature_value_forward.3} parent=0 // pred_fallthru
    _

// kernel: nature_value_forward.2
$region0: #{nature_value_forward.2}
  #allocation0 [shape = 'u32[]', space=smem, size = 0x4, offset = 0x4, fixed_abs, tag = 'smem constant byte address 0x4 - core index']
  #allocation1 [shape = 'u32[144,128]{1,0:T(1,128)}', space=vmem, size = 0x12000, scoped, tag = 'internal scratch']
  #allocation2 [shape = 'bf16[2,8,16,128]{3,2,1,0:T(16,128)(2,1)}', space=vmem, size = 0x10000, scoped, tag = 'scratch operand']
  #allocation3 [shape = 'bf16[2,6,16,64]{3,2,1,0:T(16,128)(2,1)}', space=vmem, size = 0xc000, scoped, tag = 'scratch operand']
  %s0 = inlined_call_operand.vmem [shape: bf16[2,9,9,256], index: 0, kind: input, shape index: {}]
  %s1 = inlined_call_operand.vmem [shape: bf16[4,256,128], index: 1, kind: input, shape index: {}]
  %s2 = inlined_call_operand.vmem [shape: f32[1,128], index: 2, kind: input, shape index: {}]
  %s3 = inlined_call_operand.vmem [shape: bf16[4,128,64], index: 3, kind: input, shape index: {}]
  %s4 = inlined_call_operand.vmem [shape: f32[1,64], index: 4, kind: input, shape index: {}]
  %s5 = inlined_call_operand.vmem [shape: bf16[9,64,64], index: 5, kind: input, shape index: {}]
  %s6 = inlined_call_operand.vmem [shape: f32[1,64], index: 6, kind: input, shape index: {}]
  %s7 = inlined_call_operand.vmem [shape: bf16[2,4,4,64], index: 7, kind: output, shape index: {}]
  %s8 = sld [smem:[#allocation0]]
  $region38: #{nature_value_forward.2} parent=0
    _
  %s10 = ssub.s32 1, %s8
  %s11 = scalar_select 0, %s10, %s8
  // Predicated region
  $region2: #{nature_value_forward.2} parent=0 // pred_check
    _
  $region3: #{nature_value_forward.2} parent=0 // pred_check_branch
    %13 = sbr.rel (0) target = $region5
  $region4: #{nature_value_forward.2} parent=0 // pred_region
    _
  $region5: #{nature_value_forward.2} parent=0 // pred_fallthru
    _
  // Predicated region
  $region6: #{nature_value_forward.2} parent=0 // pred_check
    _
  $region7: #{nature_value_forward.2} parent=0 // pred_check_branch
    %15 = sbr.rel (0) target = $region9
  $region8: #{nature_value_forward.2} parent=0 // pred_region
    _
  $region9: #{nature_value_forward.2} parent=0 // pred_fallthru
    _
  // Predicated region
  $region10: #{nature_value_forward.2} parent=0 // pred_check
    _
  $region11: #{nature_value_forward.2} parent=0 // pred_check_branch
    %17 = sbr.rel (0) target = $region13
  $region12: #{nature_value_forward.2} parent=0 // pred_region
    _
  $region13: #{nature_value_forward.2} parent=0 // pred_fallthru
    _
  // Predicated region
  $region14: #{nature_value_forward.2} parent=0 // pred_check
    _
  $region15: #{nature_value_forward.2} parent=0 // pred_check_branch
    %19 = sbr.rel (0) target = $region17
  $region16: #{nature_value_forward.2} parent=0 // pred_region
    _
  $region17: #{nature_value_forward.2} parent=0 // pred_fallthru
    _
  // Predicated region
  $region18: #{nature_value_forward.2} parent=0 // pred_check
    _
  $region19: #{nature_value_forward.2} parent=0 // pred_check_branch
    %21 = sbr.rel (0) target = $region21
  $region20: #{nature_value_forward.2} parent=0 // pred_region
    _
  $region21: #{nature_value_forward.2} parent=0 // pred_fallthru
    _
  // Predicated region
  $region22: #{nature_value_forward.2} parent=0 // pred_check
    _
  $region23: #{nature_value_forward.2} parent=0 // pred_check_branch
    %23 = sbr.rel (0) target = $region25
  $region24: #{nature_value_forward.2} parent=0 // pred_region
    _
  $region25: #{nature_value_forward.2} parent=0 // pred_fallthru
    _
  // Predicated region
  $region26: #{nature_value_forward.2} parent=0 // pred_check
    _
  $region27: #{nature_value_forward.2} parent=0 // pred_check_branch
    %25 = sbr.rel (0) target = $region29
  $region28: #{nature_value_forward.2} parent=0 // pred_region
    _
  $region29: #{nature_value_forward.2} parent=0 // pred_fallthru
    _
  %v27 = vld [vmem:[%s0] sm:$0xff]
  %v28 = vld [vmem:[%s0 + $0x10] sm:$0xff]
  %v29 = vld [vmem:[%s0 + $0x20] sm:$0xff]
  %v30 = vld [vmem:[%s0 + $0x30] sm:$0xff]
  %v31 = vld [vmem:[%s0 + $0x40] sm:$0xff]
  %v32 = vld [vmem:[%s0 + $0x50] sm:$0xff]
  %v33 = vld [vmem:[%s0 + $0x60] sm:$0xff]
  %v34 = vld [vmem:[%s0 + $0x70] sm:$0xff]
  %v35 = vld [vmem:[%s0 + $0x90] sm:$0xff]
  %v36 = vld [vmem:[%s0 + $0xa0] sm:$0xff]
  %v37 = vld [vmem:[%s0 + $0xb0] sm:$0xff]
  %v38 = vld [vmem:[%s0 + $0xc0] sm:$0xff]
  %v39 = vld [vmem:[%s0 + $0xd0] sm:$0xff]
  %v40 = vld [vmem:[%s0 + $0xe0] sm:$0xff]
  %v41 = vld [vmem:[%s0 + $0xf0] sm:$0xff]
  %v42 = vld [vmem:[%s0 + $0x100] sm:$0xff]
  %v43 = vld [vmem:[%s1] sm:$0xf]
  %v44 = vld [vmem:[%s1 + $0x4] sm:$0xf]
  %v45 = vld [vmem:[%s1 + $0x8] sm:$0xf]
  %v46 = vld [vmem:[%s1 + $0xc] sm:$0xf]
  %v47 = vld [vmem:[%s1 + $0x10] sm:$0xf]
  %v48 = vld [vmem:[%s1 + $0x14] sm:$0xf]
  %v49 = vld [vmem:[%s1 + $0x18] sm:$0xf]
  %v50 = vld [vmem:[%s1 + $0x1c] sm:$0xf]
  %v51 = vld [vmem:[%s1 + $0x20] sm:$0xf]
  %v52 = vld [vmem:[%s1 + $0x24] sm:$0xf]
  %v53 = vld [vmem:[%s1 + $0x28] sm:$0xf]
  %v54 = vld [vmem:[%s1 + $0x2c] sm:$0xf]
  %v55 = vld [vmem:[%s1 + $0x30] sm:$0xf]
  %v56 = vld [vmem:[%s1 + $0x34] sm:$0xf]
  %v57 = vld [vmem:[%s1 + $0x38] sm:$0xf]
  %v58 = vld [vmem:[%s1 + $0x3c] sm:$0xf]
  %v59 = vld [vmem:[%s1 + $0x40] sm:$0xf]
  %v60 = vld [vmem:[%s1 + $0x44] sm:$0xf]
  %v61 = vld [vmem:[%s1 + $0x48] sm:$0xf]
  %v62 = vld [vmem:[%s1 + $0x4c] sm:$0xf]
  %v63 = vld [vmem:[%s1 + $0x50] sm:$0xf]
  %v64 = vld [vmem:[%s1 + $0x54] sm:$0xf]
  %v65 = vld [vmem:[%s1 + $0x58] sm:$0xf]
  %v66 = vld [vmem:[%s1 + $0x5c] sm:$0xf]
  %v67 = vld [vmem:[%s1 + $0x60] sm:$0xf]
  %v68 = vld [vmem:[%s1 + $0x64] sm:$0xf]
  %v69 = vld [vmem:[%s1 + $0x68] sm:$0xf]
  %v70 = vld [vmem:[%s1 + $0x6c] sm:$0xf]
  %v71 = vld [vmem:[%s1 + $0x70] sm:$0xf]
  %v72 = vld [vmem:[%s1 + $0x74] sm:$0xf]
  %v73 = vld [vmem:[%s1 + $0x78] sm:$0xf]
  %v74 = vld [vmem:[%s1 + $0x7c] sm:$0xf]
  %v75 = vld [vmem:[%s0 + $0x8] sm:$0x11]
  %v76 = vld [vmem:[%s0 + $0x18] sm:$0x11]
  %v77 = vld [vmem:[%s0 + $0x28] sm:$0x11]
  %v78 = vld [vmem:[%s0 + $0x38] sm:$0x11]
  %v79 = vld [vmem:[%s0 + $0x48] sm:$0x11]
  %v80 = vld [vmem:[%s0 + $0x58] sm:$0x11]
  %v81 = vld [vmem:[%s0 + $0x68] sm:$0x11]
  %v82 = vld [vmem:[%s0 + $0x78] sm:$0x11]
  %v83 = vld [vmem:[%s0 + $0x98] sm:$0x11]
  %v84 = vld [vmem:[%s0 + $0xa8] sm:$0x11]
  %v85 = vld [vmem:[%s0 + $0xb8] sm:$0x11]
  %v86 = vld [vmem:[%s0 + $0xc8] sm:$0x11]
  %v87 = vld [vmem:[%s0 + $0xd8] sm:$0x11]
  %v88 = vld [vmem:[%s0 + $0xe8] sm:$0x11]
  %v89 = vld [vmem:[%s0 + $0xf8] sm:$0x11]
  %v90 = vld [vmem:[%s0 + $0x108] sm:$0x11]
  %vm91 = vsmask.f32 3328
  %vm92 = vsmask.f32 7440
  %vm93 = vmor %vm91, %vm92
  %v95 = vshrl.u32 %v27, 16
  %v97 = vrot.slane %v95, 4
  %v98 = vshll.u32 %v27, 16
  %v100 = vrot.slane %v98, 5
  %v101 = vor.u32 %v97, %v100
  %v102 = vrot.slane %v101, 4
  %v104 = vshll.u32 %v75, 16
  %v106 = vrot.slane %v104, 5
  %v107 = vsel %vm93, %v102, %v106
  %v109 = vshrl.u32 %v28, 16
  %v111 = vrot.slane %v109, 4
  %v112 = vshll.u32 %v28, 16
  %v114 = vrot.slane %v112, 5
  %v115 = vor.u32 %v111, %v114
  %v116 = vrot.slane %v115, 4
  %v118 = vshll.u32 %v76, 16
  %v120 = vrot.slane %v118, 5
  %v121 = vsel %vm93, %v116, %v120
  %v123 = vshrl.u32 %v29, 16
  %v125 = vrot.slane %v123, 4
  %v126 = vshll.u32 %v29, 16
  %v128 = vrot.slane %v126, 5
  %v129 = vor.u32 %v125, %v128
  %v130 = vrot.slane %v129, 4
  %v132 = vshll.u32 %v77, 16
  %v134 = vrot.slane %v132, 5
  %v135 = vsel %vm93, %v130, %v134
  %v137 = vshrl.u32 %v30, 16
  %v139 = vrot.slane %v137, 4
  %v140 = vshll.u32 %v30, 16
  %v142 = vrot.slane %v140, 5
  %v143 = vor.u32 %v139, %v142
  %v144 = vrot.slane %v143, 4
  %v146 = vshll.u32 %v78, 16
  %v148 = vrot.slane %v146, 5
  %v149 = vsel %vm93, %v144, %v148
  %v151 = vshrl.u32 %v31, 16
  %v153 = vrot.slane %v151, 4
  %v154 = vshll.u32 %v31, 16
  %v156 = vrot.slane %v154, 5
  %v157 = vor.u32 %v153, %v156
  %v158 = vrot.slane %v157, 4
  %v160 = vshll.u32 %v79, 16
  %v162 = vrot.slane %v160, 5
  %v163 = vsel %vm93, %v158, %v162
  %v165 = vshrl.u32 %v32, 16
  %v167 = vrot.slane %v165, 4
  %v168 = vshll.u32 %v32, 16
  %v170 = vrot.slane %v168, 5
  %v171 = vor.u32 %v167, %v170
  %v172 = vrot.slane %v171, 4
  %v174 = vshll.u32 %v80, 16
  %v176 = vrot.slane %v174, 5
  %v177 = vsel %vm93, %v172, %v176
  %v179 = vshrl.u32 %v33, 16
  %v181 = vrot.slane %v179, 4
  %v182 = vshll.u32 %v33, 16
  %v184 = vrot.slane %v182, 5
  %v185 = vor.u32 %v181, %v184
  %v186 = vrot.slane %v185, 4
  %v188 = vshll.u32 %v81, 16
  %v190 = vrot.slane %v188, 5
  %v191 = vsel %vm93, %v186, %v190
  %v193 = vshrl.u32 %v34, 16
  %v195 = vrot.slane %v193, 4
  %v196 = vshll.u32 %v34, 16
  %v198 = vrot.slane %v196, 5
  %v199 = vor.u32 %v195, %v198
  %v200 = vrot.slane %v199, 4
  %v202 = vshll.u32 %v82, 16
  %v204 = vrot.slane %v202, 5
  %v205 = vsel %vm93, %v200, %v204
  %v207 = vshrl.u32 %v35, 16
  %v209 = vrot.slane %v207, 4
  %v210 = vshll.u32 %v35, 16
  %v212 = vrot.slane %v210, 5
  %v213 = vor.u32 %v209, %v212
  %v214 = vrot.slane %v213, 4
  %v216 = vshll.u32 %v83, 16
  %v218 = vrot.slane %v216, 5
  %v219 = vsel %vm93, %v214, %v218
  %v221 = vshrl.u32 %v36, 16
  %v223 = vrot.slane %v221, 4
  %v224 = vshll.u32 %v36, 16
  %v226 = vrot.slane %v224, 5
  %v227 = vor.u32 %v223, %v226
  %v228 = vrot.slane %v227, 4
  %v230 = vshll.u32 %v84, 16
  %v232 = vrot.slane %v230, 5
  %v233 = vsel %vm93, %v228, %v232
  %v235 = vshrl.u32 %v37, 16
  %v237 = vrot.slane %v235, 4
  %v238 = vshll.u32 %v37, 16
  %v240 = vrot.slane %v238, 5
  %v241 = vor.u32 %v237, %v240
  %v242 = vrot.slane %v241, 4
  %v244 = vshll.u32 %v85, 16
  %v246 = vrot.slane %v244, 5
  %v247 = vsel %vm93, %v242, %v246
  %v249 = vshrl.u32 %v38, 16
  %v251 = vrot.slane %v249, 4
  %v252 = vshll.u32 %v38, 16
  %v254 = vrot.slane %v252, 5
  %v255 = vor.u32 %v251, %v254
  %v256 = vrot.slane %v255, 4
  %v258 = vshll.u32 %v86, 16
  %v260 = vrot.slane %v258, 5
  %v261 = vsel %vm93, %v256, %v260
  %v263 = vshrl.u32 %v39, 16
  %v265 = vrot.slane %v263, 4
  %v266 = vshll.u32 %v39, 16
  %v268 = vrot.slane %v266, 5
  %v269 = vor.u32 %v265, %v268
  %v270 = vrot.slane %v269, 4
  %v272 = vshll.u32 %v87, 16
  %v274 = vrot.slane %v272, 5
  %v275 = vsel %vm93, %v270, %v274
  %v277 = vshrl.u32 %v40, 16
  %v279 = vrot.slane %v277, 4
  %v280 = vshll.u32 %v40, 16
  %v282 = vrot.slane %v280, 5
  %v283 = vor.u32 %v279, %v282
  %v284 = vrot.slane %v283, 4
  %v286 = vshll.u32 %v88, 16
  %v288 = vrot.slane %v286, 5
  %v289 = vsel %vm93, %v284, %v288
  %v291 = vshrl.u32 %v41, 16
  %v293 = vrot.slane %v291, 4
  %v294 = vshll.u32 %v41, 16
  %v296 = vrot.slane %v294, 5
  %v297 = vor.u32 %v293, %v296
  %v298 = vrot.slane %v297, 4
  %v300 = vshll.u32 %v89, 16
  %v302 = vrot.slane %v300, 5
  %v303 = vsel %vm93, %v298, %v302
  %v305 = vshrl.u32 %v42, 16
  %v307 = vrot.slane %v305, 4
  %v308 = vshll.u32 %v42, 16
  %v310 = vrot.slane %v308, 5
  %v311 = vor.u32 %v307, %v310
  %v312 = vrot.slane %v311, 4
  %v314 = vshll.u32 %v90, 16
  %v316 = vrot.slane %v314, 5
  %v317 = vsel %vm93, %v312, %v316
  %s318 = scalar_lea.vmem %s1, 128
  %v319 = vld [vmem:[%s318] sm:$0xf]
  %v320 = vld [vmem:[%s318 + $0x4] sm:$0xf]
  %v321 = vld [vmem:[%s318 + $0x8] sm:$0xf]
  %v322 = vld [vmem:[%s318 + $0xc] sm:$0xf]
  %v323 = vld [vmem:[%s318 + $0x10] sm:$0xf]
  %v324 = vld [vmem:[%s318 + $0x14] sm:$0xf]
  %v325 = vld [vmem:[%s318 + $0x18] sm:$0xf]
  %v326 = vld [vmem:[%s318 + $0x1c] sm:$0xf]
  %v327 = vld [vmem:[%s318 + $0x20] sm:$0xf]
  %v328 = vld [vmem:[%s318 + $0x24] sm:$0xf]
  %v329 = vld [vmem:[%s318 + $0x28] sm:$0xf]
  %v330 = vld [vmem:[%s318 + $0x2c] sm:$0xf]
  %v331 = vld [vmem:[%s318 + $0x30] sm:$0xf]
  %v332 = vld [vmem:[%s318 + $0x34] sm:$0xf]
  %v333 = vld [vmem:[%s318 + $0x38] sm:$0xf]
  %v334 = vld [vmem:[%s318 + $0x3c] sm:$0xf]
  %v335 = vld [vmem:[%s318 + $0x40] sm:$0xf]
  %v336 = vld [vmem:[%s318 + $0x44] sm:$0xf]
  %v337 = vld [vmem:[%s318 + $0x48] sm:$0xf]
  %v338 = vld [vmem:[%s318 + $0x4c] sm:$0xf]
  %v339 = vld [vmem:[%s318 + $0x50] sm:$0xf]
  %v340 = vld [vmem:[%s318 + $0x54] sm:$0xf]
  %v341 = vld [vmem:[%s318 + $0x58] sm:$0xf]
  %v342 = vld [vmem:[%s318 + $0x5c] sm:$0xf]
  %v343 = vld [vmem:[%s318 + $0x60] sm:$0xf]
  %v344 = vld [vmem:[%s318 + $0x64] sm:$0xf]
  %v345 = vld [vmem:[%s318 + $0x68] sm:$0xf]
  %v346 = vld [vmem:[%s318 + $0x6c] sm:$0xf]
  %v347 = vld [vmem:[%s318 + $0x70] sm:$0xf]
  %v348 = vld [vmem:[%s318 + $0x74] sm:$0xf]
  %v349 = vld [vmem:[%s318 + $0x78] sm:$0xf]
  %v350 = vld [vmem:[%s318 + $0x7c] sm:$0xf]
  %v351 = vunpack.c.l.b16 %v107
  %v352 = vunpack.c.h.b16 %v107
  %v353 = vunpack.c.l.b16 %v121
  %v354 = vunpack.c.h.b16 %v121
  %v355 = vunpack.c.l.b16 %v135
  %v356 = vunpack.c.h.b16 %v135
  %v357 = vunpack.c.l.b16 %v149
  %v358 = vunpack.c.h.b16 %v149
  %v359 = vunpack.c.l.b16 %v163
  %v360 = vunpack.c.h.b16 %v163
  %v361 = vunpack.c.l.b16 %v177
  %v362 = vunpack.c.h.b16 %v177
  %v363 = vunpack.c.l.b16 %v191
  %v364 = vunpack.c.h.b16 %v191
  %v365 = vunpack.c.l.b16 %v205
  %v366 = vunpack.c.h.b16 %v205
  %v367 = vunpack.c.l.b16 %v219
  %v368 = vunpack.c.h.b16 %v219
  %v369 = vunpack.c.l.b16 %v233
  %v370 = vunpack.c.h.b16 %v233
  %v371 = vunpack.c.l.b16 %v247
  %v372 = vunpack.c.h.b16 %v247
  %v373 = vunpack.c.l.b16 %v261
  %v374 = vunpack.c.h.b16 %v261
  %v375 = vunpack.c.l.b16 %v275
  %v376 = vunpack.c.h.b16 %v275
  %v377 = vunpack.c.l.b16 %v289
  %v378 = vunpack.c.h.b16 %v289
  %v379 = vunpack.c.l.b16 %v303
  %v380 = vunpack.c.h.b16 %v303
  %v381 = vunpack.c.l.b16 %v317
  %v382 = vunpack.c.h.b16 %v317
  %v383 = vpack.c.b16 %v353, %v351
  %v384 = vpack.c.b16 %v354, %v352
  %v385 = vpack.c.b16 %v357, %v355
  %v386 = vpack.c.b16 %v358, %v356
  %v387 = vpack.c.b16 %v361, %v359
  %v388 = vpack.c.b16 %v362, %v360
  %v389 = vpack.c.b16 %v365, %v363
  %v390 = vpack.c.b16 %v366, %v364
  %v391 = vpack.c.b16 %v369, %v367
  %v392 = vpack.c.b16 %v370, %v368
  %v393 = vpack.c.b16 %v373, %v371
  %v394 = vpack.c.b16 %v374, %v372
  %v395 = vpack.c.b16 %v377, %v375
  %v396 = vpack.c.b16 %v378, %v376
  %v397 = vpack.c.b16 %v381, %v379
  %v398 = vpack.c.b16 %v382, %v380
  %v447 = vunpack.c.l.b16 %v319
  %v448 = vunpack.c.l.b16 %v320
  %v449 = vunpack.c.l.b16 %v321
  %v450 = vunpack.c.l.b16 %v322
  %v451 = vunpack.c.l.b16 %v323
  %v452 = vunpack.c.l.b16 %v324
  %v453 = vunpack.c.l.b16 %v325
  %v454 = vunpack.c.l.b16 %v326
  %v455 = vunpack.c.l.b16 %v327
  %v456 = vunpack.c.l.b16 %v328
  %v457 = vunpack.c.l.b16 %v329
  %v458 = vunpack.c.l.b16 %v330
  %v459 = vunpack.c.l.b16 %v331
  %v460 = vunpack.c.l.b16 %v332
  %v461 = vunpack.c.l.b16 %v333
  %v462 = vunpack.c.l.b16 %v334
  %v463 = vunpack.c.l.b16 %v335
  %v464 = vunpack.c.l.b16 %v336
  %v465 = vunpack.c.l.b16 %v337
  %v466 = vunpack.c.l.b16 %v338
  %v467 = vunpack.c.l.b16 %v339
  %v468 = vunpack.c.l.b16 %v340
  %v469 = vunpack.c.l.b16 %v341
  %v470 = vunpack.c.l.b16 %v342
  %v471 = vunpack.c.l.b16 %v343
  %v472 = vunpack.c.l.b16 %v344
  %v473 = vunpack.c.l.b16 %v345
  %v474 = vunpack.c.l.b16 %v346
  %v475 = vunpack.c.l.b16 %v347
  %v476 = vunpack.c.l.b16 %v348
  %v477 = vunpack.c.l.b16 %v349
  %v478 = vunpack.c.l.b16 %v350
  %v479 = vpack.c.b16 %v448, %v447
  %v480 = vpack.c.b16 %v450, %v449
  %v481 = vpack.c.b16 %v452, %v451
  %v482 = vpack.c.b16 %v454, %v453
  %v483 = vpack.c.b16 %v456, %v455
  %v484 = vpack.c.b16 %v458, %v457
  %v485 = vpack.c.b16 %v460, %v459
  %v486 = vpack.c.b16 %v462, %v461
  %v487 = vpack.c.b16 %v464, %v463
  %v488 = vpack.c.b16 %v466, %v465
  %v489 = vpack.c.b16 %v468, %v467
  %v490 = vpack.c.b16 %v470, %v469
  %v491 = vpack.c.b16 %v472, %v471
  %v492 = vpack.c.b16 %v474, %v473
  %v493 = vpack.c.b16 %v476, %v475
  %v494 = vpack.c.b16 %v478, %v477
  %511 = vmatprep.subr.bf16.mxu0 0
  %512 = vmatpush1.bf16.msra.mxu0 %v479
  %513 = vmatprep.subr.bf16.mxu0 0
  %514 = vmatpush1.bf16.msra.mxu0 %v480
  %515 = vmatprep.subr.bf16.mxu0 0
  %516 = vmatpush1.bf16.msra.mxu0 %v481
  %517 = vmatprep.subr.bf16.mxu0 0
  %518 = vmatpush1.bf16.msra.mxu0 %v482
  %519 = vmatprep.subr.bf16.mxu0 0
  %520 = vmatpush1.bf16.msra.mxu0 %v483
  %521 = vmatprep.subr.bf16.mxu0 0
  %522 = vmatpush1.bf16.msra.mxu0 %v484
  %523 = vmatprep.subr.bf16.mxu0 0
  %524 = vmatpush1.bf16.msra.mxu0 %v485
  %525 = vmatprep.subr.bf16.mxu0 0
  %526 = vmatpush1.bf16.msra.mxu0 %v486
  %527 = vmatprep.subr.bf16.mxu0 0
  %528 = vmatpush1.bf16.msra.mxu0 %v487
  %529 = vmatprep.subr.bf16.mxu0 0
  %530 = vmatpush1.bf16.msra.mxu0 %v488
  %531 = vmatprep.subr.bf16.mxu0 0
  %532 = vmatpush1.bf16.msra.mxu0 %v489
  %533 = vmatprep.subr.bf16.mxu0 0
  %534 = vmatpush1.bf16.msra.mxu0 %v490
  %535 = vmatprep.subr.bf16.mxu0 0
  %536 = vmatpush1.bf16.msra.mxu0 %v491
  %537 = vmatprep.subr.bf16.mxu0 0
  %538 = vmatpush1.bf16.msra.mxu0 %v492
  %539 = vmatprep.subr.bf16.mxu0 0
  %540 = vmatpush1.bf16.msra.mxu0 %v493
  %541 = vmatprep.subr.bf16.mxu0 0
  %542 = vmatpush1.bf16.msra.mxu0 %v494
  %543 = vmatprep.mubr.bf16.mxu0 %v384
  %544 = vmatmul.mubr.bf16.gmra.mrb[0].mxu0 %v383
  %v545 = vpop.f32.mrb[0].mxu0
  %v546 = vadd.f32 0.0, %v545
  %v547 = vpop.f32.mrb[0].mxu0
  %v548 = vpop.f32.mrb[0].mxu0
  %v549 = vadd.f32 0.0, %v548
  %v550 = vpop.f32.mrb[0].mxu0
  %551 = vmatprep.mubr.bf16.mxu0 %v386
  %552 = vmatmul.mubr.bf16.gmra.mrb[0].mxu0 %v385
  %v553 = vpop.f32.mrb[0].mxu0
  %v554 = vadd.f32 0.0, %v553
  %v555 = vpop.f32.mrb[0].mxu0
  %v556 = vpop.f32.mrb[0].mxu0
  %v557 = vadd.f32 0.0, %v556
  %v558 = vpop.f32.mrb[0].mxu0
  %559 = vmatprep.mubr.bf16.mxu0 %v388
  %560 = vmatmul.mubr.bf16.gmra.mrb[0].mxu0 %v387
  %v561 = vpop.f32.mrb[0].mxu0
  %v562 = vadd.f32 0.0, %v561
  %v563 = vpop.f32.mrb[0].mxu0
  %v564 = vpop.f32.mrb[0].mxu0
  %v565 = vadd.f32 0.0, %v564
  %v566 = vpop.f32.mrb[0].mxu0
  %567 = vmatprep.mubr.bf16.mxu0 %v390
  %568 = vmatmul.mubr.bf16.gmra.mrb[0].mxu0 %v389
  %v569 = vpop.f32.mrb[0].mxu0
  %v570 = vadd.f32 0.0, %v569
  %v571 = vpop.f32.mrb[0].mxu0
  %v572 = vpop.f32.mrb[0].mxu0
  %v573 = vadd.f32 0.0, %v572
  %v574 = vpop.f32.mrb[0].mxu0
  %575 = vmatprep.mubr.bf16.mxu0 %v392
  %576 = vmatmul.mubr.bf16.gmra.mrb[0].mxu0 %v391
  %v577 = vpop.f32.mrb[0].mxu0
  %v578 = vadd.f32 0.0, %v577
  %v579 = vpop.f32.mrb[0].mxu0
  %v580 = vpop.f32.mrb[0].mxu0
  %v581 = vadd.f32 0.0, %v580
  %v582 = vpop.f32.mrb[0].mxu0
  %583 = vmatprep.mubr.bf16.mxu0 %v394
  %584 = vmatmul.mubr.bf16.gmra.mrb[0].mxu0 %v393
  %v585 = vpop.f32.mrb[0].mxu0
  %v586 = vadd.f32 0.0, %v585
  %v587 = vpop.f32.mrb[0].mxu0
  %v588 = vpop.f32.mrb[0].mxu0
  %v589 = vadd.f32 0.0, %v588
  %v590 = vpop.f32.mrb[0].mxu0
  %591 = vmatprep.mubr.bf16.mxu0 %v396
  %592 = vmatmul.mubr.bf16.gmra.mrb[0].mxu0 %v395
  %v593 = vpop.f32.mrb[0].mxu0
  %v594 = vadd.f32 0.0, %v593
  %v595 = vpop.f32.mrb[0].mxu0
  %v596 = vpop.f32.mrb[0].mxu0
  %v597 = vadd.f32 0.0, %v596
  %v598 = vpop.f32.mrb[0].mxu0
  %599 = vmatprep.mubr.bf16.mxu0 %v398
  %600 = vmatmul.mubr.bf16.gmra.mrb[0].mxu0 %v397
  %v601 = vpop.f32.mrb[0].mxu0
  %v602 = vadd.f32 0.0, %v601
  %v603 = vpop.f32.mrb[0].mxu0
  %v604 = vpop.f32.mrb[0].mxu0
  %v605 = vadd.f32 0.0, %v604
  %v606 = vpop.f32.mrb[0].mxu0
  %607 = vdwg.mxu0
  %v624 = vunpack.c.l.b16 %v27
  %v625 = vunpack.c.h.b16 %v27
  %v626 = vunpack.c.l.b16 %v28
  %v627 = vunpack.c.h.b16 %v28
  %v628 = vunpack.c.l.b16 %v29
  %v629 = vunpack.c.h.b16 %v29
  %v630 = vunpack.c.l.b16 %v30
  %v631 = vunpack.c.h.b16 %v30
  %v632 = vunpack.c.l.b16 %v31
  %v633 = vunpack.c.h.b16 %v31
  %v634 = vunpack.c.l.b16 %v32
  %v635 = vunpack.c.h.b16 %v32
  %v636 = vunpack.c.l.b16 %v33
  %v637 = vunpack.c.h.b16 %v33
  %v638 = vunpack.c.l.b16 %v34
  %v639 = vunpack.c.h.b16 %v34
  %v640 = vunpack.c.l.b16 %v35
  %v641 = vunpack.c.h.b16 %v35
  %v642 = vunpack.c.l.b16 %v36
  %v643 = vunpack.c.h.b16 %v36
  %v644 = vunpack.c.l.b16 %v37
  %v645 = vunpack.c.h.b16 %v37
  %v646 = vunpack.c.l.b16 %v38
  %v647 = vunpack.c.h.b16 %v38
  %v648 = vunpack.c.l.b16 %v39
  %v649 = vunpack.c.h.b16 %v39
  %v650 = vunpack.c.l.b16 %v40
  %v651 = vunpack.c.h.b16 %v40
  %v652 = vunpack.c.l.b16 %v41
  %v653 = vunpack.c.h.b16 %v41
  %v654 = vunpack.c.l.b16 %v42
  %v655 = vunpack.c.h.b16 %v42
  %v656 = vpack.c.b16 %v626, %v624
  %v657 = vpack.c.b16 %v627, %v625
  %v658 = vpack.c.b16 %v630, %v628
  %v659 = vpack.c.b16 %v631, %v629
  %v660 = vpack.c.b16 %v634, %v632
  %v661 = vpack.c.b16 %v635, %v633
  %v662 = vpack.c.b16 %v638, %v636
  %v663 = vpack.c.b16 %v639, %v637
  %v664 = vpack.c.b16 %v642, %v640
  %v665 = vpack.c.b16 %v643, %v641
  %v666 = vpack.c.b16 %v646, %v644
  %v667 = vpack.c.b16 %v647, %v645
  %v668 = vpack.c.b16 %v650, %v648
  %v669 = vpack.c.b16 %v651, %v649
  %v670 = vpack.c.b16 %v654, %v652
  %v671 = vpack.c.b16 %v655, %v653
  %v720 = vunpack.c.l.b16 %v43
  %v721 = vunpack.c.l.b16 %v44
  %v722 = vunpack.c.l.b16 %v45
  %v723 = vunpack.c.l.b16 %v46
  %v724 = vunpack.c.l.b16 %v47
  %v725 = vunpack.c.l.b16 %v48
  %v726 = vunpack.c.l.b16 %v49
  %v727 = vunpack.c.l.b16 %v50
  %v728 = vunpack.c.l.b16 %v51
  %v729 = vunpack.c.l.b16 %v52
  %v730 = vunpack.c.l.b16 %v53
  %v731 = vunpack.c.l.b16 %v54
  %v732 = vunpack.c.l.b16 %v55
  %v733 = vunpack.c.l.b16 %v56
  %v734 = vunpack.c.l.b16 %v57
  %v735 = vunpack.c.l.b16 %v58
  %v736 = vunpack.c.l.b16 %v59
  %v737 = vunpack.c.l.b16 %v60
  %v738 = vunpack.c.l.b16 %v61
  %v739 = vunpack.c.l.b16 %v62
  %v740 = vunpack.c.l.b16 %v63
  %v741 = vunpack.c.l.b16 %v64
  %v742 = vunpack.c.l.b16 %v65
  %v743 = vunpack.c.l.b16 %v66
  %v744 = vunpack.c.l.b16 %v67
  %v745 = vunpack.c.l.b16 %v68
  %v746 = vunpack.c.l.b16 %v69
  %v747 = vunpack.c.l.b16 %v70
  %v748 = vunpack.c.l.b16 %v71
  %v749 = vunpack.c.l.b16 %v72
  %v750 = vunpack.c.l.b16 %v73
  %v751 = vunpack.c.l.b16 %v74
  %v752 = vpack.c.b16 %v721, %v720
  %v753 = vpack.c.b16 %v723, %v722
  %v754 = vpack.c.b16 %v725, %v724
  %v755 = vpack.c.b16 %v727, %v726
  %v756 = vpack.c.b16 %v729, %v728
  %v757 = vpack.c.b16 %v731, %v730
  %v758 = vpack.c.b16 %v733, %v732
  %v759 = vpack.c.b16 %v735, %v734
  %v760 = vpack.c.b16 %v737, %v736
  %v761 = vpack.c.b16 %v739, %v738
  %v762 = vpack.c.b16 %v741, %v740
  %v763 = vpack.c.b16 %v743, %v742
  %v764 = vpack.c.b16 %v745, %v744
  %v765 = vpack.c.b16 %v747, %v746
  %v766 = vpack.c.b16 %v749, %v748
  %v767 = vpack.c.b16 %v751, %v750
  %784 = vmatprep.subr.bf16.mxu0 0
  %785 = vmatpush1.bf16.msra.mxu0 %v752
  %786 = vmatprep.subr.bf16.mxu0 0
  %787 = vmatpush1.bf16.msra.mxu0 %v753
  %788 = vmatprep.subr.bf16.mxu0 0
  %789 = vmatpush1.bf16.msra.mxu0 %v754
  %790 = vmatprep.subr.bf16.mxu0 0
  %791 = vmatpush1.bf16.msra.mxu0 %v755
  %792 = vmatprep.subr.bf16.mxu0 0
  %793 = vmatpush1.bf16.msra.mxu0 %v756
  %794 = vmatprep.subr.bf16.mxu0 0
  %795 = vmatpush1.bf16.msra.mxu0 %v757
  %796 = vmatprep.subr.bf16.mxu0 0
  %797 = vmatpush1.bf16.msra.mxu0 %v758
  %798 = vmatprep.subr.bf16.mxu0 0
  %799 = vmatpush1.bf16.msra.mxu0 %v759
  %800 = vmatprep.subr.bf16.mxu0 0
  %801 = vmatpush1.bf16.msra.mxu0 %v760
  %802 = vmatprep.subr.bf16.mxu0 0
  %803 = vmatpush1.bf16.msra.mxu0 %v761
  %804 = vmatprep.subr.bf16.mxu0 0
  %805 = vmatpush1.bf16.msra.mxu0 %v762
  %806 = vmatprep.subr.bf16.mxu0 0
  %807 = vmatpush1.bf16.msra.mxu0 %v763
  %808 = vmatprep.subr.bf16.mxu0 0
  %809 = vmatpush1.bf16.msra.mxu0 %v764
  %810 = vmatprep.subr.bf16.mxu0 0
  %811 = vmatpush1.bf16.msra.mxu0 %v765
  %812 = vmatprep.subr.bf16.mxu0 0
  %813 = vmatpush1.bf16.msra.mxu0 %v766
  %814 = vmatprep.subr.bf16.mxu0 0
  %815 = vmatpush1.bf16.msra.mxu0 %v767
  %816 = vmatprep.mubr.bf16.mxu0 %v657
  %817 = vmatmul.mubr.bf16.gmra.mrb[0].mxu0 %v656
  %v818 = vpop.f32.mrb[0].mxu0
  %v819 = vadd.f32 %v546, %v818
  %v820 = vpop.f32.mrb[0].mxu0
  %v821 = vpop.f32.mrb[0].mxu0
  %v822 = vadd.f32 %v549, %v821
  %v823 = vpop.f32.mrb[0].mxu0
  %824 = vmatprep.mubr.bf16.mxu0 %v659
  %825 = vmatmul.mubr.bf16.gmra.mrb[0].mxu0 %v658
  %v826 = vpop.f32.mrb[0].mxu0
  %v827 = vadd.f32 %v554, %v826
  %v828 = vpop.f32.mrb[0].mxu0
  %v829 = vpop.f32.mrb[0].mxu0
  %v830 = vadd.f32 %v557, %v829
  %v831 = vpop.f32.mrb[0].mxu0
  %832 = vmatprep.mubr.bf16.mxu0 %v661
  %833 = vmatmul.mubr.bf16.gmra.mrb[0].mxu0 %v660
  %v834 = vpop.f32.mrb[0].mxu0
  %v835 = vadd.f32 %v562, %v834
  %v836 = vpop.f32.mrb[0].mxu0
  %v837 = vpop.f32.mrb[0].mxu0
  %v838 = vadd.f32 %v565, %v837
  %v839 = vpop.f32.mrb[0].mxu0
  %840 = vmatprep.mubr.bf16.mxu0 %v663
  %841 = vmatmul.mubr.bf16.gmra.mrb[0].mxu0 %v662
  %v842 = vpop.f32.mrb[0].mxu0
  %v843 = vadd.f32 %v570, %v842
  %v844 = vpop.f32.mrb[0].mxu0
  %v845 = vpop.f32.mrb[0].mxu0
  %v846 = vadd.f32 %v573, %v845
  %v847 = vpop.f32.mrb[0].mxu0
  %848 = vmatprep.mubr.bf16.mxu0 %v665
  %849 = vmatmul.mubr.bf16.gmra.mrb[0].mxu0 %v664
  %v850 = vpop.f32.mrb[0].mxu0
  %v851 = vadd.f32 %v578, %v850
  %v852 = vpop.f32.mrb[0].mxu0
  %v853 = vpop.f32.mrb[0].mxu0
  %v854 = vadd.f32 %v581, %v853
  %v855 = vpop.f32.mrb[0].mxu0
  %856 = vmatprep.mubr.bf16.mxu0 %v667
  %857 = vmatmul.mubr.bf16.gmra.mrb[0].mxu0 %v666
  %v858 = vpop.f32.mrb[0].mxu0
  %v859 = vadd.f32 %v586, %v858
  %v860 = vpop.f32.mrb[0].mxu0
  %v861 = vpop.f32.mrb[0].mxu0
  %v862 = vadd.f32 %v589, %v861
  %v863 = vpop.f32.mrb[0].mxu0
  %864 = vmatprep.mubr.bf16.mxu0 %v669
  %865 = vmatmul.mubr.bf16.gmra.mrb[0].mxu0 %v668
  %v866 = vpop.f32.mrb[0].mxu0
  %v867 = vadd.f32 %v594, %v866
  %v868 = vpop.f32.mrb[0].mxu0
  %v869 = vpop.f32.mrb[0].mxu0
  %v870 = vadd.f32 %v597, %v869
  %v871 = vpop.f32.mrb[0].mxu0
  %872 = vmatprep.mubr.bf16.mxu0 %v671
  %873 = vmatmul.mubr.bf16.gmra.mrb[0].mxu0 %v670
  %v874 = vpop.f32.mrb[0].mxu0
  %v875 = vadd.f32 %v602, %v874
  %v876 = vpop.f32.mrb[0].mxu0
  %v877 = vpop.f32.mrb[0].mxu0
  %v878 = vadd.f32 %v605, %v877
  %v879 = vpop.f32.mrb[0].mxu0
  %880 = vdwg.mxu0
  %s881 = scalar_lea.vmem %s0, 16
  %v882 = vld [vmem:[%s881] sm:$0xff]
  %v883 = vld [vmem:[%s881 + $0x10] sm:$0xff]
  %v884 = vld [vmem:[%s881 + $0x20] sm:$0xff]
  %v885 = vld [vmem:[%s881 + $0x30] sm:$0xff]
  %v886 = vld [vmem:[%s881 + $0x40] sm:$0xff]
  %v887 = vld [vmem:[%s881 + $0x50] sm:$0xff]
  %v888 = vld [vmem:[%s881 + $0x60] sm:$0xff]
  %v889 = vld [vmem:[%s881 + $0x70] sm:$0xff]
  %v890 = vld [vmem:[%s881 + $0x90] sm:$0xff]
  %v891 = vld [vmem:[%s881 + $0xa0] sm:$0xff]
  %v892 = vld [vmem:[%s881 + $0xb0] sm:$0xff]
  %v893 = vld [vmem:[%s881 + $0xc0] sm:$0xff]
  %v894 = vld [vmem:[%s881 + $0xd0] sm:$0xff]
  %v895 = vld [vmem:[%s881 + $0xe0] sm:$0xff]
  %v896 = vld [vmem:[%s881 + $0xf0] sm:$0xff]
  %v897 = vld [vmem:[%s881 + $0x100] sm:$0xff]
  %s898 = scalar_lea.vmem %s1, 256
  %v899 = vld [vmem:[%s898] sm:$0xf]
  %v900 = vld [vmem:[%s898 + $0x4] sm:$0xf]
  %v901 = vld [vmem:[%s898 + $0x8] sm:$0xf]
  %v902 = vld [vmem:[%s898 + $0xc] sm:$0xf]
  %v903 = vld [vmem:[%s898 + $0x10] sm:$0xf]
  %v904 = vld [vmem:[%s898 + $0x14] sm:$0xf]
  %v905 = vld [vmem:[%s898 + $0x18] sm:$0xf]
  %v906 = vld [vmem:[%s898 + $0x1c] sm:$0xf]
  %v907 = vld [vmem:[%s898 + $0x20] sm:$0xf]
  %v908 = vld [vmem:[%s898 + $0x24] sm:$0xf]
  %v909 = vld [vmem:[%s898 + $0x28] sm:$0xf]
  %v910 = vld [vmem:[%s898 + $0x2c] sm:$0xf]
  %v911 = vld [vmem:[%s898 + $0x30] sm:$0xf]
  %v912 = vld [vmem:[%s898 + $0x34] sm:$0xf]
  %v913 = vld [vmem:[%s898 + $0x38] sm:$0xf]
  %v914 = vld [vmem:[%s898 + $0x3c] sm:$0xf]
  %v915 = vld [vmem:[%s898 + $0x40] sm:$0xf]
  %v916 = vld [vmem:[%s898 + $0x44] sm:$0xf]
  %v917 = vld [vmem:[%s898 + $0x48] sm:$0xf]
  %v918 = vld [vmem:[%s898 + $0x4c] sm:$0xf]
  %v919 = vld [vmem:[%s898 + $0x50] sm:$0xf]
  %v920 = vld [vmem:[%s898 + $0x54] sm:$0xf]
  %v921 = vld [vmem:[%s898 + $0x58] sm:$0xf]
  %v922 = vld [vmem:[%s898 + $0x5c] sm:$0xf]
  %v923 = vld [vmem:[%s898 + $0x60] sm:$0xf]
  %v924 = vld [vmem:[%s898 + $0x64] sm:$0xf]
  %v925 = vld [vmem:[%s898 + $0x68] sm:$0xf]
  %v926 = vld [vmem:[%s898 + $0x6c] sm:$0xf]
  %v927 = vld [vmem:[%s898 + $0x70] sm:$0xf]
  %v928 = vld [vmem:[%s898 + $0x74] sm:$0xf]
  %v929 = vld [vmem:[%s898 + $0x78] sm:$0xf]
  %v930 = vld [vmem:[%s898 + $0x7c] sm:$0xf]
  %v947 = vunpack.c.l.b16 %v882
  %v948 = vunpack.c.h.b16 %v882
  %v949 = vunpack.c.l.b16 %v883
  %v950 = vunpack.c.h.b16 %v883
  %v951 = vunpack.c.l.b16 %v884
  %v952 = vunpack.c.h.b16 %v884
  %v953 = vunpack.c.l.b16 %v885
  %v954 = vunpack.c.h.b16 %v885
  %v955 = vunpack.c.l.b16 %v886
  %v956 = vunpack.c.h.b16 %v886
  %v957 = vunpack.c.l.b16 %v887
  %v958 = vunpack.c.h.b16 %v887
  %v959 = vunpack.c.l.b16 %v888
  %v960 = vunpack.c.h.b16 %v888
  %v961 = vunpack.c.l.b16 %v889
  %v962 = vunpack.c.h.b16 %v889
  %v963 = vunpack.c.l.b16 %v890
  %v964 = vunpack.c.h.b16 %v890
  %v965 = vunpack.c.l.b16 %v891
  %v966 = vunpack.c.h.b16 %v891
  %v967 = vunpack.c.l.b16 %v892
  %v968 = vunpack.c.h.b16 %v892
  %v969 = vunpack.c.l.b16 %v893
  %v970 = vunpack.c.h.b16 %v893
  %v971 = vunpack.c.l.b16 %v894
  %v972 = vunpack.c.h.b16 %v894
  %v973 = vunpack.c.l.b16 %v895
  %v974 = vunpack.c.h.b16 %v895
  %v975 = vunpack.c.l.b16 %v896
  %v976 = vunpack.c.h.b16 %v896
  %v977 = vunpack.c.l.b16 %v897
  %v978 = vunpack.c.h.b16 %v897
  %v979 = vpack.c.b16 %v949, %v947
  %v980 = vpack.c.b16 %v950, %v948
  %v981 = vpack.c.b16 %v953, %v951
  %v982 = vpack.c.b16 %v954, %v952
  %v983 = vpack.c.b16 %v957, %v955
  %v984 = vpack.c.b16 %v958, %v956
  %v985 = vpack.c.b16 %v961, %v959
  %v986 = vpack.c.b16 %v962, %v960
  %v987 = vpack.c.b16 %v965, %v963
  %v988 = vpack.c.b16 %v966, %v964
  %v989 = vpack.c.b16 %v969, %v967
  %v990 = vpack.c.b16 %v970, %v968
  %v991 = vpack.c.b16 %v973, %v971
  %v992 = vpack.c.b16 %v974, %v972
  %v993 = vpack.c.b16 %v977, %v975
  %v994 = vpack.c.b16 %v978, %v976
  %v1043 = vunpack.c.l.b16 %v899
  %v1044 = vunpack.c.l.b16 %v900
  %v1045 = vunpack.c.l.b16 %v901
  %v1046 = vunpack.c.l.b16 %v902
  %v1047 = vunpack.c.l.b16 %v903
  %v1048 = vunpack.c.l.b16 %v904
  %v1049 = vunpack.c.l.b16 %v905
  %v1050 = vunpack.c.l.b16 %v906
  %v1051 = vunpack.c.l.b16 %v907
  %v1052 = vunpack.c.l.b16 %v908
  %v1053 = vunpack.c.l.b16 %v909
  %v1054 = vunpack.c.l.b16 %v910
  %v1055 = vunpack.c.l.b16 %v911
  %v1056 = vunpack.c.l.b16 %v912
  %v1057 = vunpack.c.l.b16 %v913
  %v1058 = vunpack.c.l.b16 %v914
  %v1059 = vunpack.c.l.b16 %v915
  %v1060 = vunpack.c.l.b16 %v916
  %v1061 = vunpack.c.l.b16 %v917
  %v1062 = vunpack.c.l.b16 %v918
  %v1063 = vunpack.c.l.b16 %v919
  %v1064 = vunpack.c.l.b16 %v920
  %v1065 = vunpack.c.l.b16 %v921
  %v1066 = vunpack.c.l.b16 %v922
  %v1067 = vunpack.c.l.b16 %v923
  %v1068 = vunpack.c.l.b16 %v924
  %v1069 = vunpack.c.l.b16 %v925
  %v1070 = vunpack.c.l.b16 %v926
  %v1071 = vunpack.c.l.b16 %v927
  %v1072 = vunpack.c.l.b16 %v928
  %v1073 = vunpack.c.l.b16 %v929
  %v1074 = vunpack.c.l.b16 %v930
  %v1075 = vpack.c.b16 %v1044, %v1043
  %v1076 = vpack.c.b16 %v1046, %v1045
  %v1077 = vpack.c.b16 %v1048, %v1047
  %v1078 = vpack.c.b16 %v1050, %v1049
  %v1079 = vpack.c.b16 %v1052, %v1051
  %v1080 = vpack.c.b16 %v1054, %v1053
  %v1081 = vpack.c.b16 %v1056, %v1055
  %v1082 = vpack.c.b16 %v1058, %v1057
  %v1083 = vpack.c.b16 %v1060, %v1059
  %v1084 = vpack.c.b16 %v1062, %v1061
  %v1085 = vpack.c.b16 %v1064, %v1063
  %v1086 = vpack.c.b16 %v1066, %v1065
  %v1087 = vpack.c.b16 %v1068, %v1067
  %v1088 = vpack.c.b16 %v1070, %v1069
  %v1089 = vpack.c.b16 %v1072, %v1071
  %v1090 = vpack.c.b16 %v1074, %v1073
  %1107 = vmatprep.subr.bf16.mxu0 0
  %1108 = vmatpush1.bf16.msra.mxu0 %v1075
  %1109 = vmatprep.subr.bf16.mxu0 0
  %1110 = vmatpush1.bf16.msra.mxu0 %v1076
  %1111 = vmatprep.subr.bf16.mxu0 0
  %1112 = vmatpush1.bf16.msra.mxu0 %v1077
  %1113 = vmatprep.subr.bf16.mxu0 0
  %1114 = vmatpush1.bf16.msra.mxu0 %v1078
  %1115 = vmatprep.subr.bf16.mxu0 0
  %1116 = vmatpush1.bf16.msra.mxu0 %v1079
  %1117 = vmatprep.subr.bf16.mxu0 0
  %1118 = vmatpush1.bf16.msra.mxu0 %v1080
  %1119 = vmatprep.subr.bf16.mxu0 0
  %1120 = vmatpush1.bf16.msra.mxu0 %v1081
  %1121 = vmatprep.subr.bf16.mxu0 0
  %1122 = vmatpush1.bf16.msra.mxu0 %v1082
  %1123 = vmatprep.subr.bf16.mxu0 0
  %1124 = vmatpush1.bf16.msra.mxu0 %v1083
  %1125 = vmatprep.subr.bf16.mxu0 0
  %1126 = vmatpush1.bf16.msra.mxu0 %v1084
  %1127 = vmatprep.subr.bf16.mxu0 0
  %1128 = vmatpush1.bf16.msra.mxu0 %v1085
  %1129 = vmatprep.subr.bf16.mxu0 0
  %1130 = vmatpush1.bf16.msra.mxu0 %v1086
  %1131 = vmatprep.subr.bf16.mxu0 0
  %1132 = vmatpush1.bf16.msra.mxu0 %v1087
  %1133 = vmatprep.subr.bf16.mxu0 0
  %1134 = vmatpush1.bf16.msra.mxu0 %v1088
  %1135 = vmatprep.subr.bf16.mxu0 0
  %1136 = vmatpush1.bf16.msra.mxu0 %v1089
  %1137 = vmatprep.subr.bf16.mxu0 0
  %1138 = vmatpush1.bf16.msra.mxu0 %v1090
  %1139 = vmatprep.mubr.bf16.mxu0 %v980
  %1140 = vmatmul.mubr.bf16.gmra.mrb[0].mxu0 %v979
  %v1141 = vpop.f32.mrb[0].mxu0
  %v1142 = vadd.f32 0.0, %v1141
  %v1143 = vpop.f32.mrb[0].mxu0
  %v1144 = vpop.f32.mrb[0].mxu0
  %v1145 = vadd.f32 0.0, %v1144
  %v1146 = vpop.f32.mrb[0].mxu0
  %1147 = vmatprep.mubr.bf16.mxu0 %v982
  %1148 = vmatmul.mubr.bf16.gmra.mrb[0].mxu0 %v981
  %v1149 = vpop.f32.mrb[0].mxu0
  %v1150 = vadd.f32 0.0, %v1149
  %v1151 = vpop.f32.mrb[0].mxu0
  %v1152 = vpop.f32.mrb[0].mxu0
  %v1153 = vadd.f32 0.0, %v1152
  %v1154 = vpop.f32.mrb[0].mxu0
  %1155 = vmatprep.mubr.bf16.mxu0 %v984
  %1156 = vmatmul.mubr.bf16.gmra.mrb[0].mxu0 %v983
  %v1157 = vpop.f32.mrb[0].mxu0
  %v1158 = vadd.f32 0.0, %v1157
  %v1159 = vpop.f32.mrb[0].mxu0
  %v1160 = vpop.f32.mrb[0].mxu0
  %v1161 = vadd.f32 0.0, %v1160
  %v1162 = vpop.f32.mrb[0].mxu0
  %1163 = vmatprep.mubr.bf16.mxu0 %v986
  %1164 = vmatmul.mubr.bf16.gmra.mrb[0].mxu0 %v985
  %v1165 = vpop.f32.mrb[0].mxu0
  %v1166 = vadd.f32 0.0, %v1165
  %v1167 = vpop.f32.mrb[0].mxu0
  %v1168 = vpop.f32.mrb[0].mxu0
  %v1169 = vadd.f32 0.0, %v1168
  %v1170 = vpop.f32.mrb[0].mxu0
  %1171 = vmatprep.mubr.bf16.mxu0 %v988
  %1172 = vmatmul.mubr.bf16.gmra.mrb[0].mxu0 %v987
  %v1173 = vpop.f32.mrb[0].mxu0
  %v1174 = vadd.f32 0.0, %v1173
  %v1175 = vpop.f32.mrb[0].mxu0
  %v1176 = vpop.f32.mrb[0].mxu0
  %v1177 = vadd.f32 0.0, %v1176
  %v1178 = vpop.f32.mrb[0].mxu0
  %1179 = vmatprep.mubr.bf16.mxu0 %v990
  %1180 = vmatmul.mubr.bf16.gmra.mrb[0].mxu0 %v989
  %v1181 = vpop.f32.mrb[0].mxu0
  %v1182 = vadd.f32 0.0, %v1181
  %v1183 = vpop.f32.mrb[0].mxu0
  %v1184 = vpop.f32.mrb[0].mxu0
  %v1185 = vadd.f32 0.0, %v1184
  %v1186 = vpop.f32.mrb[0].mxu0
  %1187 = vmatprep.mubr.bf16.mxu0 %v992
  %1188 = vmatmul.mubr.bf16.gmra.mrb[0].mxu0 %v991
  %v1189 = vpop.f32.mrb[0].mxu0
  %v1190 = vadd.f32 0.0, %v1189
  %v1191 = vpop.f32.mrb[0].mxu0
  %v1192 = vpop.f32.mrb[0].mxu0
  %v1193 = vadd.f32 0.0, %v1192
  %v1194 = vpop.f32.mrb[0].mxu0
  %1195 = vmatprep.mubr.bf16.mxu0 %v994
  %1196 = vmatmul.mubr.bf16.gmra.mrb[0].mxu0 %v993
  %v1197 = vpop.f32.mrb[0].mxu0
  %v1198 = vadd.f32 0.0, %v1197
  %v1199 = vpop.f32.mrb[0].mxu0
  %v1200 = vpop.f32.mrb[0].mxu0
  %v1201 = vadd.f32 0.0, %v1200
  %v1202 = vpop.f32.mrb[0].mxu0
  %1203 = vdwg.mxu0
  %v1204 = vadd.f32 %v819, %v1142
  %v1205 = vadd.f32 %v822, %v1145
  %v1206 = vadd.f32 %v827, %v1150
  %v1207 = vadd.f32 %v830, %v1153
  %v1208 = vadd.f32 %v835, %v1158
  %v1209 = vadd.f32 %v838, %v1161
  %v1210 = vadd.f32 %v843, %v1166
  %v1211 = vadd.f32 %v846, %v1169
  %v1212 = vadd.f32 %v851, %v1174
  %v1213 = vadd.f32 %v854, %v1177
  %v1214 = vadd.f32 %v859, %v1182
  %v1215 = vadd.f32 %v862, %v1185
  %v1216 = vadd.f32 %v867, %v1190
  %v1217 = vadd.f32 %v870, %v1193
  %v1218 = vadd.f32 %v875, %v1198
  %v1219 = vadd.f32 %v878, %v1201
  %v1220 = vld [vmem:[%s881] sm:$0xff]
  %v1221 = vld [vmem:[%s881 + $0x8] sm:$0x11]
  %v1222 = vld [vmem:[%s881 + $0x10] sm:$0xff]
  %v1223 = vld [vmem:[%s881 + $0x18] sm:$0x11]
  %v1224 = vld [vmem:[%s881 + $0x20] sm:$0xff]
  %v1225 = vld [vmem:[%s881 + $0x28] sm:$0x11]
  %v1226 = vld [vmem:[%s881 + $0x30] sm:$0xff]
  %v1227 = vld [vmem:[%s881 + $0x38] sm:$0x11]
  %v1228 = vld [vmem:[%s881 + $0x40] sm:$0xff]
  %v1229 = vld [vmem:[%s881 + $0x48] sm:$0x11]
  %v1230 = vld [vmem:[%s881 + $0x50] sm:$0xff]
  %v1231 = vld [vmem:[%s881 + $0x58] sm:$0x11]
  %v1232 = vld [vmem:[%s881 + $0x60] sm:$0xff]
  %v1233 = vld [vmem:[%s881 + $0x68] sm:$0x11]
  %v1234 = vld [vmem:[%s881 + $0x70] sm:$0xff]
  %v1235 = vld [vmem:[%s881 + $0x78] sm:$0x11]
  %v1236 = vld [vmem:[%s881 + $0x90] sm:$0xff]
  %v1237 = vld [vmem:[%s881 + $0x98] sm:$0x11]
  %v1238 = vld [vmem:[%s881 + $0xa0] sm:$0xff]
  %v1239 = vld [vmem:[%s881 + $0xa8] sm:$0x11]
  %v1240 = vld [vmem:[%s881 + $0xb0] sm:$0xff]
  %v1241 = vld [vmem:[%s881 + $0xb8] sm:$0x11]
  %v1242 = vld [vmem:[%s881 + $0xc0] sm:$0xff]
  %v1243 = vld [vmem:[%s881 + $0xc8] sm:$0x11]
  %v1244 = vld [vmem:[%s881 + $0xd0] sm:$0xff]
  %v1245 = vld [vmem:[%s881 + $0xd8] sm:$0x11]
  %v1246 = vld [vmem:[%s881 + $0xe0] sm:$0xff]
  %v1247 = vld [vmem:[%s881 + $0xe8] sm:$0x11]
  %v1248 = vld [vmem:[%s881 + $0xf0] sm:$0xff]
  %v1249 = vld [vmem:[%s881 + $0xf8] sm:$0x11]
  %v1250 = vld [vmem:[%s881 + $0x100] sm:$0xff]
  %v1251 = vld [vmem:[%s881 + $0x108] sm:$0x11]
  %v1253 = vshrl.u32 %v1220, 16
  %v1255 = vrot.slane %v1253, 4
  %v1256 = vshll.u32 %v1220, 16
  %v1258 = vrot.slane %v1256, 5
  %v1259 = vor.u32 %v1255, %v1258
  %v1260 = vrot.slane %v1259, 4
  %v1262 = vshll.u32 %v1221, 16
  %v1264 = vrot.slane %v1262, 5
  %v1265 = vsel %vm93, %v1260, %v1264
  %v1267 = vshrl.u32 %v1222, 16
  %v1269 = vrot.slane %v1267, 4
  %v1270 = vshll.u32 %v1222, 16
  %v1272 = vrot.slane %v1270, 5
  %v1273 = vor.u32 %v1269, %v1272
  %v1274 = vrot.slane %v1273, 4
  %v1276 = vshll.u32 %v1223, 16
  %v1278 = vrot.slane %v1276, 5
  %v1279 = vsel %vm93, %v1274, %v1278
  %v1281 = vshrl.u32 %v1224, 16
  %v1283 = vrot.slane %v1281, 4
  %v1284 = vshll.u32 %v1224, 16
  %v1286 = vrot.slane %v1284, 5
  %v1287 = vor.u32 %v1283, %v1286
  %v1288 = vrot.slane %v1287, 4
  %v1290 = vshll.u32 %v1225, 16
  %v1292 = vrot.slane %v1290, 5
  %v1293 = vsel %vm93, %v1288, %v1292
  %v1295 = vshrl.u32 %v1226, 16
  %v1297 = vrot.slane %v1295, 4
  %v1298 = vshll.u32 %v1226, 16
  %v1300 = vrot.slane %v1298, 5
  %v1301 = vor.u32 %v1297, %v1300
  %v1302 = vrot.slane %v1301, 4
  %v1304 = vshll.u32 %v1227, 16
  %v1306 = vrot.slane %v1304, 5
  %v1307 = vsel %vm93, %v1302, %v1306
  %v1309 = vshrl.u32 %v1228, 16
  %v1311 = vrot.slane %v1309, 4
  %v1312 = vshll.u32 %v1228, 16
  %v1314 = vrot.slane %v1312, 5
  %v1315 = vor.u32 %v1311, %v1314
  %v1316 = vrot.slane %v1315, 4
  %v1318 = vshll.u32 %v1229, 16
  %v1320 = vrot.slane %v1318, 5
  %v1321 = vsel %vm93, %v1316, %v1320
  %v1323 = vshrl.u32 %v1230, 16
  %v1325 = vrot.slane %v1323, 4
  %v1326 = vshll.u32 %v1230, 16
  %v1328 = vrot.slane %v1326, 5
  %v1329 = vor.u32 %v1325, %v1328
  %v1330 = vrot.slane %v1329, 4
  %v1332 = vshll.u32 %v1231, 16
  %v1334 = vrot.slane %v1332, 5
  %v1335 = vsel %vm93, %v1330, %v1334
  %v1337 = vshrl.u32 %v1232, 16
  %v1339 = vrot.slane %v1337, 4
  %v1340 = vshll.u32 %v1232, 16
  %v1342 = vrot.slane %v1340, 5
  %v1343 = vor.u32 %v1339, %v1342
  %v1344 = vrot.slane %v1343, 4
  %v1346 = vshll.u32 %v1233, 16
  %v1348 = vrot.slane %v1346, 5
  %v1349 = vsel %vm93, %v1344, %v1348
  %v1351 = vshrl.u32 %v1234, 16
  %v1353 = vrot.slane %v1351, 4
  %v1354 = vshll.u32 %v1234, 16
  %v1356 = vrot.slane %v1354, 5
  %v1357 = vor.u32 %v1353, %v1356
  %v1358 = vrot.slane %v1357, 4
  %v1360 = vshll.u32 %v1235, 16
  %v1362 = vrot.slane %v1360, 5
  %v1363 = vsel %vm93, %v1358, %v1362
  %v1365 = vshrl.u32 %v1236, 16
  %v1367 = vrot.slane %v1365, 4
  %v1368 = vshll.u32 %v1236, 16
  %v1370 = vrot.slane %v1368, 5
  %v1371 = vor.u32 %v1367, %v1370
  %v1372 = vrot.slane %v1371, 4
  %v1374 = vshll.u32 %v1237, 16
  %v1376 = vrot.slane %v1374, 5
  %v1377 = vsel %vm93, %v1372, %v1376
  %v1379 = vshrl.u32 %v1238, 16
  %v1381 = vrot.slane %v1379, 4
  %v1382 = vshll.u32 %v1238, 16
  %v1384 = vrot.slane %v1382, 5
  %v1385 = vor.u32 %v1381, %v1384
  %v1386 = vrot.slane %v1385, 4
  %v1388 = vshll.u32 %v1239, 16
  %v1390 = vrot.slane %v1388, 5
  %v1391 = vsel %vm93, %v1386, %v1390
  %v1393 = vshrl.u32 %v1240, 16
  %v1395 = vrot.slane %v1393, 4
  %v1396 = vshll.u32 %v1240, 16
  %v1398 = vrot.slane %v1396, 5
  %v1399 = vor.u32 %v1395, %v1398
  %v1400 = vrot.slane %v1399, 4
  %v1402 = vshll.u32 %v1241, 16
  %v1404 = vrot.slane %v1402, 5
  %v1405 = vsel %vm93, %v1400, %v1404
  %v1407 = vshrl.u32 %v1242, 16
  %v1409 = vrot.slane %v1407, 4
  %v1410 = vshll.u32 %v1242, 16
  %v1412 = vrot.slane %v1410, 5
  %v1413 = vor.u32 %v1409, %v1412
  %v1414 = vrot.slane %v1413, 4
  %v1416 = vshll.u32 %v1243, 16
  %v1418 = vrot.slane %v1416, 5
  %v1419 = vsel %vm93, %v1414, %v1418
  %v1421 = vshrl.u32 %v1244, 16
  %v1423 = vrot.slane %v1421, 4
  %v1424 = vshll.u32 %v1244, 16
  %v1426 = vrot.slane %v1424, 5
  %v1427 = vor.u32 %v1423, %v1426
  %v1428 = vrot.slane %v1427, 4
  %v1430 = vshll.u32 %v1245, 16
  %v1432 = vrot.slane %v1430, 5
  %v1433 = vsel %vm93, %v1428, %v1432
  %v1435 = vshrl.u32 %v1246, 16
  %v1437 = vrot.slane %v1435, 4
  %v1438 = vshll.u32 %v1246, 16
  %v1440 = vrot.slane %v1438, 5
  %v1441 = vor.u32 %v1437, %v1440
  %v1442 = vrot.slane %v1441, 4
  %v1444 = vshll.u32 %v1247, 16
  %v1446 = vrot.slane %v1444, 5
  %v1447 = vsel %vm93, %v1442, %v1446
  %v1449 = vshrl.u32 %v1248, 16
  %v1451 = vrot.slane %v1449, 4
  %v1452 = vshll.u32 %v1248, 16
  %v1454 = vrot.slane %v1452, 5
  %v1455 = vor.u32 %v1451, %v1454
  %v1456 = vrot.slane %v1455, 4
  %v1458 = vshll.u32 %v1249, 16
  %v1460 = vrot.slane %v1458, 5
  %v1461 = vsel %vm93, %v1456, %v1460
  %v1463 = vshrl.u32 %v1250, 16
  %v1465 = vrot.slane %v1463, 4
  %v1466 = vshll.u32 %v1250, 16
  %v1468 = vrot.slane %v1466, 5
  %v1469 = vor.u32 %v1465, %v1468
  %v1470 = vrot.slane %v1469, 4
  %v1472 = vshll.u32 %v1251, 16
  %v1474 = vrot.slane %v1472, 5
  %v1475 = vsel %vm93, %v1470, %v1474
  %s1476 = scalar_lea.vmem %s1, 384
  %v1477 = vld [vmem:[%s1476] sm:$0xf]
  %v1478 = vld [vmem:[%s1476 + $0x4] sm:$0xf]
  %v1479 = vld [vmem:[%s1476 + $0x8] sm:$0xf]
  %v1480 = vld [vmem:[%s1476 + $0xc] sm:$0xf]
  %v1481 = vld [vmem:[%s1476 + $0x10] sm:$0xf]
  %v1482 = vld [vmem:[%s1476 + $0x14] sm:$0xf]
  %v1483 = vld [vmem:[%s1476 + $0x18] sm:$0xf]
  %v1484 = vld [vmem:[%s1476 + $0x1c] sm:$0xf]
  %v1485 = vld [vmem:[%s1476 + $0x20] sm:$0xf]
  %v1486 = vld [vmem:[%s1476 + $0x24] sm:$0xf]
  %v1487 = vld [vmem:[%s1476 + $0x28] sm:$0xf]
  %v1488 = vld [vmem:[%s1476 + $0x2c] sm:$0xf]
  %v1489 = vld [vmem:[%s1476 + $0x30] sm:$0xf]
  %v1490 = vld [vmem:[%s1476 + $0x34] sm:$0xf]
  %v1491 = vld [vmem:[%s1476 + $0x38] sm:$0xf]
  %v1492 = vld [vmem:[%s1476 + $0x3c] sm:$0xf]
  %v1493 = vld [vmem:[%s1476 + $0x40] sm:$0xf]
  %v1494 = vld [vmem:[%s1476 + $0x44] sm:$0xf]
  %v1495 = vld [vmem:[%s1476 + $0x48] sm:$0xf]
  %v1496 = vld [vmem:[%s1476 + $0x4c] sm:$0xf]
  %v1497 = vld [vmem:[%s1476 + $0x50] sm:$0xf]
  %v1498 = vld [vmem:[%s1476 + $0x54] sm:$0xf]
  %v1499 = vld [vmem:[%s1476 + $0x58] sm:$0xf]
  %v1500 = vld [vmem:[%s1476 + $0x5c] sm:$0xf]
  %v1501 = vld [vmem:[%s1476 + $0x60] sm:$0xf]
  %v1502 = vld [vmem:[%s1476 + $0x64] sm:$0xf]
  %v1503 = vld [vmem:[%s1476 + $0x68] sm:$0xf]
  %v1504 = vld [vmem:[%s1476 + $0x6c] sm:$0xf]
  %v1505 = vld [vmem:[%s1476 + $0x70] sm:$0xf]
  %v1506 = vld [vmem:[%s1476 + $0x74] sm:$0xf]
  %v1507 = vld [vmem:[%s1476 + $0x78] sm:$0xf]
  %v1508 = vld [vmem:[%s1476 + $0x7c] sm:$0xf]
  %v1509 = vunpack.c.l.b16 %v1265
  %v1510 = vunpack.c.h.b16 %v1265
  %v1511 = vunpack.c.l.b16 %v1279
  %v1512 = vunpack.c.h.b16 %v1279
  %v1513 = vunpack.c.l.b16 %v1293
  %v1514 = vunpack.c.h.b16 %v1293
  %v1515 = vunpack.c.l.b16 %v1307
  %v1516 = vunpack.c.h.b16 %v1307
  %v1517 = vunpack.c.l.b16 %v1321
  %v1518 = vunpack.c.h.b16 %v1321
  %v1519 = vunpack.c.l.b16 %v1335
  %v1520 = vunpack.c.h.b16 %v1335
  %v1521 = vunpack.c.l.b16 %v1349
  %v1522 = vunpack.c.h.b16 %v1349
  %v1523 = vunpack.c.l.b16 %v1363
  %v1524 = vunpack.c.h.b16 %v1363
  %v1525 = vunpack.c.l.b16 %v1377
  %v1526 = vunpack.c.h.b16 %v1377
  %v1527 = vunpack.c.l.b16 %v1391
  %v1528 = vunpack.c.h.b16 %v1391
  %v1529 = vunpack.c.l.b16 %v1405
  %v1530 = vunpack.c.h.b16 %v1405
  %v1531 = vunpack.c.l.b16 %v1419
  %v1532 = vunpack.c.h.b16 %v1419
  %v1533 = vunpack.c.l.b16 %v1433
  %v1534 = vunpack.c.h.b16 %v1433
  %v1535 = vunpack.c.l.b16 %v1447
  %v1536 = vunpack.c.h.b16 %v1447
  %v1537 = vunpack.c.l.b16 %v1461
  %v1538 = vunpack.c.h.b16 %v1461
  %v1539 = vunpack.c.l.b16 %v1475
  %v1540 = vunpack.c.h.b16 %v1475
  %v1541 = vpack.c.b16 %v1511, %v1509
  %v1542 = vpack.c.b16 %v1512, %v1510
  %v1543 = vpack.c.b16 %v1515, %v1513
  %v1544 = vpack.c.b16 %v1516, %v1514
  %v1545 = vpack.c.b16 %v1519, %v1517
  %v1546 = vpack.c.b16 %v1520, %v1518
  %v1547 = vpack.c.b16 %v1523, %v1521
  %v1548 = vpack.c.b16 %v1524, %v1522
  %v1549 = vpack.c.b16 %v1527, %v1525
  %v1550 = vpack.c.b16 %v1528, %v1526
  %v1551 = vpack.c.b16 %v1531, %v1529
  %v1552 = vpack.c.b16 %v1532, %v1530
  %v1553 = vpack.c.b16 %v1535, %v1533
  %v1554 = vpack.c.b16 %v1536, %v1534
  %v1555 = vpack.c.b16 %v1539, %v1537
  %v1556 = vpack.c.b16 %v1540, %v1538
  %v1605 = vunpack.c.l.b16 %v1477
  %v1606 = vunpack.c.l.b16 %v1478
  %v1607 = vunpack.c.l.b16 %v1479
  %v1608 = vunpack.c.l.b16 %v1480
  %v1609 = vunpack.c.l.b16 %v1481
  %v1610 = vunpack.c.l.b16 %v1482
  %v1611 = vunpack.c.l.b16 %v1483
  %v1612 = vunpack.c.l.b16 %v1484
  %v1613 = vunpack.c.l.b16 %v1485
  %v1614 = vunpack.c.l.b16 %v1486
  %v1615 = vunpack.c.l.b16 %v1487
  %v1616 = vunpack.c.l.b16 %v1488
  %v1617 = vunpack.c.l.b16 %v1489
  %v1618 = vunpack.c.l.b16 %v1490
  %v1619 = vunpack.c.l.b16 %v1491
  %v1620 = vunpack.c.l.b16 %v1492
  %v1621 = vunpack.c.l.b16 %v1493
  %v1622 = vunpack.c.l.b16 %v1494
  %v1623 = vunpack.c.l.b16 %v1495
  %v1624 = vunpack.c.l.b16 %v1496
  %v1625 = vunpack.c.l.b16 %v1497
  %v1626 = vunpack.c.l.b16 %v1498
  %v1627 = vunpack.c.l.b16 %v1499
  %v1628 = vunpack.c.l.b16 %v1500
  %v1629 = vunpack.c.l.b16 %v1501
  %v1630 = vunpack.c.l.b16 %v1502
  %v1631 = vunpack.c.l.b16 %v1503
  %v1632 = vunpack.c.l.b16 %v1504
  %v1633 = vunpack.c.l.b16 %v1505
  %v1634 = vunpack.c.l.b16 %v1506
  %v1635 = vunpack.c.l.b16 %v1507
  %v1636 = vunpack.c.l.b16 %v1508
  %v1637 = vpack.c.b16 %v1606, %v1605
  %v1638 = vpack.c.b16 %v1608, %v1607
  %v1639 = vpack.c.b16 %v1610, %v1609
  %v1640 = vpack.c.b16 %v1612, %v1611
  %v1641 = vpack.c.b16 %v1614, %v1613
  %v1642 = vpack.c.b16 %v1616, %v1615
  %v1643 = vpack.c.b16 %v1618, %v1617
  %v1644 = vpack.c.b16 %v1620, %v1619
  %v1645 = vpack.c.b16 %v1622, %v1621
  %v1646 = vpack.c.b16 %v1624, %v1623
  %v1647 = vpack.c.b16 %v1626, %v1625
  %v1648 = vpack.c.b16 %v1628, %v1627
  %v1649 = vpack.c.b16 %v1630, %v1629
  %v1650 = vpack.c.b16 %v1632, %v1631
  %v1651 = vpack.c.b16 %v1634, %v1633
  %v1652 = vpack.c.b16 %v1636, %v1635
  %1669 = vmatprep.subr.bf16.mxu0 0
  %1670 = vmatpush1.bf16.msra.mxu0 %v1637
  %1671 = vmatprep.subr.bf16.mxu0 0
  %1672 = vmatpush1.bf16.msra.mxu0 %v1638
  %1673 = vmatprep.subr.bf16.mxu0 0
  %1674 = vmatpush1.bf16.msra.mxu0 %v1639
  %1675 = vmatprep.subr.bf16.mxu0 0
  %1676 = vmatpush1.bf16.msra.mxu0 %v1640
  %1677 = vmatprep.subr.bf16.mxu0 0
  %1678 = vmatpush1.bf16.msra.mxu0 %v1641
  %1679 = vmatprep.subr.bf16.mxu0 0
  %1680 = vmatpush1.bf16.msra.mxu0 %v1642
  %1681 = vmatprep.subr.bf16.mxu0 0
  %1682 = vmatpush1.bf16.msra.mxu0 %v1643
  %1683 = vmatprep.subr.bf16.mxu0 0
  %1684 = vmatpush1.bf16.msra.mxu0 %v1644
  %1685 = vmatprep.subr.bf16.mxu0 0
  %1686 = vmatpush1.bf16.msra.mxu0 %v1645
  %1687 = vmatprep.subr.bf16.mxu0 0
  %1688 = vmatpush1.bf16.msra.mxu0 %v1646
  %1689 = vmatprep.subr.bf16.mxu0 0
  %1690 = vmatpush1.bf16.msra.mxu0 %v1647
  %1691 = vmatprep.subr.bf16.mxu0 0
  %1692 = vmatpush1.bf16.msra.mxu0 %v1648
  %1693 = vmatprep.subr.bf16.mxu0 0
  %1694 = vmatpush1.bf16.msra.mxu0 %v1649
  %1695 = vmatprep.subr.bf16.mxu0 0
  %1696 = vmatpush1.bf16.msra.mxu0 %v1650
  %1697 = vmatprep.subr.bf16.mxu0 0
  %1698 = vmatpush1.bf16.msra.mxu0 %v1651
  %1699 = vmatprep.subr.bf16.mxu0 0
  %1700 = vmatpush1.bf16.msra.mxu0 %v1652
  %1701 = vmatprep.mubr.bf16.mxu0 %v1542
  %1702 = vmatmul.mubr.bf16.gmra.mrb[0].mxu0 %v1541
  %v1703 = vpop.f32.mrb[0].mxu0
  %v1704 = vadd.f32 0.0, %v1703
  %v1705 = vpop.f32.mrb[0].mxu0
  %v1706 = vpop.f32.mrb[0].mxu0
  %v1707 = vadd.f32 0.0, %v1706
  %v1708 = vpop.f32.mrb[0].mxu0
  %1709 = vmatprep.mubr.bf16.mxu0 %v1544
  %1710 = vmatmul.mubr.bf16.gmra.mrb[0].mxu0 %v1543
  %v1711 = vpop.f32.mrb[0].mxu0
  %v1712 = vadd.f32 0.0, %v1711
  %v1713 = vpop.f32.mrb[0].mxu0
  %v1714 = vpop.f32.mrb[0].mxu0
  %v1715 = vadd.f32 0.0, %v1714
  %v1716 = vpop.f32.mrb[0].mxu0
  %1717 = vmatprep.mubr.bf16.mxu0 %v1546
  %1718 = vmatmul.mubr.bf16.gmra.mrb[0].mxu0 %v1545
  %v1719 = vpop.f32.mrb[0].mxu0
  %v1720 = vadd.f32 0.0, %v1719
  %v1721 = vpop.f32.mrb[0].mxu0
  %v1722 = vpop.f32.mrb[0].mxu0
  %v1723 = vadd.f32 0.0, %v1722
  %v1724 = vpop.f32.mrb[0].mxu0
  %1725 = vmatprep.mubr.bf16.mxu0 %v1548
  %1726 = vmatmul.mubr.bf16.gmra.mrb[0].mxu0 %v1547
  %v1727 = vpop.f32.mrb[0].mxu0
  %v1728 = vadd.f32 0.0, %v1727
  %v1729 = vpop.f32.mrb[0].mxu0
  %v1730 = vpop.f32.mrb[0].mxu0
  %v1731 = vadd.f32 0.0, %v1730
  %v1732 = vpop.f32.mrb[0].mxu0
  %1733 = vmatprep.mubr.bf16.mxu0 %v1550
  %1734 = vmatmul.mubr.bf16.gmra.mrb[0].mxu0 %v1549
  %v1735 = vpop.f32.mrb[0].mxu0
  %v1736 = vadd.f32 0.0, %v1735
  %v1737 = vpop.f32.mrb[0].mxu0
  %v1738 = vpop.f32.mrb[0].mxu0
  %v1739 = vadd.f32 0.0, %v1738
  %v1740 = vpop.f32.mrb[0].mxu0
  %1741 = vmatprep.mubr.bf16.mxu0 %v1552
  %1742 = vmatmul.mubr.bf16.gmra.mrb[0].mxu0 %v1551
  %v1743 = vpop.f32.mrb[0].mxu0
  %v1744 = vadd.f32 0.0, %v1743
  %v1745 = vpop.f32.mrb[0].mxu0
  %v1746 = vpop.f32.mrb[0].mxu0
  %v1747 = vadd.f32 0.0, %v1746
  %v1748 = vpop.f32.mrb[0].mxu0
  %1749 = vmatprep.mubr.bf16.mxu0 %v1554
  %1750 = vmatmul.mubr.bf16.gmra.mrb[0].mxu0 %v1553
  %v1751 = vpop.f32.mrb[0].mxu0
  %v1752 = vadd.f32 0.0, %v1751
  %v1753 = vpop.f32.mrb[0].mxu0
  %v1754 = vpop.f32.mrb[0].mxu0
  %v1755 = vadd.f32 0.0, %v1754
  %v1756 = vpop.f32.mrb[0].mxu0
  %1757 = vmatprep.mubr.bf16.mxu0 %v1556
  %1758 = vmatmul.mubr.bf16.gmra.mrb[0].mxu0 %v1555
  %v1759 = vpop.f32.mrb[0].mxu0
  %v1760 = vadd.f32 0.0, %v1759
  %v1761 = vpop.f32.mrb[0].mxu0
  %v1762 = vpop.f32.mrb[0].mxu0
  %v1763 = vadd.f32 0.0, %v1762
  %v1764 = vpop.f32.mrb[0].mxu0
  %1765 = vdwg.mxu0
  %v1766 = vadd.f32 %v1204, %v1704
  %v1767 = vadd.f32 %v1205, %v1707
  %v1768 = vadd.f32 %v1206, %v1712
  %v1769 = vadd.f32 %v1207, %v1715
  %v1770 = vadd.f32 %v1208, %v1720
  %v1771 = vadd.f32 %v1209, %v1723
  %v1772 = vadd.f32 %v1210, %v1728
  %v1773 = vadd.f32 %v1211, %v1731
  %v1774 = vadd.f32 %v1212, %v1736
  %v1775 = vadd.f32 %v1213, %v1739
  %v1776 = vadd.f32 %v1214, %v1744
  %v1777 = vadd.f32 %v1215, %v1747
  %v1778 = vadd.f32 %v1216, %v1752
  %v1779 = vadd.f32 %v1217, %v1755
  %v1780 = vadd.f32 %v1218, %v1760
  %v1781 = vadd.f32 %v1219, %v1763
  %v1782 = vld [vmem:[%s2] sm:$0x1]
  %v1784 = vlaneseq
  %v1785 = vshrl.u32 %v1784, 7
  %v1786 = vsub.s32 0, %v1785
  %v1787 = vrot.slane %v1782, %v1786
  %v1789 = vadd.f32 %v1766, %v1787
  %v1790 = vadd.f32 %v1767, %v1787
  %v1791 = vadd.f32 %v1768, %v1787
  %v1792 = vadd.f32 %v1769, %v1787
  %v1793 = vadd.f32 %v1770, %v1787
  %v1794 = vadd.f32 %v1771, %v1787
  %v1795 = vadd.f32 %v1772, %v1787
  %v1796 = vadd.f32 %v1773, %v1787
  %v1797 = vadd.f32 %v1774, %v1787
  %v1798 = vadd.f32 %v1775, %v1787
  %v1799 = vadd.f32 %v1776, %v1787
  %v1800 = vadd.f32 %v1777, %v1787
  %v1801 = vadd.f32 %v1778, %v1787
  %v1802 = vadd.f32 %v1779, %v1787
  %v1803 = vadd.f32 %v1780, %v1787
  %v1804 = vadd.f32 %v1781, %v1787
  %v1805 = vmax.f32 %v1789, 0.0
  %v1806 = vmax.f32 %v1790, 0.0
  %v1807 = vmax.f32 %v1791, 0.0
  %v1808 = vmax.f32 %v1792, 0.0
  %v1809 = vmax.f32 %v1793, 0.0
  %v1810 = vmax.f32 %v1794, 0.0
  %v1811 = vmax.f32 %v1795, 0.0
  %v1812 = vmax.f32 %v1796, 0.0
  %v1813 = vmax.f32 %v1797, 0.0
  %v1814 = vmax.f32 %v1798, 0.0
  %v1815 = vmax.f32 %v1799, 0.0
  %v1816 = vmax.f32 %v1800, 0.0
  %v1817 = vmax.f32 %v1801, 0.0
  %v1818 = vmax.f32 %v1802, 0.0
  %v1819 = vmax.f32 %v1803, 0.0
  %v1820 = vmax.f32 %v1804, 0.0
  %v1821 = vpack.c.bf16 %v1806, %v1805
  %v1822 = vpack.c.bf16 %v1808, %v1807
  %v1823 = vpack.c.bf16 %v1810, %v1809
  %v1824 = vpack.c.bf16 %v1812, %v1811
  %v1825 = vpack.c.bf16 %v1814, %v1813
  %v1826 = vpack.c.bf16 %v1816, %v1815
  %v1827 = vpack.c.bf16 %v1818, %v1817
  %v1828 = vpack.c.bf16 %v1820, %v1819
  %v1837 = vunpack.c.l.b16 %v1821
  %v1838 = vunpack.c.h.b16 %v1821
  %v1839 = vunpack.c.l.b16 %v1822
  %v1840 = vunpack.c.h.b16 %v1822
  %v1841 = vunpack.c.l.b16 %v1823
  %v1842 = vunpack.c.h.b16 %v1823
  %v1843 = vunpack.c.l.b16 %v1824
  %v1844 = vunpack.c.h.b16 %v1824
  %v1845 = vunpack.c.l.b16 %v1825
  %v1846 = vunpack.c.h.b16 %v1825
  %v1847 = vunpack.c.l.b16 %v1826
  %v1848 = vunpack.c.h.b16 %v1826
  %v1849 = vunpack.c.l.b16 %v1827
  %v1850 = vunpack.c.h.b16 %v1827
  %v1851 = vunpack.c.l.b16 %v1828
  %v1852 = vunpack.c.h.b16 %v1828
  %v1853 = vpack.c.b16 %v1837, %v1837
  %v1854 = vpack.c.b16 %v1838, %v1838
  %v1855 = vpack.c.b16 %v1839, %v1839
  %v1856 = vpack.c.b16 %v1840, %v1840
  %v1857 = vpack.c.b16 %v1841, %v1841
  %v1858 = vpack.c.b16 %v1842, %v1842
  %v1859 = vpack.c.b16 %v1843, %v1843
  %v1860 = vpack.c.b16 %v1844, %v1844
  %v1861 = vpack.c.b16 %v1845, %v1845
  %v1862 = vpack.c.b16 %v1846, %v1846
  %v1863 = vpack.c.b16 %v1847, %v1847
  %v1864 = vpack.c.b16 %v1848, %v1848
  %v1865 = vpack.c.b16 %v1849, %v1849
  %v1866 = vpack.c.b16 %v1850, %v1850
  %v1867 = vpack.c.b16 %v1851, %v1851
  %v1868 = vpack.c.b16 %v1852, %v1852
  %1885 = vst [vmem:[#allocation2] sm:$0xf] %v1853
  %1886 = vst [vmem:[#allocation2 + $0x8] sm:$0xf] %v1854
  %1887 = vst [vmem:[#allocation2 + $0x10] sm:$0xf] %v1855
  %1888 = vst [vmem:[#allocation2 + $0x18] sm:$0xf] %v1856
  %1889 = vst [vmem:[#allocation2 + $0x20] sm:$0xf] %v1857
  %1890 = vst [vmem:[#allocation2 + $0x28] sm:$0xf] %v1858
  %1891 = vst [vmem:[#allocation2 + $0x30] sm:$0xf] %v1859
  %1892 = vst [vmem:[#allocation2 + $0x38] sm:$0xf] %v1860
  %1893 = vst [vmem:[#allocation2 + $0x40] sm:$0xf] %v1861
  %1894 = vst [vmem:[#allocation2 + $0x48] sm:$0xf] %v1862
  %1895 = vst [vmem:[#allocation2 + $0x50] sm:$0xf] %v1863
  %1896 = vst [vmem:[#allocation2 + $0x58] sm:$0xf] %v1864
  %1897 = vst [vmem:[#allocation2 + $0x60] sm:$0xf] %v1865
  %1898 = vst [vmem:[#allocation2 + $0x68] sm:$0xf] %v1866
  %1899 = vst [vmem:[#allocation2 + $0x70] sm:$0xf] %v1867
  %1900 = vst [vmem:[#allocation2 + $0x78] sm:$0xf] %v1868
  %v1901 = vld [vmem:[#allocation2] sm:$0xf]
  %v1902 = vld [vmem:[#allocation2 + $0x8] sm:$0xf]
  %v1903 = vld [vmem:[#allocation2 + $0x10] sm:$0xf]
  %v1904 = vld [vmem:[#allocation2 + $0x18] sm:$0xf]
  %v1905 = vld [vmem:[#allocation2 + $0x20] sm:$0xf]
  %v1906 = vld [vmem:[#allocation2 + $0x28] sm:$0xf]
  %v1907 = vld [vmem:[#allocation2 + $0x40] sm:$0xf]
  %v1908 = vld [vmem:[#allocation2 + $0x48] sm:$0xf]
  %v1909 = vld [vmem:[#allocation2 + $0x50] sm:$0xf]
  %v1910 = vld [vmem:[#allocation2 + $0x58] sm:$0xf]
  %v1911 = vld [vmem:[#allocation2 + $0x60] sm:$0xf]
  %v1912 = vld [vmem:[#allocation2 + $0x68] sm:$0xf]
  %v1913 = vld [vmem:[%s3] sm:$0xf]
  %v1914 = vld [vmem:[%s3 + $0x4] sm:$0xf]
  %v1915 = vld [vmem:[%s3 + $0x8] sm:$0xf]
  %v1916 = vld [vmem:[%s3 + $0xc] sm:$0xf]
  %v1917 = vld [vmem:[%s3 + $0x10] sm:$0xf]
  %v1918 = vld [vmem:[%s3 + $0x14] sm:$0xf]
  %v1919 = vld [vmem:[%s3 + $0x18] sm:$0xf]
  %v1920 = vld [vmem:[%s3 + $0x1c] sm:$0xf]
  %v1921 = vld [vmem:[%s3 + $0x20] sm:$0xf]
  %v1922 = vld [vmem:[%s3 + $0x24] sm:$0xf]
  %v1923 = vld [vmem:[%s3 + $0x28] sm:$0xf]
  %v1924 = vld [vmem:[%s3 + $0x2c] sm:$0xf]
  %v1925 = vld [vmem:[%s3 + $0x30] sm:$0xf]
  %v1926 = vld [vmem:[%s3 + $0x34] sm:$0xf]
  %v1927 = vld [vmem:[%s3 + $0x38] sm:$0xf]
  %v1928 = vld [vmem:[%s3 + $0x3c] sm:$0xf]
  %v1929 = vld [vmem:[#allocation2] sm:$0x1f]
  %v1930 = vld [vmem:[#allocation2 + $0x8] sm:$0x1f]
  %v1931 = vld [vmem:[#allocation2 + $0x10] sm:$0x1f]
  %v1932 = vld [vmem:[#allocation2 + $0x18] sm:$0x1f]
  %v1933 = vld [vmem:[#allocation2 + $0x20] sm:$0x1f]
  %v1934 = vld [vmem:[#allocation2 + $0x28] sm:$0x1f]
  %v1935 = vld [vmem:[#allocation2 + $0x40] sm:$0x1f]
  %v1936 = vld [vmem:[#allocation2 + $0x48] sm:$0x1f]
  %v1937 = vld [vmem:[#allocation2 + $0x50] sm:$0x1f]
  %v1938 = vld [vmem:[#allocation2 + $0x58] sm:$0x1f]
  %v1939 = vld [vmem:[#allocation2 + $0x60] sm:$0x1f]
  %v1940 = vld [vmem:[#allocation2 + $0x68] sm:$0x1f]
  %v1953 = vunpack.c.l.b16 %v1929
  %v1954 = vunpack.c.h.b16 %v1929
  %v1955 = vunpack.c.l.b16 %v1930
  %v1956 = vunpack.c.h.b16 %v1930
  %v1957 = vunpack.c.l.b16 %v1931
  %v1958 = vunpack.c.h.b16 %v1931
  %v1959 = vunpack.c.l.b16 %v1932
  %v1960 = vunpack.c.h.b16 %v1932
  %v1961 = vunpack.c.l.b16 %v1933
  %v1962 = vunpack.c.h.b16 %v1933
  %v1963 = vunpack.c.l.b16 %v1934
  %v1964 = vunpack.c.h.b16 %v1934
  %v1965 = vunpack.c.l.b16 %v1935
  %v1966 = vunpack.c.h.b16 %v1935
  %v1967 = vunpack.c.l.b16 %v1936
  %v1968 = vunpack.c.h.b16 %v1936
  %v1969 = vunpack.c.l.b16 %v1937
  %v1970 = vunpack.c.h.b16 %v1937
  %v1971 = vunpack.c.l.b16 %v1938
  %v1972 = vunpack.c.h.b16 %v1938
  %v1973 = vunpack.c.l.b16 %v1939
  %v1974 = vunpack.c.h.b16 %v1939
  %v1975 = vunpack.c.l.b16 %v1940
  %v1976 = vunpack.c.h.b16 %v1940
  %v1977 = vpack.c.b16 %v1953, %v1953
  %v1978 = vpack.c.b16 %v1954, %v1954
  %v1979 = vpack.c.b16 %v1955, %v1955
  %v1980 = vpack.c.b16 %v1956, %v1956
  %v1981 = vpack.c.b16 %v1957, %v1957
  %v1982 = vpack.c.b16 %v1958, %v1958
  %v1983 = vpack.c.b16 %v1959, %v1959
  %v1984 = vpack.c.b16 %v1960, %v1960
  %v1985 = vpack.c.b16 %v1961, %v1961
  %v1986 = vpack.c.b16 %v1962, %v1962
  %v1987 = vpack.c.b16 %v1963, %v1963
  %v1988 = vpack.c.b16 %v1964, %v1964
  %v1989 = vpack.c.b16 %v1965, %v1965
  %v1990 = vpack.c.b16 %v1966, %v1966
  %v1991 = vpack.c.b16 %v1967, %v1967
  %v1992 = vpack.c.b16 %v1968, %v1968
  %v1993 = vpack.c.b16 %v1969, %v1969
  %v1994 = vpack.c.b16 %v1970, %v1970
  %v1995 = vpack.c.b16 %v1971, %v1971
  %v1996 = vpack.c.b16 %v1972, %v1972
  %v1997 = vpack.c.b16 %v1973, %v1973
  %v1998 = vpack.c.b16 %v1974, %v1974
  %v1999 = vpack.c.b16 %v1975, %v1975
  %v2000 = vpack.c.b16 %v1976, %v1976
  %v2002 = vshrl.u32 %v1977, 16
  %v2004 = vrot.slane %v2002, 4
  %v2005 = vshll.u32 %v1977, 16
  %v2007 = vrot.slane %v2005, 5
  %v2008 = vor.u32 %v2004, %v2007
  %v2009 = vrot.slane %v2008, 4
  %v2011 = vshll.u32 %v1978, 16
  %v2013 = vrot.slane %v2011, 5
  %v2014 = vsel %vm93, %v2009, %v2013
  %v2016 = vshrl.u32 %v1979, 16
  %v2018 = vrot.slane %v2016, 4
  %v2019 = vshll.u32 %v1979, 16
  %v2021 = vrot.slane %v2019, 5
  %v2022 = vor.u32 %v2018, %v2021
  %v2023 = vrot.slane %v2022, 4
  %v2025 = vshll.u32 %v1980, 16
  %v2027 = vrot.slane %v2025, 5
  %v2028 = vsel %vm93, %v2023, %v2027
  %v2030 = vshrl.u32 %v1981, 16
  %v2032 = vrot.slane %v2030, 4
  %v2033 = vshll.u32 %v1981, 16
  %v2035 = vrot.slane %v2033, 5
  %v2036 = vor.u32 %v2032, %v2035
  %v2037 = vrot.slane %v2036, 4
  %v2039 = vshll.u32 %v1982, 16
  %v2041 = vrot.slane %v2039, 5
  %v2042 = vsel %vm93, %v2037, %v2041
  %v2044 = vshrl.u32 %v1983, 16
  %v2046 = vrot.slane %v2044, 4
  %v2047 = vshll.u32 %v1983, 16
  %v2049 = vrot.slane %v2047, 5
  %v2050 = vor.u32 %v2046, %v2049
  %v2051 = vrot.slane %v2050, 4
  %v2053 = vshll.u32 %v1984, 16
  %v2055 = vrot.slane %v2053, 5
  %v2056 = vsel %vm93, %v2051, %v2055
  %v2058 = vshrl.u32 %v1985, 16
  %v2060 = vrot.slane %v2058, 4
  %v2061 = vshll.u32 %v1985, 16
  %v2063 = vrot.slane %v2061, 5
  %v2064 = vor.u32 %v2060, %v2063
  %v2065 = vrot.slane %v2064, 4
  %v2067 = vshll.u32 %v1986, 16
  %v2069 = vrot.slane %v2067, 5
  %v2070 = vsel %vm93, %v2065, %v2069
  %v2072 = vshrl.u32 %v1987, 16
  %v2074 = vrot.slane %v2072, 4
  %v2075 = vshll.u32 %v1987, 16
  %v2077 = vrot.slane %v2075, 5
  %v2078 = vor.u32 %v2074, %v2077
  %v2079 = vrot.slane %v2078, 4
  %v2081 = vshll.u32 %v1988, 16
  %v2083 = vrot.slane %v2081, 5
  %v2084 = vsel %vm93, %v2079, %v2083
  %v2086 = vshrl.u32 %v1989, 16
  %v2088 = vrot.slane %v2086, 4
  %v2089 = vshll.u32 %v1989, 16
  %v2091 = vrot.slane %v2089, 5
  %v2092 = vor.u32 %v2088, %v2091
  %v2093 = vrot.slane %v2092, 4
  %v2095 = vshll.u32 %v1990, 16
  %v2097 = vrot.slane %v2095, 5
  %v2098 = vsel %vm93, %v2093, %v2097
  %v2100 = vshrl.u32 %v1991, 16
  %v2102 = vrot.slane %v2100, 4
  %v2103 = vshll.u32 %v1991, 16
  %v2105 = vrot.slane %v2103, 5
  %v2106 = vor.u32 %v2102, %v2105
  %v2107 = vrot.slane %v2106, 4
  %v2109 = vshll.u32 %v1992, 16
  %v2111 = vrot.slane %v2109, 5
  %v2112 = vsel %vm93, %v2107, %v2111
  %v2114 = vshrl.u32 %v1993, 16
  %v2116 = vrot.slane %v2114, 4
  %v2117 = vshll.u32 %v1993, 16
  %v2119 = vrot.slane %v2117, 5
  %v2120 = vor.u32 %v2116, %v2119
  %v2121 = vrot.slane %v2120, 4
  %v2123 = vshll.u32 %v1994, 16
  %v2125 = vrot.slane %v2123, 5
  %v2126 = vsel %vm93, %v2121, %v2125
  %v2128 = vshrl.u32 %v1995, 16
  %v2130 = vrot.slane %v2128, 4
  %v2131 = vshll.u32 %v1995, 16
  %v2133 = vrot.slane %v2131, 5
  %v2134 = vor.u32 %v2130, %v2133
  %v2135 = vrot.slane %v2134, 4
  %v2137 = vshll.u32 %v1996, 16
  %v2139 = vrot.slane %v2137, 5
  %v2140 = vsel %vm93, %v2135, %v2139
  %v2142 = vshrl.u32 %v1997, 16
  %v2144 = vrot.slane %v2142, 4
  %v2145 = vshll.u32 %v1997, 16
  %v2147 = vrot.slane %v2145, 5
  %v2148 = vor.u32 %v2144, %v2147
  %v2149 = vrot.slane %v2148, 4
  %v2151 = vshll.u32 %v1998, 16
  %v2153 = vrot.slane %v2151, 5
  %v2154 = vsel %vm93, %v2149, %v2153
  %v2156 = vshrl.u32 %v1999, 16
  %v2158 = vrot.slane %v2156, 4
  %v2159 = vshll.u32 %v1999, 16
  %v2161 = vrot.slane %v2159, 5
  %v2162 = vor.u32 %v2158, %v2161
  %v2163 = vrot.slane %v2162, 4
  %v2165 = vshll.u32 %v2000, 16
  %v2167 = vrot.slane %v2165, 5
  %v2168 = vsel %vm93, %v2163, %v2167
  %s2169 = scalar_lea.vmem %s3, 64
  %v2170 = vld [vmem:[%s2169] sm:$0xf]
  %v2171 = vld [vmem:[%s2169 + $0x4] sm:$0xf]
  %v2172 = vld [vmem:[%s2169 + $0x8] sm:$0xf]
  %v2173 = vld [vmem:[%s2169 + $0xc] sm:$0xf]
  %v2174 = vld [vmem:[%s2169 + $0x10] sm:$0xf]
  %v2175 = vld [vmem:[%s2169 + $0x14] sm:$0xf]
  %v2176 = vld [vmem:[%s2169 + $0x18] sm:$0xf]
  %v2177 = vld [vmem:[%s2169 + $0x1c] sm:$0xf]
  %v2178 = vld [vmem:[%s2169 + $0x20] sm:$0xf]
  %v2179 = vld [vmem:[%s2169 + $0x24] sm:$0xf]
  %v2180 = vld [vmem:[%s2169 + $0x28] sm:$0xf]
  %v2181 = vld [vmem:[%s2169 + $0x2c] sm:$0xf]
  %v2182 = vld [vmem:[%s2169 + $0x30] sm:$0xf]
  %v2183 = vld [vmem:[%s2169 + $0x34] sm:$0xf]
  %v2184 = vld [vmem:[%s2169 + $0x38] sm:$0xf]
  %v2185 = vld [vmem:[%s2169 + $0x3c] sm:$0xf]
  %v2186 = vunpack.c.l.b16 %v2014
  %v2187 = vunpack.c.l.b16 %v2028
  %v2188 = vunpack.c.l.b16 %v2042
  %v2189 = vunpack.c.l.b16 %v2056
  %v2190 = vunpack.c.l.b16 %v2070
  %v2191 = vunpack.c.l.b16 %v2084
  %v2192 = vunpack.c.l.b16 %v2098
  %v2193 = vunpack.c.l.b16 %v2112
  %v2194 = vunpack.c.l.b16 %v2126
  %v2195 = vunpack.c.l.b16 %v2140
  %v2196 = vunpack.c.l.b16 %v2154
  %v2197 = vunpack.c.l.b16 %v2168
  %v2198 = vpack.c.b16 %v2187, %v2186
  %v2199 = vpack.c.b16 %v2189, %v2188
  %v2200 = vpack.c.b16 %v2191, %v2190
  %v2201 = vpack.c.b16 %v2193, %v2192
  %v2202 = vpack.c.b16 %v2195, %v2194
  %v2203 = vpack.c.b16 %v2197, %v2196
  %v2226 = vunpack.c.l.b16 %v2170
  %v2227 = vunpack.c.l.b16 %v2171
  %v2228 = vunpack.c.l.b16 %v2172
  %v2229 = vunpack.c.l.b16 %v2173
  %v2230 = vunpack.c.l.b16 %v2174
  %v2231 = vunpack.c.l.b16 %v2175
  %v2232 = vunpack.c.l.b16 %v2176
  %v2233 = vunpack.c.l.b16 %v2177
  %v2234 = vunpack.c.l.b16 %v2178
  %v2235 = vunpack.c.l.b16 %v2179
  %v2236 = vunpack.c.l.b16 %v2180
  %v2237 = vunpack.c.l.b16 %v2181
  %v2238 = vunpack.c.l.b16 %v2182
  %v2239 = vunpack.c.l.b16 %v2183
  %v2240 = vunpack.c.l.b16 %v2184
  %v2241 = vunpack.c.l.b16 %v2185
  %v2242 = vpack.c.b16 %v2227, %v2226
  %v2243 = vpack.c.b16 %v2229, %v2228
  %v2244 = vpack.c.b16 %v2231, %v2230
  %v2245 = vpack.c.b16 %v2233, %v2232
  %v2246 = vpack.c.b16 %v2235, %v2234
  %v2247 = vpack.c.b16 %v2237, %v2236
  %v2248 = vpack.c.b16 %v2239, %v2238
  %v2249 = vpack.c.b16 %v2241, %v2240
  %2258 = vmatprep.subr.bf16.mxu0 0
  %2259 = vmatpush1.bf16.msra.mxu0 %v2242
  %2260 = vmatprep.subr.bf16.mxu0 0
  %2261 = vmatpush1.bf16.msra.mxu0 %v2243
  %2262 = vmatprep.subr.bf16.mxu0 0
  %2263 = vmatpush1.bf16.msra.mxu0 %v2244
  %2264 = vmatprep.subr.bf16.mxu0 0
  %2265 = vmatpush1.bf16.msra.mxu0 %v2245
  %2266 = vmatprep.subr.bf16.mxu0 0
  %2267 = vmatpush1.bf16.msra.mxu0 %v2246
  %2268 = vmatprep.subr.bf16.mxu0 0
  %2269 = vmatpush1.bf16.msra.mxu0 %v2247
  %2270 = vmatprep.subr.bf16.mxu0 0
  %2271 = vmatpush1.bf16.msra.mxu0 %v2248
  %2272 = vmatprep.subr.bf16.mxu0 0
  %2273 = vmatpush1.bf16.msra.mxu0 %v2249
  %2274 = vmatprep.subr.bf16.mxu0 0
  %2275 = vmatpush1.bf16.msra.mxu0 0
  %2276 = vmatprep.subr.bf16.mxu0 0
  %2277 = vmatpush1.bf16.msra.mxu0 0
  %2278 = vmatprep.subr.bf16.mxu0 0
  %2279 = vmatpush1.bf16.msra.mxu0 0
  %2280 = vmatprep.subr.bf16.mxu0 0
  %2281 = vmatpush1.bf16.msra.mxu0 0
  %2282 = vmatprep.subr.bf16.mxu0 0
  %2283 = vmatpush1.bf16.msra.mxu0 0
  %2284 = vmatprep.subr.bf16.mxu0 0
  %2285 = vmatpush1.bf16.msra.mxu0 0
  %2286 = vmatprep.subr.bf16.mxu0 0
  %2287 = vmatpush1.bf16.msra.mxu0 0
  %2288 = vmatprep.subr.bf16.mxu0 0
  %2289 = vmatpush1.bf16.msra.mxu0 0
  %2290 = vmatprep.mubr.bf16.mxu0 0
  %2291 = vmatmul.mubr.bf16.gmra.mrb[0].mxu0 %v2198
  %v2292 = vpop.f32.mrb[0].mxu0
  %v2293 = vadd.f32 0.0, %v2292
  %v2294 = vpop.f32.mrb[0].mxu0
  %v2295 = vpop.f32.mrb[0].mxu0
  %v2296 = vadd.f32 0.0, %v2295
  %v2297 = vpop.f32.mrb[0].mxu0
  %2298 = vmatprep.mubr.bf16.mxu0 0
  %2299 = vmatmul.mubr.bf16.gmra.mrb[0].mxu0 %v2199
  %v2300 = vpop.f32.mrb[0].mxu0
  %v2301 = vadd.f32 0.0, %v2300
  %v2302 = vpop.f32.mrb[0].mxu0
  %v2303 = vpop.f32.mrb[0].mxu0
  %v2304 = vadd.f32 0.0, %v2303
  %v2305 = vpop.f32.mrb[0].mxu0
  %2306 = vmatprep.mubr.bf16.mxu0 0
  %2307 = vmatmul.mubr.bf16.gmra.mrb[0].mxu0 %v2200
  %v2308 = vpop.f32.mrb[0].mxu0
  %v2309 = vadd.f32 0.0, %v2308
  %v2310 = vpop.f32.mrb[0].mxu0
  %v2311 = vpop.f32.mrb[0].mxu0
  %v2312 = vadd.f32 0.0, %v2311
  %v2313 = vpop.f32.mrb[0].mxu0
  %2314 = vmatprep.mubr.bf16.mxu0 0
  %2315 = vmatmul.mubr.bf16.gmra.mrb[0].mxu0 %v2201
  %v2316 = vpop.f32.mrb[0].mxu0
  %v2317 = vadd.f32 0.0, %v2316
  %v2318 = vpop.f32.mrb[0].mxu0
  %v2319 = vpop.f32.mrb[0].mxu0
  %v2320 = vadd.f32 0.0, %v2319
  %v2321 = vpop.f32.mrb[0].mxu0
  %2322 = vmatprep.mubr.bf16.mxu0 0
  %2323 = vmatmul.mubr.bf16.gmra.mrb[0].mxu0 %v2202
  %v2324 = vpop.f32.mrb[0].mxu0
  %v2325 = vadd.f32 0.0, %v2324
  %v2326 = vpop.f32.mrb[0].mxu0
  %v2327 = vpop.f32.mrb[0].mxu0
  %v2328 = vadd.f32 0.0, %v2327
  %v2329 = vpop.f32.mrb[0].mxu0
  %2330 = vmatprep.mubr.bf16.mxu0 0
  %2331 = vmatmul.mubr.bf16.gmra.mrb[0].mxu0 %v2203
  %v2332 = vpop.f32.mrb[0].mxu0
  %v2333 = vadd.f32 0.0, %v2332
  %v2334 = vpop.f32.mrb[0].mxu0
  %v2335 = vpop.f32.mrb[0].mxu0
  %v2336 = vadd.f32 0.0, %v2335
  %v2337 = vpop.f32.mrb[0].mxu0
  %2338 = vdwg.mxu0
  %v2351 = vunpack.c.l.b16 %v1901
  %v2352 = vunpack.c.l.b16 %v1902
  %v2353 = vunpack.c.l.b16 %v1903
  %v2354 = vunpack.c.l.b16 %v1904
  %v2355 = vunpack.c.l.b16 %v1905
  %v2356 = vunpack.c.l.b16 %v1906
  %v2357 = vunpack.c.l.b16 %v1907
  %v2358 = vunpack.c.l.b16 %v1908
  %v2359 = vunpack.c.l.b16 %v1909
  %v2360 = vunpack.c.l.b16 %v1910
  %v2361 = vunpack.c.l.b16 %v1911
  %v2362 = vunpack.c.l.b16 %v1912
  %v2363 = vpack.c.b16 %v2352, %v2351
  %v2364 = vpack.c.b16 %v2354, %v2353
  %v2365 = vpack.c.b16 %v2356, %v2355
  %v2366 = vpack.c.b16 %v2358, %v2357
  %v2367 = vpack.c.b16 %v2360, %v2359
  %v2368 = vpack.c.b16 %v2362, %v2361
  %v2391 = vunpack.c.l.b16 %v1913
  %v2392 = vunpack.c.l.b16 %v1914
  %v2393 = vunpack.c.l.b16 %v1915
  %v2394 = vunpack.c.l.b16 %v1916
  %v2395 = vunpack.c.l.b16 %v1917
  %v2396 = vunpack.c.l.b16 %v1918
  %v2397 = vunpack.c.l.b16 %v1919
  %v2398 = vunpack.c.l.b16 %v1920
  %v2399 = vunpack.c.l.b16 %v1921
  %v2400 = vunpack.c.l.b16 %v1922
  %v2401 = vunpack.c.l.b16 %v1923
  %v2402 = vunpack.c.l.b16 %v1924
  %v2403 = vunpack.c.l.b16 %v1925
  %v2404 = vunpack.c.l.b16 %v1926
  %v2405 = vunpack.c.l.b16 %v1927
  %v2406 = vunpack.c.l.b16 %v1928
  %v2407 = vpack.c.b16 %v2392, %v2391
  %v2408 = vpack.c.b16 %v2394, %v2393
  %v2409 = vpack.c.b16 %v2396, %v2395
  %v2410 = vpack.c.b16 %v2398, %v2397
  %v2411 = vpack.c.b16 %v2400, %v2399
  %v2412 = vpack.c.b16 %v2402, %v2401
  %v2413 = vpack.c.b16 %v2404, %v2403
  %v2414 = vpack.c.b16 %v2406, %v2405
  %2423 = vmatprep.subr.bf16.mxu0 0
  %2424 = vmatpush1.bf16.msra.mxu0 %v2407
  %2425 = vmatprep.subr.bf16.mxu0 0
  %2426 = vmatpush1.bf16.msra.mxu0 %v2408
  %2427 = vmatprep.subr.bf16.mxu0 0
  %2428 = vmatpush1.bf16.msra.mxu0 %v2409
  %2429 = vmatprep.subr.bf16.mxu0 0
  %2430 = vmatpush1.bf16.msra.mxu0 %v2410
  %2431 = vmatprep.subr.bf16.mxu0 0
  %2432 = vmatpush1.bf16.msra.mxu0 %v2411
  %2433 = vmatprep.subr.bf16.mxu0 0
  %2434 = vmatpush1.bf16.msra.mxu0 %v2412
  %2435 = vmatprep.subr.bf16.mxu0 0
  %2436 = vmatpush1.bf16.msra.mxu0 %v2413
  %2437 = vmatprep.subr.bf16.mxu0 0
  %2438 = vmatpush1.bf16.msra.mxu0 %v2414
  %2439 = vmatprep.subr.bf16.mxu0 0
  %2440 = vmatpush1.bf16.msra.mxu0 0
  %2441 = vmatprep.subr.bf16.mxu0 0
  %2442 = vmatpush1.bf16.msra.mxu0 0
  %2443 = vmatprep.subr.bf16.mxu0 0
  %2444 = vmatpush1.bf16.msra.mxu0 0
  %2445 = vmatprep.subr.bf16.mxu0 0
  %2446 = vmatpush1.bf16.msra.mxu0 0
  %2447 = vmatprep.subr.bf16.mxu0 0
  %2448 = vmatpush1.bf16.msra.mxu0 0
  %2449 = vmatprep.subr.bf16.mxu0 0
  %2450 = vmatpush1.bf16.msra.mxu0 0
  %2451 = vmatprep.subr.bf16.mxu0 0
  %2452 = vmatpush1.bf16.msra.mxu0 0
  %2453 = vmatprep.subr.bf16.mxu0 0
  %2454 = vmatpush1.bf16.msra.mxu0 0
  %2455 = vmatprep.mubr.bf16.mxu0 0
  %2456 = vmatmul.mubr.bf16.gmra.mrb[0].mxu0 %v2363
  %v2457 = vpop.f32.mrb[0].mxu0
  %v2458 = vadd.f32 %v2293, %v2457
  %v2459 = vpop.f32.mrb[0].mxu0
  %v2460 = vpop.f32.mrb[0].mxu0
  %v2461 = vadd.f32 %v2296, %v2460
  %v2462 = vpop.f32.mrb[0].mxu0
  %2463 = vmatprep.mubr.bf16.mxu0 0
  %2464 = vmatmul.mubr.bf16.gmra.mrb[0].mxu0 %v2364
  %v2465 = vpop.f32.mrb[0].mxu0
  %v2466 = vadd.f32 %v2301, %v2465
  %v2467 = vpop.f32.mrb[0].mxu0
  %v2468 = vpop.f32.mrb[0].mxu0
  %v2469 = vadd.f32 %v2304, %v2468
  %v2470 = vpop.f32.mrb[0].mxu0
  %2471 = vmatprep.mubr.bf16.mxu0 0
  %2472 = vmatmul.mubr.bf16.gmra.mrb[0].mxu0 %v2365
  %v2473 = vpop.f32.mrb[0].mxu0
  %v2474 = vadd.f32 %v2309, %v2473
  %v2475 = vpop.f32.mrb[0].mxu0
  %v2476 = vpop.f32.mrb[0].mxu0
  %v2477 = vadd.f32 %v2312, %v2476
  %v2478 = vpop.f32.mrb[0].mxu0
  %2479 = vmatprep.mubr.bf16.mxu0 0
  %2480 = vmatmul.mubr.bf16.gmra.mrb[0].mxu0 %v2366
  %v2481 = vpop.f32.mrb[0].mxu0
  %v2482 = vadd.f32 %v2317, %v2481
  %v2483 = vpop.f32.mrb[0].mxu0
  %v2484 = vpop.f32.mrb[0].mxu0
  %v2485 = vadd.f32 %v2320, %v2484
  %v2486 = vpop.f32.mrb[0].mxu0
  %2487 = vmatprep.mubr.bf16.mxu0 0
  %2488 = vmatmul.mubr.bf16.gmra.mrb[0].mxu0 %v2367
  %v2489 = vpop.f32.mrb[0].mxu0
  %v2490 = vadd.f32 %v2325, %v2489
  %v2491 = vpop.f32.mrb[0].mxu0
  %v2492 = vpop.f32.mrb[0].mxu0
  %v2493 = vadd.f32 %v2328, %v2492
  %v2494 = vpop.f32.mrb[0].mxu0
  %2495 = vmatprep.mubr.bf16.mxu0 0
  %2496 = vmatmul.mubr.bf16.gmra.mrb[0].mxu0 %v2368
  %v2497 = vpop.f32.mrb[0].mxu0
  %v2498 = vadd.f32 %v2333, %v2497
  %v2499 = vpop.f32.mrb[0].mxu0
  %v2500 = vpop.f32.mrb[0].mxu0
  %v2501 = vadd.f32 %v2336, %v2500
  %v2502 = vpop.f32.mrb[0].mxu0
  %2503 = vdwg.mxu0
  %s2504 = scalar_lea.vmem [#allocation2], 8
  %v2505 = vld [vmem:[%s2504] sm:$0xf]
  %v2506 = vld [vmem:[%s2504 + $0x8] sm:$0xf]
  %v2507 = vld [vmem:[%s2504 + $0x10] sm:$0xf]
  %v2508 = vld [vmem:[%s2504 + $0x18] sm:$0xf]
  %v2509 = vld [vmem:[%s2504 + $0x20] sm:$0xf]
  %v2510 = vld [vmem:[%s2504 + $0x28] sm:$0xf]
  %v2511 = vld [vmem:[%s2504 + $0x40] sm:$0xf]
  %v2512 = vld [vmem:[%s2504 + $0x48] sm:$0xf]
  %v2513 = vld [vmem:[%s2504 + $0x50] sm:$0xf]
  %v2514 = vld [vmem:[%s2504 + $0x58] sm:$0xf]
  %v2515 = vld [vmem:[%s2504 + $0x60] sm:$0xf]
  %v2516 = vld [vmem:[%s2504 + $0x68] sm:$0xf]
  %s2517 = scalar_lea.vmem %s3, 128
  %v2518 = vld [vmem:[%s2517] sm:$0xf]
  %v2519 = vld [vmem:[%s2517 + $0x4] sm:$0xf]
  %v2520 = vld [vmem:[%s2517 + $0x8] sm:$0xf]
  %v2521 = vld [vmem:[%s2517 + $0xc] sm:$0xf]
  %v2522 = vld [vmem:[%s2517 + $0x10] sm:$0xf]
  %v2523 = vld [vmem:[%s2517 + $0x14] sm:$0xf]
  %v2524 = vld [vmem:[%s2517 + $0x18] sm:$0xf]
  %v2525 = vld [vmem:[%s2517 + $0x1c] sm:$0xf]
  %v2526 = vld [vmem:[%s2517 + $0x20] sm:$0xf]
  %v2527 = vld [vmem:[%s2517 + $0x24] sm:$0xf]
  %v2528 = vld [vmem:[%s2517 + $0x28] sm:$0xf]
  %v2529 = vld [vmem:[%s2517 + $0x2c] sm:$0xf]
  %v2530 = vld [vmem:[%s2517 + $0x30] sm:$0xf]
  %v2531 = vld [vmem:[%s2517 + $0x34] sm:$0xf]
  %v2532 = vld [vmem:[%s2517 + $0x38] sm:$0xf]
  %v2533 = vld [vmem:[%s2517 + $0x3c] sm:$0xf]
  %v2546 = vunpack.c.l.b16 %v2505
  %v2547 = vunpack.c.l.b16 %v2506
  %v2548 = vunpack.c.l.b16 %v2507
  %v2549 = vunpack.c.l.b16 %v2508
  %v2550 = vunpack.c.l.b16 %v2509
  %v2551 = vunpack.c.l.b16 %v2510
  %v2552 = vunpack.c.l.b16 %v2511
  %v2553 = vunpack.c.l.b16 %v2512
  %v2554 = vunpack.c.l.b16 %v2513
  %v2555 = vunpack.c.l.b16 %v2514
  %v2556 = vunpack.c.l.b16 %v2515
  %v2557 = vunpack.c.l.b16 %v2516
  %v2558 = vpack.c.b16 %v2547, %v2546
  %v2559 = vpack.c.b16 %v2549, %v2548
  %v2560 = vpack.c.b16 %v2551, %v2550
  %v2561 = vpack.c.b16 %v2553, %v2552
  %v2562 = vpack.c.b16 %v2555, %v2554
  %v2563 = vpack.c.b16 %v2557, %v2556
  %v2586 = vunpack.c.l.b16 %v2518
  %v2587 = vunpack.c.l.b16 %v2519
  %v2588 = vunpack.c.l.b16 %v2520
  %v2589 = vunpack.c.l.b16 %v2521
  %v2590 = vunpack.c.l.b16 %v2522
  %v2591 = vunpack.c.l.b16 %v2523
  %v2592 = vunpack.c.l.b16 %v2524
  %v2593 = vunpack.c.l.b16 %v2525
  %v2594 = vunpack.c.l.b16 %v2526
  %v2595 = vunpack.c.l.b16 %v2527
  %v2596 = vunpack.c.l.b16 %v2528
  %v2597 = vunpack.c.l.b16 %v2529
  %v2598 = vunpack.c.l.b16 %v2530
  %v2599 = vunpack.c.l.b16 %v2531
  %v2600 = vunpack.c.l.b16 %v2532
  %v2601 = vunpack.c.l.b16 %v2533
  %v2602 = vpack.c.b16 %v2587, %v2586
  %v2603 = vpack.c.b16 %v2589, %v2588
  %v2604 = vpack.c.b16 %v2591, %v2590
  %v2605 = vpack.c.b16 %v2593, %v2592
  %v2606 = vpack.c.b16 %v2595, %v2594
  %v2607 = vpack.c.b16 %v2597, %v2596
  %v2608 = vpack.c.b16 %v2599, %v2598
  %v2609 = vpack.c.b16 %v2601, %v2600
  %2618 = vmatprep.subr.bf16.mxu0 0
  %2619 = vmatpush1.bf16.msra.mxu0 %v2602
  %2620 = vmatprep.subr.bf16.mxu0 0
  %2621 = vmatpush1.bf16.msra.mxu0 %v2603
  %2622 = vmatprep.subr.bf16.mxu0 0
  %2623 = vmatpush1.bf16.msra.mxu0 %v2604
  %2624 = vmatprep.subr.bf16.mxu0 0
  %2625 = vmatpush1.bf16.msra.mxu0 %v2605
  %2626 = vmatprep.subr.bf16.mxu0 0
  %2627 = vmatpush1.bf16.msra.mxu0 %v2606
  %2628 = vmatprep.subr.bf16.mxu0 0
  %2629 = vmatpush1.bf16.msra.mxu0 %v2607
  %2630 = vmatprep.subr.bf16.mxu0 0
  %2631 = vmatpush1.bf16.msra.mxu0 %v2608
  %2632 = vmatprep.subr.bf16.mxu0 0
  %2633 = vmatpush1.bf16.msra.mxu0 %v2609
  %2634 = vmatprep.subr.bf16.mxu0 0
  %2635 = vmatpush1.bf16.msra.mxu0 0
  %2636 = vmatprep.subr.bf16.mxu0 0
  %2637 = vmatpush1.bf16.msra.mxu0 0
  %2638 = vmatprep.subr.bf16.mxu0 0
  %2639 = vmatpush1.bf16.msra.mxu0 0
  %2640 = vmatprep.subr.bf16.mxu0 0
  %2641 = vmatpush1.bf16.msra.mxu0 0
  %2642 = vmatprep.subr.bf16.mxu0 0
  %2643 = vmatpush1.bf16.msra.mxu0 0
  %2644 = vmatprep.subr.bf16.mxu0 0
  %2645 = vmatpush1.bf16.msra.mxu0 0
  %2646 = vmatprep.subr.bf16.mxu0 0
  %2647 = vmatpush1.bf16.msra.mxu0 0
  %2648 = vmatprep.subr.bf16.mxu0 0
  %2649 = vmatpush1.bf16.msra.mxu0 0
  %2650 = vmatprep.mubr.bf16.mxu0 0
  %2651 = vmatmul.mubr.bf16.gmra.mrb[0].mxu0 %v2558
  %v2652 = vpop.f32.mrb[0].mxu0
  %v2653 = vadd.f32 0.0, %v2652
  %v2654 = vpop.f32.mrb[0].mxu0
  %v2655 = vpop.f32.mrb[0].mxu0
  %v2656 = vadd.f32 0.0, %v2655
  %v2657 = vpop.f32.mrb[0].mxu0
  %2658 = vmatprep.mubr.bf16.mxu0 0
  %2659 = vmatmul.mubr.bf16.gmra.mrb[0].mxu0 %v2559
  %v2660 = vpop.f32.mrb[0].mxu0
  %v2661 = vadd.f32 0.0, %v2660
  %v2662 = vpop.f32.mrb[0].mxu0
  %v2663 = vpop.f32.mrb[0].mxu0
  %v2664 = vadd.f32 0.0, %v2663
  %v2665 = vpop.f32.mrb[0].mxu0
  %2666 = vmatprep.mubr.bf16.mxu0 0
  %2667 = vmatmul.mubr.bf16.gmra.mrb[0].mxu0 %v2560
  %v2668 = vpop.f32.mrb[0].mxu0
  %v2669 = vadd.f32 0.0, %v2668
  %v2670 = vpop.f32.mrb[0].mxu0
  %v2671 = vpop.f32.mrb[0].mxu0
  %v2672 = vadd.f32 0.0, %v2671
  %v2673 = vpop.f32.mrb[0].mxu0
  %2674 = vmatprep.mubr.bf16.mxu0 0
  %2675 = vmatmul.mubr.bf16.gmra.mrb[0].mxu0 %v2561
  %v2676 = vpop.f32.mrb[0].mxu0
  %v2677 = vadd.f32 0.0, %v2676
  %v2678 = vpop.f32.mrb[0].mxu0
  %v2679 = vpop.f32.mrb[0].mxu0
  %v2680 = vadd.f32 0.0, %v2679
  %v2681 = vpop.f32.mrb[0].mxu0
  %2682 = vmatprep.mubr.bf16.mxu0 0
  %2683 = vmatmul.mubr.bf16.gmra.mrb[0].mxu0 %v2562
  %v2684 = vpop.f32.mrb[0].mxu0
  %v2685 = vadd.f32 0.0, %v2684
  %v2686 = vpop.f32.mrb[0].mxu0
  %v2687 = vpop.f32.mrb[0].mxu0
  %v2688 = vadd.f32 0.0, %v2687
  %v2689 = vpop.f32.mrb[0].mxu0
  %2690 = vmatprep.mubr.bf16.mxu0 0
  %2691 = vmatmul.mubr.bf16.gmra.mrb[0].mxu0 %v2563
  %v2692 = vpop.f32.mrb[0].mxu0
  %v2693 = vadd.f32 0.0, %v2692
  %v2694 = vpop.f32.mrb[0].mxu0
  %v2695 = vpop.f32.mrb[0].mxu0
  %v2696 = vadd.f32 0.0, %v2695
  %v2697 = vpop.f32.mrb[0].mxu0
  %2698 = vdwg.mxu0
  %v2699 = vadd.f32 %v2458, %v2653
  %v2700 = vadd.f32 %v2461, %v2656
  %v2701 = vadd.f32 %v2466, %v2661
  %v2702 = vadd.f32 %v2469, %v2664
  %v2703 = vadd.f32 %v2474, %v2669
  %v2704 = vadd.f32 %v2477, %v2672
  %v2705 = vadd.f32 %v2482, %v2677
  %v2706 = vadd.f32 %v2485, %v2680
  %v2707 = vadd.f32 %v2490, %v2685
  %v2708 = vadd.f32 %v2493, %v2688
  %v2709 = vadd.f32 %v2498, %v2693
  %v2710 = vadd.f32 %v2501, %v2696
  %v2711 = vld [vmem:[%s2504] sm:$0x1f]
  %v2712 = vld [vmem:[%s2504 + $0x8] sm:$0x1f]
  %v2713 = vld [vmem:[%s2504 + $0x10] sm:$0x1f]
  %v2714 = vld [vmem:[%s2504 + $0x18] sm:$0x1f]
  %v2715 = vld [vmem:[%s2504 + $0x20] sm:$0x1f]
  %v2716 = vld [vmem:[%s2504 + $0x28] sm:$0x1f]
  %v2717 = vld [vmem:[%s2504 + $0x40] sm:$0x1f]
  %v2718 = vld [vmem:[%s2504 + $0x48] sm:$0x1f]
  %v2719 = vld [vmem:[%s2504 + $0x50] sm:$0x1f]
  %v2720 = vld [vmem:[%s2504 + $0x58] sm:$0x1f]
  %v2721 = vld [vmem:[%s2504 + $0x60] sm:$0x1f]
  %v2722 = vld [vmem:[%s2504 + $0x68] sm:$0x1f]
  %v2735 = vunpack.c.l.b16 %v2711
  %v2736 = vunpack.c.h.b16 %v2711
  %v2737 = vunpack.c.l.b16 %v2712
  %v2738 = vunpack.c.h.b16 %v2712
  %v2739 = vunpack.c.l.b16 %v2713
  %v2740 = vunpack.c.h.b16 %v2713
  %v2741 = vunpack.c.l.b16 %v2714
  %v2742 = vunpack.c.h.b16 %v2714
  %v2743 = vunpack.c.l.b16 %v2715
  %v2744 = vunpack.c.h.b16 %v2715
  %v2745 = vunpack.c.l.b16 %v2716
  %v2746 = vunpack.c.h.b16 %v2716
  %v2747 = vunpack.c.l.b16 %v2717
  %v2748 = vunpack.c.h.b16 %v2717
  %v2749 = vunpack.c.l.b16 %v2718
  %v2750 = vunpack.c.h.b16 %v2718
  %v2751 = vunpack.c.l.b16 %v2719
  %v2752 = vunpack.c.h.b16 %v2719
  %v2753 = vunpack.c.l.b16 %v2720
  %v2754 = vunpack.c.h.b16 %v2720
  %v2755 = vunpack.c.l.b16 %v2721
  %v2756 = vunpack.c.h.b16 %v2721
  %v2757 = vunpack.c.l.b16 %v2722
  %v2758 = vunpack.c.h.b16 %v2722
  %v2759 = vpack.c.b16 %v2735, %v2735
  %v2760 = vpack.c.b16 %v2736, %v2736
  %v2761 = vpack.c.b16 %v2737, %v2737
  %v2762 = vpack.c.b16 %v2738, %v2738
  %v2763 = vpack.c.b16 %v2739, %v2739
  %v2764 = vpack.c.b16 %v2740, %v2740
  %v2765 = vpack.c.b16 %v2741, %v2741
  %v2766 = vpack.c.b16 %v2742, %v2742
  %v2767 = vpack.c.b16 %v2743, %v2743
  %v2768 = vpack.c.b16 %v2744, %v2744
  %v2769 = vpack.c.b16 %v2745, %v2745
  %v2770 = vpack.c.b16 %v2746, %v2746
  %v2771 = vpack.c.b16 %v2747, %v2747
  %v2772 = vpack.c.b16 %v2748, %v2748
  %v2773 = vpack.c.b16 %v2749, %v2749
  %v2774 = vpack.c.b16 %v2750, %v2750
  %v2775 = vpack.c.b16 %v2751, %v2751
  %v2776 = vpack.c.b16 %v2752, %v2752
  %v2777 = vpack.c.b16 %v2753, %v2753
  %v2778 = vpack.c.b16 %v2754, %v2754
  %v2779 = vpack.c.b16 %v2755, %v2755
  %v2780 = vpack.c.b16 %v2756, %v2756
  %v2781 = vpack.c.b16 %v2757, %v2757
  %v2782 = vpack.c.b16 %v2758, %v2758
  %v2784 = vshrl.u32 %v2759, 16
  %v2786 = vrot.slane %v2784, 4
  %v2787 = vshll.u32 %v2759, 16
  %v2789 = vrot.slane %v2787, 5
  %v2790 = vor.u32 %v2786, %v2789
  %v2791 = vrot.slane %v2790, 4
  %v2793 = vshll.u32 %v2760, 16
  %v2795 = vrot.slane %v2793, 5
  %v2796 = vsel %vm93, %v2791, %v2795
  %v2798 = vshrl.u32 %v2761, 16
  %v2800 = vrot.slane %v2798, 4
  %v2801 = vshll.u32 %v2761, 16
  %v2803 = vrot.slane %v2801, 5
  %v2804 = vor.u32 %v2800, %v2803
  %v2805 = vrot.slane %v2804, 4
  %v2807 = vshll.u32 %v2762, 16
  %v2809 = vrot.slane %v2807, 5
  %v2810 = vsel %vm93, %v2805, %v2809
  %v2812 = vshrl.u32 %v2763, 16
  %v2814 = vrot.slane %v2812, 4
  %v2815 = vshll.u32 %v2763, 16
  %v2817 = vrot.slane %v2815, 5
  %v2818 = vor.u32 %v2814, %v2817
  %v2819 = vrot.slane %v2818, 4
  %v2821 = vshll.u32 %v2764, 16
  %v2823 = vrot.slane %v2821, 5
  %v2824 = vsel %vm93, %v2819, %v2823
  %v2826 = vshrl.u32 %v2765, 16
  %v2828 = vrot.slane %v2826, 4
  %v2829 = vshll.u32 %v2765, 16
  %v2831 = vrot.slane %v2829, 5
  %v2832 = vor.u32 %v2828, %v2831
  %v2833 = vrot.slane %v2832, 4
  %v2835 = vshll.u32 %v2766, 16
  %v2837 = vrot.slane %v2835, 5
  %v2838 = vsel %vm93, %v2833, %v2837
  %v2840 = vshrl.u32 %v2767, 16
  %v2842 = vrot.slane %v2840, 4
  %v2843 = vshll.u32 %v2767, 16
  %v2845 = vrot.slane %v2843, 5
  %v2846 = vor.u32 %v2842, %v2845
  %v2847 = vrot.slane %v2846, 4
  %v2849 = vshll.u32 %v2768, 16
  %v2851 = vrot.slane %v2849, 5
  %v2852 = vsel %vm93, %v2847, %v2851
  %v2854 = vshrl.u32 %v2769, 16
  %v2856 = vrot.slane %v2854, 4
  %v2857 = vshll.u32 %v2769, 16
  %v2859 = vrot.slane %v2857, 5
  %v2860 = vor.u32 %v2856, %v2859
  %v2861 = vrot.slane %v2860, 4
  %v2863 = vshll.u32 %v2770, 16
  %v2865 = vrot.slane %v2863, 5
  %v2866 = vsel %vm93, %v2861, %v2865
  %v2868 = vshrl.u32 %v2771, 16
  %v2870 = vrot.slane %v2868, 4
  %v2871 = vshll.u32 %v2771, 16
  %v2873 = vrot.slane %v2871, 5
  %v2874 = vor.u32 %v2870, %v2873
  %v2875 = vrot.slane %v2874, 4
  %v2877 = vshll.u32 %v2772, 16
  %v2879 = vrot.slane %v2877, 5
  %v2880 = vsel %vm93, %v2875, %v2879
  %v2882 = vshrl.u32 %v2773, 16
  %v2884 = vrot.slane %v2882, 4
  %v2885 = vshll.u32 %v2773, 16
  %v2887 = vrot.slane %v2885, 5
  %v2888 = vor.u32 %v2884, %v2887
  %v2889 = vrot.slane %v2888, 4
  %v2891 = vshll.u32 %v2774, 16
  %v2893 = vrot.slane %v2891, 5
  %v2894 = vsel %vm93, %v2889, %v2893
  %v2896 = vshrl.u32 %v2775, 16
  %v2898 = vrot.slane %v2896, 4
  %v2899 = vshll.u32 %v2775, 16
  %v2901 = vrot.slane %v2899, 5
  %v2902 = vor.u32 %v2898, %v2901
  %v2903 = vrot.slane %v2902, 4
  %v2905 = vshll.u32 %v2776, 16
  %v2907 = vrot.slane %v2905, 5
  %v2908 = vsel %vm93, %v2903, %v2907
  %v2910 = vshrl.u32 %v2777, 16
  %v2912 = vrot.slane %v2910, 4
  %v2913 = vshll.u32 %v2777, 16
  %v2915 = vrot.slane %v2913, 5
  %v2916 = vor.u32 %v2912, %v2915
  %v2917 = vrot.slane %v2916, 4
  %v2919 = vshll.u32 %v2778, 16
  %v2921 = vrot.slane %v2919, 5
  %v2922 = vsel %vm93, %v2917, %v2921
  %v2924 = vshrl.u32 %v2779, 16
  %v2926 = vrot.slane %v2924, 4
  %v2927 = vshll.u32 %v2779, 16
  %v2929 = vrot.slane %v2927, 5
  %v2930 = vor.u32 %v2926, %v2929
  %v2931 = vrot.slane %v2930, 4
  %v2933 = vshll.u32 %v2780, 16
  %v2935 = vrot.slane %v2933, 5
  %v2936 = vsel %vm93, %v2931, %v2935
  %v2938 = vshrl.u32 %v2781, 16
  %v2940 = vrot.slane %v2938, 4
  %v2941 = vshll.u32 %v2781, 16
  %v2943 = vrot.slane %v2941, 5
  %v2944 = vor.u32 %v2940, %v2943
  %v2945 = vrot.slane %v2944, 4
  %v2947 = vshll.u32 %v2782, 16
  %v2949 = vrot.slane %v2947, 5
  %v2950 = vsel %vm93, %v2945, %v2949
  %s2951 = scalar_lea.vmem %s3, 192
  %v2952 = vld [vmem:[%s2951] sm:$0xf]
  %v2953 = vld [vmem:[%s2951 + $0x4] sm:$0xf]
  %v2954 = vld [vmem:[%s2951 + $0x8] sm:$0xf]
  %v2955 = vld [vmem:[%s2951 + $0xc] sm:$0xf]
  %v2956 = vld [vmem:[%s2951 + $0x10] sm:$0xf]
  %v2957 = vld [vmem:[%s2951 + $0x14] sm:$0xf]
  %v2958 = vld [vmem:[%s2951 + $0x18] sm:$0xf]
  %v2959 = vld [vmem:[%s2951 + $0x1c] sm:$0xf]
  %v2960 = vld [vmem:[%s2951 + $0x20] sm:$0xf]
  %v2961 = vld [vmem:[%s2951 + $0x24] sm:$0xf]
  %v2962 = vld [vmem:[%s2951 + $0x28] sm:$0xf]
  %v2963 = vld [vmem:[%s2951 + $0x2c] sm:$0xf]
  %v2964 = vld [vmem:[%s2951 + $0x30] sm:$0xf]
  %v2965 = vld [vmem:[%s2951 + $0x34] sm:$0xf]
  %v2966 = vld [vmem:[%s2951 + $0x38] sm:$0xf]
  %v2967 = vld [vmem:[%s2951 + $0x3c] sm:$0xf]
  %v2968 = vunpack.c.l.b16 %v2796
  %v2969 = vunpack.c.l.b16 %v2810
  %v2970 = vunpack.c.l.b16 %v2824
  %v2971 = vunpack.c.l.b16 %v2838
  %v2972 = vunpack.c.l.b16 %v2852
  %v2973 = vunpack.c.l.b16 %v2866
  %v2974 = vunpack.c.l.b16 %v2880
  %v2975 = vunpack.c.l.b16 %v2894
  %v2976 = vunpack.c.l.b16 %v2908
  %v2977 = vunpack.c.l.b16 %v2922
  %v2978 = vunpack.c.l.b16 %v2936
  %v2979 = vunpack.c.l.b16 %v2950
  %v2980 = vpack.c.b16 %v2969, %v2968
  %v2981 = vpack.c.b16 %v2971, %v2970
  %v2982 = vpack.c.b16 %v2973, %v2972
  %v2983 = vpack.c.b16 %v2975, %v2974
  %v2984 = vpack.c.b16 %v2977, %v2976
  %v2985 = vpack.c.b16 %v2979, %v2978
  %v3008 = vunpack.c.l.b16 %v2952
  %v3009 = vunpack.c.l.b16 %v2953
  %v3010 = vunpack.c.l.b16 %v2954
  %v3011 = vunpack.c.l.b16 %v2955
  %v3012 = vunpack.c.l.b16 %v2956
  %v3013 = vunpack.c.l.b16 %v2957
  %v3014 = vunpack.c.l.b16 %v2958
  %v3015 = vunpack.c.l.b16 %v2959
  %v3016 = vunpack.c.l.b16 %v2960
  %v3017 = vunpack.c.l.b16 %v2961
  %v3018 = vunpack.c.l.b16 %v2962
  %v3019 = vunpack.c.l.b16 %v2963
  %v3020 = vunpack.c.l.b16 %v2964
  %v3021 = vunpack.c.l.b16 %v2965
  %v3022 = vunpack.c.l.b16 %v2966
  %v3023 = vunpack.c.l.b16 %v2967
  %v3024 = vpack.c.b16 %v3009, %v3008
  %v3025 = vpack.c.b16 %v3011, %v3010
  %v3026 = vpack.c.b16 %v3013, %v3012
  %v3027 = vpack.c.b16 %v3015, %v3014
  %v3028 = vpack.c.b16 %v3017, %v3016
  %v3029 = vpack.c.b16 %v3019, %v3018
  %v3030 = vpack.c.b16 %v3021, %v3020
  %v3031 = vpack.c.b16 %v3023, %v3022
  %3040 = vmatprep.subr.bf16.mxu0 0
  %3041 = vmatpush1.bf16.msra.mxu0 %v3024
  %3042 = vmatprep.subr.bf16.mxu0 0
  %3043 = vmatpush1.bf16.msra.mxu0 %v3025
  %3044 = vmatprep.subr.bf16.mxu0 0
  %3045 = vmatpush1.bf16.msra.mxu0 %v3026
  %3046 = vmatprep.subr.bf16.mxu0 0
  %3047 = vmatpush1.bf16.msra.mxu0 %v3027
  %3048 = vmatprep.subr.bf16.mxu0 0
  %3049 = vmatpush1.bf16.msra.mxu0 %v3028
  %3050 = vmatprep.subr.bf16.mxu0 0
  %3051 = vmatpush1.bf16.msra.mxu0 %v3029
  %3052 = vmatprep.subr.bf16.mxu0 0
  %3053 = vmatpush1.bf16.msra.mxu0 %v3030
  %3054 = vmatprep.subr.bf16.mxu0 0
  %3055 = vmatpush1.bf16.msra.mxu0 %v3031
  %3056 = vmatprep.subr.bf16.mxu0 0
  %3057 = vmatpush1.bf16.msra.mxu0 0
  %3058 = vmatprep.subr.bf16.mxu0 0
  %3059 = vmatpush1.bf16.msra.mxu0 0
  %3060 = vmatprep.subr.bf16.mxu0 0
  %3061 = vmatpush1.bf16.msra.mxu0 0
  %3062 = vmatprep.subr.bf16.mxu0 0
  %3063 = vmatpush1.bf16.msra.mxu0 0
  %3064 = vmatprep.subr.bf16.mxu0 0
  %3065 = vmatpush1.bf16.msra.mxu0 0
  %3066 = vmatprep.subr.bf16.mxu0 0
  %3067 = vmatpush1.bf16.msra.mxu0 0
  %3068 = vmatprep.subr.bf16.mxu0 0
  %3069 = vmatpush1.bf16.msra.mxu0 0
  %3070 = vmatprep.subr.bf16.mxu0 0
  %3071 = vmatpush1.bf16.msra.mxu0 0
  %3072 = vmatprep.mubr.bf16.mxu0 0
  %3073 = vmatmul.mubr.bf16.gmra.mrb[0].mxu0 %v2980
  %v3074 = vpop.f32.mrb[0].mxu0
  %v3075 = vadd.f32 0.0, %v3074
  %v3076 = vpop.f32.mrb[0].mxu0
  %v3077 = vpop.f32.mrb[0].mxu0
  %v3078 = vadd.f32 0.0, %v3077
  %v3079 = vpop.f32.mrb[0].mxu0
  %3080 = vmatprep.mubr.bf16.mxu0 0
  %3081 = vmatmul.mubr.bf16.gmra.mrb[0].mxu0 %v2981
  %v3082 = vpop.f32.mrb[0].mxu0
  %v3083 = vadd.f32 0.0, %v3082
  %v3084 = vpop.f32.mrb[0].mxu0
  %v3085 = vpop.f32.mrb[0].mxu0
  %v3086 = vadd.f32 0.0, %v3085
  %v3087 = vpop.f32.mrb[0].mxu0
  %3088 = vmatprep.mubr.bf16.mxu0 0
  %3089 = vmatmul.mubr.bf16.gmra.mrb[0].mxu0 %v2982
  %v3090 = vpop.f32.mrb[0].mxu0
  %v3091 = vadd.f32 0.0, %v3090
  %v3092 = vpop.f32.mrb[0].mxu0
  %v3093 = vpop.f32.mrb[0].mxu0
  %v3094 = vadd.f32 0.0, %v3093
  %v3095 = vpop.f32.mrb[0].mxu0
  %3096 = vmatprep.mubr.bf16.mxu0 0
  %3097 = vmatmul.mubr.bf16.gmra.mrb[0].mxu0 %v2983
  %v3098 = vpop.f32.mrb[0].mxu0
  %v3099 = vadd.f32 0.0, %v3098
  %v3100 = vpop.f32.mrb[0].mxu0
  %v3101 = vpop.f32.mrb[0].mxu0
  %v3102 = vadd.f32 0.0, %v3101
  %v3103 = vpop.f32.mrb[0].mxu0
  %3104 = vmatprep.mubr.bf16.mxu0 0
  %3105 = vmatmul.mubr.bf16.gmra.mrb[0].mxu0 %v2984
  %v3106 = vpop.f32.mrb[0].mxu0
  %v3107 = vadd.f32 0.0, %v3106
  %v3108 = vpop.f32.mrb[0].mxu0
  %v3109 = vpop.f32.mrb[0].mxu0
  %v3110 = vadd.f32 0.0, %v3109
  %v3111 = vpop.f32.mrb[0].mxu0
  %3112 = vmatprep.mubr.bf16.mxu0 0
  %3113 = vmatmul.mubr.bf16.gmra.mrb[0].mxu0 %v2985
  %v3114 = vpop.f32.mrb[0].mxu0
  %v3115 = vadd.f32 0.0, %v3114
  %v3116 = vpop.f32.mrb[0].mxu0
  %v3117 = vpop.f32.mrb[0].mxu0
  %v3118 = vadd.f32 0.0, %v3117
  %v3119 = vpop.f32.mrb[0].mxu0
  %3120 = vdwg.mxu0
  %v3121 = vadd.f32 %v2699, %v3075
  %v3122 = vadd.f32 %v2700, %v3078
  %v3123 = vadd.f32 %v2701, %v3083
  %v3124 = vadd.f32 %v2702, %v3086
  %v3125 = vadd.f32 %v2703, %v3091
  %v3126 = vadd.f32 %v2704, %v3094
  %v3127 = vadd.f32 %v2705, %v3099
  %v3128 = vadd.f32 %v2706, %v3102
  %v3129 = vadd.f32 %v2707, %v3107
  %v3130 = vadd.f32 %v2708, %v3110
  %v3131 = vadd.f32 %v2709, %v3115
  %v3132 = vadd.f32 %v2710, %v3118
  %v3133 = vld [vmem:[%s4] sm:$0x1]
  %v3135 = vlaneseq
  %v3136 = vshrl.u32 %v3135, 7
  %v3137 = vsub.s32 0, %v3136
  %v3138 = vrot.slane %v3133, %v3137
  %v3140 = vadd.f32 %v3121, %v3138
  %v3141 = vadd.f32 %v3122, %v3138
  %v3142 = vadd.f32 %v3123, %v3138
  %v3143 = vadd.f32 %v3124, %v3138
  %v3144 = vadd.f32 %v3125, %v3138
  %v3145 = vadd.f32 %v3126, %v3138
  %v3146 = vadd.f32 %v3127, %v3138
  %v3147 = vadd.f32 %v3128, %v3138
  %v3148 = vadd.f32 %v3129, %v3138
  %v3149 = vadd.f32 %v3130, %v3138
  %v3150 = vadd.f32 %v3131, %v3138
  %v3151 = vadd.f32 %v3132, %v3138
  %v3152 = vmax.f32 %v3140, 0.0
  %v3153 = vmax.f32 %v3141, 0.0
  %v3154 = vmax.f32 %v3142, 0.0
  %v3155 = vmax.f32 %v3143, 0.0
  %v3156 = vmax.f32 %v3144, 0.0
  %v3157 = vmax.f32 %v3145, 0.0
  %v3158 = vmax.f32 %v3146, 0.0
  %v3159 = vmax.f32 %v3147, 0.0
  %v3160 = vmax.f32 %v3148, 0.0
  %v3161 = vmax.f32 %v3149, 0.0
  %v3162 = vmax.f32 %v3150, 0.0
  %v3163 = vmax.f32 %v3151, 0.0
  %v3164 = vpack.c.bf16 %v3153, %v3152
  %v3165 = vpack.c.bf16 %v3155, %v3154
  %v3166 = vpack.c.bf16 %v3157, %v3156
  %v3167 = vpack.c.bf16 %v3159, %v3158
  %v3168 = vpack.c.bf16 %v3161, %v3160
  %v3169 = vpack.c.bf16 %v3163, %v3162
  %v3176 = vunpack.c.l.b16 %v3164
  %v3177 = vunpack.c.h.b16 %v3164
  %v3178 = vunpack.c.l.b16 %v3165
  %v3179 = vunpack.c.h.b16 %v3165
  %v3180 = vunpack.c.l.b16 %v3166
  %v3181 = vunpack.c.h.b16 %v3166
  %v3182 = vunpack.c.l.b16 %v3167
  %v3183 = vunpack.c.h.b16 %v3167
  %v3184 = vunpack.c.l.b16 %v3168
  %v3185 = vunpack.c.h.b16 %v3168
  %v3186 = vunpack.c.l.b16 %v3169
  %v3187 = vunpack.c.h.b16 %v3169
  %v3188 = vpack.c.b16 %v3176, %v3176
  %v3189 = vpack.c.b16 %v3177, %v3177
  %v3190 = vpack.c.b16 %v3178, %v3178
  %v3191 = vpack.c.b16 %v3179, %v3179
  %v3192 = vpack.c.b16 %v3180, %v3180
  %v3193 = vpack.c.b16 %v3181, %v3181
  %v3194 = vpack.c.b16 %v3182, %v3182
  %v3195 = vpack.c.b16 %v3183, %v3183
  %v3196 = vpack.c.b16 %v3184, %v3184
  %v3197 = vpack.c.b16 %v3185, %v3185
  %v3198 = vpack.c.b16 %v3186, %v3186
  %v3199 = vpack.c.b16 %v3187, %v3187
  %vm3212 = vcmask 519168
  %3213 = vst.msk [vmem:[#allocation3] sm:$0xf] %vm3212, %v3188
  %3214 = vst.msk [vmem:[#allocation3 + $0x8] sm:$0xf] %vm3212, %v3189
  %3215 = vst.msk [vmem:[#allocation3 + $0x10] sm:$0xf] %vm3212, %v3190
  %3216 = vst.msk [vmem:[#allocation3 + $0x18] sm:$0xf] %vm3212, %v3191
  %3217 = vst.msk [vmem:[#allocation3 + $0x20] sm:$0xf] %vm3212, %v3192
  %3218 = vst.msk [vmem:[#allocation3 + $0x28] sm:$0xf] %vm3212, %v3193
  %3219 = vst.msk [vmem:[#allocation3 + $0x30] sm:$0xf] %vm3212, %v3194
  %3220 = vst.msk [vmem:[#allocation3 + $0x38] sm:$0xf] %vm3212, %v3195
  %3221 = vst.msk [vmem:[#allocation3 + $0x40] sm:$0xf] %vm3212, %v3196
  %3222 = vst.msk [vmem:[#allocation3 + $0x48] sm:$0xf] %vm3212, %v3197
  %3223 = vst.msk [vmem:[#allocation3 + $0x50] sm:$0xf] %vm3212, %v3198
  %3224 = vst.msk [vmem:[#allocation3 + $0x58] sm:$0xf] %vm3212, %v3199
  %v3225 = vld [vmem:[#allocation3] sm:$0xf]
  %v3226 = vld [vmem:[#allocation3 + $0x8] sm:$0xf]
  %v3227 = vld [vmem:[#allocation3 + $0x10] sm:$0xf]
  %v3228 = vld [vmem:[#allocation3 + $0x18] sm:$0xf]
  %v3229 = vld [vmem:[#allocation3 + $0x30] sm:$0xf]
  %v3230 = vld [vmem:[#allocation3 + $0x38] sm:$0xf]
  %v3231 = vld [vmem:[#allocation3 + $0x40] sm:$0xf]
  %v3232 = vld [vmem:[#allocation3 + $0x48] sm:$0xf]
  %v3233 = vld [vmem:[%s5] sm:$0xf]
  %v3234 = vld [vmem:[%s5 + $0x4] sm:$0xf]
  %v3235 = vld [vmem:[%s5 + $0x8] sm:$0xf]
  %v3236 = vld [vmem:[%s5 + $0xc] sm:$0xf]
  %v3237 = vld [vmem:[%s5 + $0x10] sm:$0xf]
  %v3238 = vld [vmem:[%s5 + $0x14] sm:$0xf]
  %v3239 = vld [vmem:[%s5 + $0x18] sm:$0xf]
  %v3240 = vld [vmem:[%s5 + $0x1c] sm:$0xf]
  %v3241 = vld [vmem:[#allocation3] sm:$0x1f]
  %v3242 = vld [vmem:[#allocation3 + $0x8] sm:$0x1f]
  %v3243 = vld [vmem:[#allocation3 + $0x10] sm:$0x1f]
  %v3244 = vld [vmem:[#allocation3 + $0x18] sm:$0x1f]
  %v3245 = vld [vmem:[#allocation3 + $0x30] sm:$0x1f]
  %v3246 = vld [vmem:[#allocation3 + $0x38] sm:$0x1f]
  %v3247 = vld [vmem:[#allocation3 + $0x40] sm:$0x1f]
  %v3248 = vld [vmem:[#allocation3 + $0x48] sm:$0x1f]
  %v3257 = vunpack.c.l.b16 %v3241
  %v3258 = vunpack.c.h.b16 %v3241
  %v3259 = vunpack.c.l.b16 %v3242
  %v3260 = vunpack.c.h.b16 %v3242
  %v3261 = vunpack.c.l.b16 %v3243
  %v3262 = vunpack.c.h.b16 %v3243
  %v3263 = vunpack.c.l.b16 %v3244
  %v3264 = vunpack.c.h.b16 %v3244
  %v3265 = vunpack.c.l.b16 %v3245
  %v3266 = vunpack.c.h.b16 %v3245
  %v3267 = vunpack.c.l.b16 %v3246
  %v3268 = vunpack.c.h.b16 %v3246
  %v3269 = vunpack.c.l.b16 %v3247
  %v3270 = vunpack.c.h.b16 %v3247
  %v3271 = vunpack.c.l.b16 %v3248
  %v3272 = vunpack.c.h.b16 %v3248
  %v3273 = vpack.c.b16 %v3257, %v3257
  %v3274 = vpack.c.b16 %v3258, %v3258
  %v3275 = vpack.c.b16 %v3259, %v3259
  %v3276 = vpack.c.b16 %v3260, %v3260
  %v3277 = vpack.c.b16 %v3261, %v3261
  %v3278 = vpack.c.b16 %v3262, %v3262
  %v3279 = vpack.c.b16 %v3263, %v3263
  %v3280 = vpack.c.b16 %v3264, %v3264
  %v3281 = vpack.c.b16 %v3265, %v3265
  %v3282 = vpack.c.b16 %v3266, %v3266
  %v3283 = vpack.c.b16 %v3267, %v3267
  %v3284 = vpack.c.b16 %v3268, %v3268
  %v3285 = vpack.c.b16 %v3269, %v3269
  %v3286 = vpack.c.b16 %v3270, %v3270
  %v3287 = vpack.c.b16 %v3271, %v3271
  %v3288 = vpack.c.b16 %v3272, %v3272
  %v3290 = vshrl.u32 %v3273, 16
  %v3292 = vrot.slane %v3290, 4
  %v3293 = vshll.u32 %v3273, 16
  %v3295 = vrot.slane %v3293, 5
  %v3296 = vor.u32 %v3292, %v3295
  %v3297 = vrot.slane %v3296, 4
  %v3299 = vshll.u32 %v3274, 16
  %v3301 = vrot.slane %v3299, 5
  %v3302 = vsel %vm93, %v3297, %v3301
  %v3304 = vshrl.u32 %v3275, 16
  %v3306 = vrot.slane %v3304, 4
  %v3307 = vshll.u32 %v3275, 16
  %v3309 = vrot.slane %v3307, 5
  %v3310 = vor.u32 %v3306, %v3309
  %v3311 = vrot.slane %v3310, 4
  %v3313 = vshll.u32 %v3276, 16
  %v3315 = vrot.slane %v3313, 5
  %v3316 = vsel %vm93, %v3311, %v3315
  %v3318 = vshrl.u32 %v3277, 16
  %v3320 = vrot.slane %v3318, 4
  %v3321 = vshll.u32 %v3277, 16
  %v3323 = vrot.slane %v3321, 5
  %v3324 = vor.u32 %v3320, %v3323
  %v3325 = vrot.slane %v3324, 4
  %v3327 = vshll.u32 %v3278, 16
  %v3329 = vrot.slane %v3327, 5
  %v3330 = vsel %vm93, %v3325, %v3329
  %v3332 = vshrl.u32 %v3279, 16
  %v3334 = vrot.slane %v3332, 4
  %v3335 = vshll.u32 %v3279, 16
  %v3337 = vrot.slane %v3335, 5
  %v3338 = vor.u32 %v3334, %v3337
  %v3339 = vrot.slane %v3338, 4
  %v3341 = vshll.u32 %v3280, 16
  %v3343 = vrot.slane %v3341, 5
  %v3344 = vsel %vm93, %v3339, %v3343
  %v3346 = vshrl.u32 %v3281, 16
  %v3348 = vrot.slane %v3346, 4
  %v3349 = vshll.u32 %v3281, 16
  %v3351 = vrot.slane %v3349, 5
  %v3352 = vor.u32 %v3348, %v3351
  %v3353 = vrot.slane %v3352, 4
  %v3355 = vshll.u32 %v3282, 16
  %v3357 = vrot.slane %v3355, 5
  %v3358 = vsel %vm93, %v3353, %v3357
  %v3360 = vshrl.u32 %v3283, 16
  %v3362 = vrot.slane %v3360, 4
  %v3363 = vshll.u32 %v3283, 16
  %v3365 = vrot.slane %v3363, 5
  %v3366 = vor.u32 %v3362, %v3365
  %v3367 = vrot.slane %v3366, 4
  %v3369 = vshll.u32 %v3284, 16
  %v3371 = vrot.slane %v3369, 5
  %v3372 = vsel %vm93, %v3367, %v3371
  %v3374 = vshrl.u32 %v3285, 16
  %v3376 = vrot.slane %v3374, 4
  %v3377 = vshll.u32 %v3285, 16
  %v3379 = vrot.slane %v3377, 5
  %v3380 = vor.u32 %v3376, %v3379
  %v3381 = vrot.slane %v3380, 4
  %v3383 = vshll.u32 %v3286, 16
  %v3385 = vrot.slane %v3383, 5
  %v3386 = vsel %vm93, %v3381, %v3385
  %v3388 = vshrl.u32 %v3287, 16
  %v3390 = vrot.slane %v3388, 4
  %v3391 = vshll.u32 %v3287, 16
  %v3393 = vrot.slane %v3391, 5
  %v3394 = vor.u32 %v3390, %v3393
  %v3395 = vrot.slane %v3394, 4
  %v3397 = vshll.u32 %v3288, 16
  %v3399 = vrot.slane %v3397, 5
  %v3400 = vsel %vm93, %v3395, %v3399
  %s3401 = scalar_lea.vmem %s5, 32
  %v3402 = vld [vmem:[%s3401] sm:$0xf]
  %v3403 = vld [vmem:[%s3401 + $0x4] sm:$0xf]
  %v3404 = vld [vmem:[%s3401 + $0x8] sm:$0xf]
  %v3405 = vld [vmem:[%s3401 + $0xc] sm:$0xf]
  %v3406 = vld [vmem:[%s3401 + $0x10] sm:$0xf]
  %v3407 = vld [vmem:[%s3401 + $0x14] sm:$0xf]
  %v3408 = vld [vmem:[%s3401 + $0x18] sm:$0xf]
  %v3409 = vld [vmem:[%s3401 + $0x1c] sm:$0xf]
  %v3410 = vunpack.c.l.b16 %v3302
  %v3411 = vunpack.c.l.b16 %v3316
  %v3412 = vunpack.c.l.b16 %v3330
  %v3413 = vunpack.c.l.b16 %v3344
  %v3414 = vunpack.c.l.b16 %v3358
  %v3415 = vunpack.c.l.b16 %v3372
  %v3416 = vunpack.c.l.b16 %v3386
  %v3417 = vunpack.c.l.b16 %v3400
  %v3418 = vpack.c.b16 %v3411, %v3410
  %v3419 = vpack.c.b16 %v3413, %v3412
  %v3420 = vpack.c.b16 %v3415, %v3414
  %v3421 = vpack.c.b16 %v3417, %v3416
  %v3430 = vunpack.c.l.b16 %v3402
  %v3431 = vunpack.c.l.b16 %v3403
  %v3432 = vunpack.c.l.b16 %v3404
  %v3433 = vunpack.c.l.b16 %v3405
  %v3434 = vunpack.c.l.b16 %v3406
  %v3435 = vunpack.c.l.b16 %v3407
  %v3436 = vunpack.c.l.b16 %v3408
  %v3437 = vunpack.c.l.b16 %v3409
  %v3438 = vpack.c.b16 %v3431, %v3430
  %v3439 = vpack.c.b16 %v3433, %v3432
  %v3440 = vpack.c.b16 %v3435, %v3434
  %v3441 = vpack.c.b16 %v3437, %v3436
  %vm3446 = vcmask 523264
  %v3448 = vsel %vm3446, %v3418, 0
  %v3451 = vsel %vm3446, %v3419, 0
  %v3454 = vsel %vm3446, %v3420, 0
  %v3457 = vsel %vm3446, %v3421, 0
  %3459 = vmatprep.subr.bf16.mxu0 0
  %3460 = vmatpush1.bf16.msra.mxu0 %v3438
  %3461 = vmatprep.subr.bf16.mxu0 0
  %3462 = vmatpush1.bf16.msra.mxu0 %v3439
  %3463 = vmatprep.subr.bf16.mxu0 0
  %3464 = vmatpush1.bf16.msra.mxu0 %v3440
  %3465 = vmatprep.subr.bf16.mxu0 0
  %3466 = vmatpush1.bf16.msra.mxu0 %v3441
  %3467 = vmatprep.subr.bf16.mxu0 0
  %3468 = vmatpush1.bf16.msra.mxu0 0
  %3469 = vmatprep.subr.bf16.mxu0 0
  %3470 = vmatpush1.bf16.msra.mxu0 0
  %3471 = vmatprep.subr.bf16.mxu0 0
  %3472 = vmatpush1.bf16.msra.mxu0 0
  %3473 = vmatprep.subr.bf16.mxu0 0
  %3474 = vmatpush1.bf16.msra.mxu0 0
  %3475 = vmatprep.subr.bf16.mxu0 0
  %3476 = vmatpush1.bf16.msra.mxu0 0
  %3477 = vmatprep.subr.bf16.mxu0 0
  %3478 = vmatpush1.bf16.msra.mxu0 0
  %3479 = vmatprep.subr.bf16.mxu0 0
  %3480 = vmatpush1.bf16.msra.mxu0 0
  %3481 = vmatprep.subr.bf16.mxu0 0
  %3482 = vmatpush1.bf16.msra.mxu0 0
  %3483 = vmatprep.subr.bf16.mxu0 0
  %3484 = vmatpush1.bf16.msra.mxu0 0
  %3485 = vmatprep.subr.bf16.mxu0 0
  %3486 = vmatpush1.bf16.msra.mxu0 0
  %3487 = vmatprep.subr.bf16.mxu0 0
  %3488 = vmatpush1.bf16.msra.mxu0 0
  %3489 = vmatprep.subr.bf16.mxu0 0
  %3490 = vmatpush1.bf16.msra.mxu0 0
  %3491 = vmatprep.mubr.bf16.mxu0 0
  %3492 = vmatmul.mubr.bf16.gmra.mrb[0].mxu0 %v3448
  %v3493 = vpop.f32.mrb[0].mxu0
  %v3494 = vadd.f32 0.0, %v3493
  %v3495 = vpop.f32.mrb[0].mxu0
  %v3496 = vpop.f32.mrb[0].mxu0
  %v3497 = vadd.f32 0.0, %v3496
  %v3498 = vpop.f32.mrb[0].mxu0
  %3499 = vmatprep.mubr.bf16.mxu0 0
  %3500 = vmatmul.mubr.bf16.gmra.mrb[0].mxu0 %v3451
  %v3501 = vpop.f32.mrb[0].mxu0
  %v3502 = vadd.f32 0.0, %v3501
  %v3503 = vpop.f32.mrb[0].mxu0
  %v3504 = vpop.f32.mrb[0].mxu0
  %v3505 = vadd.f32 0.0, %v3504
  %v3506 = vpop.f32.mrb[0].mxu0
  %3507 = vmatprep.mubr.bf16.mxu0 0
  %3508 = vmatmul.mubr.bf16.gmra.mrb[0].mxu0 %v3454
  %v3509 = vpop.f32.mrb[0].mxu0
  %v3510 = vadd.f32 0.0, %v3509
  %v3511 = vpop.f32.mrb[0].mxu0
  %v3512 = vpop.f32.mrb[0].mxu0
  %v3513 = vadd.f32 0.0, %v3512
  %v3514 = vpop.f32.mrb[0].mxu0
  %3515 = vmatprep.mubr.bf16.mxu0 0
  %3516 = vmatmul.mubr.bf16.gmra.mrb[0].mxu0 %v3457
  %v3517 = vpop.f32.mrb[0].mxu0
  %v3518 = vadd.f32 0.0, %v3517
  %v3519 = vpop.f32.mrb[0].mxu0
  %v3520 = vpop.f32.mrb[0].mxu0
  %v3521 = vadd.f32 0.0, %v3520
  %v3522 = vpop.f32.mrb[0].mxu0
  %3523 = vdwg.mxu0
  %v3532 = vunpack.c.l.b16 %v3225
  %v3533 = vunpack.c.l.b16 %v3226
  %v3534 = vunpack.c.l.b16 %v3227
  %v3535 = vunpack.c.l.b16 %v3228
  %v3536 = vunpack.c.l.b16 %v3229
  %v3537 = vunpack.c.l.b16 %v3230
  %v3538 = vunpack.c.l.b16 %v3231
  %v3539 = vunpack.c.l.b16 %v3232
  %v3540 = vpack.c.b16 %v3533, %v3532
  %v3541 = vpack.c.b16 %v3535, %v3534
  %v3542 = vpack.c.b16 %v3537, %v3536
  %v3543 = vpack.c.b16 %v3539, %v3538
  %v3552 = vunpack.c.l.b16 %v3233
  %v3553 = vunpack.c.l.b16 %v3234
  %v3554 = vunpack.c.l.b16 %v3235
  %v3555 = vunpack.c.l.b16 %v3236
  %v3556 = vunpack.c.l.b16 %v3237
  %v3557 = vunpack.c.l.b16 %v3238
  %v3558 = vunpack.c.l.b16 %v3239
  %v3559 = vunpack.c.l.b16 %v3240
  %v3560 = vpack.c.b16 %v3553, %v3552
  %v3561 = vpack.c.b16 %v3555, %v3554
  %v3562 = vpack.c.b16 %v3557, %v3556
  %v3563 = vpack.c.b16 %v3559, %v3558
  %v3569 = vsel %vm3446, %v3540, 0
  %v3572 = vsel %vm3446, %v3541, 0
  %v3575 = vsel %vm3446, %v3542, 0
  %v3578 = vsel %vm3446, %v3543, 0
  %3580 = vmatprep.subr.bf16.mxu0 0
  %3581 = vmatpush1.bf16.msra.mxu0 %v3560
  %3582 = vmatprep.subr.bf16.mxu0 0
  %3583 = vmatpush1.bf16.msra.mxu0 %v3561
  %3584 = vmatprep.subr.bf16.mxu0 0
  %3585 = vmatpush1.bf16.msra.mxu0 %v3562
  %3586 = vmatprep.subr.bf16.mxu0 0
  %3587 = vmatpush1.bf16.msra.mxu0 %v3563
  %3588 = vmatprep.subr.bf16.mxu0 0
  %3589 = vmatpush1.bf16.msra.mxu0 0
  %3590 = vmatprep.subr.bf16.mxu0 0
  %3591 = vmatpush1.bf16.msra.mxu0 0
  %3592 = vmatprep.subr.bf16.mxu0 0
  %3593 = vmatpush1.bf16.msra.mxu0 0
  %3594 = vmatprep.subr.bf16.mxu0 0
  %3595 = vmatpush1.bf16.msra.mxu0 0
  %3596 = vmatprep.subr.bf16.mxu0 0
  %3597 = vmatpush1.bf16.msra.mxu0 0
  %3598 = vmatprep.subr.bf16.mxu0 0
  %3599 = vmatpush1.bf16.msra.mxu0 0
  %3600 = vmatprep.subr.bf16.mxu0 0
  %3601 = vmatpush1.bf16.msra.mxu0 0
  %3602 = vmatprep.subr.bf16.mxu0 0
  %3603 = vmatpush1.bf16.msra.mxu0 0
  %3604 = vmatprep.subr.bf16.mxu0 0
  %3605 = vmatpush1.bf16.msra.mxu0 0
  %3606 = vmatprep.subr.bf16.mxu0 0
  %3607 = vmatpush1.bf16.msra.mxu0 0
  %3608 = vmatprep.subr.bf16.mxu0 0
  %3609 = vmatpush1.bf16.msra.mxu0 0
  %3610 = vmatprep.subr.bf16.mxu0 0
  %3611 = vmatpush1.bf16.msra.mxu0 0
  %3612 = vmatprep.mubr.bf16.mxu0 0
  %3613 = vmatmul.mubr.bf16.gmra.mrb[0].mxu0 %v3569
  %v3614 = vpop.f32.mrb[0].mxu0
  %v3615 = vadd.f32 %v3494, %v3614
  %v3616 = vpop.f32.mrb[0].mxu0
  %v3617 = vpop.f32.mrb[0].mxu0
  %v3618 = vadd.f32 %v3497, %v3617
  %v3619 = vpop.f32.mrb[0].mxu0
  %3620 = vmatprep.mubr.bf16.mxu0 0
  %3621 = vmatmul.mubr.bf16.gmra.mrb[0].mxu0 %v3572
  %v3622 = vpop.f32.mrb[0].mxu0
  %v3623 = vadd.f32 %v3502, %v3622
  %v3624 = vpop.f32.mrb[0].mxu0
  %v3625 = vpop.f32.mrb[0].mxu0
  %v3626 = vadd.f32 %v3505, %v3625
  %v3627 = vpop.f32.mrb[0].mxu0
  %3628 = vmatprep.mubr.bf16.mxu0 0
  %3629 = vmatmul.mubr.bf16.gmra.mrb[0].mxu0 %v3575
  %v3630 = vpop.f32.mrb[0].mxu0
  %v3631 = vadd.f32 %v3510, %v3630
  %v3632 = vpop.f32.mrb[0].mxu0
  %v3633 = vpop.f32.mrb[0].mxu0
  %v3634 = vadd.f32 %v3513, %v3633
  %v3635 = vpop.f32.mrb[0].mxu0
  %3636 = vmatprep.mubr.bf16.mxu0 0
  %3637 = vmatmul.mubr.bf16.gmra.mrb[0].mxu0 %v3578
  %v3638 = vpop.f32.mrb[0].mxu0
  %v3639 = vadd.f32 %v3518, %v3638
  %v3640 = vpop.f32.mrb[0].mxu0
  %v3641 = vpop.f32.mrb[0].mxu0
  %v3642 = vadd.f32 %v3521, %v3641
  %v3643 = vpop.f32.mrb[0].mxu0
  %3644 = vdwg.mxu0
  %v3645 = vld [vmem:[#allocation3] sm:$0x1e]
  %v3646 = vld [vmem:[#allocation3 + $0x8] sm:$0x1e]
  %v3647 = vld [vmem:[#allocation3 + $0x10] sm:$0x1e]
  %v3648 = vld [vmem:[#allocation3 + $0x18] sm:$0x1e]
  %v3649 = vld [vmem:[#allocation3 + $0x30] sm:$0x1e]
  %v3650 = vld [vmem:[#allocation3 + $0x38] sm:$0x1e]
  %v3651 = vld [vmem:[#allocation3 + $0x40] sm:$0x1e]
  %v3652 = vld [vmem:[#allocation3 + $0x48] sm:$0x1e]
  %v3661 = vunpack.c.l.b16 %v3645
  %v3662 = vunpack.c.h.b16 %v3645
  %v3663 = vunpack.c.l.b16 %v3646
  %v3664 = vunpack.c.h.b16 %v3646
  %v3665 = vunpack.c.l.b16 %v3647
  %v3666 = vunpack.c.h.b16 %v3647
  %v3667 = vunpack.c.l.b16 %v3648
  %v3668 = vunpack.c.h.b16 %v3648
  %v3669 = vunpack.c.l.b16 %v3649
  %v3670 = vunpack.c.h.b16 %v3649
  %v3671 = vunpack.c.l.b16 %v3650
  %v3672 = vunpack.c.h.b16 %v3650
  %v3673 = vunpack.c.l.b16 %v3651
  %v3674 = vunpack.c.h.b16 %v3651
  %v3675 = vunpack.c.l.b16 %v3652
  %v3676 = vunpack.c.h.b16 %v3652
  %v3677 = vpack.c.b16 %v3661, %v3661
  %v3678 = vpack.c.b16 %v3662, %v3662
  %v3679 = vpack.c.b16 %v3663, %v3663
  %v3680 = vpack.c.b16 %v3664, %v3664
  %v3681 = vpack.c.b16 %v3665, %v3665
  %v3682 = vpack.c.b16 %v3666, %v3666
  %v3683 = vpack.c.b16 %v3667, %v3667
  %v3684 = vpack.c.b16 %v3668, %v3668
  %v3685 = vpack.c.b16 %v3669, %v3669
  %v3686 = vpack.c.b16 %v3670, %v3670
  %v3687 = vpack.c.b16 %v3671, %v3671
  %v3688 = vpack.c.b16 %v3672, %v3672
  %v3689 = vpack.c.b16 %v3673, %v3673
  %v3690 = vpack.c.b16 %v3674, %v3674
  %v3691 = vpack.c.b16 %v3675, %v3675
  %v3692 = vpack.c.b16 %v3676, %v3676
  %vm3693 = vcmask 1042432
  %vm3694 = vcmask 1046532
  %vm3695 = vmor %vm3693, %vm3694
  %v3696 = vrot.slane %v3677, 5
  %v3697 = vrot.slane %v3696, 4
  %v3698 = vrot.slane %v3678, 5
  %v3699 = vsel %vm3695, %v3697, %v3698
  %v3700 = vrot.slane %v3679, 5
  %v3701 = vrot.slane %v3700, 4
  %v3702 = vrot.slane %v3680, 5
  %v3703 = vsel %vm3695, %v3701, %v3702
  %v3704 = vrot.slane %v3681, 5
  %v3705 = vrot.slane %v3704, 4
  %v3706 = vrot.slane %v3682, 5
  %v3707 = vsel %vm3695, %v3705, %v3706
  %v3708 = vrot.slane %v3683, 5
  %v3709 = vrot.slane %v3708, 4
  %v3710 = vrot.slane %v3684, 5
  %v3711 = vsel %vm3695, %v3709, %v3710
  %v3712 = vrot.slane %v3685, 5
  %v3713 = vrot.slane %v3712, 4
  %v3714 = vrot.slane %v3686, 5
  %v3715 = vsel %vm3695, %v3713, %v3714
  %v3716 = vrot.slane %v3687, 5
  %v3717 = vrot.slane %v3716, 4
  %v3718 = vrot.slane %v3688, 5
  %v3719 = vsel %vm3695, %v3717, %v3718
  %v3720 = vrot.slane %v3689, 5
  %v3721 = vrot.slane %v3720, 4
  %v3722 = vrot.slane %v3690, 5
  %v3723 = vsel %vm3695, %v3721, %v3722
  %v3724 = vrot.slane %v3691, 5
  %v3725 = vrot.slane %v3724, 4
  %v3726 = vrot.slane %v3692, 5
  %v3727 = vsel %vm3695, %v3725, %v3726
  %s3728 = scalar_lea.vmem %s5, 64
  %v3729 = vld [vmem:[%s3728] sm:$0xf]
  %v3730 = vld [vmem:[%s3728 + $0x4] sm:$0xf]
  %v3731 = vld [vmem:[%s3728 + $0x8] sm:$0xf]
  %v3732 = vld [vmem:[%s3728 + $0xc] sm:$0xf]
  %v3733 = vld [vmem:[%s3728 + $0x10] sm:$0xf]
  %v3734 = vld [vmem:[%s3728 + $0x14] sm:$0xf]
  %v3735 = vld [vmem:[%s3728 + $0x18] sm:$0xf]
  %v3736 = vld [vmem:[%s3728 + $0x1c] sm:$0xf]
  %v3737 = vunpack.c.l.b16 %v3699
  %v3738 = vunpack.c.l.b16 %v3703
  %v3739 = vunpack.c.l.b16 %v3707
  %v3740 = vunpack.c.l.b16 %v3711
  %v3741 = vunpack.c.l.b16 %v3715
  %v3742 = vunpack.c.l.b16 %v3719
  %v3743 = vunpack.c.l.b16 %v3723
  %v3744 = vunpack.c.l.b16 %v3727
  %v3745 = vpack.c.b16 %v3738, %v3737
  %v3746 = vpack.c.b16 %v3740, %v3739
  %v3747 = vpack.c.b16 %v3742, %v3741
  %v3748 = vpack.c.b16 %v3744, %v3743
  %v3757 = vunpack.c.l.b16 %v3729
  %v3758 = vunpack.c.l.b16 %v3730
  %v3759 = vunpack.c.l.b16 %v3731
  %v3760 = vunpack.c.l.b16 %v3732
  %v3761 = vunpack.c.l.b16 %v3733
  %v3762 = vunpack.c.l.b16 %v3734
  %v3763 = vunpack.c.l.b16 %v3735
  %v3764 = vunpack.c.l.b16 %v3736
  %v3765 = vpack.c.b16 %v3758, %v3757
  %v3766 = vpack.c.b16 %v3760, %v3759
  %v3767 = vpack.c.b16 %v3762, %v3761
  %v3768 = vpack.c.b16 %v3764, %v3763
  %v3774 = vsel %vm3446, %v3745, 0
  %v3777 = vsel %vm3446, %v3746, 0
  %v3780 = vsel %vm3446, %v3747, 0
  %v3783 = vsel %vm3446, %v3748, 0
  %3785 = vmatprep.subr.bf16.mxu0 0
  %3786 = vmatpush1.bf16.msra.mxu0 %v3765
  %3787 = vmatprep.subr.bf16.mxu0 0
  %3788 = vmatpush1.bf16.msra.mxu0 %v3766
  %3789 = vmatprep.subr.bf16.mxu0 0
  %3790 = vmatpush1.bf16.msra.mxu0 %v3767
  %3791 = vmatprep.subr.bf16.mxu0 0
  %3792 = vmatpush1.bf16.msra.mxu0 %v3768
  %3793 = vmatprep.subr.bf16.mxu0 0
  %3794 = vmatpush1.bf16.msra.mxu0 0
  %3795 = vmatprep.subr.bf16.mxu0 0
  %3796 = vmatpush1.bf16.msra.mxu0 0
  %3797 = vmatprep.subr.bf16.mxu0 0
  %3798 = vmatpush1.bf16.msra.mxu0 0
  %3799 = vmatprep.subr.bf16.mxu0 0
  %3800 = vmatpush1.bf16.msra.mxu0 0
  %3801 = vmatprep.subr.bf16.mxu0 0
  %3802 = vmatpush1.bf16.msra.mxu0 0
  %3803 = vmatprep.subr.bf16.mxu0 0
  %3804 = vmatpush1.bf16.msra.mxu0 0
  %3805 = vmatprep.subr.bf16.mxu0 0
  %3806 = vmatpush1.bf16.msra.mxu0 0
  %3807 = vmatprep.subr.bf16.mxu0 0
  %3808 = vmatpush1.bf16.msra.mxu0 0
  %3809 = vmatprep.subr.bf16.mxu0 0
  %3810 = vmatpush1.bf16.msra.mxu0 0
  %3811 = vmatprep.subr.bf16.mxu0 0
  %3812 = vmatpush1.bf16.msra.mxu0 0
  %3813 = vmatprep.subr.bf16.mxu0 0
  %3814 = vmatpush1.bf16.msra.mxu0 0
  %3815 = vmatprep.subr.bf16.mxu0 0
  %3816 = vmatpush1.bf16.msra.mxu0 0
  %3817 = vmatprep.mubr.bf16.mxu0 0
  %3818 = vmatmul.mubr.bf16.gmra.mrb[0].mxu0 %v3774
  %v3819 = vpop.f32.mrb[0].mxu0
  %v3820 = vadd.f32 0.0, %v3819
  %v3821 = vpop.f32.mrb[0].mxu0
  %v3822 = vpop.f32.mrb[0].mxu0
  %v3823 = vadd.f32 0.0, %v3822
  %v3824 = vpop.f32.mrb[0].mxu0
  %3825 = vmatprep.mubr.bf16.mxu0 0
  %3826 = vmatmul.mubr.bf16.gmra.mrb[0].mxu0 %v3777
  %v3827 = vpop.f32.mrb[0].mxu0
  %v3828 = vadd.f32 0.0, %v3827
  %v3829 = vpop.f32.mrb[0].mxu0
  %v3830 = vpop.f32.mrb[0].mxu0
  %v3831 = vadd.f32 0.0, %v3830
  %v3832 = vpop.f32.mrb[0].mxu0
  %3833 = vmatprep.mubr.bf16.mxu0 0
  %3834 = vmatmul.mubr.bf16.gmra.mrb[0].mxu0 %v3780
  %v3835 = vpop.f32.mrb[0].mxu0
  %v3836 = vadd.f32 0.0, %v3835
  %v3837 = vpop.f32.mrb[0].mxu0
  %v3838 = vpop.f32.mrb[0].mxu0
  %v3839 = vadd.f32 0.0, %v3838
  %v3840 = vpop.f32.mrb[0].mxu0
  %3841 = vmatprep.mubr.bf16.mxu0 0
  %3842 = vmatmul.mubr.bf16.gmra.mrb[0].mxu0 %v3783
  %v3843 = vpop.f32.mrb[0].mxu0
  %v3844 = vadd.f32 0.0, %v3843
  %v3845 = vpop.f32.mrb[0].mxu0
  %v3846 = vpop.f32.mrb[0].mxu0
  %v3847 = vadd.f32 0.0, %v3846
  %v3848 = vpop.f32.mrb[0].mxu0
  %3849 = vdwg.mxu0
  %v3850 = vadd.f32 %v3615, %v3820
  %v3851 = vadd.f32 %v3618, %v3823
  %v3852 = vadd.f32 %v3623, %v3828
  %v3853 = vadd.f32 %v3626, %v3831
  %v3854 = vadd.f32 %v3631, %v3836
  %v3855 = vadd.f32 %v3634, %v3839
  %v3856 = vadd.f32 %v3639, %v3844
  %v3857 = vadd.f32 %v3642, %v3847
  %s3858 = scalar_lea.vmem [#allocation3], 8
  %v3859 = vld [vmem:[%s3858] sm:$0xf]
  %v3860 = vld [vmem:[%s3858 + $0x8] sm:$0xf]
  %v3861 = vld [vmem:[%s3858 + $0x10] sm:$0xf]
  %v3862 = vld [vmem:[%s3858 + $0x18] sm:$0xf]
  %v3863 = vld [vmem:[%s3858 + $0x30] sm:$0xf]
  %v3864 = vld [vmem:[%s3858 + $0x38] sm:$0xf]
  %v3865 = vld [vmem:[%s3858 + $0x40] sm:$0xf]
  %v3866 = vld [vmem:[%s3858 + $0x48] sm:$0xf]
  %s3867 = scalar_lea.vmem %s5, 96
  %v3868 = vld [vmem:[%s3867] sm:$0xf]
  %v3869 = vld [vmem:[%s3867 + $0x4] sm:$0xf]
  %v3870 = vld [vmem:[%s3867 + $0x8] sm:$0xf]
  %v3871 = vld [vmem:[%s3867 + $0xc] sm:$0xf]
  %v3872 = vld [vmem:[%s3867 + $0x10] sm:$0xf]
  %v3873 = vld [vmem:[%s3867 + $0x14] sm:$0xf]
  %v3874 = vld [vmem:[%s3867 + $0x18] sm:$0xf]
  %v3875 = vld [vmem:[%s3867 + $0x1c] sm:$0xf]
  %v3884 = vunpack.c.l.b16 %v3859
  %v3885 = vunpack.c.l.b16 %v3860
  %v3886 = vunpack.c.l.b16 %v3861
  %v3887 = vunpack.c.l.b16 %v3862
  %v3888 = vunpack.c.l.b16 %v3863
  %v3889 = vunpack.c.l.b16 %v3864
  %v3890 = vunpack.c.l.b16 %v3865
  %v3891 = vunpack.c.l.b16 %v3866
  %v3892 = vpack.c.b16 %v3885, %v3884
  %v3893 = vpack.c.b16 %v3887, %v3886
  %v3894 = vpack.c.b16 %v3889, %v3888
  %v3895 = vpack.c.b16 %v3891, %v3890
  %v3904 = vunpack.c.l.b16 %v3868
  %v3905 = vunpack.c.l.b16 %v3869
  %v3906 = vunpack.c.l.b16 %v3870
  %v3907 = vunpack.c.l.b16 %v3871
  %v3908 = vunpack.c.l.b16 %v3872
  %v3909 = vunpack.c.l.b16 %v3873
  %v3910 = vunpack.c.l.b16 %v3874
  %v3911 = vunpack.c.l.b16 %v3875
  %v3912 = vpack.c.b16 %v3905, %v3904
  %v3913 = vpack.c.b16 %v3907, %v3906
  %v3914 = vpack.c.b16 %v3909, %v3908
  %v3915 = vpack.c.b16 %v3911, %v3910
  %v3921 = vsel %vm3446, %v3892, 0
  %v3924 = vsel %vm3446, %v3893, 0
  %v3927 = vsel %vm3446, %v3894, 0
  %v3930 = vsel %vm3446, %v3895, 0
  %3932 = vmatprep.subr.bf16.mxu0 0
  %3933 = vmatpush1.bf16.msra.mxu0 %v3912
  %3934 = vmatprep.subr.bf16.mxu0 0
  %3935 = vmatpush1.bf16.msra.mxu0 %v3913
  %3936 = vmatprep.subr.bf16.mxu0 0
  %3937 = vmatpush1.bf16.msra.mxu0 %v3914
  %3938 = vmatprep.subr.bf16.mxu0 0
  %3939 = vmatpush1.bf16.msra.mxu0 %v3915
  %3940 = vmatprep.subr.bf16.mxu0 0
  %3941 = vmatpush1.bf16.msra.mxu0 0
  %3942 = vmatprep.subr.bf16.mxu0 0
  %3943 = vmatpush1.bf16.msra.mxu0 0
  %3944 = vmatprep.subr.bf16.mxu0 0
  %3945 = vmatpush1.bf16.msra.mxu0 0
  %3946 = vmatprep.subr.bf16.mxu0 0
  %3947 = vmatpush1.bf16.msra.mxu0 0
  %3948 = vmatprep.subr.bf16.mxu0 0
  %3949 = vmatpush1.bf16.msra.mxu0 0
  %3950 = vmatprep.subr.bf16.mxu0 0
  %3951 = vmatpush1.bf16.msra.mxu0 0
  %3952 = vmatprep.subr.bf16.mxu0 0
  %3953 = vmatpush1.bf16.msra.mxu0 0
  %3954 = vmatprep.subr.bf16.mxu0 0
  %3955 = vmatpush1.bf16.msra.mxu0 0
  %3956 = vmatprep.subr.bf16.mxu0 0
  %3957 = vmatpush1.bf16.msra.mxu0 0
  %3958 = vmatprep.subr.bf16.mxu0 0
  %3959 = vmatpush1.bf16.msra.mxu0 0
  %3960 = vmatprep.subr.bf16.mxu0 0
  %3961 = vmatpush1.bf16.msra.mxu0 0
  %3962 = vmatprep.subr.bf16.mxu0 0
  %3963 = vmatpush1.bf16.msra.mxu0 0
  %3964 = vmatprep.mubr.bf16.mxu0 0
  %3965 = vmatmul.mubr.bf16.gmra.mrb[0].mxu0 %v3921
  %v3966 = vpop.f32.mrb[0].mxu0
  %v3967 = vadd.f32 0.0, %v3966
  %v3968 = vpop.f32.mrb[0].mxu0
  %v3969 = vpop.f32.mrb[0].mxu0
  %v3970 = vadd.f32 0.0, %v3969
  %v3971 = vpop.f32.mrb[0].mxu0
  %3972 = vmatprep.mubr.bf16.mxu0 0
  %3973 = vmatmul.mubr.bf16.gmra.mrb[0].mxu0 %v3924
  %v3974 = vpop.f32.mrb[0].mxu0
  %v3975 = vadd.f32 0.0, %v3974
  %v3976 = vpop.f32.mrb[0].mxu0
  %v3977 = vpop.f32.mrb[0].mxu0
  %v3978 = vadd.f32 0.0, %v3977
  %v3979 = vpop.f32.mrb[0].mxu0
  %3980 = vmatprep.mubr.bf16.mxu0 0
  %3981 = vmatmul.mubr.bf16.gmra.mrb[0].mxu0 %v3927
  %v3982 = vpop.f32.mrb[0].mxu0
  %v3983 = vadd.f32 0.0, %v3982
  %v3984 = vpop.f32.mrb[0].mxu0
  %v3985 = vpop.f32.mrb[0].mxu0
  %v3986 = vadd.f32 0.0, %v3985
  %v3987 = vpop.f32.mrb[0].mxu0
  %3988 = vmatprep.mubr.bf16.mxu0 0
  %3989 = vmatmul.mubr.bf16.gmra.mrb[0].mxu0 %v3930
  %v3990 = vpop.f32.mrb[0].mxu0
  %v3991 = vadd.f32 0.0, %v3990
  %v3992 = vpop.f32.mrb[0].mxu0
  %v3993 = vpop.f32.mrb[0].mxu0
  %v3994 = vadd.f32 0.0, %v3993
  %v3995 = vpop.f32.mrb[0].mxu0
  %3996 = vdwg.mxu0
  %v3997 = vadd.f32 %v3850, %v3967
  %v3998 = vadd.f32 %v3851, %v3970
  %v3999 = vadd.f32 %v3852, %v3975
  %v4000 = vadd.f32 %v3853, %v3978
  %v4001 = vadd.f32 %v3854, %v3983
  %v4002 = vadd.f32 %v3855, %v3986
  %v4003 = vadd.f32 %v3856, %v3991
  %v4004 = vadd.f32 %v3857, %v3994
  %v4005 = vld [vmem:[%s3858] sm:$0x1f]
  %v4006 = vld [vmem:[%s3858 + $0x8] sm:$0x1f]
  %v4007 = vld [vmem:[%s3858 + $0x10] sm:$0x1f]
  %v4008 = vld [vmem:[%s3858 + $0x18] sm:$0x1f]
  %v4009 = vld [vmem:[%s3858 + $0x30] sm:$0x1f]
  %v4010 = vld [vmem:[%s3858 + $0x38] sm:$0x1f]
  %v4011 = vld [vmem:[%s3858 + $0x40] sm:$0x1f]
  %v4012 = vld [vmem:[%s3858 + $0x48] sm:$0x1f]
  %v4021 = vunpack.c.l.b16 %v4005
  %v4022 = vunpack.c.h.b16 %v4005
  %v4023 = vunpack.c.l.b16 %v4006
  %v4024 = vunpack.c.h.b16 %v4006
  %v4025 = vunpack.c.l.b16 %v4007
  %v4026 = vunpack.c.h.b16 %v4007
  %v4027 = vunpack.c.l.b16 %v4008
  %v4028 = vunpack.c.h.b16 %v4008
  %v4029 = vunpack.c.l.b16 %v4009
  %v4030 = vunpack.c.h.b16 %v4009
  %v4031 = vunpack.c.l.b16 %v4010
  %v4032 = vunpack.c.h.b16 %v4010
  %v4033 = vunpack.c.l.b16 %v4011
  %v4034 = vunpack.c.h.b16 %v4011
  %v4035 = vunpack.c.l.b16 %v4012
  %v4036 = vunpack.c.h.b16 %v4012
  %v4037 = vpack.c.b16 %v4021, %v4021
  %v4038 = vpack.c.b16 %v4022, %v4022
  %v4039 = vpack.c.b16 %v4023, %v4023
  %v4040 = vpack.c.b16 %v4024, %v4024
  %v4041 = vpack.c.b16 %v4025, %v4025
  %v4042 = vpack.c.b16 %v4026, %v4026
  %v4043 = vpack.c.b16 %v4027, %v4027
  %v4044 = vpack.c.b16 %v4028, %v4028
  %v4045 = vpack.c.b16 %v4029, %v4029
  %v4046 = vpack.c.b16 %v4030, %v4030
  %v4047 = vpack.c.b16 %v4031, %v4031
  %v4048 = vpack.c.b16 %v4032, %v4032
  %v4049 = vpack.c.b16 %v4033, %v4033
  %v4050 = vpack.c.b16 %v4034, %v4034
  %v4051 = vpack.c.b16 %v4035, %v4035
  %v4052 = vpack.c.b16 %v4036, %v4036
  %v4054 = vshrl.u32 %v4037, 16
  %v4056 = vrot.slane %v4054, 4
  %v4057 = vshll.u32 %v4037, 16
  %v4059 = vrot.slane %v4057, 5
  %v4060 = vor.u32 %v4056, %v4059
  %v4061 = vrot.slane %v4060, 4
  %v4063 = vshll.u32 %v4038, 16
  %v4065 = vrot.slane %v4063, 5
  %v4066 = vsel %vm93, %v4061, %v4065
  %v4068 = vshrl.u32 %v4039, 16
  %v4070 = vrot.slane %v4068, 4
  %v4071 = vshll.u32 %v4039, 16
  %v4073 = vrot.slane %v4071, 5
  %v4074 = vor.u32 %v4070, %v4073
  %v4075 = vrot.slane %v4074, 4
  %v4077 = vshll.u32 %v4040, 16
  %v4079 = vrot.slane %v4077, 5
  %v4080 = vsel %vm93, %v4075, %v4079
  %v4082 = vshrl.u32 %v4041, 16
  %v4084 = vrot.slane %v4082, 4
  %v4085 = vshll.u32 %v4041, 16
  %v4087 = vrot.slane %v4085, 5
  %v4088 = vor.u32 %v4084, %v4087
  %v4089 = vrot.slane %v4088, 4
  %v4091 = vshll.u32 %v4042, 16
  %v4093 = vrot.slane %v4091, 5
  %v4094 = vsel %vm93, %v4089, %v4093
  %v4096 = vshrl.u32 %v4043, 16
  %v4098 = vrot.slane %v4096, 4
  %v4099 = vshll.u32 %v4043, 16
  %v4101 = vrot.slane %v4099, 5
  %v4102 = vor.u32 %v4098, %v4101
  %v4103 = vrot.slane %v4102, 4
  %v4105 = vshll.u32 %v4044, 16
  %v4107 = vrot.slane %v4105, 5
  %v4108 = vsel %vm93, %v4103, %v4107
  %v4110 = vshrl.u32 %v4045, 16
  %v4112 = vrot.slane %v4110, 4
  %v4113 = vshll.u32 %v4045, 16
  %v4115 = vrot.slane %v4113, 5
  %v4116 = vor.u32 %v4112, %v4115
  %v4117 = vrot.slane %v4116, 4
  %v4119 = vshll.u32 %v4046, 16
  %v4121 = vrot.slane %v4119, 5
  %v4122 = vsel %vm93, %v4117, %v4121
  %v4124 = vshrl.u32 %v4047, 16
  %v4126 = vrot.slane %v4124, 4
  %v4127 = vshll.u32 %v4047, 16
  %v4129 = vrot.slane %v4127, 5
  %v4130 = vor.u32 %v4126, %v4129
  %v4131 = vrot.slane %v4130, 4
  %v4133 = vshll.u32 %v4048, 16
  %v4135 = vrot.slane %v4133, 5
  %v4136 = vsel %vm93, %v4131, %v4135
  %v4138 = vshrl.u32 %v4049, 16
  %v4140 = vrot.slane %v4138, 4
  %v4141 = vshll.u32 %v4049, 16
  %v4143 = vrot.slane %v4141, 5
  %v4144 = vor.u32 %v4140, %v4143
  %v4145 = vrot.slane %v4144, 4
  %v4147 = vshll.u32 %v4050, 16
  %v4149 = vrot.slane %v4147, 5
  %v4150 = vsel %vm93, %v4145, %v4149
  %v4152 = vshrl.u32 %v4051, 16
  %v4154 = vrot.slane %v4152, 4
  %v4155 = vshll.u32 %v4051, 16
  %v4157 = vrot.slane %v4155, 5
  %v4158 = vor.u32 %v4154, %v4157
  %v4159 = vrot.slane %v4158, 4
  %v4161 = vshll.u32 %v4052, 16
  %v4163 = vrot.slane %v4161, 5
  %v4164 = vsel %vm93, %v4159, %v4163
  %s4165 = scalar_lea.vmem %s5, 128
  %v4166 = vld [vmem:[%s4165] sm:$0xf]
  %v4167 = vld [vmem:[%s4165 + $0x4] sm:$0xf]
  %v4168 = vld [vmem:[%s4165 + $0x8] sm:$0xf]
  %v4169 = vld [vmem:[%s4165 + $0xc] sm:$0xf]
  %v4170 = vld [vmem:[%s4165 + $0x10] sm:$0xf]
  %v4171 = vld [vmem:[%s4165 + $0x14] sm:$0xf]
  %v4172 = vld [vmem:[%s4165 + $0x18] sm:$0xf]
  %v4173 = vld [vmem:[%s4165 + $0x1c] sm:$0xf]
  %v4174 = vunpack.c.l.b16 %v4066
  %v4175 = vunpack.c.l.b16 %v4080
  %v4176 = vunpack.c.l.b16 %v4094
  %v4177 = vunpack.c.l.b16 %v4108
  %v4178 = vunpack.c.l.b16 %v4122
  %v4179 = vunpack.c.l.b16 %v4136
  %v4180 = vunpack.c.l.b16 %v4150
  %v4181 = vunpack.c.l.b16 %v4164
  %v4182 = vpack.c.b16 %v4175, %v4174
  %v4183 = vpack.c.b16 %v4177, %v4176
  %v4184 = vpack.c.b16 %v4179, %v4178
  %v4185 = vpack.c.b16 %v4181, %v4180
  %v4194 = vunpack.c.l.b16 %v4166
  %v4195 = vunpack.c.l.b16 %v4167
  %v4196 = vunpack.c.l.b16 %v4168
  %v4197 = vunpack.c.l.b16 %v4169
  %v4198 = vunpack.c.l.b16 %v4170
  %v4199 = vunpack.c.l.b16 %v4171
  %v4200 = vunpack.c.l.b16 %v4172
  %v4201 = vunpack.c.l.b16 %v4173
  %v4202 = vpack.c.b16 %v4195, %v4194
  %v4203 = vpack.c.b16 %v4197, %v4196
  %v4204 = vpack.c.b16 %v4199, %v4198
  %v4205 = vpack.c.b16 %v4201, %v4200
  %v4211 = vsel %vm3446, %v4182, 0
  %v4214 = vsel %vm3446, %v4183, 0
  %v4217 = vsel %vm3446, %v4184, 0
  %v4220 = vsel %vm3446, %v4185, 0
  %4222 = vmatprep.subr.bf16.mxu0 0
  %4223 = vmatpush1.bf16.msra.mxu0 %v4202
  %4224 = vmatprep.subr.bf16.mxu0 0
  %4225 = vmatpush1.bf16.msra.mxu0 %v4203
  %4226 = vmatprep.subr.bf16.mxu0 0
  %4227 = vmatpush1.bf16.msra.mxu0 %v4204
  %4228 = vmatprep.subr.bf16.mxu0 0
  %4229 = vmatpush1.bf16.msra.mxu0 %v4205
  %4230 = vmatprep.subr.bf16.mxu0 0
  %4231 = vmatpush1.bf16.msra.mxu0 0
  %4232 = vmatprep.subr.bf16.mxu0 0
  %4233 = vmatpush1.bf16.msra.mxu0 0
  %4234 = vmatprep.subr.bf16.mxu0 0
  %4235 = vmatpush1.bf16.msra.mxu0 0
  %4236 = vmatprep.subr.bf16.mxu0 0
  %4237 = vmatpush1.bf16.msra.mxu0 0
  %4238 = vmatprep.subr.bf16.mxu0 0
  %4239 = vmatpush1.bf16.msra.mxu0 0
  %4240 = vmatprep.subr.bf16.mxu0 0
  %4241 = vmatpush1.bf16.msra.mxu0 0
  %4242 = vmatprep.subr.bf16.mxu0 0
  %4243 = vmatpush1.bf16.msra.mxu0 0
  %4244 = vmatprep.subr.bf16.mxu0 0
  %4245 = vmatpush1.bf16.msra.mxu0 0
  %4246 = vmatprep.subr.bf16.mxu0 0
  %4247 = vmatpush1.bf16.msra.mxu0 0
  %4248 = vmatprep.subr.bf16.mxu0 0
  %4249 = vmatpush1.bf16.msra.mxu0 0
  %4250 = vmatprep.subr.bf16.mxu0 0
  %4251 = vmatpush1.bf16.msra.mxu0 0
  %4252 = vmatprep.subr.bf16.mxu0 0
  %4253 = vmatpush1.bf16.msra.mxu0 0
  %4254 = vmatprep.mubr.bf16.mxu0 0
  %4255 = vmatmul.mubr.bf16.gmra.mrb[0].mxu0 %v4211
  %v4256 = vpop.f32.mrb[0].mxu0
  %v4257 = vadd.f32 0.0, %v4256
  %v4258 = vpop.f32.mrb[0].mxu0
  %v4259 = vpop.f32.mrb[0].mxu0
  %v4260 = vadd.f32 0.0, %v4259
  %v4261 = vpop.f32.mrb[0].mxu0
  %4262 = vmatprep.mubr.bf16.mxu0 0
  %4263 = vmatmul.mubr.bf16.gmra.mrb[0].mxu0 %v4214
  %v4264 = vpop.f32.mrb[0].mxu0
  %v4265 = vadd.f32 0.0, %v4264
  %v4266 = vpop.f32.mrb[0].mxu0
  %v4267 = vpop.f32.mrb[0].mxu0
  %v4268 = vadd.f32 0.0, %v4267
  %v4269 = vpop.f32.mrb[0].mxu0
  %4270 = vmatprep.mubr.bf16.mxu0 0
  %4271 = vmatmul.mubr.bf16.gmra.mrb[0].mxu0 %v4217
  %v4272 = vpop.f32.mrb[0].mxu0
  %v4273 = vadd.f32 0.0, %v4272
  %v4274 = vpop.f32.mrb[0].mxu0
  %v4275 = vpop.f32.mrb[0].mxu0
  %v4276 = vadd.f32 0.0, %v4275
  %v4277 = vpop.f32.mrb[0].mxu0
  %4278 = vmatprep.mubr.bf16.mxu0 0
  %4279 = vmatmul.mubr.bf16.gmra.mrb[0].mxu0 %v4220
  %v4280 = vpop.f32.mrb[0].mxu0
  %v4281 = vadd.f32 0.0, %v4280
  %v4282 = vpop.f32.mrb[0].mxu0
  %v4283 = vpop.f32.mrb[0].mxu0
  %v4284 = vadd.f32 0.0, %v4283
  %v4285 = vpop.f32.mrb[0].mxu0
  %4286 = vdwg.mxu0
  %v4287 = vadd.f32 %v3997, %v4257
  %v4288 = vadd.f32 %v3998, %v4260
  %v4289 = vadd.f32 %v3999, %v4265
  %v4290 = vadd.f32 %v4000, %v4268
  %v4291 = vadd.f32 %v4001, %v4273
  %v4292 = vadd.f32 %v4002, %v4276
  %v4293 = vadd.f32 %v4003, %v4281
  %v4294 = vadd.f32 %v4004, %v4284
  %v4295 = vld [vmem:[%s3858] sm:$0x1e]
  %v4296 = vld [vmem:[%s3858 + $0x8] sm:$0x1e]
  %v4297 = vld [vmem:[%s3858 + $0x10] sm:$0x1e]
  %v4298 = vld [vmem:[%s3858 + $0x18] sm:$0x1e]
  %v4299 = vld [vmem:[%s3858 + $0x30] sm:$0x1e]
  %v4300 = vld [vmem:[%s3858 + $0x38] sm:$0x1e]
  %v4301 = vld [vmem:[%s3858 + $0x40] sm:$0x1e]
  %v4302 = vld [vmem:[%s3858 + $0x48] sm:$0x1e]
  %v4311 = vunpack.c.l.b16 %v4295
  %v4312 = vunpack.c.h.b16 %v4295
  %v4313 = vunpack.c.l.b16 %v4296
  %v4314 = vunpack.c.h.b16 %v4296
  %v4315 = vunpack.c.l.b16 %v4297
  %v4316 = vunpack.c.h.b16 %v4297
  %v4317 = vunpack.c.l.b16 %v4298
  %v4318 = vunpack.c.h.b16 %v4298
  %v4319 = vunpack.c.l.b16 %v4299
  %v4320 = vunpack.c.h.b16 %v4299
  %v4321 = vunpack.c.l.b16 %v4300
  %v4322 = vunpack.c.h.b16 %v4300
  %v4323 = vunpack.c.l.b16 %v4301
  %v4324 = vunpack.c.h.b16 %v4301
  %v4325 = vunpack.c.l.b16 %v4302
  %v4326 = vunpack.c.h.b16 %v4302
  %v4327 = vpack.c.b16 %v4311, %v4311
  %v4328 = vpack.c.b16 %v4312, %v4312
  %v4329 = vpack.c.b16 %v4313, %v4313
  %v4330 = vpack.c.b16 %v4314, %v4314
  %v4331 = vpack.c.b16 %v4315, %v4315
  %v4332 = vpack.c.b16 %v4316, %v4316
  %v4333 = vpack.c.b16 %v4317, %v4317
  %v4334 = vpack.c.b16 %v4318, %v4318
  %v4335 = vpack.c.b16 %v4319, %v4319
  %v4336 = vpack.c.b16 %v4320, %v4320
  %v4337 = vpack.c.b16 %v4321, %v4321
  %v4338 = vpack.c.b16 %v4322, %v4322
  %v4339 = vpack.c.b16 %v4323, %v4323
  %v4340 = vpack.c.b16 %v4324, %v4324
  %v4341 = vpack.c.b16 %v4325, %v4325
  %v4342 = vpack.c.b16 %v4326, %v4326
  %v4343 = vrot.slane %v4327, 5
  %v4344 = vrot.slane %v4343, 4
  %v4345 = vrot.slane %v4328, 5
  %v4346 = vsel %vm3695, %v4344, %v4345
  %v4347 = vrot.slane %v4329, 5
  %v4348 = vrot.slane %v4347, 4
  %v4349 = vrot.slane %v4330, 5
  %v4350 = vsel %vm3695, %v4348, %v4349
  %v4351 = vrot.slane %v4331, 5
  %v4352 = vrot.slane %v4351, 4
  %v4353 = vrot.slane %v4332, 5
  %v4354 = vsel %vm3695, %v4352, %v4353
  %v4355 = vrot.slane %v4333, 5
  %v4356 = vrot.slane %v4355, 4
  %v4357 = vrot.slane %v4334, 5
  %v4358 = vsel %vm3695, %v4356, %v4357
  %v4359 = vrot.slane %v4335, 5
  %v4360 = vrot.slane %v4359, 4
  %v4361 = vrot.slane %v4336, 5
  %v4362 = vsel %vm3695, %v4360, %v4361
  %v4363 = vrot.slane %v4337, 5
  %v4364 = vrot.slane %v4363, 4
  %v4365 = vrot.slane %v4338, 5
  %v4366 = vsel %vm3695, %v4364, %v4365
  %v4367 = vrot.slane %v4339, 5
  %v4368 = vrot.slane %v4367, 4
  %v4369 = vrot.slane %v4340, 5
  %v4370 = vsel %vm3695, %v4368, %v4369
  %v4371 = vrot.slane %v4341, 5
  %v4372 = vrot.slane %v4371, 4
  %v4373 = vrot.slane %v4342, 5
  %v4374 = vsel %vm3695, %v4372, %v4373
  %s4375 = scalar_lea.vmem %s5, 160
  %v4376 = vld [vmem:[%s4375] sm:$0xf]
  %v4377 = vld [vmem:[%s4375 + $0x4] sm:$0xf]
  %v4378 = vld [vmem:[%s4375 + $0x8] sm:$0xf]
  %v4379 = vld [vmem:[%s4375 + $0xc] sm:$0xf]
  %v4380 = vld [vmem:[%s4375 + $0x10] sm:$0xf]
  %v4381 = vld [vmem:[%s4375 + $0x14] sm:$0xf]
  %v4382 = vld [vmem:[%s4375 + $0x18] sm:$0xf]
  %v4383 = vld [vmem:[%s4375 + $0x1c] sm:$0xf]
  %v4384 = vunpack.c.l.b16 %v4346
  %v4385 = vunpack.c.l.b16 %v4350
  %v4386 = vunpack.c.l.b16 %v4354
  %v4387 = vunpack.c.l.b16 %v4358
  %v4388 = vunpack.c.l.b16 %v4362
  %v4389 = vunpack.c.l.b16 %v4366
  %v4390 = vunpack.c.l.b16 %v4370
  %v4391 = vunpack.c.l.b16 %v4374
  %v4392 = vpack.c.b16 %v4385, %v4384
  %v4393 = vpack.c.b16 %v4387, %v4386
  %v4394 = vpack.c.b16 %v4389, %v4388
  %v4395 = vpack.c.b16 %v4391, %v4390
  %v4404 = vunpack.c.l.b16 %v4376
  %v4405 = vunpack.c.l.b16 %v4377
  %v4406 = vunpack.c.l.b16 %v4378
  %v4407 = vunpack.c.l.b16 %v4379
  %v4408 = vunpack.c.l.b16 %v4380
  %v4409 = vunpack.c.l.b16 %v4381
  %v4410 = vunpack.c.l.b16 %v4382
  %v4411 = vunpack.c.l.b16 %v4383
  %v4412 = vpack.c.b16 %v4405, %v4404
  %v4413 = vpack.c.b16 %v4407, %v4406
  %v4414 = vpack.c.b16 %v4409, %v4408
  %v4415 = vpack.c.b16 %v4411, %v4410
  %v4421 = vsel %vm3446, %v4392, 0
  %v4424 = vsel %vm3446, %v4393, 0
  %v4427 = vsel %vm3446, %v4394, 0
  %v4430 = vsel %vm3446, %v4395, 0
  %4432 = vmatprep.subr.bf16.mxu0 0
  %4433 = vmatpush1.bf16.msra.mxu0 %v4412
  %4434 = vmatprep.subr.bf16.mxu0 0
  %4435 = vmatpush1.bf16.msra.mxu0 %v4413
  %4436 = vmatprep.subr.bf16.mxu0 0
  %4437 = vmatpush1.bf16.msra.mxu0 %v4414
  %4438 = vmatprep.subr.bf16.mxu0 0
  %4439 = vmatpush1.bf16.msra.mxu0 %v4415
  %4440 = vmatprep.subr.bf16.mxu0 0
  %4441 = vmatpush1.bf16.msra.mxu0 0
  %4442 = vmatprep.subr.bf16.mxu0 0
  %4443 = vmatpush1.bf16.msra.mxu0 0
  %4444 = vmatprep.subr.bf16.mxu0 0
  %4445 = vmatpush1.bf16.msra.mxu0 0
  %4446 = vmatprep.subr.bf16.mxu0 0
  %4447 = vmatpush1.bf16.msra.mxu0 0
  %4448 = vmatprep.subr.bf16.mxu0 0
  %4449 = vmatpush1.bf16.msra.mxu0 0
  %4450 = vmatprep.subr.bf16.mxu0 0
  %4451 = vmatpush1.bf16.msra.mxu0 0
  %4452 = vmatprep.subr.bf16.mxu0 0
  %4453 = vmatpush1.bf16.msra.mxu0 0
  %4454 = vmatprep.subr.bf16.mxu0 0
  %4455 = vmatpush1.bf16.msra.mxu0 0
  %4456 = vmatprep.subr.bf16.mxu0 0
  %4457 = vmatpush1.bf16.msra.mxu0 0
  %4458 = vmatprep.subr.bf16.mxu0 0
  %4459 = vmatpush1.bf16.msra.mxu0 0
  %4460 = vmatprep.subr.bf16.mxu0 0
  %4461 = vmatpush1.bf16.msra.mxu0 0
  %4462 = vmatprep.subr.bf16.mxu0 0
  %4463 = vmatpush1.bf16.msra.mxu0 0
  %4464 = vmatprep.mubr.bf16.mxu0 0
  %4465 = vmatmul.mubr.bf16.gmra.mrb[0].mxu0 %v4421
  %v4466 = vpop.f32.mrb[0].mxu0
  %v4467 = vadd.f32 0.0, %v4466
  %v4468 = vpop.f32.mrb[0].mxu0
  %v4469 = vpop.f32.mrb[0].mxu0
  %v4470 = vadd.f32 0.0, %v4469
  %v4471 = vpop.f32.mrb[0].mxu0
  %4472 = vmatprep.mubr.bf16.mxu0 0
  %4473 = vmatmul.mubr.bf16.gmra.mrb[0].mxu0 %v4424
  %v4474 = vpop.f32.mrb[0].mxu0
  %v4475 = vadd.f32 0.0, %v4474
  %v4476 = vpop.f32.mrb[0].mxu0
  %v4477 = vpop.f32.mrb[0].mxu0
  %v4478 = vadd.f32 0.0, %v4477
  %v4479 = vpop.f32.mrb[0].mxu0
  %4480 = vmatprep.mubr.bf16.mxu0 0
  %4481 = vmatmul.mubr.bf16.gmra.mrb[0].mxu0 %v4427
  %v4482 = vpop.f32.mrb[0].mxu0
  %v4483 = vadd.f32 0.0, %v4482
  %v4484 = vpop.f32.mrb[0].mxu0
  %v4485 = vpop.f32.mrb[0].mxu0
  %v4486 = vadd.f32 0.0, %v4485
  %v4487 = vpop.f32.mrb[0].mxu0
  %4488 = vmatprep.mubr.bf16.mxu0 0
  %4489 = vmatmul.mubr.bf16.gmra.mrb[0].mxu0 %v4430
  %v4490 = vpop.f32.mrb[0].mxu0
  %v4491 = vadd.f32 0.0, %v4490
  %v4492 = vpop.f32.mrb[0].mxu0
  %v4493 = vpop.f32.mrb[0].mxu0
  %v4494 = vadd.f32 0.0, %v4493
  %v4495 = vpop.f32.mrb[0].mxu0
  %4496 = vdwg.mxu0
  %v4497 = vadd.f32 %v4287, %v4467
  %v4498 = vadd.f32 %v4288, %v4470
  %v4499 = vadd.f32 %v4289, %v4475
  %v4500 = vadd.f32 %v4290, %v4478
  %v4501 = vadd.f32 %v4291, %v4483
  %v4502 = vadd.f32 %v4292, %v4486
  %v4503 = vadd.f32 %v4293, %v4491
  %v4504 = vadd.f32 %v4294, %v4494
  %s4505 = scalar_lea.vmem [#allocation3], 16
  %v4506 = vld [vmem:[%s4505] sm:$0xf]
  %v4507 = vld [vmem:[%s4505 + $0x8] sm:$0xf]
  %v4508 = vld [vmem:[%s4505 + $0x10] sm:$0xf]
  %v4509 = vld [vmem:[%s4505 + $0x18] sm:$0xf]
  %v4510 = vld [vmem:[%s4505 + $0x30] sm:$0xf]
  %v4511 = vld [vmem:[%s4505 + $0x38] sm:$0xf]
  %v4512 = vld [vmem:[%s4505 + $0x40] sm:$0xf]
  %v4513 = vld [vmem:[%s4505 + $0x48] sm:$0xf]
  %s4514 = scalar_lea.vmem %s5, 192
  %v4515 = vld [vmem:[%s4514] sm:$0xf]
  %v4516 = vld [vmem:[%s4514 + $0x4] sm:$0xf]
  %v4517 = vld [vmem:[%s4514 + $0x8] sm:$0xf]
  %v4518 = vld [vmem:[%s4514 + $0xc] sm:$0xf]
  %v4519 = vld [vmem:[%s4514 + $0x10] sm:$0xf]
  %v4520 = vld [vmem:[%s4514 + $0x14] sm:$0xf]
  %v4521 = vld [vmem:[%s4514 + $0x18] sm:$0xf]
  %v4522 = vld [vmem:[%s4514 + $0x1c] sm:$0xf]
  %v4531 = vunpack.c.l.b16 %v4506
  %v4532 = vunpack.c.l.b16 %v4507
  %v4533 = vunpack.c.l.b16 %v4508
  %v4534 = vunpack.c.l.b16 %v4509
  %v4535 = vunpack.c.l.b16 %v4510
  %v4536 = vunpack.c.l.b16 %v4511
  %v4537 = vunpack.c.l.b16 %v4512
  %v4538 = vunpack.c.l.b16 %v4513
  %v4539 = vpack.c.b16 %v4532, %v4531
  %v4540 = vpack.c.b16 %v4534, %v4533
  %v4541 = vpack.c.b16 %v4536, %v4535
  %v4542 = vpack.c.b16 %v4538, %v4537
  %v4551 = vunpack.c.l.b16 %v4515
  %v4552 = vunpack.c.l.b16 %v4516
  %v4553 = vunpack.c.l.b16 %v4517
  %v4554 = vunpack.c.l.b16 %v4518
  %v4555 = vunpack.c.l.b16 %v4519
  %v4556 = vunpack.c.l.b16 %v4520
  %v4557 = vunpack.c.l.b16 %v4521
  %v4558 = vunpack.c.l.b16 %v4522
  %v4559 = vpack.c.b16 %v4552, %v4551
  %v4560 = vpack.c.b16 %v4554, %v4553
  %v4561 = vpack.c.b16 %v4556, %v4555
  %v4562 = vpack.c.b16 %v4558, %v4557
  %v4568 = vsel %vm3446, %v4539, 0
  %v4571 = vsel %vm3446, %v4540, 0
  %v4574 = vsel %vm3446, %v4541, 0
  %v4577 = vsel %vm3446, %v4542, 0
  %4579 = vmatprep.subr.bf16.mxu0 0
  %4580 = vmatpush1.bf16.msra.mxu0 %v4559
  %4581 = vmatprep.subr.bf16.mxu0 0
  %4582 = vmatpush1.bf16.msra.mxu0 %v4560
  %4583 = vmatprep.subr.bf16.mxu0 0
  %4584 = vmatpush1.bf16.msra.mxu0 %v4561
  %4585 = vmatprep.subr.bf16.mxu0 0
  %4586 = vmatpush1.bf16.msra.mxu0 %v4562
  %4587 = vmatprep.subr.bf16.mxu0 0
  %4588 = vmatpush1.bf16.msra.mxu0 0
  %4589 = vmatprep.subr.bf16.mxu0 0
  %4590 = vmatpush1.bf16.msra.mxu0 0
  %4591 = vmatprep.subr.bf16.mxu0 0
  %4592 = vmatpush1.bf16.msra.mxu0 0
  %4593 = vmatprep.subr.bf16.mxu0 0
  %4594 = vmatpush1.bf16.msra.mxu0 0
  %4595 = vmatprep.subr.bf16.mxu0 0
  %4596 = vmatpush1.bf16.msra.mxu0 0
  %4597 = vmatprep.subr.bf16.mxu0 0
  %4598 = vmatpush1.bf16.msra.mxu0 0
  %4599 = vmatprep.subr.bf16.mxu0 0
  %4600 = vmatpush1.bf16.msra.mxu0 0
  %4601 = vmatprep.subr.bf16.mxu0 0
  %4602 = vmatpush1.bf16.msra.mxu0 0
  %4603 = vmatprep.subr.bf16.mxu0 0
  %4604 = vmatpush1.bf16.msra.mxu0 0
  %4605 = vmatprep.subr.bf16.mxu0 0
  %4606 = vmatpush1.bf16.msra.mxu0 0
  %4607 = vmatprep.subr.bf16.mxu0 0
  %4608 = vmatpush1.bf16.msra.mxu0 0
  %4609 = vmatprep.subr.bf16.mxu0 0
  %4610 = vmatpush1.bf16.msra.mxu0 0
  %4611 = vmatprep.mubr.bf16.mxu0 0
  %4612 = vmatmul.mubr.bf16.gmra.mrb[0].mxu0 %v4568
  %v4613 = vpop.f32.mrb[0].mxu0
  %v4614 = vadd.f32 0.0, %v4613
  %v4615 = vpop.f32.mrb[0].mxu0
  %v4616 = vpop.f32.mrb[0].mxu0
  %v4617 = vadd.f32 0.0, %v4616
  %v4618 = vpop.f32.mrb[0].mxu0
  %4619 = vmatprep.mubr.bf16.mxu0 0
  %4620 = vmatmul.mubr.bf16.gmra.mrb[0].mxu0 %v4571
  %v4621 = vpop.f32.mrb[0].mxu0
  %v4622 = vadd.f32 0.0, %v4621
  %v4623 = vpop.f32.mrb[0].mxu0
  %v4624 = vpop.f32.mrb[0].mxu0
  %v4625 = vadd.f32 0.0, %v4624
  %v4626 = vpop.f32.mrb[0].mxu0
  %4627 = vmatprep.mubr.bf16.mxu0 0
  %4628 = vmatmul.mubr.bf16.gmra.mrb[0].mxu0 %v4574
  %v4629 = vpop.f32.mrb[0].mxu0
  %v4630 = vadd.f32 0.0, %v4629
  %v4631 = vpop.f32.mrb[0].mxu0
  %v4632 = vpop.f32.mrb[0].mxu0
  %v4633 = vadd.f32 0.0, %v4632
  %v4634 = vpop.f32.mrb[0].mxu0
  %4635 = vmatprep.mubr.bf16.mxu0 0
  %4636 = vmatmul.mubr.bf16.gmra.mrb[0].mxu0 %v4577
  %v4637 = vpop.f32.mrb[0].mxu0
  %v4638 = vadd.f32 0.0, %v4637
  %v4639 = vpop.f32.mrb[0].mxu0
  %v4640 = vpop.f32.mrb[0].mxu0
  %v4641 = vadd.f32 0.0, %v4640
  %v4642 = vpop.f32.mrb[0].mxu0
  %4643 = vdwg.mxu0
  %v4644 = vadd.f32 %v4497, %v4614
  %v4645 = vadd.f32 %v4498, %v4617
  %v4646 = vadd.f32 %v4499, %v4622
  %v4647 = vadd.f32 %v4500, %v4625
  %v4648 = vadd.f32 %v4501, %v4630
  %v4649 = vadd.f32 %v4502, %v4633
  %v4650 = vadd.f32 %v4503, %v4638
  %v4651 = vadd.f32 %v4504, %v4641
  %v4652 = vld [vmem:[%s4505] sm:$0x1f]
  %v4653 = vld [vmem:[%s4505 + $0x8] sm:$0x1f]
  %v4654 = vld [vmem:[%s4505 + $0x10] sm:$0x1f]
  %v4655 = vld [vmem:[%s4505 + $0x18] sm:$0x1f]
  %v4656 = vld [vmem:[%s4505 + $0x30] sm:$0x1f]
  %v4657 = vld [vmem:[%s4505 + $0x38] sm:$0x1f]
  %v4658 = vld [vmem:[%s4505 + $0x40] sm:$0x1f]
  %v4659 = vld [vmem:[%s4505 + $0x48] sm:$0x1f]
  %v4668 = vunpack.c.l.b16 %v4652
  %v4669 = vunpack.c.h.b16 %v4652
  %v4670 = vunpack.c.l.b16 %v4653
  %v4671 = vunpack.c.h.b16 %v4653
  %v4672 = vunpack.c.l.b16 %v4654
  %v4673 = vunpack.c.h.b16 %v4654
  %v4674 = vunpack.c.l.b16 %v4655
  %v4675 = vunpack.c.h.b16 %v4655
  %v4676 = vunpack.c.l.b16 %v4656
  %v4677 = vunpack.c.h.b16 %v4656
  %v4678 = vunpack.c.l.b16 %v4657
  %v4679 = vunpack.c.h.b16 %v4657
  %v4680 = vunpack.c.l.b16 %v4658
  %v4681 = vunpack.c.h.b16 %v4658
  %v4682 = vunpack.c.l.b16 %v4659
  %v4683 = vunpack.c.h.b16 %v4659
  %v4684 = vpack.c.b16 %v4668, %v4668
  %v4685 = vpack.c.b16 %v4669, %v4669
  %v4686 = vpack.c.b16 %v4670, %v4670
  %v4687 = vpack.c.b16 %v4671, %v4671
  %v4688 = vpack.c.b16 %v4672, %v4672
  %v4689 = vpack.c.b16 %v4673, %v4673
  %v4690 = vpack.c.b16 %v4674, %v4674
  %v4691 = vpack.c.b16 %v4675, %v4675
  %v4692 = vpack.c.b16 %v4676, %v4676
  %v4693 = vpack.c.b16 %v4677, %v4677
  %v4694 = vpack.c.b16 %v4678, %v4678
  %v4695 = vpack.c.b16 %v4679, %v4679
  %v4696 = vpack.c.b16 %v4680, %v4680
  %v4697 = vpack.c.b16 %v4681, %v4681
  %v4698 = vpack.c.b16 %v4682, %v4682
  %v4699 = vpack.c.b16 %v4683, %v4683
  %v4701 = vshrl.u32 %v4684, 16
  %v4703 = vrot.slane %v4701, 4
  %v4704 = vshll.u32 %v4684, 16
  %v4706 = vrot.slane %v4704, 5
  %v4707 = vor.u32 %v4703, %v4706
  %v4708 = vrot.slane %v4707, 4
  %v4710 = vshll.u32 %v4685, 16
  %v4712 = vrot.slane %v4710, 5
  %v4713 = vsel %vm93, %v4708, %v4712
  %v4715 = vshrl.u32 %v4686, 16
  %v4717 = vrot.slane %v4715, 4
  %v4718 = vshll.u32 %v4686, 16
  %v4720 = vrot.slane %v4718, 5
  %v4721 = vor.u32 %v4717, %v4720
  %v4722 = vrot.slane %v4721, 4
  %v4724 = vshll.u32 %v4687, 16
  %v4726 = vrot.slane %v4724, 5
  %v4727 = vsel %vm93, %v4722, %v4726
  %v4729 = vshrl.u32 %v4688, 16
  %v4731 = vrot.slane %v4729, 4
  %v4732 = vshll.u32 %v4688, 16
  %v4734 = vrot.slane %v4732, 5
  %v4735 = vor.u32 %v4731, %v4734
  %v4736 = vrot.slane %v4735, 4
  %v4738 = vshll.u32 %v4689, 16
  %v4740 = vrot.slane %v4738, 5
  %v4741 = vsel %vm93, %v4736, %v4740
  %v4743 = vshrl.u32 %v4690, 16
  %v4745 = vrot.slane %v4743, 4
  %v4746 = vshll.u32 %v4690, 16
  %v4748 = vrot.slane %v4746, 5
  %v4749 = vor.u32 %v4745, %v4748
  %v4750 = vrot.slane %v4749, 4
  %v4752 = vshll.u32 %v4691, 16
  %v4754 = vrot.slane %v4752, 5
  %v4755 = vsel %vm93, %v4750, %v4754
  %v4757 = vshrl.u32 %v4692, 16
  %v4759 = vrot.slane %v4757, 4
  %v4760 = vshll.u32 %v4692, 16
  %v4762 = vrot.slane %v4760, 5
  %v4763 = vor.u32 %v4759, %v4762
  %v4764 = vrot.slane %v4763, 4
  %v4766 = vshll.u32 %v4693, 16
  %v4768 = vrot.slane %v4766, 5
  %v4769 = vsel %vm93, %v4764, %v4768
  %v4771 = vshrl.u32 %v4694, 16
  %v4773 = vrot.slane %v4771, 4
  %v4774 = vshll.u32 %v4694, 16
  %v4776 = vrot.slane %v4774, 5
  %v4777 = vor.u32 %v4773, %v4776
  %v4778 = vrot.slane %v4777, 4
  %v4780 = vshll.u32 %v4695, 16
  %v4782 = vrot.slane %v4780, 5
  %v4783 = vsel %vm93, %v4778, %v4782
  %v4785 = vshrl.u32 %v4696, 16
  %v4787 = vrot.slane %v4785, 4
  %v4788 = vshll.u32 %v4696, 16
  %v4790 = vrot.slane %v4788, 5
  %v4791 = vor.u32 %v4787, %v4790
  %v4792 = vrot.slane %v4791, 4
  %v4794 = vshll.u32 %v4697, 16
  %v4796 = vrot.slane %v4794, 5
  %v4797 = vsel %vm93, %v4792, %v4796
  %v4799 = vshrl.u32 %v4698, 16
  %v4801 = vrot.slane %v4799, 4
  %v4802 = vshll.u32 %v4698, 16
  %v4804 = vrot.slane %v4802, 5
  %v4805 = vor.u32 %v4801, %v4804
  %v4806 = vrot.slane %v4805, 4
  %v4808 = vshll.u32 %v4699, 16
  %v4810 = vrot.slane %v4808, 5
  %v4811 = vsel %vm93, %v4806, %v4810
  %s4812 = scalar_lea.vmem %s5, 224
  %v4813 = vld [vmem:[%s4812] sm:$0xf]
  %v4814 = vld [vmem:[%s4812 + $0x4] sm:$0xf]
  %v4815 = vld [vmem:[%s4812 + $0x8] sm:$0xf]
  %v4816 = vld [vmem:[%s4812 + $0xc] sm:$0xf]
  %v4817 = vld [vmem:[%s4812 + $0x10] sm:$0xf]
  %v4818 = vld [vmem:[%s4812 + $0x14] sm:$0xf]
  %v4819 = vld [vmem:[%s4812 + $0x18] sm:$0xf]
  %v4820 = vld [vmem:[%s4812 + $0x1c] sm:$0xf]
  %v4821 = vunpack.c.l.b16 %v4713
  %v4822 = vunpack.c.l.b16 %v4727
  %v4823 = vunpack.c.l.b16 %v4741
  %v4824 = vunpack.c.l.b16 %v4755
  %v4825 = vunpack.c.l.b16 %v4769
  %v4826 = vunpack.c.l.b16 %v4783
  %v4827 = vunpack.c.l.b16 %v4797
  %v4828 = vunpack.c.l.b16 %v4811
  %v4829 = vpack.c.b16 %v4822, %v4821
  %v4830 = vpack.c.b16 %v4824, %v4823
  %v4831 = vpack.c.b16 %v4826, %v4825
  %v4832 = vpack.c.b16 %v4828, %v4827
  %v4841 = vunpack.c.l.b16 %v4813
  %v4842 = vunpack.c.l.b16 %v4814
  %v4843 = vunpack.c.l.b16 %v4815
  %v4844 = vunpack.c.l.b16 %v4816
  %v4845 = vunpack.c.l.b16 %v4817
  %v4846 = vunpack.c.l.b16 %v4818
  %v4847 = vunpack.c.l.b16 %v4819
  %v4848 = vunpack.c.l.b16 %v4820
  %v4849 = vpack.c.b16 %v4842, %v4841
  %v4850 = vpack.c.b16 %v4844, %v4843
  %v4851 = vpack.c.b16 %v4846, %v4845
  %v4852 = vpack.c.b16 %v4848, %v4847
  %v4858 = vsel %vm3446, %v4829, 0
  %v4861 = vsel %vm3446, %v4830, 0
  %v4864 = vsel %vm3446, %v4831, 0
  %v4867 = vsel %vm3446, %v4832, 0
  %4869 = vmatprep.subr.bf16.mxu0 0
  %4870 = vmatpush1.bf16.msra.mxu0 %v4849
  %4871 = vmatprep.subr.bf16.mxu0 0
  %4872 = vmatpush1.bf16.msra.mxu0 %v4850
  %4873 = vmatprep.subr.bf16.mxu0 0
  %4874 = vmatpush1.bf16.msra.mxu0 %v4851
  %4875 = vmatprep.subr.bf16.mxu0 0
  %4876 = vmatpush1.bf16.msra.mxu0 %v4852
  %4877 = vmatprep.subr.bf16.mxu0 0
  %4878 = vmatpush1.bf16.msra.mxu0 0
  %4879 = vmatprep.subr.bf16.mxu0 0
  %4880 = vmatpush1.bf16.msra.mxu0 0
  %4881 = vmatprep.subr.bf16.mxu0 0
  %4882 = vmatpush1.bf16.msra.mxu0 0
  %4883 = vmatprep.subr.bf16.mxu0 0
  %4884 = vmatpush1.bf16.msra.mxu0 0
  %4885 = vmatprep.subr.bf16.mxu0 0
  %4886 = vmatpush1.bf16.msra.mxu0 0
  %4887 = vmatprep.subr.bf16.mxu0 0
  %4888 = vmatpush1.bf16.msra.mxu0 0
  %4889 = vmatprep.subr.bf16.mxu0 0
  %4890 = vmatpush1.bf16.msra.mxu0 0
  %4891 = vmatprep.subr.bf16.mxu0 0
  %4892 = vmatpush1.bf16.msra.mxu0 0
  %4893 = vmatprep.subr.bf16.mxu0 0
  %4894 = vmatpush1.bf16.msra.mxu0 0
  %4895 = vmatprep.subr.bf16.mxu0 0
  %4896 = vmatpush1.bf16.msra.mxu0 0
  %4897 = vmatprep.subr.bf16.mxu0 0
  %4898 = vmatpush1.bf16.msra.mxu0 0
  %4899 = vmatprep.subr.bf16.mxu0 0
  %4900 = vmatpush1.bf16.msra.mxu0 0
  %4901 = vmatprep.mubr.bf16.mxu0 0
  %4902 = vmatmul.mubr.bf16.gmra.mrb[0].mxu0 %v4858
  %v4903 = vpop.f32.mrb[0].mxu0
  %v4904 = vadd.f32 0.0, %v4903
  %v4905 = vpop.f32.mrb[0].mxu0
  %v4906 = vpop.f32.mrb[0].mxu0
  %v4907 = vadd.f32 0.0, %v4906
  %v4908 = vpop.f32.mrb[0].mxu0
  %4909 = vmatprep.mubr.bf16.mxu0 0
  %4910 = vmatmul.mubr.bf16.gmra.mrb[0].mxu0 %v4861
  %v4911 = vpop.f32.mrb[0].mxu0
  %v4912 = vadd.f32 0.0, %v4911
  %v4913 = vpop.f32.mrb[0].mxu0
  %v4914 = vpop.f32.mrb[0].mxu0
  %v4915 = vadd.f32 0.0, %v4914
  %v4916 = vpop.f32.mrb[0].mxu0
  %4917 = vmatprep.mubr.bf16.mxu0 0
  %4918 = vmatmul.mubr.bf16.gmra.mrb[0].mxu0 %v4864
  %v4919 = vpop.f32.mrb[0].mxu0
  %v4920 = vadd.f32 0.0, %v4919
  %v4921 = vpop.f32.mrb[0].mxu0
  %v4922 = vpop.f32.mrb[0].mxu0
  %v4923 = vadd.f32 0.0, %v4922
  %v4924 = vpop.f32.mrb[0].mxu0
  %4925 = vmatprep.mubr.bf16.mxu0 0
  %4926 = vmatmul.mubr.bf16.gmra.mrb[0].mxu0 %v4867
  %v4927 = vpop.f32.mrb[0].mxu0
  %v4928 = vadd.f32 0.0, %v4927
  %v4929 = vpop.f32.mrb[0].mxu0
  %v4930 = vpop.f32.mrb[0].mxu0
  %v4931 = vadd.f32 0.0, %v4930
  %v4932 = vpop.f32.mrb[0].mxu0
  %4933 = vdwg.mxu0
  %v4934 = vadd.f32 %v4644, %v4904
  %v4935 = vadd.f32 %v4645, %v4907
  %v4936 = vadd.f32 %v4646, %v4912
  %v4937 = vadd.f32 %v4647, %v4915
  %v4938 = vadd.f32 %v4648, %v4920
  %v4939 = vadd.f32 %v4649, %v4923
  %v4940 = vadd.f32 %v4650, %v4928
  %v4941 = vadd.f32 %v4651, %v4931
  %v4942 = vld [vmem:[%s4505] sm:$0x1e]
  %v4943 = vld [vmem:[%s4505 + $0x8] sm:$0x1e]
  %v4944 = vld [vmem:[%s4505 + $0x10] sm:$0x1e]
  %v4945 = vld [vmem:[%s4505 + $0x18] sm:$0x1e]
  %v4946 = vld [vmem:[%s4505 + $0x30] sm:$0x1e]
  %v4947 = vld [vmem:[%s4505 + $0x38] sm:$0x1e]
  %v4948 = vld [vmem:[%s4505 + $0x40] sm:$0x1e]
  %v4949 = vld [vmem:[%s4505 + $0x48] sm:$0x1e]
  %v4958 = vunpack.c.l.b16 %v4942
  %v4959 = vunpack.c.h.b16 %v4942
  %v4960 = vunpack.c.l.b16 %v4943
  %v4961 = vunpack.c.h.b16 %v4943
  %v4962 = vunpack.c.l.b16 %v4944
  %v4963 = vunpack.c.h.b16 %v4944
  %v4964 = vunpack.c.l.b16 %v4945
  %v4965 = vunpack.c.h.b16 %v4945
  %v4966 = vunpack.c.l.b16 %v4946
  %v4967 = vunpack.c.h.b16 %v4946
  %v4968 = vunpack.c.l.b16 %v4947
  %v4969 = vunpack.c.h.b16 %v4947
  %v4970 = vunpack.c.l.b16 %v4948
  %v4971 = vunpack.c.h.b16 %v4948
  %v4972 = vunpack.c.l.b16 %v4949
  %v4973 = vunpack.c.h.b16 %v4949
  %v4974 = vpack.c.b16 %v4958, %v4958
  %v4975 = vpack.c.b16 %v4959, %v4959
  %v4976 = vpack.c.b16 %v4960, %v4960
  %v4977 = vpack.c.b16 %v4961, %v4961
  %v4978 = vpack.c.b16 %v4962, %v4962
  %v4979 = vpack.c.b16 %v4963, %v4963
  %v4980 = vpack.c.b16 %v4964, %v4964
  %v4981 = vpack.c.b16 %v4965, %v4965
  %v4982 = vpack.c.b16 %v4966, %v4966
  %v4983 = vpack.c.b16 %v4967, %v4967
  %v4984 = vpack.c.b16 %v4968, %v4968
  %v4985 = vpack.c.b16 %v4969, %v4969
  %v4986 = vpack.c.b16 %v4970, %v4970
  %v4987 = vpack.c.b16 %v4971, %v4971
  %v4988 = vpack.c.b16 %v4972, %v4972
  %v4989 = vpack.c.b16 %v4973, %v4973
  %v4990 = vrot.slane %v4974, 5
  %v4991 = vrot.slane %v4990, 4
  %v4992 = vrot.slane %v4975, 5
  %v4993 = vsel %vm3695, %v4991, %v4992
  %v4994 = vrot.slane %v4976, 5
  %v4995 = vrot.slane %v4994, 4
  %v4996 = vrot.slane %v4977, 5
  %v4997 = vsel %vm3695, %v4995, %v4996
  %v4998 = vrot.slane %v4978, 5
  %v4999 = vrot.slane %v4998, 4
  %v5000 = vrot.slane %v4979, 5
  %v5001 = vsel %vm3695, %v4999, %v5000
  %v5002 = vrot.slane %v4980, 5
  %v5003 = vrot.slane %v5002, 4
  %v5004 = vrot.slane %v4981, 5
  %v5005 = vsel %vm3695, %v5003, %v5004
  %v5006 = vrot.slane %v4982, 5
  %v5007 = vrot.slane %v5006, 4
  %v5008 = vrot.slane %v4983, 5
  %v5009 = vsel %vm3695, %v5007, %v5008
  %v5010 = vrot.slane %v4984, 5
  %v5011 = vrot.slane %v5010, 4
  %v5012 = vrot.slane %v4985, 5
  %v5013 = vsel %vm3695, %v5011, %v5012
  %v5014 = vrot.slane %v4986, 5
  %v5015 = vrot.slane %v5014, 4
  %v5016 = vrot.slane %v4987, 5
  %v5017 = vsel %vm3695, %v5015, %v5016
  %v5018 = vrot.slane %v4988, 5
  %v5019 = vrot.slane %v5018, 4
  %v5020 = vrot.slane %v4989, 5
  %v5021 = vsel %vm3695, %v5019, %v5020
  %s5022 = scalar_lea.vmem %s5, 256
  %v5023 = vld [vmem:[%s5022] sm:$0xf]
  %v5024 = vld [vmem:[%s5022 + $0x4] sm:$0xf]
  %v5025 = vld [vmem:[%s5022 + $0x8] sm:$0xf]
  %v5026 = vld [vmem:[%s5022 + $0xc] sm:$0xf]
  %v5027 = vld [vmem:[%s5022 + $0x10] sm:$0xf]
  %v5028 = vld [vmem:[%s5022 + $0x14] sm:$0xf]
  %v5029 = vld [vmem:[%s5022 + $0x18] sm:$0xf]
  %v5030 = vld [vmem:[%s5022 + $0x1c] sm:$0xf]
  %v5031 = vunpack.c.l.b16 %v4993
  %v5032 = vunpack.c.l.b16 %v4997
  %v5033 = vunpack.c.l.b16 %v5001
  %v5034 = vunpack.c.l.b16 %v5005
  %v5035 = vunpack.c.l.b16 %v5009
  %v5036 = vunpack.c.l.b16 %v5013
  %v5037 = vunpack.c.l.b16 %v5017
  %v5038 = vunpack.c.l.b16 %v5021
  %v5039 = vpack.c.b16 %v5032, %v5031
  %v5040 = vpack.c.b16 %v5034, %v5033
  %v5041 = vpack.c.b16 %v5036, %v5035
  %v5042 = vpack.c.b16 %v5038, %v5037
  %v5051 = vunpack.c.l.b16 %v5023
  %v5052 = vunpack.c.l.b16 %v5024
  %v5053 = vunpack.c.l.b16 %v5025
  %v5054 = vunpack.c.l.b16 %v5026
  %v5055 = vunpack.c.l.b16 %v5027
  %v5056 = vunpack.c.l.b16 %v5028
  %v5057 = vunpack.c.l.b16 %v5029
  %v5058 = vunpack.c.l.b16 %v5030
  %v5059 = vpack.c.b16 %v5052, %v5051
  %v5060 = vpack.c.b16 %v5054, %v5053
  %v5061 = vpack.c.b16 %v5056, %v5055
  %v5062 = vpack.c.b16 %v5058, %v5057
  %v5068 = vsel %vm3446, %v5039, 0
  %v5071 = vsel %vm3446, %v5040, 0
  %v5074 = vsel %vm3446, %v5041, 0
  %v5077 = vsel %vm3446, %v5042, 0
  %5079 = vmatprep.subr.bf16.mxu0 0
  %5080 = vmatpush1.bf16.msra.mxu0 %v5059
  %5081 = vmatprep.subr.bf16.mxu0 0
  %5082 = vmatpush1.bf16.msra.mxu0 %v5060
  %5083 = vmatprep.subr.bf16.mxu0 0
  %5084 = vmatpush1.bf16.msra.mxu0 %v5061
  %5085 = vmatprep.subr.bf16.mxu0 0
  %5086 = vmatpush1.bf16.msra.mxu0 %v5062
  %5087 = vmatprep.subr.bf16.mxu0 0
  %5088 = vmatpush1.bf16.msra.mxu0 0
  %5089 = vmatprep.subr.bf16.mxu0 0
  %5090 = vmatpush1.bf16.msra.mxu0 0
  %5091 = vmatprep.subr.bf16.mxu0 0
  %5092 = vmatpush1.bf16.msra.mxu0 0
  %5093 = vmatprep.subr.bf16.mxu0 0
  %5094 = vmatpush1.bf16.msra.mxu0 0
  %5095 = vmatprep.subr.bf16.mxu0 0
  %5096 = vmatpush1.bf16.msra.mxu0 0
  %5097 = vmatprep.subr.bf16.mxu0 0
  %5098 = vmatpush1.bf16.msra.mxu0 0
  %5099 = vmatprep.subr.bf16.mxu0 0
  %5100 = vmatpush1.bf16.msra.mxu0 0
  %5101 = vmatprep.subr.bf16.mxu0 0
  %5102 = vmatpush1.bf16.msra.mxu0 0
  %5103 = vmatprep.subr.bf16.mxu0 0
  %5104 = vmatpush1.bf16.msra.mxu0 0
  %5105 = vmatprep.subr.bf16.mxu0 0
  %5106 = vmatpush1.bf16.msra.mxu0 0
  %5107 = vmatprep.subr.bf16.mxu0 0
  %5108 = vmatpush1.bf16.msra.mxu0 0
  %5109 = vmatprep.subr.bf16.mxu0 0
  %5110 = vmatpush1.bf16.msra.mxu0 0
  %5111 = vmatprep.mubr.bf16.mxu0 0
  %5112 = vmatmul.mubr.bf16.gmra.mrb[0].mxu0 %v5068
  %v5113 = vpop.f32.mrb[0].mxu0
  %v5114 = vadd.f32 0.0, %v5113
  %v5115 = vpop.f32.mrb[0].mxu0
  %v5116 = vpop.f32.mrb[0].mxu0
  %v5117 = vadd.f32 0.0, %v5116
  %v5118 = vpop.f32.mrb[0].mxu0
  %5119 = vmatprep.mubr.bf16.mxu0 0
  %5120 = vmatmul.mubr.bf16.gmra.mrb[0].mxu0 %v5071
  %v5121 = vpop.f32.mrb[0].mxu0
  %v5122 = vadd.f32 0.0, %v5121
  %v5123 = vpop.f32.mrb[0].mxu0
  %v5124 = vpop.f32.mrb[0].mxu0
  %v5125 = vadd.f32 0.0, %v5124
  %v5126 = vpop.f32.mrb[0].mxu0
  %5127 = vmatprep.mubr.bf16.mxu0 0
  %5128 = vmatmul.mubr.bf16.gmra.mrb[0].mxu0 %v5074
  %v5129 = vpop.f32.mrb[0].mxu0
  %v5130 = vadd.f32 0.0, %v5129
  %v5131 = vpop.f32.mrb[0].mxu0
  %v5132 = vpop.f32.mrb[0].mxu0
  %v5133 = vadd.f32 0.0, %v5132
  %v5134 = vpop.f32.mrb[0].mxu0
  %5135 = vmatprep.mubr.bf16.mxu0 0
  %5136 = vmatmul.mubr.bf16.gmra.mrb[0].mxu0 %v5077
  %v5137 = vpop.f32.mrb[0].mxu0
  %v5138 = vadd.f32 0.0, %v5137
  %v5139 = vpop.f32.mrb[0].mxu0
  %v5140 = vpop.f32.mrb[0].mxu0
  %v5141 = vadd.f32 0.0, %v5140
  %v5142 = vpop.f32.mrb[0].mxu0
  %5143 = vdwg.mxu0
  %v5144 = vadd.f32 %v4934, %v5114
  %v5145 = vadd.f32 %v4935, %v5117
  %v5146 = vadd.f32 %v4936, %v5122
  %v5147 = vadd.f32 %v4937, %v5125
  %v5148 = vadd.f32 %v4938, %v5130
  %v5149 = vadd.f32 %v4939, %v5133
  %v5150 = vadd.f32 %v4940, %v5138
  %v5151 = vadd.f32 %v4941, %v5141
  %v5152 = vld [vmem:[%s6] sm:$0x1]
  %v5154 = vlaneseq
  %v5155 = vshrl.u32 %v5154, 7
  %v5156 = vsub.s32 0, %v5155
  %v5157 = vrot.slane %v5152, %v5156
  %v5159 = vadd.f32 %v5144, %v5157
  %v5160 = vadd.f32 %v5145, %v5157
  %v5161 = vadd.f32 %v5146, %v5157
  %v5162 = vadd.f32 %v5147, %v5157
  %v5163 = vadd.f32 %v5148, %v5157
  %v5164 = vadd.f32 %v5149, %v5157
  %v5165 = vadd.f32 %v5150, %v5157
  %v5166 = vadd.f32 %v5151, %v5157
  %v5167 = vmax.f32 %v5159, 0.0
  %v5168 = vmax.f32 %v5160, 0.0
  %v5169 = vmax.f32 %v5161, 0.0
  %v5170 = vmax.f32 %v5162, 0.0
  %v5171 = vmax.f32 %v5163, 0.0
  %v5172 = vmax.f32 %v5164, 0.0
  %v5173 = vmax.f32 %v5165, 0.0
  %v5174 = vmax.f32 %v5166, 0.0
  %v5175 = vpack.c.bf16 %v5167, %v5167
  %v5176 = vpack.c.bf16 %v5168, %v5168
  %v5177 = vpack.c.bf16 %v5169, %v5169
  %v5178 = vpack.c.bf16 %v5170, %v5170
  %v5179 = vpack.c.bf16 %v5171, %v5171
  %v5180 = vpack.c.bf16 %v5172, %v5172
  %v5181 = vpack.c.bf16 %v5173, %v5173
  %v5182 = vpack.c.bf16 %v5174, %v5174
  %vm5183 = vcmask 517120
  %5184 = vst.msk [vmem:[%s7] sm:$0x3] %vm5183, %v5175
  %5185 = vst.msk [vmem:[%s7 + $0x2] sm:$0x3] %vm5183, %v5176
  %5186 = vst.msk [vmem:[%s7 + $0x4] sm:$0x3] %vm5183, %v5177
  %5187 = vst.msk [vmem:[%s7 + $0x6] sm:$0x3] %vm5183, %v5178
  %5188 = vst.msk [vmem:[%s7 + $0x8] sm:$0x3] %vm5183, %v5179
  %5189 = vst.msk [vmem:[%s7 + $0xa] sm:$0x3] %vm5183, %v5180
  %5190 = vst.msk [vmem:[%s7 + $0xc] sm:$0x3] %vm5183, %v5181
  %5191 = vst.msk [vmem:[%s7 + $0xe] sm:$0x3] %vm5183, %v5182
  // Predicated region
  $region30: #{nature_value_forward.2} parent=0 // pred_check
    _
  $region31: #{nature_value_forward.2} parent=0 // pred_check_branch
    %5193 = sbr.rel (0) target = $region33
  $region32: #{nature_value_forward.2} parent=0 // pred_region
    _
  $region33: #{nature_value_forward.2} parent=0 // pred_fallthru
    _
  // Predicated region
  $region34: #{nature_value_forward.2} parent=0 // pred_check
    _
  $region35: #{nature_value_forward.2} parent=0 // pred_check_branch
    %5195 = sbr.rel (0) target = $region37
  $region36: #{nature_value_forward.2} parent=0 // pred_region
    _
  $region37: #{nature_value_forward.2} parent=0 // pred_fallthru
    _

</llo_original>
